<compile_context>
chip_gen: v7x
topology: tpu7x:2x2x1
jax: 0.10.0
libtpu: 0.0.40
codegen_flags: <defaults>
</compile_context>

<pallas_src>
import functools

import jax
import jax.numpy as jnp
from jax import lax
from jax.experimental import pallas as pl
from jax.experimental.pallas import tpu as pltpu


# ----------------------------------------------------------------------------
# Fused Pallas kernel
# ----------------------------------------------------------------------------
def _fused_inverted_residual_kernel(
    x_ref,      # (1, Cin, H, W)        full input image for this batch element
    w1_ref,     # (Cin, hidden, 1, 1)   expand weights   (BN scale folded in)
    b1_ref,     # (hidden, 1, 1)        expand BN shift
    wdw_ref,    # (9, hidden, 1, 1)     depthwise 3x3    (BN scale folded in)
    b2_ref,     # (hidden, 1, 1)        depthwise BN shift
    w3_ref,     # (hidden, oup, 1, 1)   project weights  (BN scale folded in)
    b3_ref,     # (oup, 1, 1)           project BN shift
    o_ref,      # (1, oup, TH, Wo)      output row tile
    x32_ref,    # VMEM scratch (Cin, H, W) f32  - upcast copy of x
    h_ref,      # VMEM scratch (hidden, R_in, W+2) f32 - padded expanded act.
    *, stride, use_res):
    f32 = jnp.float32
    s = stride
    cin, hidden = w1_ref.shape[0], w1_ref.shape[1]
    H, W = x_ref.shape[2], x_ref.shape[3]
    TH = o_ref.shape[2]
    R_dense = (TH - 1) * s + 1          # dense (stride-1) depthwise rows needed
    R_in = R_dense + 2                  # + 1-row halo on each side

    t = pl.program_id(1)
    out_r0 = t * TH                     # first output row of this tile
    mid_start = out_r0 * s              # first always-valid input row
    top_row = mid_start - 1             # may be -1  -> zero padding
    bot_row = mid_start + R_dense       # may be H   -> zero padding

    # Upcast the whole x block once (bf16 storage in HBM, f32 math in VMEM);
    # all dynamic row slicing happens on the f32 scratch.
    x32_ref[...] = x_ref[0].astype(f32)

    def expand(rows):                   # rows: (cin, r, W) -> (hidden, r, W)
        acc = b1_ref[...].astype(f32)   # (hidden, 1, 1) broadcasts
        for ci in range(cin):
            acc = acc + w1_ref[ci].astype(f32) * rows[ci][None, :, :]
        return jnp.clip(acc, 0.0, 6.0)

    # ---- 1x1 expand + BN + ReLU6 written into the padded VMEM window -------
    x_mid = x32_ref[:, pl.ds(mid_start, R_dense), :]          # always in range
    h_ref[:, 1:1 + R_dense, 1:1 + W] = expand(x_mid)

    top_idx = jnp.maximum(top_row, 0)
    bot_idx = jnp.minimum(bot_row, H - 1)
    top_ok = (top_row >= 0).astype(f32)                       # 0 -> pad row
    bot_ok = (bot_row <= H - 1).astype(f32)
    x_top = x32_ref[:, pl.ds(top_idx, 1), :]
    x_bot = x32_ref[:, pl.ds(bot_idx, 1), :]
    h_ref[:, 0:1, 1:1 + W] = expand(x_top) * top_ok
    h_ref[:, R_in - 1:R_in, 1:1 + W] = expand(x_bot) * bot_ok

    zcol = jnp.zeros((hidden, R_in, 1), f32)                  # left/right pad
    h_ref[:, :, 0:1] = zcol
    h_ref[:, :, W + 1:W + 2] = zcol

    # ---- depthwise 3x3 (dense taps, single subsample) + BN + ReLU6 ---------
    hw = h_ref[...]                                           # (hidden, R_in, W+2)
    acc = jnp.zeros((hidden, R_dense, W), f32)
    for dy in range(3):
        for dx in range(3):
            acc = acc + wdw_ref[3 * dy + dx].astype(f32) * hw[:, dy:dy + R_dense,
                                                              dx:dx + W]
    if s > 1:
        # One strided subsample instead of 9 strided per-tap slices.
        acc = lax.slice(acc, (0, 0, 0), acc.shape, (1, s, s))  # (hidden, TH, Wo)
    d = jnp.clip(acc + b2_ref[...].astype(f32), 0.0, 6.0)

    # ---- 1x1 project + BN (+ residual from the resident x tile) ------------
    out = b3_ref[...].astype(f32)                             # (oup, 1, 1)
    for c in range(hidden):
        out = out + w3_ref[c].astype(f32) * d[c][None, :, :]
    if use_res:
        out = out + x_mid                 # stride==1 -> x_mid rows == out rows
    o_ref[...] = out[None].astype(o_ref.dtype)


# ----------------------------------------------------------------------------
# Wrapper
# ----------------------------------------------------------------------------
def inverted_residual_forward(x_nchw, p, stride, use_res_connect):
    """Fused Pallas forward of InvertedResidual (expand_ratio != 1, eval BN)."""
    N, Cin, H, W = x_nchw.shape
    hidden = p["w1"].shape[0]
    oup = p["w3"].shape[0]
    assert p["w1"].shape[1] == Cin
    if use_res_connect:
        assert stride == 1 and Cin == oup

    dt = x_nchw.dtype
    # Fold eval-mode BN scales into the conv weights (f32 math), then store the
    # weights at the activation dtype (bf16 halves HBM bytes on v6e/v7x).
    w1e = jnp.transpose(p["w1"][:, :, 0, 0], (1, 0)) * p["s1"][None, :]      # (Cin, hidden)
    wdwe = (jnp.transpose(p["w_dw"][:, 0], (1, 2, 0)).reshape(9, hidden)
            * p["s2"][None, :])                                              # (9, hidden)
    w3e = jnp.transpose(p["w3"][:, :, 0, 0], (1, 0)) * p["s3"][None, :]      # (hidden, oup)
    w1e = w1e[:, :, None, None].astype(dt)
    wdwe = wdwe[:, :, None, None].astype(dt)
    w3e = w3e[:, :, None, None].astype(dt)
    b1 = p["b1"][:, None, None].astype(jnp.float32)   # biases stay f32 (tiny)
    b2 = p["b2"][:, None, None].astype(jnp.float32)
    b3 = p["b3"][:, None, None].astype(jnp.float32)

    Ho = (H - 1) // stride + 1
    Wo = (W - 1) // stride + 1

    # Output-row tile: smallest sublane-aligned divisor of Ho (8 rows for f32,
    # 16 for packed bf16) -> several parallel grid steps, bounded VMEM.
    row_gran = 8 if dt == jnp.float32 else 16
    TH = Ho
    for cand in range(row_gran, Ho + 1, row_gran):
        if Ho % cand == 0:
            TH = cand
            break
    R_in = (TH - 1) * stride + 3

    kernel = functools.partial(_fused_inverted_residual_kernel,
                               stride=stride, use_res=use_res_connect)

    return pl.pallas_call(
        kernel,
        out_shape=jax.ShapeDtypeStruct((N, oup, Ho, Wo), dt),
        grid=(N, Ho // TH),
        in_specs=[
            pl.BlockSpec((1, Cin, H, W), lambda n, t: (n, 0, 0, 0)),
            pl.BlockSpec((Cin, hidden, 1, 1), lambda n, t: (0, 0, 0, 0)),
            pl.BlockSpec((hidden, 1, 1), lambda n, t: (0, 0, 0)),
            pl.BlockSpec((9, hidden, 1, 1), lambda n, t: (0, 0, 0, 0)),
            pl.BlockSpec((hidden, 1, 1), lambda n, t: (0, 0, 0)),
            pl.BlockSpec((hidden, oup, 1, 1), lambda n, t: (0, 0, 0, 0)),
            pl.BlockSpec((oup, 1, 1), lambda n, t: (0, 0, 0)),
        ],
        out_specs=pl.BlockSpec((1, oup, TH, Wo), lambda n, t: (n, 0, t, 0)),
        scratch_shapes=[
            pltpu.VMEM((Cin, H, W), jnp.float32),
            pltpu.VMEM((hidden, R_in, W + 2), jnp.float32),
        ],
        compiler_params=pltpu.CompilerParams(
            dimension_semantics=("parallel", "parallel"),
            vmem_limit_bytes=32 * 1024 * 1024),
    )(x_nchw, w1e, b1, wdwe, b2, w3e, b3)


# ----------------------------------------------------------------------------
# Pure-JAX NCHW reference (mirrors the PyTorch module in eval mode)
# ----------------------------------------------------------------------------
def reference_forward(x, p, stride, use_res_connect, hidden):
    def bn(y, s, b):
        return y * s[None, :, None, None] + b[None, :, None, None]

    dn = ("NCHW", "OIHW", "NCHW")
    y = lax.conv_general_dilated(x, p["w1"], (1, 1), "VALID", dimension_numbers=dn)
    y = jnp.clip(bn(y, p["s1"], p["b1"]), 0.0, 6.0)
    y = lax.conv_general_dilated(y, p["w_dw"], (stride, stride), [(1, 1), (1, 1)],
                                 dimension_numbers=dn, feature_group_count=hidden)
    y = jnp.clip(bn(y, p["s2"], p["b2"]), 0.0, 6.0)
    y = lax.conv_general_dilated(y, p["w3"], (1, 1), "VALID", dimension_numbers=dn)
    y = bn(y, p["s3"], p["b3"])
    return x + y if use_res_connect else y


# ----------------------------------------------------------------------------
# Deterministic parameter construction (eval-mode BN folded to scale/shift)
# ----------------------------------------------------------------------------
def make_params(key, inp, oup, hidden, eps=1e-5):
    ks = jax.random.split(key, 6)
    w1 = 0.1 * jax.random.normal(ks[0], (hidden, inp, 1, 1), jnp.float32)
    w_dw = 0.1 * jax.random.normal(ks[1], (hidden, 1, 3, 3), jnp.float32)
    w3 = 0.1 * jax.random.normal(ks[2], (oup, hidden, 1, 1), jnp.float32)

    def bn_params(k, c):
        k1, k2, k3, k4 = jax.random.split(k, 4)
        gamma = jax.random.uniform(k1, (c,), jnp.float32, 0.5, 1.5)
        beta = 0.1 * jax.random.normal(k2, (c,), jnp.float32)
        mean = 0.1 * jax.random.normal(k3, (c,), jnp.float32)
        var = jax.random.uniform(k4, (c,), jnp.float32, 0.5, 1.5)
        scale = gamma / jnp.sqrt(var + eps)
        shift = beta - mean * scale
        return scale, shift

    s1, b1 = bn_params(ks[3], hidden)
    s2, b2 = bn_params(ks[4], hidden)
    s3, b3 = bn_params(ks[5], oup)
    return dict(w1=w1, w_dw=w_dw, w3=w3, s1=s1, b1=b1, s2=s2, b2=b2, s3=s3, b3=b3)


if __name__ == "__main__":
    # InvertedResidual(inp=4, oup=4, stride=1, expand_ratio=6) -> residual path.
    inp, oup, stride, expand_ratio = 4, 4, 1, 6
    hidden = int(inp * expand_ratio)
    use_res_connect = (stride == 1) and (inp == oup)

    N, H, W = 2, 16, 16
    key = jax.random.PRNGKey(0)
    kx, kp = jax.random.split(key)
    x = jax.random.normal(kx, (N, inp, H, W), jnp.float32)
    params = make_params(kp, inp, oup, hidden)

    # f32 storage path (exact check vs. reference).
    out = inverted_residual_forward(x, params, stride, use_res_connect)
    out = jax.block_until_ready(out)
    ref = reference_forward(x, params, stride, use_res_connect, hidden)
    ref = jax.block_until_ready(ref)
    assert out.shape == ref.shape == (N, oup, H, W)
    max_err = float(jnp.max(jnp.abs(out - ref)))
    assert jnp.allclose(out, ref, atol=1e-4, rtol=1e-4), max_err

    # bf16 storage path (v6e/v7x): same kernel, half the HBM bytes, f32 accumulation.
    out_bf = inverted_residual_forward(x.astype(jnp.bfloat16), params, stride,
                                       use_res_connect)
    out_bf = jax.block_until_ready(out_bf)
    err_bf = float(jnp.max(jnp.abs(out_bf.astype(jnp.float32) - ref)))
    assert out_bf.dtype == jnp.bfloat16 and err_bf < 0.1, err_bf

    print("KERNEL_OK")
</pallas_src>

<mosaic_0001>
module attributes {stable_mosaic.version = 11 : i64} {
  func.func @_fused_inverted_residual_kernel(%arg0: i32, %arg1: i32, %arg2: memref<1x4x16x16xf32, #tpu.memory_space<vmem>>, %arg3: memref<4x24x1x1xf32, #tpu.memory_space<vmem>>, %arg4: memref<24x1x1xf32, #tpu.memory_space<vmem>>, %arg5: memref<9x24x1x1xf32, #tpu.memory_space<vmem>>, %arg6: memref<24x1x1xf32, #tpu.memory_space<vmem>>, %arg7: memref<24x4x1x1xf32, #tpu.memory_space<vmem>>, %arg8: memref<4x1x1xf32, #tpu.memory_space<vmem>>, %arg9: memref<1x4x8x16xf32, #tpu.memory_space<vmem>>, %arg10: memref<4x16x16xf32, #tpu.memory_space<vmem>>, %arg11: memref<24x10x18xf32, #tpu.memory_space<vmem>>) attributes {dimension_semantics = [#tpu.dimension_semantics<parallel>, #tpu.dimension_semantics<parallel>], iteration_bounds = array<i64: 2, 2>, scalar_prefetch = 0 : i64, scratch_operands = 2 : i64, tpu.core_type = #tpu.core_type<tc>, window_params = [{transform_indices = @transform_0, window_bounds = array<i64: 1, 4, 16, 16>}, {pipeline_mode = #tpu.pipeline_mode<synchronous>, transform_indices = @transform_1, window_bounds = array<i64: 4, 24, 1, 1>}, {pipeline_mode = #tpu.pipeline_mode<synchronous>, transform_indices = @transform_2, window_bounds = array<i64: 24, 1, 1>}, {pipeline_mode = #tpu.pipeline_mode<synchronous>, transform_indices = @transform_3, window_bounds = array<i64: 9, 24, 1, 1>}, {pipeline_mode = #tpu.pipeline_mode<synchronous>, transform_indices = @transform_4, window_bounds = array<i64: 24, 1, 1>}, {pipeline_mode = #tpu.pipeline_mode<synchronous>, transform_indices = @transform_5, window_bounds = array<i64: 24, 4, 1, 1>}, {pipeline_mode = #tpu.pipeline_mode<synchronous>, transform_indices = @transform_6, window_bounds = array<i64: 4, 1, 1>}, {transform_indices = @transform_7, window_bounds = array<i64: 1, 4, 8, 16>}]} {
    %c8_i32 = arith.constant 8 : i32
    %0 = arith.muli %arg1, %c8_i32 : i32
    %c1_i32 = arith.constant 1 : i32
    %1 = arith.muli %0, %c1_i32 : i32
    %c1_i32_0 = arith.constant 1 : i32
    %2 = arith.subi %1, %c1_i32_0 : i32
    %c8_i32_1 = arith.constant 8 : i32
    %3 = arith.addi %1, %c8_i32_1 : i32
    %c0 = arith.constant 0 : index
    %c0_2 = arith.constant 0 : index
    %c0_3 = arith.constant 0 : index
    %c0_4 = arith.constant 0 : index
    %4 = vector.load %arg2[%c0, %c0_2, %c0_3, %c0_4] : memref<1x4x16x16xf32, #tpu.memory_space<vmem>>, vector<1x4x16x16xf32>
    %5 = vector.shape_cast %4 : vector<1x4x16x16xf32> to vector<4x16x16xf32>
    %c0_5 = arith.constant 0 : index
    %c0_6 = arith.constant 0 : index
    %c0_7 = arith.constant 0 : index
    %6 = vector.load %arg10[%c0_5, %c0_6, %c0_7] : memref<4x16x16xf32, #tpu.memory_space<vmem>>, vector<4x16x16xf32>
    tpu.vector_store %arg10[%c0_5, %c0_6, %c0_7], %5 {strides = array<i32>} : memref<4x16x16xf32, #tpu.memory_space<vmem>>, vector<4x16x16xf32>,
    %c0_8 = arith.constant 0 : index
    %7 = arith.index_cast %1 : i32 to index
    %c0_9 = arith.constant 0 : index
    %8 = vector.load %arg10[%c0_8, %7, %c0_9] : memref<4x16x16xf32, #tpu.memory_space<vmem>>, vector<4x8x16xf32>
    %c0_10 = arith.constant 0 : index
    %c0_11 = arith.constant 0 : index
    %c0_12 = arith.constant 0 : index
    %9 = vector.load %arg4[%c0_10, %c0_11, %c0_12] : memref<24x1x1xf32, #tpu.memory_space<vmem>>, vector<24x1x1xf32>
    %c0_13 = arith.constant 0 : index
    %c0_14 = arith.constant 0 : index
    %c0_15 = arith.constant 0 : index
    %c0_16 = arith.constant 0 : index
    %10 = vector.load %arg3[%c0_13, %c0_14, %c0_15, %c0_16] : memref<4x24x1x1xf32, #tpu.memory_space<vmem>>, vector<1x24x1x1xf32>
    %11 = vector.shape_cast %10 : vector<1x24x1x1xf32> to vector<24x1x1xf32>
    %12 = vector.extract_strided_slice %8 {offsets = [0, 0, 0], sizes = [1, 8, 16], strides = [1, 1, 1]} : vector<4x8x16xf32> to vector<1x8x16xf32>
    %13 = vector.shape_cast %12 : vector<1x8x16xf32> to vector<8x16xf32>
    %14 = vector.shape_cast %13 : vector<8x16xf32> to vector<1x8x16xf32>
    %15 = vector.broadcast %11 : vector<24x1x1xf32> to vector<24x8x16xf32>
    %16 = vector.broadcast %14 : vector<1x8x16xf32> to vector<24x8x16xf32>
    %17 = arith.mulf %15, %16 : vector<24x8x16xf32>
    %18 = vector.broadcast %9 : vector<24x1x1xf32> to vector<24x8x16xf32>
    %19 = arith.addf %18, %17 : vector<24x8x16xf32>
    %c1 = arith.constant 1 : index
    %c0_17 = arith.constant 0 : index
    %c0_18 = arith.constant 0 : index
    %c0_19 = arith.constant 0 : index
    %20 = vector.load %arg3[%c1, %c0_17, %c0_18, %c0_19] : memref<4x24x1x1xf32, #tpu.memory_space<vmem>>, vector<1x24x1x1xf32>
    %21 = vector.shape_cast %20 : vector<1x24x1x1xf32> to vector<24x1x1xf32>
    %22 = vector.extract_strided_slice %8 {offsets = [1, 0, 0], sizes = [1, 8, 16], strides = [1, 1, 1]} : vector<4x8x16xf32> to vector<1x8x16xf32>
    %23 = vector.shape_cast %22 : vector<1x8x16xf32> to vector<8x16xf32>
    %24 = vector.shape_cast %23 : vector<8x16xf32> to vector<1x8x16xf32>
    %25 = vector.broadcast %21 : vector<24x1x1xf32> to vector<24x8x16xf32>
    %26 = vector.broadcast %24 : vector<1x8x16xf32> to vector<24x8x16xf32>
    %27 = arith.mulf %25, %26 : vector<24x8x16xf32>
    %28 = arith.addf %19, %27 : vector<24x8x16xf32>
    %c2 = arith.constant 2 : index
    %c0_20 = arith.constant 0 : index
    %c0_21 = arith.constant 0 : index
    %c0_22 = arith.constant 0 : index
    %29 = vector.load %arg3[%c2, %c0_20, %c0_21, %c0_22] : memref<4x24x1x1xf32, #tpu.memory_space<vmem>>, vector<1x24x1x1xf32>
    %30 = vector.shape_cast %29 : vector<1x24x1x1xf32> to vector<24x1x1xf32>
    %31 = vector.extract_strided_slice %8 {offsets = [2, 0, 0], sizes = [1, 8, 16], strides = [1, 1, 1]} : vector<4x8x16xf32> to vector<1x8x16xf32>
    %32 = vector.shape_cast %31 : vector<1x8x16xf32> to vector<8x16xf32>
    %33 = vector.shape_cast %32 : vector<8x16xf32> to vector<1x8x16xf32>
    %34 = vector.broadcast %30 : vector<24x1x1xf32> to vector<24x8x16xf32>
    %35 = vector.broadcast %33 : vector<1x8x16xf32> to vector<24x8x16xf32>
    %36 = arith.mulf %34, %35 : vector<24x8x16xf32>
    %37 = arith.addf %28, %36 : vector<24x8x16xf32>
    %c3 = arith.constant 3 : index
    %c0_23 = arith.constant 0 : index
    %c0_24 = arith.constant 0 : index
    %c0_25 = arith.constant 0 : index
    %38 = vector.load %arg3[%c3, %c0_23, %c0_24, %c0_25] : memref<4x24x1x1xf32, #tpu.memory_space<vmem>>, vector<1x24x1x1xf32>
    %39 = vector.shape_cast %38 : vector<1x24x1x1xf32> to vector<24x1x1xf32>
    %40 = vector.extract_strided_slice %8 {offsets = [3, 0, 0], sizes = [1, 8, 16], strides = [1, 1, 1]} : vector<4x8x16xf32> to vector<1x8x16xf32>
    %41 = vector.shape_cast %40 : vector<1x8x16xf32> to vector<8x16xf32>
    %42 = vector.shape_cast %41 : vector<8x16xf32> to vector<1x8x16xf32>
    %43 = vector.broadcast %39 : vector<24x1x1xf32> to vector<24x8x16xf32>
    %44 = vector.broadcast %42 : vector<1x8x16xf32> to vector<24x8x16xf32>
    %45 = arith.mulf %43, %44 : vector<24x8x16xf32>
    %46 = arith.addf %37, %45 : vector<24x8x16xf32>
    %cst = arith.constant 0.000000e+00 : f32
    %cst_26 = arith.constant 6.000000e+00 : f32
    %47 = vector.broadcast %cst : f32 to vector<24x8x16xf32>
    %48 = arith.maximumf %47, %46 : vector<24x8x16xf32>
    %49 = vector.broadcast %cst_26 : f32 to vector<24x8x16xf32>
    %50 = arith.minimumf %49, %48 : vector<24x8x16xf32>
    %c0_27 = arith.constant 0 : index
    %c1_28 = arith.constant 1 : index
    %c1_29 = arith.constant 1 : index
    %51 = vector.load %arg11[%c0_27, %c1_28, %c1_29] : memref<24x10x18xf32, #tpu.memory_space<vmem>>, vector<24x8x16xf32>
    tpu.vector_store %arg11[%c0_27, %c1_28, %c1_29], %50 {strides = array<i32>} : memref<24x10x18xf32, #tpu.memory_space<vmem>>, vector<24x8x16xf32>,
    %c0_i32 = arith.constant 0 : i32
    %52 = arith.maxsi %2, %c0_i32 : i32
    %c15_i32 = arith.constant 15 : i32
    %53 = arith.minsi %3, %c15_i32 : i32
    %c0_i32_30 = arith.constant 0 : i32
    %54 = arith.cmpi sge, %2, %c0_i32_30 : i32
    %55 = arith.extui %54 : i1 to i32
    %56 = arith.sitofp %55 : i32 to f32
    %c15_i32_31 = arith.constant 15 : i32
    %57 = arith.cmpi sle, %3, %c15_i32_31 : i32
    %58 = arith.extui %57 : i1 to i32
    %59 = arith.sitofp %58 : i32 to f32
    %c0_32 = arith.constant 0 : index
    %60 = arith.index_cast %52 : i32 to index
    %c0_33 = arith.constant 0 : index
    %61 = vector.load %arg10[%c0_32, %60, %c0_33] : memref<4x16x16xf32, #tpu.memory_space<vmem>>, vector<4x1x16xf32>
    %c0_34 = arith.constant 0 : index
    %62 = arith.index_cast %53 : i32 to index
    %c0_35 = arith.constant 0 : index
    %63 = vector.load %arg10[%c0_34, %62, %c0_35] : memref<4x16x16xf32, #tpu.memory_space<vmem>>, vector<4x1x16xf32>
    %c0_36 = arith.constant 0 : index
    %c0_37 = arith.constant 0 : index
    %c0_38 = arith.constant 0 : index
    %64 = vector.load %arg4[%c0_36, %c0_37, %c0_38] : memref<24x1x1xf32, #tpu.memory_space<vmem>>, vector<24x1x1xf32>
    %c0_39 = arith.constant 0 : index
    %c0_40 = arith.constant 0 : index
    %c0_41 = arith.constant 0 : index
    %c0_42 = arith.constant 0 : index
    %65 = vector.load %arg3[%c0_39, %c0_40, %c0_41, %c0_42] : memref<4x24x1x1xf32, #tpu.memory_space<vmem>>, vector<1x24x1x1xf32>
    %66 = vector.shape_cast %65 : vector<1x24x1x1xf32> to vector<24x1x1xf32>
    %67 = vector.extract_strided_slice %61 {offsets = [0, 0, 0], sizes = [1, 1, 16], strides = [1, 1, 1]} : vector<4x1x16xf32> to vector<1x1x16xf32>
    %68 = vector.shape_cast %67 : vector<1x1x16xf32> to vector<1x16xf32>
    %69 = vector.shape_cast %68 : vector<1x16xf32> to vector<1x1x16xf32>
    %70 = vector.broadcast %66 : vector<24x1x1xf32> to vector<24x1x16xf32>
    %71 = vector.broadcast %69 : vector<1x1x16xf32> to vector<24x1x16xf32>
    %72 = arith.mulf %70, %71 : vector<24x1x16xf32>
    %73 = vector.broadcast %64 : vector<24x1x1xf32> to vector<24x1x16xf32>
    %74 = arith.addf %73, %72 : vector<24x1x16xf32>
    %c1_43 = arith.constant 1 : index
    %c0_44 = arith.constant 0 : index
    %c0_45 = arith.constant 0 : index
    %c0_46 = arith.constant 0 : index
    %75 = vector.load %arg3[%c1_43, %c0_44, %c0_45, %c0_46] : memref<4x24x1x1xf32, #tpu.memory_space<vmem>>, vector<1x24x1x1xf32>
    %76 = vector.shape_cast %75 : vector<1x24x1x1xf32> to vector<24x1x1xf32>
    %77 = vector.extract_strided_slice %61 {offsets = [1, 0, 0], sizes = [1, 1, 16], strides = [1, 1, 1]} : vector<4x1x16xf32> to vector<1x1x16xf32>
    %78 = vector.shape_cast %77 : vector<1x1x16xf32> to vector<1x16xf32>
    %79 = vector.shape_cast %78 : vector<1x16xf32> to vector<1x1x16xf32>
    %80 = vector.broadcast %76 : vector<24x1x1xf32> to vector<24x1x16xf32>
    %81 = vector.broadcast %79 : vector<1x1x16xf32> to vector<24x1x16xf32>
    %82 = arith.mulf %80, %81 : vector<24x1x16xf32>
    %83 = arith.addf %74, %82 : vector<24x1x16xf32>
    %c2_47 = arith.constant 2 : index
    %c0_48 = arith.constant 0 : index
    %c0_49 = arith.constant 0 : index
    %c0_50 = arith.constant 0 : index
    %84 = vector.load %arg3[%c2_47, %c0_48, %c0_49, %c0_50] : memref<4x24x1x1xf32, #tpu.memory_space<vmem>>, vector<1x24x1x1xf32>
    %85 = vector.shape_cast %84 : vector<1x24x1x1xf32> to vector<24x1x1xf32>
    %86 = vector.extract_strided_slice %61 {offsets = [2, 0, 0], sizes = [1, 1, 16], strides = [1, 1, 1]} : vector<4x1x16xf32> to vector<1x1x16xf32>
    %87 = vector.shape_cast %86 : vector<1x1x16xf32> to vector<1x16xf32>
    %88 = vector.shape_cast %87 : vector<1x16xf32> to vector<1x1x16xf32>
    %89 = vector.broadcast %85 : vector<24x1x1xf32> to vector<24x1x16xf32>
    %90 = vector.broadcast %88 : vector<1x1x16xf32> to vector<24x1x16xf32>
    %91 = arith.mulf %89, %90 : vector<24x1x16xf32>
    %92 = arith.addf %83, %91 : vector<24x1x16xf32>
    %c3_51 = arith.constant 3 : index
    %c0_52 = arith.constant 0 : index
    %c0_53 = arith.constant 0 : index
    %c0_54 = arith.constant 0 : index
    %93 = vector.load %arg3[%c3_51, %c0_52, %c0_53, %c0_54] : memref<4x24x1x1xf32, #tpu.memory_space<vmem>>, vector<1x24x1x1xf32>
    %94 = vector.shape_cast %93 : vector<1x24x1x1xf32> to vector<24x1x1xf32>
    %95 = vector.extract_strided_slice %61 {offsets = [3, 0, 0], sizes = [1, 1, 16], strides = [1, 1, 1]} : vector<4x1x16xf32> to vector<1x1x16xf32>
    %96 = vector.shape_cast %95 : vector<1x1x16xf32> to vector<1x16xf32>
    %97 = vector.shape_cast %96 : vector<1x16xf32> to vector<1x1x16xf32>
    %98 = vector.broadcast %94 : vector<24x1x1xf32> to vector<24x1x16xf32>
    %99 = vector.broadcast %97 : vector<1x1x16xf32> to vector<24x1x16xf32>
    %100 = arith.mulf %98, %99 : vector<24x1x16xf32>
    %101 = arith.addf %92, %100 : vector<24x1x16xf32>
    %cst_55 = arith.constant 0.000000e+00 : f32
    %cst_56 = arith.constant 6.000000e+00 : f32
    %102 = vector.broadcast %cst_55 : f32 to vector<24x1x16xf32>
    %103 = arith.maximumf %102, %101 : vector<24x1x16xf32>
    %104 = vector.broadcast %cst_56 : f32 to vector<24x1x16xf32>
    %105 = arith.minimumf %104, %103 : vector<24x1x16xf32>
    %106 = vector.broadcast %56 : f32 to vector<24x1x16xf32>
    %107 = arith.mulf %105, %106 : vector<24x1x16xf32>
    %c0_57 = arith.constant 0 : index
    %c0_58 = arith.constant 0 : index
    %c1_59 = arith.constant 1 : index
    %108 = vector.load %arg11[%c0_57, %c0_58, %c1_59] : memref<24x10x18xf32, #tpu.memory_space<vmem>>, vector<24x1x16xf32>
    tpu.vector_store %arg11[%c0_57, %c0_58, %c1_59], %107 {strides = array<i32>} : memref<24x10x18xf32, #tpu.memory_space<vmem>>, vector<24x1x16xf32>,
    %c0_60 = arith.constant 0 : index
    %c0_61 = arith.constant 0 : index
    %c0_62 = arith.constant 0 : index
    %109 = vector.load %arg4[%c0_60, %c0_61, %c0_62] : memref<24x1x1xf32, #tpu.memory_space<vmem>>, vector<24x1x1xf32>
    %c0_63 = arith.constant 0 : index
    %c0_64 = arith.constant 0 : index
    %c0_65 = arith.constant 0 : index
    %c0_66 = arith.constant 0 : index
    %110 = vector.load %arg3[%c0_63, %c0_64, %c0_65, %c0_66] : memref<4x24x1x1xf32, #tpu.memory_space<vmem>>, vector<1x24x1x1xf32>
    %111 = vector.shape_cast %110 : vector<1x24x1x1xf32> to vector<24x1x1xf32>
    %112 = vector.extract_strided_slice %63 {offsets = [0, 0, 0], sizes = [1, 1, 16], strides = [1, 1, 1]} : vector<4x1x16xf32> to vector<1x1x16xf32>
    %113 = vector.shape_cast %112 : vector<1x1x16xf32> to vector<1x16xf32>
    %114 = vector.shape_cast %113 : vector<1x16xf32> to vector<1x1x16xf32>
    %115 = vector.broadcast %111 : vector<24x1x1xf32> to vector<24x1x16xf32>
    %116 = vector.broadcast %114 : vector<1x1x16xf32> to vector<24x1x16xf32>
    %117 = arith.mulf %115, %116 : vector<24x1x16xf32>
    %118 = vector.broadcast %109 : vector<24x1x1xf32> to vector<24x1x16xf32>
    %119 = arith.addf %118, %117 : vector<24x1x16xf32>
    %c1_67 = arith.constant 1 : index
    %c0_68 = arith.constant 0 : index
    %c0_69 = arith.constant 0 : index
    %c0_70 = arith.constant 0 : index
    %120 = vector.load %arg3[%c1_67, %c0_68, %c0_69, %c0_70] : memref<4x24x1x1xf32, #tpu.memory_space<vmem>>, vector<1x24x1x1xf32>
    %121 = vector.shape_cast %120 : vector<1x24x1x1xf32> to vector<24x1x1xf32>
    %122 = vector.extract_strided_slice %63 {offsets = [1, 0, 0], sizes = [1, 1, 16], strides = [1, 1, 1]} : vector<4x1x16xf32> to vector<1x1x16xf32>
    %123 = vector.shape_cast %122 : vector<1x1x16xf32> to vector<1x16xf32>
    %124 = vector.shape_cast %123 : vector<1x16xf32> to vector<1x1x16xf32>
    %125 = vector.broadcast %121 : vector<24x1x1xf32> to vector<24x1x16xf32>
    %126 = vector.broadcast %124 : vector<1x1x16xf32> to vector<24x1x16xf32>
    %127 = arith.mulf %125, %126 : vector<24x1x16xf32>
    %128 = arith.addf %119, %127 : vector<24x1x16xf32>
    %c2_71 = arith.constant 2 : index
    %c0_72 = arith.constant 0 : index
    %c0_73 = arith.constant 0 : index
    %c0_74 = arith.constant 0 : index
    %129 = vector.load %arg3[%c2_71, %c0_72, %c0_73, %c0_74] : memref<4x24x1x1xf32, #tpu.memory_space<vmem>>, vector<1x24x1x1xf32>
    %130 = vector.shape_cast %129 : vector<1x24x1x1xf32> to vector<24x1x1xf32>
    %131 = vector.extract_strided_slice %63 {offsets = [2, 0, 0], sizes = [1, 1, 16], strides = [1, 1, 1]} : vector<4x1x16xf32> to vector<1x1x16xf32>
    %132 = vector.shape_cast %131 : vector<1x1x16xf32> to vector<1x16xf32>
    %133 = vector.shape_cast %132 : vector<1x16xf32> to vector<1x1x16xf32>
    %134 = vector.broadcast %130 : vector<24x1x1xf32> to vector<24x1x16xf32>
    %135 = vector.broadcast %133 : vector<1x1x16xf32> to vector<24x1x16xf32>
    %136 = arith.mulf %134, %135 : vector<24x1x16xf32>
    %137 = arith.addf %128, %136 : vector<24x1x16xf32>
    %c3_75 = arith.constant 3 : index
    %c0_76 = arith.constant 0 : index
    %c0_77 = arith.constant 0 : index
    %c0_78 = arith.constant 0 : index
    %138 = vector.load %arg3[%c3_75, %c0_76, %c0_77, %c0_78] : memref<4x24x1x1xf32, #tpu.memory_space<vmem>>, vector<1x24x1x1xf32>
    %139 = vector.shape_cast %138 : vector<1x24x1x1xf32> to vector<24x1x1xf32>
    %140 = vector.extract_strided_slice %63 {offsets = [3, 0, 0], sizes = [1, 1, 16], strides = [1, 1, 1]} : vector<4x1x16xf32> to vector<1x1x16xf32>
    %141 = vector.shape_cast %140 : vector<1x1x16xf32> to vector<1x16xf32>
    %142 = vector.shape_cast %141 : vector<1x16xf32> to vector<1x1x16xf32>
    %143 = vector.broadcast %139 : vector<24x1x1xf32> to vector<24x1x16xf32>
    %144 = vector.broadcast %142 : vector<1x1x16xf32> to vector<24x1x16xf32>
    %145 = arith.mulf %143, %144 : vector<24x1x16xf32>
    %146 = arith.addf %137, %145 : vector<24x1x16xf32>
    %cst_79 = arith.constant 0.000000e+00 : f32
    %cst_80 = arith.constant 6.000000e+00 : f32
    %147 = vector.broadcast %cst_79 : f32 to vector<24x1x16xf32>
    %148 = arith.maximumf %147, %146 : vector<24x1x16xf32>
    %149 = vector.broadcast %cst_80 : f32 to vector<24x1x16xf32>
    %150 = arith.minimumf %149, %148 : vector<24x1x16xf32>
    %151 = vector.broadcast %59 : f32 to vector<24x1x16xf32>
    %152 = arith.mulf %150, %151 : vector<24x1x16xf32>
    %c0_81 = arith.constant 0 : index
    %c9 = arith.constant 9 : index
    %c1_82 = arith.constant 1 : index
    %153 = vector.load %arg11[%c0_81, %c9, %c1_82] : memref<24x10x18xf32, #tpu.memory_space<vmem>>, vector<24x1x16xf32>
    tpu.vector_store %arg11[%c0_81, %c9, %c1_82], %152 {strides = array<i32>} : memref<24x10x18xf32, #tpu.memory_space<vmem>>, vector<24x1x16xf32>,
    %cst_83 = arith.constant 0.000000e+00 : f32
    %154 = vector.broadcast %cst_83 : f32 to vector<24x10x1xf32>
    %c0_84 = arith.constant 0 : index
    %c0_85 = arith.constant 0 : index
    %c0_86 = arith.constant 0 : index
    %155 = vector.load %arg11[%c0_84, %c0_85, %c0_86] : memref<24x10x18xf32, #tpu.memory_space<vmem>>, vector<24x10x1xf32>
    tpu.vector_store %arg11[%c0_84, %c0_85, %c0_86], %154 {strides = array<i32>} : memref<24x10x18xf32, #tpu.memory_space<vmem>>, vector<24x10x1xf32>,
    %c0_87 = arith.constant 0 : index
    %c0_88 = arith.constant 0 : index
    %c17 = arith.constant 17 : index
    %156 = vector.load %arg11[%c0_87, %c0_88, %c17] : memref<24x10x18xf32, #tpu.memory_space<vmem>>, vector<24x10x1xf32>
    tpu.vector_store %arg11[%c0_87, %c0_88, %c17], %154 {strides = array<i32>} : memref<24x10x18xf32, #tpu.memory_space<vmem>>, vector<24x10x1xf32>,
    %c0_89 = arith.constant 0 : index
    %c0_90 = arith.constant 0 : index
    %c0_91 = arith.constant 0 : index
    %157 = vector.load %arg11[%c0_89, %c0_90, %c0_91] : memref<24x10x18xf32, #tpu.memory_space<vmem>>, vector<24x10x18xf32>
    %cst_92 = arith.constant 0.000000e+00 : f32
    %158 = vector.broadcast %cst_92 : f32 to vector<24x8x16xf32>
    %c0_93 = arith.constant 0 : index
    %c0_94 = arith.constant 0 : index
    %c0_95 = arith.constant 0 : index
    %c0_96 = arith.constant 0 : index
    %159 = vector.load %arg5[%c0_93, %c0_94, %c0_95, %c0_96] : memref<9x24x1x1xf32, #tpu.memory_space<vmem>>, vector<1x24x1x1xf32>
    %160 = vector.shape_cast %159 : vector<1x24x1x1xf32> to vector<24x1x1xf32>
    %161 = vector.extract_strided_slice %157 {offsets = [0, 0, 0], sizes = [24, 8, 16], strides = [1, 1, 1]} : vector<24x10x18xf32> to vector<24x8x16xf32>
    %162 = vector.broadcast %160 : vector<24x1x1xf32> to vector<24x8x16xf32>
    %163 = arith.mulf %162, %161 : vector<24x8x16xf32>
    %164 = arith.addf %158, %163 : vector<24x8x16xf32>
    %c1_97 = arith.constant 1 : index
    %c0_98 = arith.constant 0 : index
    %c0_99 = arith.constant 0 : index
    %c0_100 = arith.constant 0 : index
    %165 = vector.load %arg5[%c1_97, %c0_98, %c0_99, %c0_100] : memref<9x24x1x1xf32, #tpu.memory_space<vmem>>, vector<1x24x1x1xf32>
    %166 = vector.shape_cast %165 : vector<1x24x1x1xf32> to vector<24x1x1xf32>
    %167 = vector.extract_strided_slice %157 {offsets = [0, 0, 1], sizes = [24, 8, 16], strides = [1, 1, 1]} : vector<24x10x18xf32> to vector<24x8x16xf32>
    %168 = vector.broadcast %166 : vector<24x1x1xf32> to vector<24x8x16xf32>
    %169 = arith.mulf %168, %167 : vector<24x8x16xf32>
    %170 = arith.addf %164, %169 : vector<24x8x16xf32>
    %c2_101 = arith.constant 2 : index
    %c0_102 = arith.constant 0 : index
    %c0_103 = arith.constant 0 : index
    %c0_104 = arith.constant 0 : index
    %171 = vector.load %arg5[%c2_101, %c0_102, %c0_103, %c0_104] : memref<9x24x1x1xf32, #tpu.memory_space<vmem>>, vector<1x24x1x1xf32>
    %172 = vector.shape_cast %171 : vector<1x24x1x1xf32> to vector<24x1x1xf32>
    %173 = vector.extract_strided_slice %157 {offsets = [0, 0, 2], sizes = [24, 8, 16], strides = [1, 1, 1]} : vector<24x10x18xf32> to vector<24x8x16xf32>
    %174 = vector.broadcast %172 : vector<24x1x1xf32> to vector<24x8x16xf32>
    %175 = arith.mulf %174, %173 : vector<24x8x16xf32>
    %176 = arith.addf %170, %175 : vector<24x8x16xf32>
    %c3_105 = arith.constant 3 : index
    %c0_106 = arith.constant 0 : index
    %c0_107 = arith.constant 0 : index
    %c0_108 = arith.constant 0 : index
    %177 = vector.load %arg5[%c3_105, %c0_106, %c0_107, %c0_108] : memref<9x24x1x1xf32, #tpu.memory_space<vmem>>, vector<1x24x1x1xf32>
    %178 = vector.shape_cast %177 : vector<1x24x1x1xf32> to vector<24x1x1xf32>
    %179 = vector.extract_strided_slice %157 {offsets = [0, 1, 0], sizes = [24, 8, 16], strides = [1, 1, 1]} : vector<24x10x18xf32> to vector<24x8x16xf32>
    %180 = vector.broadcast %178 : vector<24x1x1xf32> to vector<24x8x16xf32>
    %181 = arith.mulf %180, %179 : vector<24x8x16xf32>
    %182 = arith.addf %176, %181 : vector<24x8x16xf32>
    %c4 = arith.constant 4 : index
    %c0_109 = arith.constant 0 : index
    %c0_110 = arith.constant 0 : index
    %c0_111 = arith.constant 0 : index
    %183 = vector.load %arg5[%c4, %c0_109, %c0_110, %c0_111] : memref<9x24x1x1xf32, #tpu.memory_space<vmem>>, vector<1x24x1x1xf32>
    %184 = vector.shape_cast %183 : vector<1x24x1x1xf32> to vector<24x1x1xf32>
    %185 = vector.extract_strided_slice %157 {offsets = [0, 1, 1], sizes = [24, 8, 16], strides = [1, 1, 1]} : vector<24x10x18xf32> to vector<24x8x16xf32>
    %186 = vector.broadcast %184 : vector<24x1x1xf32> to vector<24x8x16xf32>
    %187 = arith.mulf %186, %185 : vector<24x8x16xf32>
    %188 = arith.addf %182, %187 : vector<24x8x16xf32>
    %c5 = arith.constant 5 : index
    %c0_112 = arith.constant 0 : index
    %c0_113 = arith.constant 0 : index
    %c0_114 = arith.constant 0 : index
    %189 = vector.load %arg5[%c5, %c0_112, %c0_113, %c0_114] : memref<9x24x1x1xf32, #tpu.memory_space<vmem>>, vector<1x24x1x1xf32>
    %190 = vector.shape_cast %189 : vector<1x24x1x1xf32> to vector<24x1x1xf32>
    %191 = vector.extract_strided_slice %157 {offsets = [0, 1, 2], sizes = [24, 8, 16], strides = [1, 1, 1]} : vector<24x10x18xf32> to vector<24x8x16xf32>
    %192 = vector.broadcast %190 : vector<24x1x1xf32> to vector<24x8x16xf32>
    %193 = arith.mulf %192, %191 : vector<24x8x16xf32>
    %194 = arith.addf %188, %193 : vector<24x8x16xf32>
    %c6 = arith.constant 6 : index
    %c0_115 = arith.constant 0 : index
    %c0_116 = arith.constant 0 : index
    %c0_117 = arith.constant 0 : index
    %195 = vector.load %arg5[%c6, %c0_115, %c0_116, %c0_117] : memref<9x24x1x1xf32, #tpu.memory_space<vmem>>, vector<1x24x1x1xf32>
    %196 = vector.shape_cast %195 : vector<1x24x1x1xf32> to vector<24x1x1xf32>
    %197 = vector.extract_strided_slice %157 {offsets = [0, 2, 0], sizes = [24, 8, 16], strides = [1, 1, 1]} : vector<24x10x18xf32> to vector<24x8x16xf32>
    %198 = vector.broadcast %196 : vector<24x1x1xf32> to vector<24x8x16xf32>
    %199 = arith.mulf %198, %197 : vector<24x8x16xf32>
    %200 = arith.addf %194, %199 : vector<24x8x16xf32>
    %c7 = arith.constant 7 : index
    %c0_118 = arith.constant 0 : index
    %c0_119 = arith.constant 0 : index
    %c0_120 = arith.constant 0 : index
    %201 = vector.load %arg5[%c7, %c0_118, %c0_119, %c0_120] : memref<9x24x1x1xf32, #tpu.memory_space<vmem>>, vector<1x24x1x1xf32>
    %202 = vector.shape_cast %201 : vector<1x24x1x1xf32> to vector<24x1x1xf32>
    %203 = vector.extract_strided_slice %157 {offsets = [0, 2, 1], sizes = [24, 8, 16], strides = [1, 1, 1]} : vector<24x10x18xf32> to vector<24x8x16xf32>
    %204 = vector.broadcast %202 : vector<24x1x1xf32> to vector<24x8x16xf32>
    %205 = arith.mulf %204, %203 : vector<24x8x16xf32>
    %206 = arith.addf %200, %205 : vector<24x8x16xf32>
    %c8 = arith.constant 8 : index
    %c0_121 = arith.constant 0 : index
    %c0_122 = arith.constant 0 : index
    %c0_123 = arith.constant 0 : index
    %207 = vector.load %arg5[%c8, %c0_121, %c0_122, %c0_123] : memref<9x24x1x1xf32, #tpu.memory_space<vmem>>, vector<1x24x1x1xf32>
    %208 = vector.shape_cast %207 : vector<1x24x1x1xf32> to vector<24x1x1xf32>
    %209 = vector.extract_strided_slice %157 {offsets = [0, 2, 2], sizes = [24, 8, 16], strides = [1, 1, 1]} : vector<24x10x18xf32> to vector<24x8x16xf32>
    %210 = vector.broadcast %208 : vector<24x1x1xf32> to vector<24x8x16xf32>
    %211 = arith.mulf %210, %209 : vector<24x8x16xf32>
    %212 = arith.addf %206, %211 : vector<24x8x16xf32>
    %c0_124 = arith.constant 0 : index
    %c0_125 = arith.constant 0 : index
    %c0_126 = arith.constant 0 : index
    %213 = vector.load %arg6[%c0_124, %c0_125, %c0_126] : memref<24x1x1xf32, #tpu.memory_space<vmem>>, vector<24x1x1xf32>
    %214 = vector.broadcast %213 : vector<24x1x1xf32> to vector<24x8x16xf32>
    %215 = arith.addf %212, %214 : vector<24x8x16xf32>
    %cst_127 = arith.constant 0.000000e+00 : f32
    %cst_128 = arith.constant 6.000000e+00 : f32
    %216 = vector.broadcast %cst_127 : f32 to vector<24x8x16xf32>
    %217 = arith.maximumf %216, %215 : vector<24x8x16xf32>
    %218 = vector.broadcast %cst_128 : f32 to vector<24x8x16xf32>
    %219 = arith.minimumf %218, %217 : vector<24x8x16xf32>
    %c0_129 = arith.constant 0 : index
    %c0_130 = arith.constant 0 : index
    %c0_131 = arith.constant 0 : index
    %220 = vector.load %arg8[%c0_129, %c0_130, %c0_131] : memref<4x1x1xf32, #tpu.memory_space<vmem>>, vector<4x1x1xf32>
    %c0_132 = arith.constant 0 : index
    %c0_133 = arith.constant 0 : index
    %c0_134 = arith.constant 0 : index
    %c0_135 = arith.constant 0 : index
    %221 = vector.load %arg7[%c0_132, %c0_133, %c0_134, %c0_135] : memref<24x4x1x1xf32, #tpu.memory_space<vmem>>, vector<1x4x1x1xf32>
    %222 = vector.shape_cast %221 : vector<1x4x1x1xf32> to vector<4x1x1xf32>
    %223 = vector.extract_strided_slice %219 {offsets = [0, 0, 0], sizes = [1, 8, 16], strides = [1, 1, 1]} : vector<24x8x16xf32> to vector<1x8x16xf32>
    %224 = vector.shape_cast %223 : vector<1x8x16xf32> to vector<8x16xf32>
    %225 = vector.shape_cast %224 : vector<8x16xf32> to vector<1x8x16xf32>
    %226 = vector.broadcast %222 : vector<4x1x1xf32> to vector<4x8x16xf32>
    %227 = vector.broadcast %225 : vector<1x8x16xf32> to vector<4x8x16xf32>
    %228 = arith.mulf %226, %227 : vector<4x8x16xf32>
    %229 = vector.broadcast %220 : vector<4x1x1xf32> to vector<4x8x16xf32>
    %230 = arith.addf %229, %228 : vector<4x8x16xf32>
    %c1_136 = arith.constant 1 : index
    %c0_137 = arith.constant 0 : index
    %c0_138 = arith.constant 0 : index
    %c0_139 = arith.constant 0 : index
    %231 = vector.load %arg7[%c1_136, %c0_137, %c0_138, %c0_139] : memref<24x4x1x1xf32, #tpu.memory_space<vmem>>, vector<1x4x1x1xf32>
    %232 = vector.shape_cast %231 : vector<1x4x1x1xf32> to vector<4x1x1xf32>
    %233 = vector.extract_strided_slice %219 {offsets = [1, 0, 0], sizes = [1, 8, 16], strides = [1, 1, 1]} : vector<24x8x16xf32> to vector<1x8x16xf32>
    %234 = vector.shape_cast %233 : vector<1x8x16xf32> to vector<8x16xf32>
    %235 = vector.shape_cast %234 : vector<8x16xf32> to vector<1x8x16xf32>
    %236 = vector.broadcast %232 : vector<4x1x1xf32> to vector<4x8x16xf32>
    %237 = vector.broadcast %235 : vector<1x8x16xf32> to vector<4x8x16xf32>
    %238 = arith.mulf %236, %237 : vector<4x8x16xf32>
    %239 = arith.addf %230, %238 : vector<4x8x16xf32>
    %c2_140 = arith.constant 2 : index
    %c0_141 = arith.constant 0 : index
    %c0_142 = arith.constant 0 : index
    %c0_143 = arith.constant 0 : index
    %240 = vector.load %arg7[%c2_140, %c0_141, %c0_142, %c0_143] : memref<24x4x1x1xf32, #tpu.memory_space<vmem>>, vector<1x4x1x1xf32>
    %241 = vector.shape_cast %240 : vector<1x4x1x1xf32> to vector<4x1x1xf32>
    %242 = vector.extract_strided_slice %219 {offsets = [2, 0, 0], sizes = [1, 8, 16], strides = [1, 1, 1]} : vector<24x8x16xf32> to vector<1x8x16xf32>
    %243 = vector.shape_cast %242 : vector<1x8x16xf32> to vector<8x16xf32>
    %244 = vector.shape_cast %243 : vector<8x16xf32> to vector<1x8x16xf32>
    %245 = vector.broadcast %241 : vector<4x1x1xf32> to vector<4x8x16xf32>
    %246 = vector.broadcast %244 : vector<1x8x16xf32> to vector<4x8x16xf32>
    %247 = arith.mulf %245, %246 : vector<4x8x16xf32>
    %248 = arith.addf %239, %247 : vector<4x8x16xf32>
    %c3_144 = arith.constant 3 : index
    %c0_145 = arith.constant 0 : index
    %c0_146 = arith.constant 0 : index
    %c0_147 = arith.constant 0 : index
    %249 = vector.load %arg7[%c3_144, %c0_145, %c0_146, %c0_147] : memref<24x4x1x1xf32, #tpu.memory_space<vmem>>, vector<1x4x1x1xf32>
    %250 = vector.shape_cast %249 : vector<1x4x1x1xf32> to vector<4x1x1xf32>
    %251 = vector.extract_strided_slice %219 {offsets = [3, 0, 0], sizes = [1, 8, 16], strides = [1, 1, 1]} : vector<24x8x16xf32> to vector<1x8x16xf32>
    %252 = vector.shape_cast %251 : vector<1x8x16xf32> to vector<8x16xf32>
    %253 = vector.shape_cast %252 : vector<8x16xf32> to vector<1x8x16xf32>
    %254 = vector.broadcast %250 : vector<4x1x1xf32> to vector<4x8x16xf32>
    %255 = vector.broadcast %253 : vector<1x8x16xf32> to vector<4x8x16xf32>
    %256 = arith.mulf %254, %255 : vector<4x8x16xf32>
    %257 = arith.addf %248, %256 : vector<4x8x16xf32>
    %c4_148 = arith.constant 4 : index
    %c0_149 = arith.constant 0 : index
    %c0_150 = arith.constant 0 : index
    %c0_151 = arith.constant 0 : index
    %258 = vector.load %arg7[%c4_148, %c0_149, %c0_150, %c0_151] : memref<24x4x1x1xf32, #tpu.memory_space<vmem>>, vector<1x4x1x1xf32>
    %259 = vector.shape_cast %258 : vector<1x4x1x1xf32> to vector<4x1x1xf32>
    %260 = vector.extract_strided_slice %219 {offsets = [4, 0, 0], sizes = [1, 8, 16], strides = [1, 1, 1]} : vector<24x8x16xf32> to vector<1x8x16xf32>
    %261 = vector.shape_cast %260 : vector<1x8x16xf32> to vector<8x16xf32>
    %262 = vector.shape_cast %261 : vector<8x16xf32> to vector<1x8x16xf32>
    %263 = vector.broadcast %259 : vector<4x1x1xf32> to vector<4x8x16xf32>
    %264 = vector.broadcast %262 : vector<1x8x16xf32> to vector<4x8x16xf32>
    %265 = arith.mulf %263, %264 : vector<4x8x16xf32>
    %266 = arith.addf %257, %265 : vector<4x8x16xf32>
    %c5_152 = arith.constant 5 : index
    %c0_153 = arith.constant 0 : index
    %c0_154 = arith.constant 0 : index
    %c0_155 = arith.constant 0 : index
    %267 = vector.load %arg7[%c5_152, %c0_153, %c0_154, %c0_155] : memref<24x4x1x1xf32, #tpu.memory_space<vmem>>, vector<1x4x1x1xf32>
    %268 = vector.shape_cast %267 : vector<1x4x1x1xf32> to vector<4x1x1xf32>
    %269 = vector.extract_strided_slice %219 {offsets = [5, 0, 0], sizes = [1, 8, 16], strides = [1, 1, 1]} : vector<24x8x16xf32> to vector<1x8x16xf32>
    %270 = vector.shape_cast %269 : vector<1x8x16xf32> to vector<8x16xf32>
    %271 = vector.shape_cast %270 : vector<8x16xf32> to vector<1x8x16xf32>
    %272 = vector.broadcast %268 : vector<4x1x1xf32> to vector<4x8x16xf32>
    %273 = vector.broadcast %271 : vector<1x8x16xf32> to vector<4x8x16xf32>
    %274 = arith.mulf %272, %273 : vector<4x8x16xf32>
    %275 = arith.addf %266, %274 : vector<4x8x16xf32>
    %c6_156 = arith.constant 6 : index
    %c0_157 = arith.constant 0 : index
    %c0_158 = arith.constant 0 : index
    %c0_159 = arith.constant 0 : index
    %276 = vector.load %arg7[%c6_156, %c0_157, %c0_158, %c0_159] : memref<24x4x1x1xf32, #tpu.memory_space<vmem>>, vector<1x4x1x1xf32>
    %277 = vector.shape_cast %276 : vector<1x4x1x1xf32> to vector<4x1x1xf32>
    %278 = vector.extract_strided_slice %219 {offsets = [6, 0, 0], sizes = [1, 8, 16], strides = [1, 1, 1]} : vector<24x8x16xf32> to vector<1x8x16xf32>
    %279 = vector.shape_cast %278 : vector<1x8x16xf32> to vector<8x16xf32>
    %280 = vector.shape_cast %279 : vector<8x16xf32> to vector<1x8x16xf32>
    %281 = vector.broadcast %277 : vector<4x1x1xf32> to vector<4x8x16xf32>
    %282 = vector.broadcast %280 : vector<1x8x16xf32> to vector<4x8x16xf32>
    %283 = arith.mulf %281, %282 : vector<4x8x16xf32>
    %284 = arith.addf %275, %283 : vector<4x8x16xf32>
    %c7_160 = arith.constant 7 : index
    %c0_161 = arith.constant 0 : index
    %c0_162 = arith.constant 0 : index
    %c0_163 = arith.constant 0 : index
    %285 = vector.load %arg7[%c7_160, %c0_161, %c0_162, %c0_163] : memref<24x4x1x1xf32, #tpu.memory_space<vmem>>, vector<1x4x1x1xf32>
    %286 = vector.shape_cast %285 : vector<1x4x1x1xf32> to vector<4x1x1xf32>
    %287 = vector.extract_strided_slice %219 {offsets = [7, 0, 0], sizes = [1, 8, 16], strides = [1, 1, 1]} : vector<24x8x16xf32> to vector<1x8x16xf32>
    %288 = vector.shape_cast %287 : vector<1x8x16xf32> to vector<8x16xf32>
    %289 = vector.shape_cast %288 : vector<8x16xf32> to vector<1x8x16xf32>
    %290 = vector.broadcast %286 : vector<4x1x1xf32> to vector<4x8x16xf32>
    %291 = vector.broadcast %289 : vector<1x8x16xf32> to vector<4x8x16xf32>
    %292 = arith.mulf %290, %291 : vector<4x8x16xf32>
    %293 = arith.addf %284, %292 : vector<4x8x16xf32>
    %c8_164 = arith.constant 8 : index
    %c0_165 = arith.constant 0 : index
    %c0_166 = arith.constant 0 : index
    %c0_167 = arith.constant 0 : index
    %294 = vector.load %arg7[%c8_164, %c0_165, %c0_166, %c0_167] : memref<24x4x1x1xf32, #tpu.memory_space<vmem>>, vector<1x4x1x1xf32>
    %295 = vector.shape_cast %294 : vector<1x4x1x1xf32> to vector<4x1x1xf32>
    %296 = vector.extract_strided_slice %219 {offsets = [8, 0, 0], sizes = [1, 8, 16], strides = [1, 1, 1]} : vector<24x8x16xf32> to vector<1x8x16xf32>
    %297 = vector.shape_cast %296 : vector<1x8x16xf32> to vector<8x16xf32>
    %298 = vector.shape_cast %297 : vector<8x16xf32> to vector<1x8x16xf32>
    %299 = vector.broadcast %295 : vector<4x1x1xf32> to vector<4x8x16xf32>
    %300 = vector.broadcast %298 : vector<1x8x16xf32> to vector<4x8x16xf32>
    %301 = arith.mulf %299, %300 : vector<4x8x16xf32>
    %302 = arith.addf %293, %301 : vector<4x8x16xf32>
    %c9_168 = arith.constant 9 : index
    %c0_169 = arith.constant 0 : index
    %c0_170 = arith.constant 0 : index
    %c0_171 = arith.constant 0 : index
    %303 = vector.load %arg7[%c9_168, %c0_169, %c0_170, %c0_171] : memref<24x4x1x1xf32, #tpu.memory_space<vmem>>, vector<1x4x1x1xf32>
    %304 = vector.shape_cast %303 : vector<1x4x1x1xf32> to vector<4x1x1xf32>
    %305 = vector.extract_strided_slice %219 {offsets = [9, 0, 0], sizes = [1, 8, 16], strides = [1, 1, 1]} : vector<24x8x16xf32> to vector<1x8x16xf32>
    %306 = vector.shape_cast %305 : vector<1x8x16xf32> to vector<8x16xf32>
    %307 = vector.shape_cast %306 : vector<8x16xf32> to vector<1x8x16xf32>
    %308 = vector.broadcast %304 : vector<4x1x1xf32> to vector<4x8x16xf32>
    %309 = vector.broadcast %307 : vector<1x8x16xf32> to vector<4x8x16xf32>
    %310 = arith.mulf %308, %309 : vector<4x8x16xf32>
    %311 = arith.addf %302, %310 : vector<4x8x16xf32>
    %c10 = arith.constant 10 : index
    %c0_172 = arith.constant 0 : index
    %c0_173 = arith.constant 0 : index
    %c0_174 = arith.constant 0 : index
    %312 = vector.load %arg7[%c10, %c0_172, %c0_173, %c0_174] : memref<24x4x1x1xf32, #tpu.memory_space<vmem>>, vector<1x4x1x1xf32>
    %313 = vector.shape_cast %312 : vector<1x4x1x1xf32> to vector<4x1x1xf32>
    %314 = vector.extract_strided_slice %219 {offsets = [10, 0, 0], sizes = [1, 8, 16], strides = [1, 1, 1]} : vector<24x8x16xf32> to vector<1x8x16xf32>
    %315 = vector.shape_cast %314 : vector<1x8x16xf32> to vector<8x16xf32>
    %316 = vector.shape_cast %315 : vector<8x16xf32> to vector<1x8x16xf32>
    %317 = vector.broadcast %313 : vector<4x1x1xf32> to vector<4x8x16xf32>
    %318 = vector.broadcast %316 : vector<1x8x16xf32> to vector<4x8x16xf32>
    %319 = arith.mulf %317, %318 : vector<4x8x16xf32>
    %320 = arith.addf %311, %319 : vector<4x8x16xf32>
    %c11 = arith.constant 11 : index
    %c0_175 = arith.constant 0 : index
    %c0_176 = arith.constant 0 : index
    %c0_177 = arith.constant 0 : index
    %321 = vector.load %arg7[%c11, %c0_175, %c0_176, %c0_177] : memref<24x4x1x1xf32, #tpu.memory_space<vmem>>, vector<1x4x1x1xf32>
    %322 = vector.shape_cast %321 : vector<1x4x1x1xf32> to vector<4x1x1xf32>
    %323 = vector.extract_strided_slice %219 {offsets = [11, 0, 0], sizes = [1, 8, 16], strides = [1, 1, 1]} : vector<24x8x16xf32> to vector<1x8x16xf32>
    %324 = vector.shape_cast %323 : vector<1x8x16xf32> to vector<8x16xf32>
    %325 = vector.shape_cast %324 : vector<8x16xf32> to vector<1x8x16xf32>
    %326 = vector.broadcast %322 : vector<4x1x1xf32> to vector<4x8x16xf32>
    %327 = vector.broadcast %325 : vector<1x8x16xf32> to vector<4x8x16xf32>
    %328 = arith.mulf %326, %327 : vector<4x8x16xf32>
    %329 = arith.addf %320, %328 : vector<4x8x16xf32>
    %c12 = arith.constant 12 : index
    %c0_178 = arith.constant 0 : index
    %c0_179 = arith.constant 0 : index
    %c0_180 = arith.constant 0 : index
    %330 = vector.load %arg7[%c12, %c0_178, %c0_179, %c0_180] : memref<24x4x1x1xf32, #tpu.memory_space<vmem>>, vector<1x4x1x1xf32>
    %331 = vector.shape_cast %330 : vector<1x4x1x1xf32> to vector<4x1x1xf32>
    %332 = vector.extract_strided_slice %219 {offsets = [12, 0, 0], sizes = [1, 8, 16], strides = [1, 1, 1]} : vector<24x8x16xf32> to vector<1x8x16xf32>
    %333 = vector.shape_cast %332 : vector<1x8x16xf32> to vector<8x16xf32>
    %334 = vector.shape_cast %333 : vector<8x16xf32> to vector<1x8x16xf32>
    %335 = vector.broadcast %331 : vector<4x1x1xf32> to vector<4x8x16xf32>
    %336 = vector.broadcast %334 : vector<1x8x16xf32> to vector<4x8x16xf32>
    %337 = arith.mulf %335, %336 : vector<4x8x16xf32>
    %338 = arith.addf %329, %337 : vector<4x8x16xf32>
    %c13 = arith.constant 13 : index
    %c0_181 = arith.constant 0 : index
    %c0_182 = arith.constant 0 : index
    %c0_183 = arith.constant 0 : index
    %339 = vector.load %arg7[%c13, %c0_181, %c0_182, %c0_183] : memref<24x4x1x1xf32, #tpu.memory_space<vmem>>, vector<1x4x1x1xf32>
    %340 = vector.shape_cast %339 : vector<1x4x1x1xf32> to vector<4x1x1xf32>
    %341 = vector.extract_strided_slice %219 {offsets = [13, 0, 0], sizes = [1, 8, 16], strides = [1, 1, 1]} : vector<24x8x16xf32> to vector<1x8x16xf32>
    %342 = vector.shape_cast %341 : vector<1x8x16xf32> to vector<8x16xf32>
    %343 = vector.shape_cast %342 : vector<8x16xf32> to vector<1x8x16xf32>
    %344 = vector.broadcast %340 : vector<4x1x1xf32> to vector<4x8x16xf32>
    %345 = vector.broadcast %343 : vector<1x8x16xf32> to vector<4x8x16xf32>
    %346 = arith.mulf %344, %345 : vector<4x8x16xf32>
    %347 = arith.addf %338, %346 : vector<4x8x16xf32>
    %c14 = arith.constant 14 : index
    %c0_184 = arith.constant 0 : index
    %c0_185 = arith.constant 0 : index
    %c0_186 = arith.constant 0 : index
    %348 = vector.load %arg7[%c14, %c0_184, %c0_185, %c0_186] : memref<24x4x1x1xf32, #tpu.memory_space<vmem>>, vector<1x4x1x1xf32>
    %349 = vector.shape_cast %348 : vector<1x4x1x1xf32> to vector<4x1x1xf32>
    %350 = vector.extract_strided_slice %219 {offsets = [14, 0, 0], sizes = [1, 8, 16], strides = [1, 1, 1]} : vector<24x8x16xf32> to vector<1x8x16xf32>
    %351 = vector.shape_cast %350 : vector<1x8x16xf32> to vector<8x16xf32>
    %352 = vector.shape_cast %351 : vector<8x16xf32> to vector<1x8x16xf32>
    %353 = vector.broadcast %349 : vector<4x1x1xf32> to vector<4x8x16xf32>
    %354 = vector.broadcast %352 : vector<1x8x16xf32> to vector<4x8x16xf32>
    %355 = arith.mulf %353, %354 : vector<4x8x16xf32>
    %356 = arith.addf %347, %355 : vector<4x8x16xf32>
    %c15 = arith.constant 15 : index
    %c0_187 = arith.constant 0 : index
    %c0_188 = arith.constant 0 : index
    %c0_189 = arith.constant 0 : index
    %357 = vector.load %arg7[%c15, %c0_187, %c0_188, %c0_189] : memref<24x4x1x1xf32, #tpu.memory_space<vmem>>, vector<1x4x1x1xf32>
    %358 = vector.shape_cast %357 : vector<1x4x1x1xf32> to vector<4x1x1xf32>
    %359 = vector.extract_strided_slice %219 {offsets = [15, 0, 0], sizes = [1, 8, 16], strides = [1, 1, 1]} : vector<24x8x16xf32> to vector<1x8x16xf32>
    %360 = vector.shape_cast %359 : vector<1x8x16xf32> to vector<8x16xf32>
    %361 = vector.shape_cast %360 : vector<8x16xf32> to vector<1x8x16xf32>
    %362 = vector.broadcast %358 : vector<4x1x1xf32> to vector<4x8x16xf32>
    %363 = vector.broadcast %361 : vector<1x8x16xf32> to vector<4x8x16xf32>
    %364 = arith.mulf %362, %363 : vector<4x8x16xf32>
    %365 = arith.addf %356, %364 : vector<4x8x16xf32>
    %c16 = arith.constant 16 : index
    %c0_190 = arith.constant 0 : index
    %c0_191 = arith.constant 0 : index
    %c0_192 = arith.constant 0 : index
    %366 = vector.load %arg7[%c16, %c0_190, %c0_191, %c0_192] : memref<24x4x1x1xf32, #tpu.memory_space<vmem>>, vector<1x4x1x1xf32>
    %367 = vector.shape_cast %366 : vector<1x4x1x1xf32> to vector<4x1x1xf32>
    %368 = vector.extract_strided_slice %219 {offsets = [16, 0, 0], sizes = [1, 8, 16], strides = [1, 1, 1]} : vector<24x8x16xf32> to vector<1x8x16xf32>
    %369 = vector.shape_cast %368 : vector<1x8x16xf32> to vector<8x16xf32>
    %370 = vector.shape_cast %369 : vector<8x16xf32> to vector<1x8x16xf32>
    %371 = vector.broadcast %367 : vector<4x1x1xf32> to vector<4x8x16xf32>
    %372 = vector.broadcast %370 : vector<1x8x16xf32> to vector<4x8x16xf32>
    %373 = arith.mulf %371, %372 : vector<4x8x16xf32>
    %374 = arith.addf %365, %373 : vector<4x8x16xf32>
    %c17_193 = arith.constant 17 : index
    %c0_194 = arith.constant 0 : index
    %c0_195 = arith.constant 0 : index
    %c0_196 = arith.constant 0 : index
    %375 = vector.load %arg7[%c17_193, %c0_194, %c0_195, %c0_196] : memref<24x4x1x1xf32, #tpu.memory_space<vmem>>, vector<1x4x1x1xf32>
    %376 = vector.shape_cast %375 : vector<1x4x1x1xf32> to vector<4x1x1xf32>
    %377 = vector.extract_strided_slice %219 {offsets = [17, 0, 0], sizes = [1, 8, 16], strides = [1, 1, 1]} : vector<24x8x16xf32> to vector<1x8x16xf32>
    %378 = vector.shape_cast %377 : vector<1x8x16xf32> to vector<8x16xf32>
    %379 = vector.shape_cast %378 : vector<8x16xf32> to vector<1x8x16xf32>
    %380 = vector.broadcast %376 : vector<4x1x1xf32> to vector<4x8x16xf32>
    %381 = vector.broadcast %379 : vector<1x8x16xf32> to vector<4x8x16xf32>
    %382 = arith.mulf %380, %381 : vector<4x8x16xf32>
    %383 = arith.addf %374, %382 : vector<4x8x16xf32>
    %c18 = arith.constant 18 : index
    %c0_197 = arith.constant 0 : index
    %c0_198 = arith.constant 0 : index
    %c0_199 = arith.constant 0 : index
    %384 = vector.load %arg7[%c18, %c0_197, %c0_198, %c0_199] : memref<24x4x1x1xf32, #tpu.memory_space<vmem>>, vector<1x4x1x1xf32>
    %385 = vector.shape_cast %384 : vector<1x4x1x1xf32> to vector<4x1x1xf32>
    %386 = vector.extract_strided_slice %219 {offsets = [18, 0, 0], sizes = [1, 8, 16], strides = [1, 1, 1]} : vector<24x8x16xf32> to vector<1x8x16xf32>
    %387 = vector.shape_cast %386 : vector<1x8x16xf32> to vector<8x16xf32>
    %388 = vector.shape_cast %387 : vector<8x16xf32> to vector<1x8x16xf32>
    %389 = vector.broadcast %385 : vector<4x1x1xf32> to vector<4x8x16xf32>
    %390 = vector.broadcast %388 : vector<1x8x16xf32> to vector<4x8x16xf32>
    %391 = arith.mulf %389, %390 : vector<4x8x16xf32>
    %392 = arith.addf %383, %391 : vector<4x8x16xf32>
    %c19 = arith.constant 19 : index
    %c0_200 = arith.constant 0 : index
    %c0_201 = arith.constant 0 : index
    %c0_202 = arith.constant 0 : index
    %393 = vector.load %arg7[%c19, %c0_200, %c0_201, %c0_202] : memref<24x4x1x1xf32, #tpu.memory_space<vmem>>, vector<1x4x1x1xf32>
    %394 = vector.shape_cast %393 : vector<1x4x1x1xf32> to vector<4x1x1xf32>
    %395 = vector.extract_strided_slice %219 {offsets = [19, 0, 0], sizes = [1, 8, 16], strides = [1, 1, 1]} : vector<24x8x16xf32> to vector<1x8x16xf32>
    %396 = vector.shape_cast %395 : vector<1x8x16xf32> to vector<8x16xf32>
    %397 = vector.shape_cast %396 : vector<8x16xf32> to vector<1x8x16xf32>
    %398 = vector.broadcast %394 : vector<4x1x1xf32> to vector<4x8x16xf32>
    %399 = vector.broadcast %397 : vector<1x8x16xf32> to vector<4x8x16xf32>
    %400 = arith.mulf %398, %399 : vector<4x8x16xf32>
    %401 = arith.addf %392, %400 : vector<4x8x16xf32>
    %c20 = arith.constant 20 : index
    %c0_203 = arith.constant 0 : index
    %c0_204 = arith.constant 0 : index
    %c0_205 = arith.constant 0 : index
    %402 = vector.load %arg7[%c20, %c0_203, %c0_204, %c0_205] : memref<24x4x1x1xf32, #tpu.memory_space<vmem>>, vector<1x4x1x1xf32>
    %403 = vector.shape_cast %402 : vector<1x4x1x1xf32> to vector<4x1x1xf32>
    %404 = vector.extract_strided_slice %219 {offsets = [20, 0, 0], sizes = [1, 8, 16], strides = [1, 1, 1]} : vector<24x8x16xf32> to vector<1x8x16xf32>
    %405 = vector.shape_cast %404 : vector<1x8x16xf32> to vector<8x16xf32>
    %406 = vector.shape_cast %405 : vector<8x16xf32> to vector<1x8x16xf32>
    %407 = vector.broadcast %403 : vector<4x1x1xf32> to vector<4x8x16xf32>
    %408 = vector.broadcast %406 : vector<1x8x16xf32> to vector<4x8x16xf32>
    %409 = arith.mulf %407, %408 : vector<4x8x16xf32>
    %410 = arith.addf %401, %409 : vector<4x8x16xf32>
    %c21 = arith.constant 21 : index
    %c0_206 = arith.constant 0 : index
    %c0_207 = arith.constant 0 : index
    %c0_208 = arith.constant 0 : index
    %411 = vector.load %arg7[%c21, %c0_206, %c0_207, %c0_208] : memref<24x4x1x1xf32, #tpu.memory_space<vmem>>, vector<1x4x1x1xf32>
    %412 = vector.shape_cast %411 : vector<1x4x1x1xf32> to vector<4x1x1xf32>
    %413 = vector.extract_strided_slice %219 {offsets = [21, 0, 0], sizes = [1, 8, 16], strides = [1, 1, 1]} : vector<24x8x16xf32> to vector<1x8x16xf32>
    %414 = vector.shape_cast %413 : vector<1x8x16xf32> to vector<8x16xf32>
    %415 = vector.shape_cast %414 : vector<8x16xf32> to vector<1x8x16xf32>
    %416 = vector.broadcast %412 : vector<4x1x1xf32> to vector<4x8x16xf32>
    %417 = vector.broadcast %415 : vector<1x8x16xf32> to vector<4x8x16xf32>
    %418 = arith.mulf %416, %417 : vector<4x8x16xf32>
    %419 = arith.addf %410, %418 : vector<4x8x16xf32>
    %c22 = arith.constant 22 : index
    %c0_209 = arith.constant 0 : index
    %c0_210 = arith.constant 0 : index
    %c0_211 = arith.constant 0 : index
    %420 = vector.load %arg7[%c22, %c0_209, %c0_210, %c0_211] : memref<24x4x1x1xf32, #tpu.memory_space<vmem>>, vector<1x4x1x1xf32>
    %421 = vector.shape_cast %420 : vector<1x4x1x1xf32> to vector<4x1x1xf32>
    %422 = vector.extract_strided_slice %219 {offsets = [22, 0, 0], sizes = [1, 8, 16], strides = [1, 1, 1]} : vector<24x8x16xf32> to vector<1x8x16xf32>
    %423 = vector.shape_cast %422 : vector<1x8x16xf32> to vector<8x16xf32>
    %424 = vector.shape_cast %423 : vector<8x16xf32> to vector<1x8x16xf32>
    %425 = vector.broadcast %421 : vector<4x1x1xf32> to vector<4x8x16xf32>
    %426 = vector.broadcast %424 : vector<1x8x16xf32> to vector<4x8x16xf32>
    %427 = arith.mulf %425, %426 : vector<4x8x16xf32>
    %428 = arith.addf %419, %427 : vector<4x8x16xf32>
    %c23 = arith.constant 23 : index
    %c0_212 = arith.constant 0 : index
    %c0_213 = arith.constant 0 : index
    %c0_214 = arith.constant 0 : index
    %429 = vector.load %arg7[%c23, %c0_212, %c0_213, %c0_214] : memref<24x4x1x1xf32, #tpu.memory_space<vmem>>, vector<1x4x1x1xf32>
    %430 = vector.shape_cast %429 : vector<1x4x1x1xf32> to vector<4x1x1xf32>
    %431 = vector.extract_strided_slice %219 {offsets = [23, 0, 0], sizes = [1, 8, 16], strides = [1, 1, 1]} : vector<24x8x16xf32> to vector<1x8x16xf32>
    %432 = vector.shape_cast %431 : vector<1x8x16xf32> to vector<8x16xf32>
    %433 = vector.shape_cast %432 : vector<8x16xf32> to vector<1x8x16xf32>
    %434 = vector.broadcast %430 : vector<4x1x1xf32> to vector<4x8x16xf32>
    %435 = vector.broadcast %433 : vector<1x8x16xf32> to vector<4x8x16xf32>
    %436 = arith.mulf %434, %435 : vector<4x8x16xf32>
    %437 = arith.addf %428, %436 : vector<4x8x16xf32>
    %438 = arith.addf %437, %8 : vector<4x8x16xf32>
    %439 = vector.shape_cast %438 : vector<4x8x16xf32> to vector<1x4x8x16xf32>
    %c0_215 = arith.constant 0 : index
    %c0_216 = arith.constant 0 : index
    %c0_217 = arith.constant 0 : index
    %c0_218 = arith.constant 0 : index
    %440 = vector.load %arg9[%c0_215, %c0_216, %c0_217, %c0_218] : memref<1x4x8x16xf32, #tpu.memory_space<vmem>>, vector<1x4x8x16xf32>
    tpu.vector_store %arg9[%c0_215, %c0_216, %c0_217, %c0_218], %439 {strides = array<i32>} : memref<1x4x8x16xf32, #tpu.memory_space<vmem>>, vector<1x4x8x16xf32>,
    return
  }
  func.func @transform_0(%arg0: i32, %arg1: i32) -> (i32, i32, i32, i32) {
    %c0_i32 = arith.constant 0 : i32
    %c0_i32_0 = arith.constant 0 : i32
    %c0_i32_1 = arith.constant 0 : i32
    %c0_i32_2 = arith.constant 0 : i32
    return %arg0, %c0_i32, %c0_i32_0, %c0_i32_1 : i32, i32, i32, i32
  }
  func.func @transform_1(%arg0: i32, %arg1: i32) -> (i32, i32, i32, i32) {
    %c0_i32 = arith.constant 0 : i32
    %c0_i32_0 = arith.constant 0 : i32
    %c0_i32_1 = arith.constant 0 : i32
    %c0_i32_2 = arith.constant 0 : i32
    %c0_i32_3 = arith.constant 0 : i32
    return %c0_i32, %c0_i32_0, %c0_i32_1, %c0_i32_2 : i32, i32, i32, i32
  }
  func.func @transform_2(%arg0: i32, %arg1: i32) -> (i32, i32, i32) {
    %c0_i32 = arith.constant 0 : i32
    %c0_i32_0 = arith.constant 0 : i32
    %c0_i32_1 = arith.constant 0 : i32
    %c0_i32_2 = arith.constant 0 : i32
    return %c0_i32, %c0_i32_0, %c0_i32_1 : i32, i32, i32
  }
  func.func @transform_3(%arg0: i32, %arg1: i32) -> (i32, i32, i32, i32) {
    %c0_i32 = arith.constant 0 : i32
    %c0_i32_0 = arith.constant 0 : i32
    %c0_i32_1 = arith.constant 0 : i32
    %c0_i32_2 = arith.constant 0 : i32
    %c0_i32_3 = arith.constant 0 : i32
    return %c0_i32, %c0_i32_0, %c0_i32_1, %c0_i32_2 : i32, i32, i32, i32
  }
  func.func @transform_4(%arg0: i32, %arg1: i32) -> (i32, i32, i32) {
    %c0_i32 = arith.constant 0 : i32
    %c0_i32_0 = arith.constant 0 : i32
    %c0_i32_1 = arith.constant 0 : i32
    %c0_i32_2 = arith.constant 0 : i32
    return %c0_i32, %c0_i32_0, %c0_i32_1 : i32, i32, i32
  }
  func.func @transform_5(%arg0: i32, %arg1: i32) -> (i32, i32, i32, i32) {
    %c0_i32 = arith.constant 0 : i32
    %c0_i32_0 = arith.constant 0 : i32
    %c0_i32_1 = arith.constant 0 : i32
    %c0_i32_2 = arith.constant 0 : i32
    %c0_i32_3 = arith.constant 0 : i32
    return %c0_i32, %c0_i32_0, %c0_i32_1, %c0_i32_2 : i32, i32, i32, i32
  }
  func.func @transform_6(%arg0: i32, %arg1: i32) -> (i32, i32, i32) {
    %c0_i32 = arith.constant 0 : i32
    %c0_i32_0 = arith.constant 0 : i32
    %c0_i32_1 = arith.constant 0 : i32
    %c0_i32_2 = arith.constant 0 : i32
    return %c0_i32, %c0_i32_0, %c0_i32_1 : i32, i32, i32
  }
  func.func @transform_7(%arg0: i32, %arg1: i32) -> (i32, i32, i32, i32) {
    %c0_i32 = arith.constant 0 : i32
    %c0_i32_0 = arith.constant 0 : i32
    %c0_i32_1 = arith.constant 0 : i32
    return %arg0, %c0_i32, %arg1, %c0_i32_0 : i32, i32, i32, i32
  }
}

</mosaic_0001>

<llo_original>
// kernel: tpu_custom_call.1
$region0: #{tpu_custom_call.1}
  #allocation0 [shape = 'u32[]', space=smem, size = 0x4, offset = 0x4, fixed_abs, tag = 'smem constant byte address 0x4 - core index']
  #allocation1 [shape = 'u32[144,128]{1,0:T(1,128)}', space=vmem, size = 0x12000, scoped, tag = 'internal scratch']
  #allocation2 [shape = 'f32[4,16,16]{2,1,0:T(8,128)}', space=vmem, size = 0x8000, scoped, tag = 'scratch operand']
  #allocation3 [shape = 'f32[24,10,18]{2,1,0:T(8,128)}', space=vmem, size = 0x30000, scoped, tag = 'scratch operand']
  %s0 = inlined_call_operand.vmem [shape: f32[2,4,16,16], index: 0, kind: input, shape index: {}]
  %s1 = inlined_call_operand.vmem [shape: f32[4,24,1,1], index: 1, kind: input, shape index: {}]
  %s2 = inlined_call_operand.vmem [shape: f32[24,1,1], index: 2, kind: input, shape index: {}]
  %s3 = inlined_call_operand.vmem [shape: f32[9,24,1,1], index: 3, kind: input, shape index: {}]
  %s4 = inlined_call_operand.vmem [shape: f32[24,1,1], index: 4, kind: input, shape index: {}]
  %s5 = inlined_call_operand.vmem [shape: f32[24,4,1,1], index: 5, kind: input, shape index: {}]
  %s6 = inlined_call_operand.vmem [shape: f32[4,1,1], index: 6, kind: input, shape index: {}]
  %s7 = inlined_call_operand.hbm [shape: f32[2,4,16,16], index: 7, kind: output, shape index: {}]
  %s8 = sld [smem:[#allocation0]]
  $region61: #{tpu_custom_call.1} parent=0
    _
  %s10 = ssub.s32 1, %s8
  %s11 = scalar_select 0, %s10, %s8
  $region1: #{tpu_custom_call.1} parent=0
    #allocation4 [shape = 'u8[32768]{0}', space=vmem, size = 0x8000, scoped, tag = 'output window, operand 0']
    #allocation5 [shape = 's32[2]{0}', space=sflag, size = 0x8, scoped, tag = 'scoped memory for tpu_custom_call.1']
    %12 = vsyncpa [#allocation5], 0
    %s13 = scalar_lea.sflag [#allocation5], 1
    %14 = vsyncpa %s13, 0
    loop: start=0, step=1, limit=6
    $region2: #{tpu_custom_call.1} parent=1 // loop_pre_header
      _
    $region3: #{tpu_custom_call.1} parent=1 // loop_header
      %s16 = sphi 0, %s20
      %p17 = scmp.ge.s32.totalorder %s16, 6
      %s23 = sphi 0, %s35
      %s24 = sphi 0, %s31
      %s25 = sphi 0, %s23
      %s26 = sphi 0, %s24
      %s27 = sphi 0, %s25
      %s28 = sphi 0, %s26
      %s38 = sphi 0, %s40
      %s41 = sphi 0, %s38
      %s42 = sphi 0, %s41
      %s58 = sphi 0, %s42
      %s62 = sphi 0, %s62
      %s64 = sphi 0, %s62
      %s65 = sphi 0, %s64
      %s79 = sphi 0, %s65
      %s83 = sphi 0, %s83
      %s85 = sphi 0, %s83
      %s86 = sphi 0, %s85
      %s100 = sphi 0, %s86
      %s104 = sphi 0, %s104
      %s106 = sphi 0, %s104
      %s107 = sphi 0, %s106
      %s121 = sphi 0, %s107
      %s125 = sphi 0, %s125
      %s127 = sphi 0, %s125
      %s128 = sphi 0, %s127
      %s142 = sphi 0, %s128
      %s146 = sphi 0, %s146
      %s148 = sphi 0, %s146
      %s149 = sphi 0, %s148
      %s163 = sphi 0, %s149
      %s167 = sphi 0, %s167
      %s169 = sphi 0, %s167
      %s170 = sphi 0, %s169
      %s184 = sphi 0, %s170
      %s192 = sphi 0, %s194
      %s195 = sphi 0, %s192
      %s196 = sphi 0, %s195
      %s212 = sphi 0, %s196
    $region4: #{tpu_custom_call.1} parent=1 // loop_header_branch
      %19 = sbr.rel (%p17) target = $region8
    $region5: #{tpu_custom_call.1} parent=1 // loop_body
      %s21 = ssub.s32 %s16, 1
      %s22 = ssub.s32 %s16, 2
      %s29 = sadd.s32 1, %s24
      %p30 = scmp.ge.s32.totalorder %s29, 2
      %s31 = scalar_select %p30, 0, %s29
      %s32 = sadd.s32 1, %s23
      %s33 = scalar_select %p30, %s32, %s23
      %p34 = scmp.ge.s32.totalorder %s33, 2
      %s35 = scalar_select %p34, 0, %s33
      %s36 = ssub.s32 %s23, %s35
      %p37 = scmp.eq.s32.totalorder %s36, 0
      %s39 = sadd.s32 %s38, 1
      %s40 = scalar_select %p37, %s38, %s39
      %p43 = pneg %p37
      %p44 = scmp.eq.s32.totalorder %s16, 3
      %p45 = por %p43, %p44
      %p46 = scmp.ne.s32.totalorder %s38, %s41
      %p47 = scmp.eq.s32.totalorder %s16, 0
      %p48 = por %p46, %p47
      %p49 = scmp.ne.s32.totalorder %s38, %s41
      %p50 = scmp.eq.s32.totalorder %s21, 3
      %p51 = por %p49, %p50
      %p52 = scmp.ne.s32.totalorder %s41, %s42
      %p53 = scmp.eq.s32.totalorder %s21, 0
      %p54 = por %p52, %p53
      %p55 = scmp.ne.s32.totalorder %s41, %s42
      %p56 = scmp.eq.s32.totalorder %s22, 3
      %p57 = por %p55, %p56
      %p59 = scmp.ne.s32.totalorder %s42, %s58
      %p60 = scmp.eq.s32.totalorder %s22, 0
      %p61 = por %p59, %p60
      %s63 = sadd.s32 %s62, 1
      %p66 = scmp.eq.s32.totalorder %s16, 3
      %p67 = scmp.ne.s32.totalorder %s62, %s64
      %p68 = scmp.eq.s32.totalorder %s16, 0
      %p69 = por %p67, %p68
      %p70 = scmp.ne.s32.totalorder %s62, %s64
      %p71 = scmp.eq.s32.totalorder %s21, 3
      %p72 = por %p70, %p71
      %p73 = scmp.ne.s32.totalorder %s64, %s65
      %p74 = scmp.eq.s32.totalorder %s21, 0
      %p75 = por %p73, %p74
      %p76 = scmp.ne.s32.totalorder %s64, %s65
      %p77 = scmp.eq.s32.totalorder %s22, 3
      %p78 = por %p76, %p77
      %p80 = scmp.ne.s32.totalorder %s65, %s79
      %p81 = scmp.eq.s32.totalorder %s22, 0
      %p82 = por %p80, %p81
      %s84 = sadd.s32 %s83, 1
      %p87 = scmp.eq.s32.totalorder %s16, 3
      %p88 = scmp.ne.s32.totalorder %s83, %s85
      %p89 = scmp.eq.s32.totalorder %s16, 0
      %p90 = por %p88, %p89
      %p91 = scmp.ne.s32.totalorder %s83, %s85
      %p92 = scmp.eq.s32.totalorder %s21, 3
      %p93 = por %p91, %p92
      %p94 = scmp.ne.s32.totalorder %s85, %s86
      %p95 = scmp.eq.s32.totalorder %s21, 0
      %p96 = por %p94, %p95
      %p97 = scmp.ne.s32.totalorder %s85, %s86
      %p98 = scmp.eq.s32.totalorder %s22, 3
      %p99 = por %p97, %p98
      %p101 = scmp.ne.s32.totalorder %s86, %s100
      %p102 = scmp.eq.s32.totalorder %s22, 0
      %p103 = por %p101, %p102
      %s105 = sadd.s32 %s104, 1
      %p108 = scmp.eq.s32.totalorder %s16, 3
      %p109 = scmp.ne.s32.totalorder %s104, %s106
      %p110 = scmp.eq.s32.totalorder %s16, 0
      %p111 = por %p109, %p110
      %p112 = scmp.ne.s32.totalorder %s104, %s106
      %p113 = scmp.eq.s32.totalorder %s21, 3
      %p114 = por %p112, %p113
      %p115 = scmp.ne.s32.totalorder %s106, %s107
      %p116 = scmp.eq.s32.totalorder %s21, 0
      %p117 = por %p115, %p116
      %p118 = scmp.ne.s32.totalorder %s106, %s107
      %p119 = scmp.eq.s32.totalorder %s22, 3
      %p120 = por %p118, %p119
      %p122 = scmp.ne.s32.totalorder %s107, %s121
      %p123 = scmp.eq.s32.totalorder %s22, 0
      %p124 = por %p122, %p123
      %s126 = sadd.s32 %s125, 1
      %p129 = scmp.eq.s32.totalorder %s16, 3
      %p130 = scmp.ne.s32.totalorder %s125, %s127
      %p131 = scmp.eq.s32.totalorder %s16, 0
      %p132 = por %p130, %p131
      %p133 = scmp.ne.s32.totalorder %s125, %s127
      %p134 = scmp.eq.s32.totalorder %s21, 3
      %p135 = por %p133, %p134
      %p136 = scmp.ne.s32.totalorder %s127, %s128
      %p137 = scmp.eq.s32.totalorder %s21, 0
      %p138 = por %p136, %p137
      %p139 = scmp.ne.s32.totalorder %s127, %s128
      %p140 = scmp.eq.s32.totalorder %s22, 3
      %p141 = por %p139, %p140
      %p143 = scmp.ne.s32.totalorder %s128, %s142
      %p144 = scmp.eq.s32.totalorder %s22, 0
      %p145 = por %p143, %p144
      %s147 = sadd.s32 %s146, 1
      %p150 = scmp.eq.s32.totalorder %s16, 3
      %p151 = scmp.ne.s32.totalorder %s146, %s148
      %p152 = scmp.eq.s32.totalorder %s16, 0
      %p153 = por %p151, %p152
      %p154 = scmp.ne.s32.totalorder %s146, %s148
      %p155 = scmp.eq.s32.totalorder %s21, 3
      %p156 = por %p154, %p155
      %p157 = scmp.ne.s32.totalorder %s148, %s149
      %p158 = scmp.eq.s32.totalorder %s21, 0
      %p159 = por %p157, %p158
      %p160 = scmp.ne.s32.totalorder %s148, %s149
      %p161 = scmp.eq.s32.totalorder %s22, 3
      %p162 = por %p160, %p161
      %p164 = scmp.ne.s32.totalorder %s149, %s163
      %p165 = scmp.eq.s32.totalorder %s22, 0
      %p166 = por %p164, %p165
      %s168 = sadd.s32 %s167, 1
      %p171 = scmp.eq.s32.totalorder %s16, 3
      %p172 = scmp.ne.s32.totalorder %s167, %s169
      %p173 = scmp.eq.s32.totalorder %s16, 0
      %p174 = por %p172, %p173
      %p175 = scmp.ne.s32.totalorder %s167, %s169
      %p176 = scmp.eq.s32.totalorder %s21, 3
      %p177 = por %p175, %p176
      %p178 = scmp.ne.s32.totalorder %s169, %s170
      %p179 = scmp.eq.s32.totalorder %s21, 0
      %p180 = por %p178, %p179
      %p181 = scmp.ne.s32.totalorder %s169, %s170
      %p182 = scmp.eq.s32.totalorder %s22, 3
      %p183 = por %p181, %p182
      %p185 = scmp.ne.s32.totalorder %s170, %s184
      %p186 = scmp.eq.s32.totalorder %s22, 0
      %p187 = por %p185, %p186
      %s188 = ssub.s32 %s23, %s35
      %s189 = ssub.s32 %s24, %s31
      %s190 = sor.u32 %s188, %s189
      %p191 = scmp.eq.s32.totalorder %s190, 0
      %s193 = sadd.s32 %s192, 1
      %s194 = scalar_select %p191, %s192, %s193
      %p197 = pneg %p191
      %p198 = scmp.eq.s32.totalorder %s16, 3
      %p199 = por %p197, %p198
      %p200 = scmp.ne.s32.totalorder %s192, %s195
      %p201 = scmp.eq.s32.totalorder %s16, 0
      %p202 = por %p200, %p201
      %p203 = scmp.ne.s32.totalorder %s192, %s195
      %p204 = scmp.eq.s32.totalorder %s21, 3
      %p205 = por %p203, %p204
      %p206 = scmp.ne.s32.totalorder %s195, %s196
      %p207 = scmp.eq.s32.totalorder %s21, 0
      %p208 = por %p206, %p207
      %p209 = scmp.ne.s32.totalorder %s195, %s196
      %p210 = scmp.eq.s32.totalorder %s22, 3
      %p211 = por %p209, %p210
      %p213 = scmp.ne.s32.totalorder %s196, %s212
      %p214 = scmp.eq.s32.totalorder %s22, 0
      %p215 = por %p213, %p214
      %p216 = scmp.le.s32.totalorder 1, %s16
      %p217 = scmp.lt.s32.totalorder %s16, 5
      %p218 = pnand %p216, %p217
      %p219 = pneg %p218
      // Predicated region
      $region9: #{tpu_custom_call.1} parent=5 // pred_check
        _
      $region10: #{tpu_custom_call.1} parent=5 // pred_check_branch
        %221 = sbr.rel (%p218) target = $region12
      $region11: #{tpu_custom_call.1} parent=5 // pred_region
        %s222 = ssub.s32 %s16, 1
        // Predicated region
        $region13: #{tpu_custom_call.1} parent=11 // pred_check
          %p223 = pneg %p75
        $region14: #{tpu_custom_call.1} parent=11 // pred_check_branch
          %225 = sbr.rel (%p223) target = $region16
        $region15: #{tpu_custom_call.1} parent=11 // pred_region
          _
        $region16: #{tpu_custom_call.1} parent=11 // pred_fallthru
          _
        // Predicated region
        $region17: #{tpu_custom_call.1} parent=11 // pred_check
          %p226 = pneg %p96
        $region18: #{tpu_custom_call.1} parent=11 // pred_check_branch
          %228 = sbr.rel (%p226) target = $region20
        $region19: #{tpu_custom_call.1} parent=11 // pred_region
          _
        $region20: #{tpu_custom_call.1} parent=11 // pred_fallthru
          _
        // Predicated region
        $region21: #{tpu_custom_call.1} parent=11 // pred_check
          %p229 = pneg %p117
        $region22: #{tpu_custom_call.1} parent=11 // pred_check_branch
          %231 = sbr.rel (%p229) target = $region24
        $region23: #{tpu_custom_call.1} parent=11 // pred_region
          _
        $region24: #{tpu_custom_call.1} parent=11 // pred_fallthru
          _
        // Predicated region
        $region25: #{tpu_custom_call.1} parent=11 // pred_check
          %p232 = pneg %p138
        $region26: #{tpu_custom_call.1} parent=11 // pred_check_branch
          %234 = sbr.rel (%p232) target = $region28
        $region27: #{tpu_custom_call.1} parent=11 // pred_region
          _
        $region28: #{tpu_custom_call.1} parent=11 // pred_fallthru
          _
        // Predicated region
        $region29: #{tpu_custom_call.1} parent=11 // pred_check
          %p235 = pneg %p159
        $region30: #{tpu_custom_call.1} parent=11 // pred_check_branch
          %237 = sbr.rel (%p235) target = $region32
        $region31: #{tpu_custom_call.1} parent=11 // pred_region
          _
        $region32: #{tpu_custom_call.1} parent=11 // pred_fallthru
          _
        // Predicated region
        $region33: #{tpu_custom_call.1} parent=11 // pred_check
          %p238 = pneg %p180
        $region34: #{tpu_custom_call.1} parent=11 // pred_check_branch
          %240 = sbr.rel (%p238) target = $region36
        $region35: #{tpu_custom_call.1} parent=11 // pred_region
          _
        $region36: #{tpu_custom_call.1} parent=11 // pred_fallthru
          _
      $region12: #{tpu_custom_call.1} parent=5 // pred_fallthru
        _
      %p241 = scmp.lt.s32.totalorder %s16, 4
      // Predicated region
      $region37: #{tpu_custom_call.1} parent=5 // pred_check
        %p242 = pneg %p241
      $region38: #{tpu_custom_call.1} parent=5 // pred_check_branch
        %244 = sbr.rel (%p242) target = $region40
      $region39: #{tpu_custom_call.1} parent=5 // pred_region
        // Predicated region
        $region41: #{tpu_custom_call.1} parent=39 // pred_check
          %p245 = pneg %p48
        $region42: #{tpu_custom_call.1} parent=39 // pred_check_branch
          %247 = sbr.rel (%p245) target = $region44
        $region43: #{tpu_custom_call.1} parent=39 // pred_region
          %p248 = scmp.lt.s32.totalorder %s23, 1
          %s249 = scalar_select %p248, %s23, 1
          %s250 = smul.addr %s249, 8
          %s251 = smul.addr %s250, 8
          %s252 = scalar_lea.vmem %s0, %s251
        $region44: #{tpu_custom_call.1} parent=39 // pred_fallthru
          _
      $region40: #{tpu_custom_call.1} parent=5 // pred_fallthru
        _
      %p253 = scmp.le.s32.totalorder 1, %s16
      %p254 = scmp.lt.s32.totalorder %s16, 5
      %p255 = pnand %p253, %p254
      %p256 = pneg %p255
      // Predicated region
      $region45: #{tpu_custom_call.1} parent=5 // pred_check
        _
      $region46: #{tpu_custom_call.1} parent=5 // pred_check_branch
        %258 = sbr.rel (%p255) target = $region48
      $region47: #{tpu_custom_call.1} parent=5 // pred_region
        %s259 = ssub.s32 %s16, 1
        %p260 = scmp.lt.s32.totalorder %s25, 1
        %s261 = scalar_select %p260, %s25, 1
        %s262 = smul.addr %s261, 8
        %s263 = smul.addr %s262, 8
        %s264 = scalar_lea.vmem %s0, %s263
        %p265 = pneg %p54
        %p266 = pneg %p51
        %p267 = pneg %p75
        %p268 = pneg %p72
        %p269 = pneg %p96
        %p270 = pneg %p93
        %p271 = pneg %p117
        %p272 = pneg %p114
        %p273 = pneg %p138
        %p274 = pneg %p135
        %p275 = pneg %p159
        %p276 = pneg %p156
        %p277 = pneg %p180
        %p278 = pneg %p177
        %p279 = pneg %p208
        %p280 = pneg %p205
        %s281 = sand.u32 %s195, 1
        %s282 = scalar_lea.sflag [#allocation5], %s281
        %s283 = sand.u32 %s195, 1
        %s284 = smul.addr %s283, 32
        %s285 = scalar_lea.vmem [#allocation4], %s284
        %p286 = scmp.lt.s32.totalorder %s25, 1
        %s287 = scalar_select %p286, %s25, 1
        %s288 = smul.addr %s287, 8
        %s289 = smul.addr %s288, 8
        %s290 = scalar_lea.vmem %s0, %s289
        %s291 = smul.u32 %s26, 8
        %s292 = ssub.s32 %s291, 1
        %s293 = sadd.s32 %s291, 8
        %v294 = vld [vmem:[%s290] sm:$0xff]
        %v295 = vld [vmem:[%s290 + $0x8] sm:$0xff]
        %v296 = vld [vmem:[%s290 + $0x10] sm:$0xff]
        %v297 = vld [vmem:[%s290 + $0x18] sm:$0xff]
        %v298 = vld [vmem:[%s290 + $0x20] sm:$0xff]
        %v299 = vld [vmem:[%s290 + $0x28] sm:$0xff]
        %v300 = vld [vmem:[%s290 + $0x30] sm:$0xff]
        %v301 = vld [vmem:[%s290 + $0x38] sm:$0xff]
        %vm302 = vcmask 130048
        %303 = vst.msk [vmem:[#allocation2] sm:$0xff] %vm302, %v294
        %304 = vst.msk [vmem:[#allocation2 + $0x8] sm:$0xff] %vm302, %v295
        %305 = vst.msk [vmem:[#allocation2 + $0x10] sm:$0xff] %vm302, %v296
        %306 = vst.msk [vmem:[#allocation2 + $0x18] sm:$0xff] %vm302, %v297
        %307 = vst.msk [vmem:[#allocation2 + $0x20] sm:$0xff] %vm302, %v298
        %308 = vst.msk [vmem:[#allocation2 + $0x28] sm:$0xff] %vm302, %v299
        %309 = vst.msk [vmem:[#allocation2 + $0x30] sm:$0xff] %vm302, %v300
        %310 = vst.msk [vmem:[#allocation2 + $0x38] sm:$0xff] %vm302, %v301
        %s311 = scalar_lea.vmem [#allocation2], %s291
        %v312 = vld [vmem:[%s311] sm:$0xff]
        %v313 = vld [vmem:[%s311 + $0x10] sm:$0xff]
        %v314 = vld [vmem:[%s311 + $0x20] sm:$0xff]
        %v315 = vld [vmem:[%s311 + $0x30] sm:$0xff]
        %v316 = vld [vmem:[%s2] sm:$0x1]
        %v317 = vld [vmem:[%s2 + $0x1] sm:$0x1]
        %v318 = vld [vmem:[%s2 + $0x2] sm:$0x1]
        %v319 = vld [vmem:[%s2 + $0x3] sm:$0x1]
        %v320 = vld [vmem:[%s2 + $0x4] sm:$0x1]
        %v321 = vld [vmem:[%s2 + $0x5] sm:$0x1]
        %v322 = vld [vmem:[%s2 + $0x6] sm:$0x1]
        %v323 = vld [vmem:[%s2 + $0x7] sm:$0x1]
        %v324 = vld [vmem:[%s2 + $0x8] sm:$0x1]
        %v325 = vld [vmem:[%s2 + $0x9] sm:$0x1]
        %v326 = vld [vmem:[%s2 + $0xa] sm:$0x1]
        %v327 = vld [vmem:[%s2 + $0xb] sm:$0x1]
        %v328 = vld [vmem:[%s2 + $0xc] sm:$0x1]
        %v329 = vld [vmem:[%s2 + $0xd] sm:$0x1]
        %v330 = vld [vmem:[%s2 + $0xe] sm:$0x1]
        %v331 = vld [vmem:[%s2 + $0xf] sm:$0x1]
        %v332 = vld [vmem:[%s2 + $0x10] sm:$0x1]
        %v333 = vld [vmem:[%s2 + $0x11] sm:$0x1]
        %v334 = vld [vmem:[%s2 + $0x12] sm:$0x1]
        %v335 = vld [vmem:[%s2 + $0x13] sm:$0x1]
        %v336 = vld [vmem:[%s2 + $0x14] sm:$0x1]
        %v337 = vld [vmem:[%s2 + $0x15] sm:$0x1]
        %v338 = vld [vmem:[%s2 + $0x16] sm:$0x1]
        %v339 = vld [vmem:[%s2 + $0x17] sm:$0x1]
        %v340 = vld [vmem:[%s1] sm:$0x1]
        %v341 = vld [vmem:[%s1 + $0x1] sm:$0x1]
        %v342 = vld [vmem:[%s1 + $0x2] sm:$0x1]
        %v343 = vld [vmem:[%s1 + $0x3] sm:$0x1]
        %v344 = vld [vmem:[%s1 + $0x4] sm:$0x1]
        %v345 = vld [vmem:[%s1 + $0x5] sm:$0x1]
        %v346 = vld [vmem:[%s1 + $0x6] sm:$0x1]
        %v347 = vld [vmem:[%s1 + $0x7] sm:$0x1]
        %v348 = vld [vmem:[%s1 + $0x8] sm:$0x1]
        %v349 = vld [vmem:[%s1 + $0x9] sm:$0x1]
        %v350 = vld [vmem:[%s1 + $0xa] sm:$0x1]
        %v351 = vld [vmem:[%s1 + $0xb] sm:$0x1]
        %v352 = vld [vmem:[%s1 + $0xc] sm:$0x1]
        %v353 = vld [vmem:[%s1 + $0xd] sm:$0x1]
        %v354 = vld [vmem:[%s1 + $0xe] sm:$0x1]
        %v355 = vld [vmem:[%s1 + $0xf] sm:$0x1]
        %v356 = vld [vmem:[%s1 + $0x10] sm:$0x1]
        %v357 = vld [vmem:[%s1 + $0x11] sm:$0x1]
        %v358 = vld [vmem:[%s1 + $0x12] sm:$0x1]
        %v359 = vld [vmem:[%s1 + $0x13] sm:$0x1]
        %v360 = vld [vmem:[%s1 + $0x14] sm:$0x1]
        %v361 = vld [vmem:[%s1 + $0x15] sm:$0x1]
        %v362 = vld [vmem:[%s1 + $0x16] sm:$0x1]
        %v363 = vld [vmem:[%s1 + $0x17] sm:$0x1]
        %v388 = vlaneseq
        %v389 = vshrl.u32 %v388, 7
        %v390 = vsub.s32 0, %v389
        %v391 = vrot.slane %v340, %v390
        %v392 = vlaneseq
        %v393 = vshrl.u32 %v392, 7
        %v394 = vsub.s32 0, %v393
        %v395 = vrot.slane %v341, %v394
        %v396 = vlaneseq
        %v397 = vshrl.u32 %v396, 7
        %v398 = vsub.s32 0, %v397
        %v399 = vrot.slane %v342, %v398
        %v400 = vlaneseq
        %v401 = vshrl.u32 %v400, 7
        %v402 = vsub.s32 0, %v401
        %v403 = vrot.slane %v343, %v402
        %v404 = vlaneseq
        %v405 = vshrl.u32 %v404, 7
        %v406 = vsub.s32 0, %v405
        %v407 = vrot.slane %v344, %v406
        %v408 = vlaneseq
        %v409 = vshrl.u32 %v408, 7
        %v410 = vsub.s32 0, %v409
        %v411 = vrot.slane %v345, %v410
        %v412 = vlaneseq
        %v413 = vshrl.u32 %v412, 7
        %v414 = vsub.s32 0, %v413
        %v415 = vrot.slane %v346, %v414
        %v416 = vlaneseq
        %v417 = vshrl.u32 %v416, 7
        %v418 = vsub.s32 0, %v417
        %v419 = vrot.slane %v347, %v418
        %v420 = vlaneseq
        %v421 = vshrl.u32 %v420, 7
        %v422 = vsub.s32 0, %v421
        %v423 = vrot.slane %v348, %v422
        %v424 = vlaneseq
        %v425 = vshrl.u32 %v424, 7
        %v426 = vsub.s32 0, %v425
        %v427 = vrot.slane %v349, %v426
        %v428 = vlaneseq
        %v429 = vshrl.u32 %v428, 7
        %v430 = vsub.s32 0, %v429
        %v431 = vrot.slane %v350, %v430
        %v432 = vlaneseq
        %v433 = vshrl.u32 %v432, 7
        %v434 = vsub.s32 0, %v433
        %v435 = vrot.slane %v351, %v434
        %v436 = vlaneseq
        %v437 = vshrl.u32 %v436, 7
        %v438 = vsub.s32 0, %v437
        %v439 = vrot.slane %v352, %v438
        %v440 = vlaneseq
        %v441 = vshrl.u32 %v440, 7
        %v442 = vsub.s32 0, %v441
        %v443 = vrot.slane %v353, %v442
        %v444 = vlaneseq
        %v445 = vshrl.u32 %v444, 7
        %v446 = vsub.s32 0, %v445
        %v447 = vrot.slane %v354, %v446
        %v448 = vlaneseq
        %v449 = vshrl.u32 %v448, 7
        %v450 = vsub.s32 0, %v449
        %v451 = vrot.slane %v355, %v450
        %v452 = vlaneseq
        %v453 = vshrl.u32 %v452, 7
        %v454 = vsub.s32 0, %v453
        %v455 = vrot.slane %v356, %v454
        %v456 = vlaneseq
        %v457 = vshrl.u32 %v456, 7
        %v458 = vsub.s32 0, %v457
        %v459 = vrot.slane %v357, %v458
        %v460 = vlaneseq
        %v461 = vshrl.u32 %v460, 7
        %v462 = vsub.s32 0, %v461
        %v463 = vrot.slane %v358, %v462
        %v464 = vlaneseq
        %v465 = vshrl.u32 %v464, 7
        %v466 = vsub.s32 0, %v465
        %v467 = vrot.slane %v359, %v466
        %v468 = vlaneseq
        %v469 = vshrl.u32 %v468, 7
        %v470 = vsub.s32 0, %v469
        %v471 = vrot.slane %v360, %v470
        %v472 = vlaneseq
        %v473 = vshrl.u32 %v472, 7
        %v474 = vsub.s32 0, %v473
        %v475 = vrot.slane %v361, %v474
        %v476 = vlaneseq
        %v477 = vshrl.u32 %v476, 7
        %v478 = vsub.s32 0, %v477
        %v479 = vrot.slane %v362, %v478
        %v480 = vlaneseq
        %v481 = vshrl.u32 %v480, 7
        %v482 = vsub.s32 0, %v481
        %v483 = vrot.slane %v363, %v482
        %484 = vset.pattern.permute.xlu0 0
        %485 = vperm.xlu0 %484, %v391
        %v486 = vpop.permute.xlu0 %485
        %488 = vset.pattern.permute.xlu0 0
        %489 = vperm.xlu0 %488, %v395
        %v490 = vpop.permute.xlu0 %489
        %492 = vset.pattern.permute.xlu0 0
        %493 = vperm.xlu0 %492, %v399
        %v494 = vpop.permute.xlu0 %493
        %496 = vset.pattern.permute.xlu0 0
        %497 = vperm.xlu0 %496, %v403
        %v498 = vpop.permute.xlu0 %497
        %500 = vset.pattern.permute.xlu0 0
        %501 = vperm.xlu0 %500, %v407
        %v502 = vpop.permute.xlu0 %501
        %504 = vset.pattern.permute.xlu0 0
        %505 = vperm.xlu0 %504, %v411
        %v506 = vpop.permute.xlu0 %505
        %508 = vset.pattern.permute.xlu0 0
        %509 = vperm.xlu0 %508, %v415
        %v510 = vpop.permute.xlu0 %509
        %512 = vset.pattern.permute.xlu0 0
        %513 = vperm.xlu0 %512, %v419
        %v514 = vpop.permute.xlu0 %513
        %516 = vset.pattern.permute.xlu0 0
        %517 = vperm.xlu0 %516, %v423
        %v518 = vpop.permute.xlu0 %517
        %520 = vset.pattern.permute.xlu0 0
        %521 = vperm.xlu0 %520, %v427
        %v522 = vpop.permute.xlu0 %521
        %524 = vset.pattern.permute.xlu0 0
        %525 = vperm.xlu0 %524, %v431
        %v526 = vpop.permute.xlu0 %525
        %528 = vset.pattern.permute.xlu0 0
        %529 = vperm.xlu0 %528, %v435
        %v530 = vpop.permute.xlu0 %529
        %532 = vset.pattern.permute.xlu0 0
        %533 = vperm.xlu0 %532, %v439
        %v534 = vpop.permute.xlu0 %533
        %536 = vset.pattern.permute.xlu0 0
        %537 = vperm.xlu0 %536, %v443
        %v538 = vpop.permute.xlu0 %537
        %540 = vset.pattern.permute.xlu0 0
        %541 = vperm.xlu0 %540, %v447
        %v542 = vpop.permute.xlu0 %541
        %544 = vset.pattern.permute.xlu0 0
        %545 = vperm.xlu0 %544, %v451
        %v546 = vpop.permute.xlu0 %545
        %548 = vset.pattern.permute.xlu0 0
        %549 = vperm.xlu0 %548, %v455
        %v550 = vpop.permute.xlu0 %549
        %552 = vset.pattern.permute.xlu0 0
        %553 = vperm.xlu0 %552, %v459
        %v554 = vpop.permute.xlu0 %553
        %556 = vset.pattern.permute.xlu0 0
        %557 = vperm.xlu0 %556, %v463
        %v558 = vpop.permute.xlu0 %557
        %560 = vset.pattern.permute.xlu0 0
        %561 = vperm.xlu0 %560, %v467
        %v562 = vpop.permute.xlu0 %561
        %564 = vset.pattern.permute.xlu0 0
        %565 = vperm.xlu0 %564, %v471
        %v566 = vpop.permute.xlu0 %565
        %568 = vset.pattern.permute.xlu0 0
        %569 = vperm.xlu0 %568, %v475
        %v570 = vpop.permute.xlu0 %569
        %572 = vset.pattern.permute.xlu0 0
        %573 = vperm.xlu0 %572, %v479
        %v574 = vpop.permute.xlu0 %573
        %576 = vset.pattern.permute.xlu0 0
        %577 = vperm.xlu0 %576, %v483
        %v578 = vpop.permute.xlu0 %577
        %v580 = vmul.f32 %v486, %v312
        %v581 = vmul.f32 %v490, %v312
        %v582 = vmul.f32 %v494, %v312
        %v583 = vmul.f32 %v498, %v312
        %v584 = vmul.f32 %v502, %v312
        %v585 = vmul.f32 %v506, %v312
        %v586 = vmul.f32 %v510, %v312
        %v587 = vmul.f32 %v514, %v312
        %v588 = vmul.f32 %v518, %v312
        %v589 = vmul.f32 %v522, %v312
        %v590 = vmul.f32 %v526, %v312
        %v591 = vmul.f32 %v530, %v312
        %v592 = vmul.f32 %v534, %v312
        %v593 = vmul.f32 %v538, %v312
        %v594 = vmul.f32 %v542, %v312
        %v595 = vmul.f32 %v546, %v312
        %v596 = vmul.f32 %v550, %v312
        %v597 = vmul.f32 %v554, %v312
        %v598 = vmul.f32 %v558, %v312
        %v599 = vmul.f32 %v562, %v312
        %v600 = vmul.f32 %v566, %v312
        %v601 = vmul.f32 %v570, %v312
        %v602 = vmul.f32 %v574, %v312
        %v603 = vmul.f32 %v578, %v312
        %v628 = vlaneseq
        %v629 = vshrl.u32 %v628, 7
        %v630 = vsub.s32 0, %v629
        %v631 = vrot.slane %v316, %v630
        %v632 = vlaneseq
        %v633 = vshrl.u32 %v632, 7
        %v634 = vsub.s32 0, %v633
        %v635 = vrot.slane %v317, %v634
        %v636 = vlaneseq
        %v637 = vshrl.u32 %v636, 7
        %v638 = vsub.s32 0, %v637
        %v639 = vrot.slane %v318, %v638
        %v640 = vlaneseq
        %v641 = vshrl.u32 %v640, 7
        %v642 = vsub.s32 0, %v641
        %v643 = vrot.slane %v319, %v642
        %v644 = vlaneseq
        %v645 = vshrl.u32 %v644, 7
        %v646 = vsub.s32 0, %v645
        %v647 = vrot.slane %v320, %v646
        %v648 = vlaneseq
        %v649 = vshrl.u32 %v648, 7
        %v650 = vsub.s32 0, %v649
        %v651 = vrot.slane %v321, %v650
        %v652 = vlaneseq
        %v653 = vshrl.u32 %v652, 7
        %v654 = vsub.s32 0, %v653
        %v655 = vrot.slane %v322, %v654
        %v656 = vlaneseq
        %v657 = vshrl.u32 %v656, 7
        %v658 = vsub.s32 0, %v657
        %v659 = vrot.slane %v323, %v658
        %v660 = vlaneseq
        %v661 = vshrl.u32 %v660, 7
        %v662 = vsub.s32 0, %v661
        %v663 = vrot.slane %v324, %v662
        %v664 = vlaneseq
        %v665 = vshrl.u32 %v664, 7
        %v666 = vsub.s32 0, %v665
        %v667 = vrot.slane %v325, %v666
        %v668 = vlaneseq
        %v669 = vshrl.u32 %v668, 7
        %v670 = vsub.s32 0, %v669
        %v671 = vrot.slane %v326, %v670
        %v672 = vlaneseq
        %v673 = vshrl.u32 %v672, 7
        %v674 = vsub.s32 0, %v673
        %v675 = vrot.slane %v327, %v674
        %v676 = vlaneseq
        %v677 = vshrl.u32 %v676, 7
        %v678 = vsub.s32 0, %v677
        %v679 = vrot.slane %v328, %v678
        %v680 = vlaneseq
        %v681 = vshrl.u32 %v680, 7
        %v682 = vsub.s32 0, %v681
        %v683 = vrot.slane %v329, %v682
        %v684 = vlaneseq
        %v685 = vshrl.u32 %v684, 7
        %v686 = vsub.s32 0, %v685
        %v687 = vrot.slane %v330, %v686
        %v688 = vlaneseq
        %v689 = vshrl.u32 %v688, 7
        %v690 = vsub.s32 0, %v689
        %v691 = vrot.slane %v331, %v690
        %v692 = vlaneseq
        %v693 = vshrl.u32 %v692, 7
        %v694 = vsub.s32 0, %v693
        %v695 = vrot.slane %v332, %v694
        %v696 = vlaneseq
        %v697 = vshrl.u32 %v696, 7
        %v698 = vsub.s32 0, %v697
        %v699 = vrot.slane %v333, %v698
        %v700 = vlaneseq
        %v701 = vshrl.u32 %v700, 7
        %v702 = vsub.s32 0, %v701
        %v703 = vrot.slane %v334, %v702
        %v704 = vlaneseq
        %v705 = vshrl.u32 %v704, 7
        %v706 = vsub.s32 0, %v705
        %v707 = vrot.slane %v335, %v706
        %v708 = vlaneseq
        %v709 = vshrl.u32 %v708, 7
        %v710 = vsub.s32 0, %v709
        %v711 = vrot.slane %v336, %v710
        %v712 = vlaneseq
        %v713 = vshrl.u32 %v712, 7
        %v714 = vsub.s32 0, %v713
        %v715 = vrot.slane %v337, %v714
        %v716 = vlaneseq
        %v717 = vshrl.u32 %v716, 7
        %v718 = vsub.s32 0, %v717
        %v719 = vrot.slane %v338, %v718
        %v720 = vlaneseq
        %v721 = vshrl.u32 %v720, 7
        %v722 = vsub.s32 0, %v721
        %v723 = vrot.slane %v339, %v722
        %724 = vset.pattern.permute.xlu0 0
        %725 = vperm.xlu0 %724, %v631
        %v726 = vpop.permute.xlu0 %725
        %728 = vset.pattern.permute.xlu0 0
        %729 = vperm.xlu0 %728, %v635
        %v730 = vpop.permute.xlu0 %729
        %732 = vset.pattern.permute.xlu0 0
        %733 = vperm.xlu0 %732, %v639
        %v734 = vpop.permute.xlu0 %733
        %736 = vset.pattern.permute.xlu0 0
        %737 = vperm.xlu0 %736, %v643
        %v738 = vpop.permute.xlu0 %737
        %740 = vset.pattern.permute.xlu0 0
        %741 = vperm.xlu0 %740, %v647
        %v742 = vpop.permute.xlu0 %741
        %744 = vset.pattern.permute.xlu0 0
        %745 = vperm.xlu0 %744, %v651
        %v746 = vpop.permute.xlu0 %745
        %748 = vset.pattern.permute.xlu0 0
        %749 = vperm.xlu0 %748, %v655
        %v750 = vpop.permute.xlu0 %749
        %752 = vset.pattern.permute.xlu0 0
        %753 = vperm.xlu0 %752, %v659
        %v754 = vpop.permute.xlu0 %753
        %756 = vset.pattern.permute.xlu0 0
        %757 = vperm.xlu0 %756, %v663
        %v758 = vpop.permute.xlu0 %757
        %760 = vset.pattern.permute.xlu0 0
        %761 = vperm.xlu0 %760, %v667
        %v762 = vpop.permute.xlu0 %761
        %764 = vset.pattern.permute.xlu0 0
        %765 = vperm.xlu0 %764, %v671
        %v766 = vpop.permute.xlu0 %765
        %768 = vset.pattern.permute.xlu0 0
        %769 = vperm.xlu0 %768, %v675
        %v770 = vpop.permute.xlu0 %769
        %772 = vset.pattern.permute.xlu0 0
        %773 = vperm.xlu0 %772, %v679
        %v774 = vpop.permute.xlu0 %773
        %776 = vset.pattern.permute.xlu0 0
        %777 = vperm.xlu0 %776, %v683
        %v778 = vpop.permute.xlu0 %777
        %780 = vset.pattern.permute.xlu0 0
        %781 = vperm.xlu0 %780, %v687
        %v782 = vpop.permute.xlu0 %781
        %784 = vset.pattern.permute.xlu0 0
        %785 = vperm.xlu0 %784, %v691
        %v786 = vpop.permute.xlu0 %785
        %788 = vset.pattern.permute.xlu0 0
        %789 = vperm.xlu0 %788, %v695
        %v790 = vpop.permute.xlu0 %789
        %792 = vset.pattern.permute.xlu0 0
        %793 = vperm.xlu0 %792, %v699
        %v794 = vpop.permute.xlu0 %793
        %796 = vset.pattern.permute.xlu0 0
        %797 = vperm.xlu0 %796, %v703
        %v798 = vpop.permute.xlu0 %797
        %800 = vset.pattern.permute.xlu0 0
        %801 = vperm.xlu0 %800, %v707
        %v802 = vpop.permute.xlu0 %801
        %804 = vset.pattern.permute.xlu0 0
        %805 = vperm.xlu0 %804, %v711
        %v806 = vpop.permute.xlu0 %805
        %808 = vset.pattern.permute.xlu0 0
        %809 = vperm.xlu0 %808, %v715
        %v810 = vpop.permute.xlu0 %809
        %812 = vset.pattern.permute.xlu0 0
        %813 = vperm.xlu0 %812, %v719
        %v814 = vpop.permute.xlu0 %813
        %816 = vset.pattern.permute.xlu0 0
        %817 = vperm.xlu0 %816, %v723
        %v818 = vpop.permute.xlu0 %817
        %v820 = vadd.f32 %v726, %v580
        %v821 = vadd.f32 %v730, %v581
        %v822 = vadd.f32 %v734, %v582
        %v823 = vadd.f32 %v738, %v583
        %v824 = vadd.f32 %v742, %v584
        %v825 = vadd.f32 %v746, %v585
        %v826 = vadd.f32 %v750, %v586
        %v827 = vadd.f32 %v754, %v587
        %v828 = vadd.f32 %v758, %v588
        %v829 = vadd.f32 %v762, %v589
        %v830 = vadd.f32 %v766, %v590
        %v831 = vadd.f32 %v770, %v591
        %v832 = vadd.f32 %v774, %v592
        %v833 = vadd.f32 %v778, %v593
        %v834 = vadd.f32 %v782, %v594
        %v835 = vadd.f32 %v786, %v595
        %v836 = vadd.f32 %v790, %v596
        %v837 = vadd.f32 %v794, %v597
        %v838 = vadd.f32 %v798, %v598
        %v839 = vadd.f32 %v802, %v599
        %v840 = vadd.f32 %v806, %v600
        %v841 = vadd.f32 %v810, %v601
        %v842 = vadd.f32 %v814, %v602
        %v843 = vadd.f32 %v818, %v603
        %s844 = scalar_lea.vmem %s1, 24
        %v845 = vld [vmem:[%s844] sm:$0x1]
        %v846 = vld [vmem:[%s844 + $0x1] sm:$0x1]
        %v847 = vld [vmem:[%s844 + $0x2] sm:$0x1]
        %v848 = vld [vmem:[%s844 + $0x3] sm:$0x1]
        %v849 = vld [vmem:[%s844 + $0x4] sm:$0x1]
        %v850 = vld [vmem:[%s844 + $0x5] sm:$0x1]
        %v851 = vld [vmem:[%s844 + $0x6] sm:$0x1]
        %v852 = vld [vmem:[%s844 + $0x7] sm:$0x1]
        %v853 = vld [vmem:[%s844 + $0x8] sm:$0x1]
        %v854 = vld [vmem:[%s844 + $0x9] sm:$0x1]
        %v855 = vld [vmem:[%s844 + $0xa] sm:$0x1]
        %v856 = vld [vmem:[%s844 + $0xb] sm:$0x1]
        %v857 = vld [vmem:[%s844 + $0xc] sm:$0x1]
        %v858 = vld [vmem:[%s844 + $0xd] sm:$0x1]
        %v859 = vld [vmem:[%s844 + $0xe] sm:$0x1]
        %v860 = vld [vmem:[%s844 + $0xf] sm:$0x1]
        %v861 = vld [vmem:[%s844 + $0x10] sm:$0x1]
        %v862 = vld [vmem:[%s844 + $0x11] sm:$0x1]
        %v863 = vld [vmem:[%s844 + $0x12] sm:$0x1]
        %v864 = vld [vmem:[%s844 + $0x13] sm:$0x1]
        %v865 = vld [vmem:[%s844 + $0x14] sm:$0x1]
        %v866 = vld [vmem:[%s844 + $0x15] sm:$0x1]
        %v867 = vld [vmem:[%s844 + $0x16] sm:$0x1]
        %v868 = vld [vmem:[%s844 + $0x17] sm:$0x1]
        %v893 = vlaneseq
        %v894 = vshrl.u32 %v893, 7
        %v895 = vsub.s32 0, %v894
        %v896 = vrot.slane %v845, %v895
        %v897 = vlaneseq
        %v898 = vshrl.u32 %v897, 7
        %v899 = vsub.s32 0, %v898
        %v900 = vrot.slane %v846, %v899
        %v901 = vlaneseq
        %v902 = vshrl.u32 %v901, 7
        %v903 = vsub.s32 0, %v902
        %v904 = vrot.slane %v847, %v903
        %v905 = vlaneseq
        %v906 = vshrl.u32 %v905, 7
        %v907 = vsub.s32 0, %v906
        %v908 = vrot.slane %v848, %v907
        %v909 = vlaneseq
        %v910 = vshrl.u32 %v909, 7
        %v911 = vsub.s32 0, %v910
        %v912 = vrot.slane %v849, %v911
        %v913 = vlaneseq
        %v914 = vshrl.u32 %v913, 7
        %v915 = vsub.s32 0, %v914
        %v916 = vrot.slane %v850, %v915
        %v917 = vlaneseq
        %v918 = vshrl.u32 %v917, 7
        %v919 = vsub.s32 0, %v918
        %v920 = vrot.slane %v851, %v919
        %v921 = vlaneseq
        %v922 = vshrl.u32 %v921, 7
        %v923 = vsub.s32 0, %v922
        %v924 = vrot.slane %v852, %v923
        %v925 = vlaneseq
        %v926 = vshrl.u32 %v925, 7
        %v927 = vsub.s32 0, %v926
        %v928 = vrot.slane %v853, %v927
        %v929 = vlaneseq
        %v930 = vshrl.u32 %v929, 7
        %v931 = vsub.s32 0, %v930
        %v932 = vrot.slane %v854, %v931
        %v933 = vlaneseq
        %v934 = vshrl.u32 %v933, 7
        %v935 = vsub.s32 0, %v934
        %v936 = vrot.slane %v855, %v935
        %v937 = vlaneseq
        %v938 = vshrl.u32 %v937, 7
        %v939 = vsub.s32 0, %v938
        %v940 = vrot.slane %v856, %v939
        %v941 = vlaneseq
        %v942 = vshrl.u32 %v941, 7
        %v943 = vsub.s32 0, %v942
        %v944 = vrot.slane %v857, %v943
        %v945 = vlaneseq
        %v946 = vshrl.u32 %v945, 7
        %v947 = vsub.s32 0, %v946
        %v948 = vrot.slane %v858, %v947
        %v949 = vlaneseq
        %v950 = vshrl.u32 %v949, 7
        %v951 = vsub.s32 0, %v950
        %v952 = vrot.slane %v859, %v951
        %v953 = vlaneseq
        %v954 = vshrl.u32 %v953, 7
        %v955 = vsub.s32 0, %v954
        %v956 = vrot.slane %v860, %v955
        %v957 = vlaneseq
        %v958 = vshrl.u32 %v957, 7
        %v959 = vsub.s32 0, %v958
        %v960 = vrot.slane %v861, %v959
        %v961 = vlaneseq
        %v962 = vshrl.u32 %v961, 7
        %v963 = vsub.s32 0, %v962
        %v964 = vrot.slane %v862, %v963
        %v965 = vlaneseq
        %v966 = vshrl.u32 %v965, 7
        %v967 = vsub.s32 0, %v966
        %v968 = vrot.slane %v863, %v967
        %v969 = vlaneseq
        %v970 = vshrl.u32 %v969, 7
        %v971 = vsub.s32 0, %v970
        %v972 = vrot.slane %v864, %v971
        %v973 = vlaneseq
        %v974 = vshrl.u32 %v973, 7
        %v975 = vsub.s32 0, %v974
        %v976 = vrot.slane %v865, %v975
        %v977 = vlaneseq
        %v978 = vshrl.u32 %v977, 7
        %v979 = vsub.s32 0, %v978
        %v980 = vrot.slane %v866, %v979
        %v981 = vlaneseq
        %v982 = vshrl.u32 %v981, 7
        %v983 = vsub.s32 0, %v982
        %v984 = vrot.slane %v867, %v983
        %v985 = vlaneseq
        %v986 = vshrl.u32 %v985, 7
        %v987 = vsub.s32 0, %v986
        %v988 = vrot.slane %v868, %v987
        %989 = vset.pattern.permute.xlu0 0
        %990 = vperm.xlu0 %989, %v896
        %v991 = vpop.permute.xlu0 %990
        %993 = vset.pattern.permute.xlu0 0
        %994 = vperm.xlu0 %993, %v900
        %v995 = vpop.permute.xlu0 %994
        %997 = vset.pattern.permute.xlu0 0
        %998 = vperm.xlu0 %997, %v904
        %v999 = vpop.permute.xlu0 %998
        %1001 = vset.pattern.permute.xlu0 0
        %1002 = vperm.xlu0 %1001, %v908
        %v1003 = vpop.permute.xlu0 %1002
        %1005 = vset.pattern.permute.xlu0 0
        %1006 = vperm.xlu0 %1005, %v912
        %v1007 = vpop.permute.xlu0 %1006
        %1009 = vset.pattern.permute.xlu0 0
        %1010 = vperm.xlu0 %1009, %v916
        %v1011 = vpop.permute.xlu0 %1010
        %1013 = vset.pattern.permute.xlu0 0
        %1014 = vperm.xlu0 %1013, %v920
        %v1015 = vpop.permute.xlu0 %1014
        %1017 = vset.pattern.permute.xlu0 0
        %1018 = vperm.xlu0 %1017, %v924
        %v1019 = vpop.permute.xlu0 %1018
        %1021 = vset.pattern.permute.xlu0 0
        %1022 = vperm.xlu0 %1021, %v928
        %v1023 = vpop.permute.xlu0 %1022
        %1025 = vset.pattern.permute.xlu0 0
        %1026 = vperm.xlu0 %1025, %v932
        %v1027 = vpop.permute.xlu0 %1026
        %1029 = vset.pattern.permute.xlu0 0
        %1030 = vperm.xlu0 %1029, %v936
        %v1031 = vpop.permute.xlu0 %1030
        %1033 = vset.pattern.permute.xlu0 0
        %1034 = vperm.xlu0 %1033, %v940
        %v1035 = vpop.permute.xlu0 %1034
        %1037 = vset.pattern.permute.xlu0 0
        %1038 = vperm.xlu0 %1037, %v944
        %v1039 = vpop.permute.xlu0 %1038
        %1041 = vset.pattern.permute.xlu0 0
        %1042 = vperm.xlu0 %1041, %v948
        %v1043 = vpop.permute.xlu0 %1042
        %1045 = vset.pattern.permute.xlu0 0
        %1046 = vperm.xlu0 %1045, %v952
        %v1047 = vpop.permute.xlu0 %1046
        %1049 = vset.pattern.permute.xlu0 0
        %1050 = vperm.xlu0 %1049, %v956
        %v1051 = vpop.permute.xlu0 %1050
        %1053 = vset.pattern.permute.xlu0 0
        %1054 = vperm.xlu0 %1053, %v960
        %v1055 = vpop.permute.xlu0 %1054
        %1057 = vset.pattern.permute.xlu0 0
        %1058 = vperm.xlu0 %1057, %v964
        %v1059 = vpop.permute.xlu0 %1058
        %1061 = vset.pattern.permute.xlu0 0
        %1062 = vperm.xlu0 %1061, %v968
        %v1063 = vpop.permute.xlu0 %1062
        %1065 = vset.pattern.permute.xlu0 0
        %1066 = vperm.xlu0 %1065, %v972
        %v1067 = vpop.permute.xlu0 %1066
        %1069 = vset.pattern.permute.xlu0 0
        %1070 = vperm.xlu0 %1069, %v976
        %v1071 = vpop.permute.xlu0 %1070
        %1073 = vset.pattern.permute.xlu0 0
        %1074 = vperm.xlu0 %1073, %v980
        %v1075 = vpop.permute.xlu0 %1074
        %1077 = vset.pattern.permute.xlu0 0
        %1078 = vperm.xlu0 %1077, %v984
        %v1079 = vpop.permute.xlu0 %1078
        %1081 = vset.pattern.permute.xlu0 0
        %1082 = vperm.xlu0 %1081, %v988
        %v1083 = vpop.permute.xlu0 %1082
        %v1085 = vmul.f32 %v991, %v313
        %v1086 = vmul.f32 %v995, %v313
        %v1087 = vmul.f32 %v999, %v313
        %v1088 = vmul.f32 %v1003, %v313
        %v1089 = vmul.f32 %v1007, %v313
        %v1090 = vmul.f32 %v1011, %v313
        %v1091 = vmul.f32 %v1015, %v313
        %v1092 = vmul.f32 %v1019, %v313
        %v1093 = vmul.f32 %v1023, %v313
        %v1094 = vmul.f32 %v1027, %v313
        %v1095 = vmul.f32 %v1031, %v313
        %v1096 = vmul.f32 %v1035, %v313
        %v1097 = vmul.f32 %v1039, %v313
        %v1098 = vmul.f32 %v1043, %v313
        %v1099 = vmul.f32 %v1047, %v313
        %v1100 = vmul.f32 %v1051, %v313
        %v1101 = vmul.f32 %v1055, %v313
        %v1102 = vmul.f32 %v1059, %v313
        %v1103 = vmul.f32 %v1063, %v313
        %v1104 = vmul.f32 %v1067, %v313
        %v1105 = vmul.f32 %v1071, %v313
        %v1106 = vmul.f32 %v1075, %v313
        %v1107 = vmul.f32 %v1079, %v313
        %v1108 = vmul.f32 %v1083, %v313
        %v1109 = vadd.f32 %v820, %v1085
        %v1110 = vadd.f32 %v821, %v1086
        %v1111 = vadd.f32 %v822, %v1087
        %v1112 = vadd.f32 %v823, %v1088
        %v1113 = vadd.f32 %v824, %v1089
        %v1114 = vadd.f32 %v825, %v1090
        %v1115 = vadd.f32 %v826, %v1091
        %v1116 = vadd.f32 %v827, %v1092
        %v1117 = vadd.f32 %v828, %v1093
        %v1118 = vadd.f32 %v829, %v1094
        %v1119 = vadd.f32 %v830, %v1095
        %v1120 = vadd.f32 %v831, %v1096
        %v1121 = vadd.f32 %v832, %v1097
        %v1122 = vadd.f32 %v833, %v1098
        %v1123 = vadd.f32 %v834, %v1099
        %v1124 = vadd.f32 %v835, %v1100
        %v1125 = vadd.f32 %v836, %v1101
        %v1126 = vadd.f32 %v837, %v1102
        %v1127 = vadd.f32 %v838, %v1103
        %v1128 = vadd.f32 %v839, %v1104
        %v1129 = vadd.f32 %v840, %v1105
        %v1130 = vadd.f32 %v841, %v1106
        %v1131 = vadd.f32 %v842, %v1107
        %v1132 = vadd.f32 %v843, %v1108
        %s1133 = scalar_lea.vmem %s1, 48
        %v1134 = vld [vmem:[%s1133] sm:$0x1]
        %v1135 = vld [vmem:[%s1133 + $0x1] sm:$0x1]
        %v1136 = vld [vmem:[%s1133 + $0x2] sm:$0x1]
        %v1137 = vld [vmem:[%s1133 + $0x3] sm:$0x1]
        %v1138 = vld [vmem:[%s1133 + $0x4] sm:$0x1]
        %v1139 = vld [vmem:[%s1133 + $0x5] sm:$0x1]
        %v1140 = vld [vmem:[%s1133 + $0x6] sm:$0x1]
        %v1141 = vld [vmem:[%s1133 + $0x7] sm:$0x1]
        %v1142 = vld [vmem:[%s1133 + $0x8] sm:$0x1]
        %v1143 = vld [vmem:[%s1133 + $0x9] sm:$0x1]
        %v1144 = vld [vmem:[%s1133 + $0xa] sm:$0x1]
        %v1145 = vld [vmem:[%s1133 + $0xb] sm:$0x1]
        %v1146 = vld [vmem:[%s1133 + $0xc] sm:$0x1]
        %v1147 = vld [vmem:[%s1133 + $0xd] sm:$0x1]
        %v1148 = vld [vmem:[%s1133 + $0xe] sm:$0x1]
        %v1149 = vld [vmem:[%s1133 + $0xf] sm:$0x1]
        %v1150 = vld [vmem:[%s1133 + $0x10] sm:$0x1]
        %v1151 = vld [vmem:[%s1133 + $0x11] sm:$0x1]
        %v1152 = vld [vmem:[%s1133 + $0x12] sm:$0x1]
        %v1153 = vld [vmem:[%s1133 + $0x13] sm:$0x1]
        %v1154 = vld [vmem:[%s1133 + $0x14] sm:$0x1]
        %v1155 = vld [vmem:[%s1133 + $0x15] sm:$0x1]
        %v1156 = vld [vmem:[%s1133 + $0x16] sm:$0x1]
        %v1157 = vld [vmem:[%s1133 + $0x17] sm:$0x1]
        %v1182 = vlaneseq
        %v1183 = vshrl.u32 %v1182, 7
        %v1184 = vsub.s32 0, %v1183
        %v1185 = vrot.slane %v1134, %v1184
        %v1186 = vlaneseq
        %v1187 = vshrl.u32 %v1186, 7
        %v1188 = vsub.s32 0, %v1187
        %v1189 = vrot.slane %v1135, %v1188
        %v1190 = vlaneseq
        %v1191 = vshrl.u32 %v1190, 7
        %v1192 = vsub.s32 0, %v1191
        %v1193 = vrot.slane %v1136, %v1192
        %v1194 = vlaneseq
        %v1195 = vshrl.u32 %v1194, 7
        %v1196 = vsub.s32 0, %v1195
        %v1197 = vrot.slane %v1137, %v1196
        %v1198 = vlaneseq
        %v1199 = vshrl.u32 %v1198, 7
        %v1200 = vsub.s32 0, %v1199
        %v1201 = vrot.slane %v1138, %v1200
        %v1202 = vlaneseq
        %v1203 = vshrl.u32 %v1202, 7
        %v1204 = vsub.s32 0, %v1203
        %v1205 = vrot.slane %v1139, %v1204
        %v1206 = vlaneseq
        %v1207 = vshrl.u32 %v1206, 7
        %v1208 = vsub.s32 0, %v1207
        %v1209 = vrot.slane %v1140, %v1208
        %v1210 = vlaneseq
        %v1211 = vshrl.u32 %v1210, 7
        %v1212 = vsub.s32 0, %v1211
        %v1213 = vrot.slane %v1141, %v1212
        %v1214 = vlaneseq
        %v1215 = vshrl.u32 %v1214, 7
        %v1216 = vsub.s32 0, %v1215
        %v1217 = vrot.slane %v1142, %v1216
        %v1218 = vlaneseq
        %v1219 = vshrl.u32 %v1218, 7
        %v1220 = vsub.s32 0, %v1219
        %v1221 = vrot.slane %v1143, %v1220
        %v1222 = vlaneseq
        %v1223 = vshrl.u32 %v1222, 7
        %v1224 = vsub.s32 0, %v1223
        %v1225 = vrot.slane %v1144, %v1224
        %v1226 = vlaneseq
        %v1227 = vshrl.u32 %v1226, 7
        %v1228 = vsub.s32 0, %v1227
        %v1229 = vrot.slane %v1145, %v1228
        %v1230 = vlaneseq
        %v1231 = vshrl.u32 %v1230, 7
        %v1232 = vsub.s32 0, %v1231
        %v1233 = vrot.slane %v1146, %v1232
        %v1234 = vlaneseq
        %v1235 = vshrl.u32 %v1234, 7
        %v1236 = vsub.s32 0, %v1235
        %v1237 = vrot.slane %v1147, %v1236
        %v1238 = vlaneseq
        %v1239 = vshrl.u32 %v1238, 7
        %v1240 = vsub.s32 0, %v1239
        %v1241 = vrot.slane %v1148, %v1240
        %v1242 = vlaneseq
        %v1243 = vshrl.u32 %v1242, 7
        %v1244 = vsub.s32 0, %v1243
        %v1245 = vrot.slane %v1149, %v1244
        %v1246 = vlaneseq
        %v1247 = vshrl.u32 %v1246, 7
        %v1248 = vsub.s32 0, %v1247
        %v1249 = vrot.slane %v1150, %v1248
        %v1250 = vlaneseq
        %v1251 = vshrl.u32 %v1250, 7
        %v1252 = vsub.s32 0, %v1251
        %v1253 = vrot.slane %v1151, %v1252
        %v1254 = vlaneseq
        %v1255 = vshrl.u32 %v1254, 7
        %v1256 = vsub.s32 0, %v1255
        %v1257 = vrot.slane %v1152, %v1256
        %v1258 = vlaneseq
        %v1259 = vshrl.u32 %v1258, 7
        %v1260 = vsub.s32 0, %v1259
        %v1261 = vrot.slane %v1153, %v1260
        %v1262 = vlaneseq
        %v1263 = vshrl.u32 %v1262, 7
        %v1264 = vsub.s32 0, %v1263
        %v1265 = vrot.slane %v1154, %v1264
        %v1266 = vlaneseq
        %v1267 = vshrl.u32 %v1266, 7
        %v1268 = vsub.s32 0, %v1267
        %v1269 = vrot.slane %v1155, %v1268
        %v1270 = vlaneseq
        %v1271 = vshrl.u32 %v1270, 7
        %v1272 = vsub.s32 0, %v1271
        %v1273 = vrot.slane %v1156, %v1272
        %v1274 = vlaneseq
        %v1275 = vshrl.u32 %v1274, 7
        %v1276 = vsub.s32 0, %v1275
        %v1277 = vrot.slane %v1157, %v1276
        %1278 = vset.pattern.permute.xlu0 0
        %1279 = vperm.xlu0 %1278, %v1185
        %v1280 = vpop.permute.xlu0 %1279
        %1282 = vset.pattern.permute.xlu0 0
        %1283 = vperm.xlu0 %1282, %v1189
        %v1284 = vpop.permute.xlu0 %1283
        %1286 = vset.pattern.permute.xlu0 0
        %1287 = vperm.xlu0 %1286, %v1193
        %v1288 = vpop.permute.xlu0 %1287
        %1290 = vset.pattern.permute.xlu0 0
        %1291 = vperm.xlu0 %1290, %v1197
        %v1292 = vpop.permute.xlu0 %1291
        %1294 = vset.pattern.permute.xlu0 0
        %1295 = vperm.xlu0 %1294, %v1201
        %v1296 = vpop.permute.xlu0 %1295
        %1298 = vset.pattern.permute.xlu0 0
        %1299 = vperm.xlu0 %1298, %v1205
        %v1300 = vpop.permute.xlu0 %1299
        %1302 = vset.pattern.permute.xlu0 0
        %1303 = vperm.xlu0 %1302, %v1209
        %v1304 = vpop.permute.xlu0 %1303
        %1306 = vset.pattern.permute.xlu0 0
        %1307 = vperm.xlu0 %1306, %v1213
        %v1308 = vpop.permute.xlu0 %1307
        %1310 = vset.pattern.permute.xlu0 0
        %1311 = vperm.xlu0 %1310, %v1217
        %v1312 = vpop.permute.xlu0 %1311
        %1314 = vset.pattern.permute.xlu0 0
        %1315 = vperm.xlu0 %1314, %v1221
        %v1316 = vpop.permute.xlu0 %1315
        %1318 = vset.pattern.permute.xlu0 0
        %1319 = vperm.xlu0 %1318, %v1225
        %v1320 = vpop.permute.xlu0 %1319
        %1322 = vset.pattern.permute.xlu0 0
        %1323 = vperm.xlu0 %1322, %v1229
        %v1324 = vpop.permute.xlu0 %1323
        %1326 = vset.pattern.permute.xlu0 0
        %1327 = vperm.xlu0 %1326, %v1233
        %v1328 = vpop.permute.xlu0 %1327
        %1330 = vset.pattern.permute.xlu0 0
        %1331 = vperm.xlu0 %1330, %v1237
        %v1332 = vpop.permute.xlu0 %1331
        %1334 = vset.pattern.permute.xlu0 0
        %1335 = vperm.xlu0 %1334, %v1241
        %v1336 = vpop.permute.xlu0 %1335
        %1338 = vset.pattern.permute.xlu0 0
        %1339 = vperm.xlu0 %1338, %v1245
        %v1340 = vpop.permute.xlu0 %1339
        %1342 = vset.pattern.permute.xlu0 0
        %1343 = vperm.xlu0 %1342, %v1249
        %v1344 = vpop.permute.xlu0 %1343
        %1346 = vset.pattern.permute.xlu0 0
        %1347 = vperm.xlu0 %1346, %v1253
        %v1348 = vpop.permute.xlu0 %1347
        %1350 = vset.pattern.permute.xlu0 0
        %1351 = vperm.xlu0 %1350, %v1257
        %v1352 = vpop.permute.xlu0 %1351
        %1354 = vset.pattern.permute.xlu0 0
        %1355 = vperm.xlu0 %1354, %v1261
        %v1356 = vpop.permute.xlu0 %1355
        %1358 = vset.pattern.permute.xlu0 0
        %1359 = vperm.xlu0 %1358, %v1265
        %v1360 = vpop.permute.xlu0 %1359
        %1362 = vset.pattern.permute.xlu0 0
        %1363 = vperm.xlu0 %1362, %v1269
        %v1364 = vpop.permute.xlu0 %1363
        %1366 = vset.pattern.permute.xlu0 0
        %1367 = vperm.xlu0 %1366, %v1273
        %v1368 = vpop.permute.xlu0 %1367
        %1370 = vset.pattern.permute.xlu0 0
        %1371 = vperm.xlu0 %1370, %v1277
        %v1372 = vpop.permute.xlu0 %1371
        %v1374 = vmul.f32 %v1280, %v314
        %v1375 = vmul.f32 %v1284, %v314
        %v1376 = vmul.f32 %v1288, %v314
        %v1377 = vmul.f32 %v1292, %v314
        %v1378 = vmul.f32 %v1296, %v314
        %v1379 = vmul.f32 %v1300, %v314
        %v1380 = vmul.f32 %v1304, %v314
        %v1381 = vmul.f32 %v1308, %v314
        %v1382 = vmul.f32 %v1312, %v314
        %v1383 = vmul.f32 %v1316, %v314
        %v1384 = vmul.f32 %v1320, %v314
        %v1385 = vmul.f32 %v1324, %v314
        %v1386 = vmul.f32 %v1328, %v314
        %v1387 = vmul.f32 %v1332, %v314
        %v1388 = vmul.f32 %v1336, %v314
        %v1389 = vmul.f32 %v1340, %v314
        %v1390 = vmul.f32 %v1344, %v314
        %v1391 = vmul.f32 %v1348, %v314
        %v1392 = vmul.f32 %v1352, %v314
        %v1393 = vmul.f32 %v1356, %v314
        %v1394 = vmul.f32 %v1360, %v314
        %v1395 = vmul.f32 %v1364, %v314
        %v1396 = vmul.f32 %v1368, %v314
        %v1397 = vmul.f32 %v1372, %v314
        %v1398 = vadd.f32 %v1109, %v1374
        %v1399 = vadd.f32 %v1110, %v1375
        %v1400 = vadd.f32 %v1111, %v1376
        %v1401 = vadd.f32 %v1112, %v1377
        %v1402 = vadd.f32 %v1113, %v1378
        %v1403 = vadd.f32 %v1114, %v1379
        %v1404 = vadd.f32 %v1115, %v1380
        %v1405 = vadd.f32 %v1116, %v1381
        %v1406 = vadd.f32 %v1117, %v1382
        %v1407 = vadd.f32 %v1118, %v1383
        %v1408 = vadd.f32 %v1119, %v1384
        %v1409 = vadd.f32 %v1120, %v1385
        %v1410 = vadd.f32 %v1121, %v1386
        %v1411 = vadd.f32 %v1122, %v1387
        %v1412 = vadd.f32 %v1123, %v1388
        %v1413 = vadd.f32 %v1124, %v1389
        %v1414 = vadd.f32 %v1125, %v1390
        %v1415 = vadd.f32 %v1126, %v1391
        %v1416 = vadd.f32 %v1127, %v1392
        %v1417 = vadd.f32 %v1128, %v1393
        %v1418 = vadd.f32 %v1129, %v1394
        %v1419 = vadd.f32 %v1130, %v1395
        %v1420 = vadd.f32 %v1131, %v1396
        %v1421 = vadd.f32 %v1132, %v1397
        %s1422 = scalar_lea.vmem %s1, 72
        %v1423 = vld [vmem:[%s1422] sm:$0x1]
        %v1424 = vld [vmem:[%s1422 + $0x1] sm:$0x1]
        %v1425 = vld [vmem:[%s1422 + $0x2] sm:$0x1]
        %v1426 = vld [vmem:[%s1422 + $0x3] sm:$0x1]
        %v1427 = vld [vmem:[%s1422 + $0x4] sm:$0x1]
        %v1428 = vld [vmem:[%s1422 + $0x5] sm:$0x1]
        %v1429 = vld [vmem:[%s1422 + $0x6] sm:$0x1]
        %v1430 = vld [vmem:[%s1422 + $0x7] sm:$0x1]
        %v1431 = vld [vmem:[%s1422 + $0x8] sm:$0x1]
        %v1432 = vld [vmem:[%s1422 + $0x9] sm:$0x1]
        %v1433 = vld [vmem:[%s1422 + $0xa] sm:$0x1]
        %v1434 = vld [vmem:[%s1422 + $0xb] sm:$0x1]
        %v1435 = vld [vmem:[%s1422 + $0xc] sm:$0x1]
        %v1436 = vld [vmem:[%s1422 + $0xd] sm:$0x1]
        %v1437 = vld [vmem:[%s1422 + $0xe] sm:$0x1]
        %v1438 = vld [vmem:[%s1422 + $0xf] sm:$0x1]
        %v1439 = vld [vmem:[%s1422 + $0x10] sm:$0x1]
        %v1440 = vld [vmem:[%s1422 + $0x11] sm:$0x1]
        %v1441 = vld [vmem:[%s1422 + $0x12] sm:$0x1]
        %v1442 = vld [vmem:[%s1422 + $0x13] sm:$0x1]
        %v1443 = vld [vmem:[%s1422 + $0x14] sm:$0x1]
        %v1444 = vld [vmem:[%s1422 + $0x15] sm:$0x1]
        %v1445 = vld [vmem:[%s1422 + $0x16] sm:$0x1]
        %v1446 = vld [vmem:[%s1422 + $0x17] sm:$0x1]
        %v1471 = vlaneseq
        %v1472 = vshrl.u32 %v1471, 7
        %v1473 = vsub.s32 0, %v1472
        %v1474 = vrot.slane %v1423, %v1473
        %v1475 = vlaneseq
        %v1476 = vshrl.u32 %v1475, 7
        %v1477 = vsub.s32 0, %v1476
        %v1478 = vrot.slane %v1424, %v1477
        %v1479 = vlaneseq
        %v1480 = vshrl.u32 %v1479, 7
        %v1481 = vsub.s32 0, %v1480
        %v1482 = vrot.slane %v1425, %v1481
        %v1483 = vlaneseq
        %v1484 = vshrl.u32 %v1483, 7
        %v1485 = vsub.s32 0, %v1484
        %v1486 = vrot.slane %v1426, %v1485
        %v1487 = vlaneseq
        %v1488 = vshrl.u32 %v1487, 7
        %v1489 = vsub.s32 0, %v1488
        %v1490 = vrot.slane %v1427, %v1489
        %v1491 = vlaneseq
        %v1492 = vshrl.u32 %v1491, 7
        %v1493 = vsub.s32 0, %v1492
        %v1494 = vrot.slane %v1428, %v1493
        %v1495 = vlaneseq
        %v1496 = vshrl.u32 %v1495, 7
        %v1497 = vsub.s32 0, %v1496
        %v1498 = vrot.slane %v1429, %v1497
        %v1499 = vlaneseq
        %v1500 = vshrl.u32 %v1499, 7
        %v1501 = vsub.s32 0, %v1500
        %v1502 = vrot.slane %v1430, %v1501
        %v1503 = vlaneseq
        %v1504 = vshrl.u32 %v1503, 7
        %v1505 = vsub.s32 0, %v1504
        %v1506 = vrot.slane %v1431, %v1505
        %v1507 = vlaneseq
        %v1508 = vshrl.u32 %v1507, 7
        %v1509 = vsub.s32 0, %v1508
        %v1510 = vrot.slane %v1432, %v1509
        %v1511 = vlaneseq
        %v1512 = vshrl.u32 %v1511, 7
        %v1513 = vsub.s32 0, %v1512
        %v1514 = vrot.slane %v1433, %v1513
        %v1515 = vlaneseq
        %v1516 = vshrl.u32 %v1515, 7
        %v1517 = vsub.s32 0, %v1516
        %v1518 = vrot.slane %v1434, %v1517
        %v1519 = vlaneseq
        %v1520 = vshrl.u32 %v1519, 7
        %v1521 = vsub.s32 0, %v1520
        %v1522 = vrot.slane %v1435, %v1521
        %v1523 = vlaneseq
        %v1524 = vshrl.u32 %v1523, 7
        %v1525 = vsub.s32 0, %v1524
        %v1526 = vrot.slane %v1436, %v1525
        %v1527 = vlaneseq
        %v1528 = vshrl.u32 %v1527, 7
        %v1529 = vsub.s32 0, %v1528
        %v1530 = vrot.slane %v1437, %v1529
        %v1531 = vlaneseq
        %v1532 = vshrl.u32 %v1531, 7
        %v1533 = vsub.s32 0, %v1532
        %v1534 = vrot.slane %v1438, %v1533
        %v1535 = vlaneseq
        %v1536 = vshrl.u32 %v1535, 7
        %v1537 = vsub.s32 0, %v1536
        %v1538 = vrot.slane %v1439, %v1537
        %v1539 = vlaneseq
        %v1540 = vshrl.u32 %v1539, 7
        %v1541 = vsub.s32 0, %v1540
        %v1542 = vrot.slane %v1440, %v1541
        %v1543 = vlaneseq
        %v1544 = vshrl.u32 %v1543, 7
        %v1545 = vsub.s32 0, %v1544
        %v1546 = vrot.slane %v1441, %v1545
        %v1547 = vlaneseq
        %v1548 = vshrl.u32 %v1547, 7
        %v1549 = vsub.s32 0, %v1548
        %v1550 = vrot.slane %v1442, %v1549
        %v1551 = vlaneseq
        %v1552 = vshrl.u32 %v1551, 7
        %v1553 = vsub.s32 0, %v1552
        %v1554 = vrot.slane %v1443, %v1553
        %v1555 = vlaneseq
        %v1556 = vshrl.u32 %v1555, 7
        %v1557 = vsub.s32 0, %v1556
        %v1558 = vrot.slane %v1444, %v1557
        %v1559 = vlaneseq
        %v1560 = vshrl.u32 %v1559, 7
        %v1561 = vsub.s32 0, %v1560
        %v1562 = vrot.slane %v1445, %v1561
        %v1563 = vlaneseq
        %v1564 = vshrl.u32 %v1563, 7
        %v1565 = vsub.s32 0, %v1564
        %v1566 = vrot.slane %v1446, %v1565
        %1567 = vset.pattern.permute.xlu0 0
        %1568 = vperm.xlu0 %1567, %v1474
        %v1569 = vpop.permute.xlu0 %1568
        %1571 = vset.pattern.permute.xlu0 0
        %1572 = vperm.xlu0 %1571, %v1478
        %v1573 = vpop.permute.xlu0 %1572
        %1575 = vset.pattern.permute.xlu0 0
        %1576 = vperm.xlu0 %1575, %v1482
        %v1577 = vpop.permute.xlu0 %1576
        %1579 = vset.pattern.permute.xlu0 0
        %1580 = vperm.xlu0 %1579, %v1486
        %v1581 = vpop.permute.xlu0 %1580
        %1583 = vset.pattern.permute.xlu0 0
        %1584 = vperm.xlu0 %1583, %v1490
        %v1585 = vpop.permute.xlu0 %1584
        %1587 = vset.pattern.permute.xlu0 0
        %1588 = vperm.xlu0 %1587, %v1494
        %v1589 = vpop.permute.xlu0 %1588
        %1591 = vset.pattern.permute.xlu0 0
        %1592 = vperm.xlu0 %1591, %v1498
        %v1593 = vpop.permute.xlu0 %1592
        %1595 = vset.pattern.permute.xlu0 0
        %1596 = vperm.xlu0 %1595, %v1502
        %v1597 = vpop.permute.xlu0 %1596
        %1599 = vset.pattern.permute.xlu0 0
        %1600 = vperm.xlu0 %1599, %v1506
        %v1601 = vpop.permute.xlu0 %1600
        %1603 = vset.pattern.permute.xlu0 0
        %1604 = vperm.xlu0 %1603, %v1510
        %v1605 = vpop.permute.xlu0 %1604
        %1607 = vset.pattern.permute.xlu0 0
        %1608 = vperm.xlu0 %1607, %v1514
        %v1609 = vpop.permute.xlu0 %1608
        %1611 = vset.pattern.permute.xlu0 0
        %1612 = vperm.xlu0 %1611, %v1518
        %v1613 = vpop.permute.xlu0 %1612
        %1615 = vset.pattern.permute.xlu0 0
        %1616 = vperm.xlu0 %1615, %v1522
        %v1617 = vpop.permute.xlu0 %1616
        %1619 = vset.pattern.permute.xlu0 0
        %1620 = vperm.xlu0 %1619, %v1526
        %v1621 = vpop.permute.xlu0 %1620
        %1623 = vset.pattern.permute.xlu0 0
        %1624 = vperm.xlu0 %1623, %v1530
        %v1625 = vpop.permute.xlu0 %1624
        %1627 = vset.pattern.permute.xlu0 0
        %1628 = vperm.xlu0 %1627, %v1534
        %v1629 = vpop.permute.xlu0 %1628
        %1631 = vset.pattern.permute.xlu0 0
        %1632 = vperm.xlu0 %1631, %v1538
        %v1633 = vpop.permute.xlu0 %1632
        %1635 = vset.pattern.permute.xlu0 0
        %1636 = vperm.xlu0 %1635, %v1542
        %v1637 = vpop.permute.xlu0 %1636
        %1639 = vset.pattern.permute.xlu0 0
        %1640 = vperm.xlu0 %1639, %v1546
        %v1641 = vpop.permute.xlu0 %1640
        %1643 = vset.pattern.permute.xlu0 0
        %1644 = vperm.xlu0 %1643, %v1550
        %v1645 = vpop.permute.xlu0 %1644
        %1647 = vset.pattern.permute.xlu0 0
        %1648 = vperm.xlu0 %1647, %v1554
        %v1649 = vpop.permute.xlu0 %1648
        %1651 = vset.pattern.permute.xlu0 0
        %1652 = vperm.xlu0 %1651, %v1558
        %v1653 = vpop.permute.xlu0 %1652
        %1655 = vset.pattern.permute.xlu0 0
        %1656 = vperm.xlu0 %1655, %v1562
        %v1657 = vpop.permute.xlu0 %1656
        %1659 = vset.pattern.permute.xlu0 0
        %1660 = vperm.xlu0 %1659, %v1566
        %v1661 = vpop.permute.xlu0 %1660
        %v1663 = vmul.f32 %v1569, %v315
        %v1664 = vmul.f32 %v1573, %v315
        %v1665 = vmul.f32 %v1577, %v315
        %v1666 = vmul.f32 %v1581, %v315
        %v1667 = vmul.f32 %v1585, %v315
        %v1668 = vmul.f32 %v1589, %v315
        %v1669 = vmul.f32 %v1593, %v315
        %v1670 = vmul.f32 %v1597, %v315
        %v1671 = vmul.f32 %v1601, %v315
        %v1672 = vmul.f32 %v1605, %v315
        %v1673 = vmul.f32 %v1609, %v315
        %v1674 = vmul.f32 %v1613, %v315
        %v1675 = vmul.f32 %v1617, %v315
        %v1676 = vmul.f32 %v1621, %v315
        %v1677 = vmul.f32 %v1625, %v315
        %v1678 = vmul.f32 %v1629, %v315
        %v1679 = vmul.f32 %v1633, %v315
        %v1680 = vmul.f32 %v1637, %v315
        %v1681 = vmul.f32 %v1641, %v315
        %v1682 = vmul.f32 %v1645, %v315
        %v1683 = vmul.f32 %v1649, %v315
        %v1684 = vmul.f32 %v1653, %v315
        %v1685 = vmul.f32 %v1657, %v315
        %v1686 = vmul.f32 %v1661, %v315
        %v1687 = vadd.f32 %v1398, %v1663
        %v1688 = vadd.f32 %v1399, %v1664
        %v1689 = vadd.f32 %v1400, %v1665
        %v1690 = vadd.f32 %v1401, %v1666
        %v1691 = vadd.f32 %v1402, %v1667
        %v1692 = vadd.f32 %v1403, %v1668
        %v1693 = vadd.f32 %v1404, %v1669
        %v1694 = vadd.f32 %v1405, %v1670
        %v1695 = vadd.f32 %v1406, %v1671
        %v1696 = vadd.f32 %v1407, %v1672
        %v1697 = vadd.f32 %v1408, %v1673
        %v1698 = vadd.f32 %v1409, %v1674
        %v1699 = vadd.f32 %v1410, %v1675
        %v1700 = vadd.f32 %v1411, %v1676
        %v1701 = vadd.f32 %v1412, %v1677
        %v1702 = vadd.f32 %v1413, %v1678
        %v1703 = vadd.f32 %v1414, %v1679
        %v1704 = vadd.f32 %v1415, %v1680
        %v1705 = vadd.f32 %v1416, %v1681
        %v1706 = vadd.f32 %v1417, %v1682
        %v1707 = vadd.f32 %v1418, %v1683
        %v1708 = vadd.f32 %v1419, %v1684
        %v1709 = vadd.f32 %v1420, %v1685
        %v1710 = vadd.f32 %v1421, %v1686
        %v1711 = vmax.f32 %v1687, 0.0
        %v1712 = vmax.f32 %v1688, 0.0
        %v1713 = vmax.f32 %v1689, 0.0
        %v1714 = vmax.f32 %v1690, 0.0
        %v1715 = vmax.f32 %v1691, 0.0
        %v1716 = vmax.f32 %v1692, 0.0
        %v1717 = vmax.f32 %v1693, 0.0
        %v1718 = vmax.f32 %v1694, 0.0
        %v1719 = vmax.f32 %v1695, 0.0
        %v1720 = vmax.f32 %v1696, 0.0
        %v1721 = vmax.f32 %v1697, 0.0
        %v1722 = vmax.f32 %v1698, 0.0
        %v1723 = vmax.f32 %v1699, 0.0
        %v1724 = vmax.f32 %v1700, 0.0
        %v1725 = vmax.f32 %v1701, 0.0
        %v1726 = vmax.f32 %v1702, 0.0
        %v1727 = vmax.f32 %v1703, 0.0
        %v1728 = vmax.f32 %v1704, 0.0
        %v1729 = vmax.f32 %v1705, 0.0
        %v1730 = vmax.f32 %v1706, 0.0
        %v1731 = vmax.f32 %v1707, 0.0
        %v1732 = vmax.f32 %v1708, 0.0
        %v1733 = vmax.f32 %v1709, 0.0
        %v1734 = vmax.f32 %v1710, 0.0
        %v1735 = vmin.f32 %v1711, 6.0
        %v1736 = vmin.f32 %v1712, 6.0
        %v1737 = vmin.f32 %v1713, 6.0
        %v1738 = vmin.f32 %v1714, 6.0
        %v1739 = vmin.f32 %v1715, 6.0
        %v1740 = vmin.f32 %v1716, 6.0
        %v1741 = vmin.f32 %v1717, 6.0
        %v1742 = vmin.f32 %v1718, 6.0
        %v1743 = vmin.f32 %v1719, 6.0
        %v1744 = vmin.f32 %v1720, 6.0
        %v1745 = vmin.f32 %v1721, 6.0
        %v1746 = vmin.f32 %v1722, 6.0
        %v1747 = vmin.f32 %v1723, 6.0
        %v1748 = vmin.f32 %v1724, 6.0
        %v1749 = vmin.f32 %v1725, 6.0
        %v1750 = vmin.f32 %v1726, 6.0
        %v1751 = vmin.f32 %v1727, 6.0
        %v1752 = vmin.f32 %v1728, 6.0
        %v1753 = vmin.f32 %v1729, 6.0
        %v1754 = vmin.f32 %v1730, 6.0
        %v1755 = vmin.f32 %v1731, 6.0
        %v1756 = vmin.f32 %v1732, 6.0
        %v1757 = vmin.f32 %v1733, 6.0
        %v1758 = vmin.f32 %v1734, 6.0
        %1783 = vrot.lane.b32.xlu0 %v1735, 1
        %v1784 = vpop.permute.xlu0 %1783
        %1785 = vrot.lane.b32.xlu0 %v1736, 1
        %v1786 = vpop.permute.xlu0 %1785
        %1787 = vrot.lane.b32.xlu0 %v1737, 1
        %v1788 = vpop.permute.xlu0 %1787
        %1789 = vrot.lane.b32.xlu0 %v1738, 1
        %v1790 = vpop.permute.xlu0 %1789
        %1791 = vrot.lane.b32.xlu0 %v1739, 1
        %v1792 = vpop.permute.xlu0 %1791
        %1793 = vrot.lane.b32.xlu0 %v1740, 1
        %v1794 = vpop.permute.xlu0 %1793
        %1795 = vrot.lane.b32.xlu0 %v1741, 1
        %v1796 = vpop.permute.xlu0 %1795
        %1797 = vrot.lane.b32.xlu0 %v1742, 1
        %v1798 = vpop.permute.xlu0 %1797
        %1799 = vrot.lane.b32.xlu0 %v1743, 1
        %v1800 = vpop.permute.xlu0 %1799
        %1801 = vrot.lane.b32.xlu0 %v1744, 1
        %v1802 = vpop.permute.xlu0 %1801
        %1803 = vrot.lane.b32.xlu0 %v1745, 1
        %v1804 = vpop.permute.xlu0 %1803
        %1805 = vrot.lane.b32.xlu0 %v1746, 1
        %v1806 = vpop.permute.xlu0 %1805
        %1807 = vrot.lane.b32.xlu0 %v1747, 1
        %v1808 = vpop.permute.xlu0 %1807
        %1809 = vrot.lane.b32.xlu0 %v1748, 1
        %v1810 = vpop.permute.xlu0 %1809
        %1811 = vrot.lane.b32.xlu0 %v1749, 1
        %v1812 = vpop.permute.xlu0 %1811
        %1813 = vrot.lane.b32.xlu0 %v1750, 1
        %v1814 = vpop.permute.xlu0 %1813
        %1815 = vrot.lane.b32.xlu0 %v1751, 1
        %v1816 = vpop.permute.xlu0 %1815
        %1817 = vrot.lane.b32.xlu0 %v1752, 1
        %v1818 = vpop.permute.xlu0 %1817
        %1819 = vrot.lane.b32.xlu0 %v1753, 1
        %v1820 = vpop.permute.xlu0 %1819
        %1821 = vrot.lane.b32.xlu0 %v1754, 1
        %v1822 = vpop.permute.xlu0 %1821
        %1823 = vrot.lane.b32.xlu0 %v1755, 1
        %v1824 = vpop.permute.xlu0 %1823
        %1825 = vrot.lane.b32.xlu0 %v1756, 1
        %v1826 = vpop.permute.xlu0 %1825
        %1827 = vrot.lane.b32.xlu0 %v1757, 1
        %v1828 = vpop.permute.xlu0 %1827
        %1829 = vrot.lane.b32.xlu0 %v1758, 1
        %v1830 = vpop.permute.xlu0 %1829
        %vm1855 = vcmask 138248
        %1856 = vst.msk [vmem:[#allocation3 + $0x1] sm:$0xff] %vm1855, %v1784
        %1857 = vst.msk [vmem:[#allocation3 + $0x11] sm:$0xff] %vm1855, %v1786
        %1858 = vst.msk [vmem:[#allocation3 + $0x21] sm:$0xff] %vm1855, %v1788
        %1859 = vst.msk [vmem:[#allocation3 + $0x31] sm:$0xff] %vm1855, %v1790
        %1860 = vst.msk [vmem:[#allocation3 + $0x41] sm:$0xff] %vm1855, %v1792
        %1861 = vst.msk [vmem:[#allocation3 + $0x51] sm:$0xff] %vm1855, %v1794
        %1862 = vst.msk [vmem:[#allocation3 + $0x61] sm:$0xff] %vm1855, %v1796
        %1863 = vst.msk [vmem:[#allocation3 + $0x71] sm:$0xff] %vm1855, %v1798
        %1864 = vst.msk [vmem:[#allocation3 + $0x81] sm:$0xff] %vm1855, %v1800
        %1865 = vst.msk [vmem:[#allocation3 + $0x91] sm:$0xff] %vm1855, %v1802
        %1866 = vst.msk [vmem:[#allocation3 + $0xa1] sm:$0xff] %vm1855, %v1804
        %1867 = vst.msk [vmem:[#allocation3 + $0xb1] sm:$0xff] %vm1855, %v1806
        %1868 = vst.msk [vmem:[#allocation3 + $0xc1] sm:$0xff] %vm1855, %v1808
        %1869 = vst.msk [vmem:[#allocation3 + $0xd1] sm:$0xff] %vm1855, %v1810
        %1870 = vst.msk [vmem:[#allocation3 + $0xe1] sm:$0xff] %vm1855, %v1812
        %1871 = vst.msk [vmem:[#allocation3 + $0xf1] sm:$0xff] %vm1855, %v1814
        %1872 = vst.msk [vmem:[#allocation3 + $0x101] sm:$0xff] %vm1855, %v1816
        %1873 = vst.msk [vmem:[#allocation3 + $0x111] sm:$0xff] %vm1855, %v1818
        %1874 = vst.msk [vmem:[#allocation3 + $0x121] sm:$0xff] %vm1855, %v1820
        %1875 = vst.msk [vmem:[#allocation3 + $0x131] sm:$0xff] %vm1855, %v1822
        %1876 = vst.msk [vmem:[#allocation3 + $0x141] sm:$0xff] %vm1855, %v1824
        %1877 = vst.msk [vmem:[#allocation3 + $0x151] sm:$0xff] %vm1855, %v1826
        %1878 = vst.msk [vmem:[#allocation3 + $0x161] sm:$0xff] %vm1855, %v1828
        %1879 = vst.msk [vmem:[#allocation3 + $0x171] sm:$0xff] %vm1855, %v1830
        %p1880 = scmp.gt.s32.totalorder %s292, 0
        %s1881 = scalar_select %p1880, %s292, 0
        %p1882 = scmp.lt.s32.totalorder %s293, 15
        %s1883 = scalar_select %p1882, %s293, 15
        %p1884 = scmp.ge.s32.totalorder %s292, 0
        %s1885 = scalar_select %p1884, 1, 0
        %s1886 = scvt.s32.f32 %s1885
        %p1887 = scmp.le.s32.totalorder %s293, 15
        %s1888 = scalar_select %p1887, 1, 0
        %s1889 = scvt.s32.f32 %s1888
        %s1890 = scalar_lea.vmem [#allocation2], %s1881
        %v1891 = vld [vmem:[%s1890] sm:$0x1]
        %v1892 = vld [vmem:[%s1890 + $0x10] sm:$0x1]
        %v1893 = vld [vmem:[%s1890 + $0x20] sm:$0x1]
        %v1894 = vld [vmem:[%s1890 + $0x30] sm:$0x1]
        %s1895 = scalar_lea.vmem [#allocation2], %s1883
        %v1896 = vld [vmem:[%s1895] sm:$0x1]
        %v1897 = vld [vmem:[%s1895 + $0x10] sm:$0x1]
        %v1898 = vld [vmem:[%s1895 + $0x20] sm:$0x1]
        %v1899 = vld [vmem:[%s1895 + $0x30] sm:$0x1]
        %v1900 = vld [vmem:[%s2] sm:$0x1]
        %v1901 = vld [vmem:[%s2 + $0x1] sm:$0x1]
        %v1902 = vld [vmem:[%s2 + $0x2] sm:$0x1]
        %v1903 = vld [vmem:[%s2 + $0x3] sm:$0x1]
        %v1904 = vld [vmem:[%s2 + $0x4] sm:$0x1]
        %v1905 = vld [vmem:[%s2 + $0x5] sm:$0x1]
        %v1906 = vld [vmem:[%s2 + $0x6] sm:$0x1]
        %v1907 = vld [vmem:[%s2 + $0x7] sm:$0x1]
        %v1908 = vld [vmem:[%s2 + $0x8] sm:$0x1]
        %v1909 = vld [vmem:[%s2 + $0x9] sm:$0x1]
        %v1910 = vld [vmem:[%s2 + $0xa] sm:$0x1]
        %v1911 = vld [vmem:[%s2 + $0xb] sm:$0x1]
        %v1912 = vld [vmem:[%s2 + $0xc] sm:$0x1]
        %v1913 = vld [vmem:[%s2 + $0xd] sm:$0x1]
        %v1914 = vld [vmem:[%s2 + $0xe] sm:$0x1]
        %v1915 = vld [vmem:[%s2 + $0xf] sm:$0x1]
        %v1916 = vld [vmem:[%s2 + $0x10] sm:$0x1]
        %v1917 = vld [vmem:[%s2 + $0x11] sm:$0x1]
        %v1918 = vld [vmem:[%s2 + $0x12] sm:$0x1]
        %v1919 = vld [vmem:[%s2 + $0x13] sm:$0x1]
        %v1920 = vld [vmem:[%s2 + $0x14] sm:$0x1]
        %v1921 = vld [vmem:[%s2 + $0x15] sm:$0x1]
        %v1922 = vld [vmem:[%s2 + $0x16] sm:$0x1]
        %v1923 = vld [vmem:[%s2 + $0x17] sm:$0x1]
        %v1924 = vld [vmem:[%s1] sm:$0x1]
        %v1925 = vld [vmem:[%s1 + $0x1] sm:$0x1]
        %v1926 = vld [vmem:[%s1 + $0x2] sm:$0x1]
        %v1927 = vld [vmem:[%s1 + $0x3] sm:$0x1]
        %v1928 = vld [vmem:[%s1 + $0x4] sm:$0x1]
        %v1929 = vld [vmem:[%s1 + $0x5] sm:$0x1]
        %v1930 = vld [vmem:[%s1 + $0x6] sm:$0x1]
        %v1931 = vld [vmem:[%s1 + $0x7] sm:$0x1]
        %v1932 = vld [vmem:[%s1 + $0x8] sm:$0x1]
        %v1933 = vld [vmem:[%s1 + $0x9] sm:$0x1]
        %v1934 = vld [vmem:[%s1 + $0xa] sm:$0x1]
        %v1935 = vld [vmem:[%s1 + $0xb] sm:$0x1]
        %v1936 = vld [vmem:[%s1 + $0xc] sm:$0x1]
        %v1937 = vld [vmem:[%s1 + $0xd] sm:$0x1]
        %v1938 = vld [vmem:[%s1 + $0xe] sm:$0x1]
        %v1939 = vld [vmem:[%s1 + $0xf] sm:$0x1]
        %v1940 = vld [vmem:[%s1 + $0x10] sm:$0x1]
        %v1941 = vld [vmem:[%s1 + $0x11] sm:$0x1]
        %v1942 = vld [vmem:[%s1 + $0x12] sm:$0x1]
        %v1943 = vld [vmem:[%s1 + $0x13] sm:$0x1]
        %v1944 = vld [vmem:[%s1 + $0x14] sm:$0x1]
        %v1945 = vld [vmem:[%s1 + $0x15] sm:$0x1]
        %v1946 = vld [vmem:[%s1 + $0x16] sm:$0x1]
        %v1947 = vld [vmem:[%s1 + $0x17] sm:$0x1]
        %1949 = vset.pattern.permute.xlu0 0
        %1950 = vperm.xlu0 %1949, %v1924
        %v1951 = vpop.permute.xlu0 %1950
        %v1953 = vlaneseq
        %v1954 = vshrl.u32 %v1953, 7
        %v1955 = vsub.s32 0, %v1954
        %v1956 = vrot.slane %v1951, %v1955
        %1958 = vset.pattern.permute.xlu0 0
        %1959 = vperm.xlu0 %1958, %v1925
        %v1960 = vpop.permute.xlu0 %1959
        %v1962 = vlaneseq
        %v1963 = vshrl.u32 %v1962, 7
        %v1964 = vsub.s32 0, %v1963
        %v1965 = vrot.slane %v1960, %v1964
        %1967 = vset.pattern.permute.xlu0 0
        %1968 = vperm.xlu0 %1967, %v1926
        %v1969 = vpop.permute.xlu0 %1968
        %v1971 = vlaneseq
        %v1972 = vshrl.u32 %v1971, 7
        %v1973 = vsub.s32 0, %v1972
        %v1974 = vrot.slane %v1969, %v1973
        %1976 = vset.pattern.permute.xlu0 0
        %1977 = vperm.xlu0 %1976, %v1927
        %v1978 = vpop.permute.xlu0 %1977
        %v1980 = vlaneseq
        %v1981 = vshrl.u32 %v1980, 7
        %v1982 = vsub.s32 0, %v1981
        %v1983 = vrot.slane %v1978, %v1982
        %1985 = vset.pattern.permute.xlu0 0
        %1986 = vperm.xlu0 %1985, %v1928
        %v1987 = vpop.permute.xlu0 %1986
        %v1989 = vlaneseq
        %v1990 = vshrl.u32 %v1989, 7
        %v1991 = vsub.s32 0, %v1990
        %v1992 = vrot.slane %v1987, %v1991
        %1994 = vset.pattern.permute.xlu0 0
        %1995 = vperm.xlu0 %1994, %v1929
        %v1996 = vpop.permute.xlu0 %1995
        %v1998 = vlaneseq
        %v1999 = vshrl.u32 %v1998, 7
        %v2000 = vsub.s32 0, %v1999
        %v2001 = vrot.slane %v1996, %v2000
        %2003 = vset.pattern.permute.xlu0 0
        %2004 = vperm.xlu0 %2003, %v1930
        %v2005 = vpop.permute.xlu0 %2004
        %v2007 = vlaneseq
        %v2008 = vshrl.u32 %v2007, 7
        %v2009 = vsub.s32 0, %v2008
        %v2010 = vrot.slane %v2005, %v2009
        %2012 = vset.pattern.permute.xlu0 0
        %2013 = vperm.xlu0 %2012, %v1931
        %v2014 = vpop.permute.xlu0 %2013
        %v2016 = vlaneseq
        %v2017 = vshrl.u32 %v2016, 7
        %v2018 = vsub.s32 0, %v2017
        %v2019 = vrot.slane %v2014, %v2018
        %2021 = vset.pattern.permute.xlu0 0
        %2022 = vperm.xlu0 %2021, %v1932
        %v2023 = vpop.permute.xlu0 %2022
        %v2025 = vlaneseq
        %v2026 = vshrl.u32 %v2025, 7
        %v2027 = vsub.s32 0, %v2026
        %v2028 = vrot.slane %v2023, %v2027
        %2030 = vset.pattern.permute.xlu0 0
        %2031 = vperm.xlu0 %2030, %v1933
        %v2032 = vpop.permute.xlu0 %2031
        %v2034 = vlaneseq
        %v2035 = vshrl.u32 %v2034, 7
        %v2036 = vsub.s32 0, %v2035
        %v2037 = vrot.slane %v2032, %v2036
        %2039 = vset.pattern.permute.xlu0 0
        %2040 = vperm.xlu0 %2039, %v1934
        %v2041 = vpop.permute.xlu0 %2040
        %v2043 = vlaneseq
        %v2044 = vshrl.u32 %v2043, 7
        %v2045 = vsub.s32 0, %v2044
        %v2046 = vrot.slane %v2041, %v2045
        %2048 = vset.pattern.permute.xlu0 0
        %2049 = vperm.xlu0 %2048, %v1935
        %v2050 = vpop.permute.xlu0 %2049
        %v2052 = vlaneseq
        %v2053 = vshrl.u32 %v2052, 7
        %v2054 = vsub.s32 0, %v2053
        %v2055 = vrot.slane %v2050, %v2054
        %2057 = vset.pattern.permute.xlu0 0
        %2058 = vperm.xlu0 %2057, %v1936
        %v2059 = vpop.permute.xlu0 %2058
        %v2061 = vlaneseq
        %v2062 = vshrl.u32 %v2061, 7
        %v2063 = vsub.s32 0, %v2062
        %v2064 = vrot.slane %v2059, %v2063
        %2066 = vset.pattern.permute.xlu0 0
        %2067 = vperm.xlu0 %2066, %v1937
        %v2068 = vpop.permute.xlu0 %2067
        %v2070 = vlaneseq
        %v2071 = vshrl.u32 %v2070, 7
        %v2072 = vsub.s32 0, %v2071
        %v2073 = vrot.slane %v2068, %v2072
        %2075 = vset.pattern.permute.xlu0 0
        %2076 = vperm.xlu0 %2075, %v1938
        %v2077 = vpop.permute.xlu0 %2076
        %v2079 = vlaneseq
        %v2080 = vshrl.u32 %v2079, 7
        %v2081 = vsub.s32 0, %v2080
        %v2082 = vrot.slane %v2077, %v2081
        %2084 = vset.pattern.permute.xlu0 0
        %2085 = vperm.xlu0 %2084, %v1939
        %v2086 = vpop.permute.xlu0 %2085
        %v2088 = vlaneseq
        %v2089 = vshrl.u32 %v2088, 7
        %v2090 = vsub.s32 0, %v2089
        %v2091 = vrot.slane %v2086, %v2090
        %2093 = vset.pattern.permute.xlu0 0
        %2094 = vperm.xlu0 %2093, %v1940
        %v2095 = vpop.permute.xlu0 %2094
        %v2097 = vlaneseq
        %v2098 = vshrl.u32 %v2097, 7
        %v2099 = vsub.s32 0, %v2098
        %v2100 = vrot.slane %v2095, %v2099
        %2102 = vset.pattern.permute.xlu0 0
        %2103 = vperm.xlu0 %2102, %v1941
        %v2104 = vpop.permute.xlu0 %2103
        %v2106 = vlaneseq
        %v2107 = vshrl.u32 %v2106, 7
        %v2108 = vsub.s32 0, %v2107
        %v2109 = vrot.slane %v2104, %v2108
        %2111 = vset.pattern.permute.xlu0 0
        %2112 = vperm.xlu0 %2111, %v1942
        %v2113 = vpop.permute.xlu0 %2112
        %v2115 = vlaneseq
        %v2116 = vshrl.u32 %v2115, 7
        %v2117 = vsub.s32 0, %v2116
        %v2118 = vrot.slane %v2113, %v2117
        %2120 = vset.pattern.permute.xlu0 0
        %2121 = vperm.xlu0 %2120, %v1943
        %v2122 = vpop.permute.xlu0 %2121
        %v2124 = vlaneseq
        %v2125 = vshrl.u32 %v2124, 7
        %v2126 = vsub.s32 0, %v2125
        %v2127 = vrot.slane %v2122, %v2126
        %2129 = vset.pattern.permute.xlu0 0
        %2130 = vperm.xlu0 %2129, %v1944
        %v2131 = vpop.permute.xlu0 %2130
        %v2133 = vlaneseq
        %v2134 = vshrl.u32 %v2133, 7
        %v2135 = vsub.s32 0, %v2134
        %v2136 = vrot.slane %v2131, %v2135
        %2138 = vset.pattern.permute.xlu0 0
        %2139 = vperm.xlu0 %2138, %v1945
        %v2140 = vpop.permute.xlu0 %2139
        %v2142 = vlaneseq
        %v2143 = vshrl.u32 %v2142, 7
        %v2144 = vsub.s32 0, %v2143
        %v2145 = vrot.slane %v2140, %v2144
        %2147 = vset.pattern.permute.xlu0 0
        %2148 = vperm.xlu0 %2147, %v1946
        %v2149 = vpop.permute.xlu0 %2148
        %v2151 = vlaneseq
        %v2152 = vshrl.u32 %v2151, 7
        %v2153 = vsub.s32 0, %v2152
        %v2154 = vrot.slane %v2149, %v2153
        %2156 = vset.pattern.permute.xlu0 0
        %2157 = vperm.xlu0 %2156, %v1947
        %v2158 = vpop.permute.xlu0 %2157
        %v2160 = vlaneseq
        %v2161 = vshrl.u32 %v2160, 7
        %v2162 = vsub.s32 0, %v2161
        %v2163 = vrot.slane %v2158, %v2162
        %v2164 = vmul.f32 %v1956, %v1891
        %v2165 = vmul.f32 %v1965, %v1891
        %v2166 = vmul.f32 %v1974, %v1891
        %v2167 = vmul.f32 %v1983, %v1891
        %v2168 = vmul.f32 %v1992, %v1891
        %v2169 = vmul.f32 %v2001, %v1891
        %v2170 = vmul.f32 %v2010, %v1891
        %v2171 = vmul.f32 %v2019, %v1891
        %v2172 = vmul.f32 %v2028, %v1891
        %v2173 = vmul.f32 %v2037, %v1891
        %v2174 = vmul.f32 %v2046, %v1891
        %v2175 = vmul.f32 %v2055, %v1891
        %v2176 = vmul.f32 %v2064, %v1891
        %v2177 = vmul.f32 %v2073, %v1891
        %v2178 = vmul.f32 %v2082, %v1891
        %v2179 = vmul.f32 %v2091, %v1891
        %v2180 = vmul.f32 %v2100, %v1891
        %v2181 = vmul.f32 %v2109, %v1891
        %v2182 = vmul.f32 %v2118, %v1891
        %v2183 = vmul.f32 %v2127, %v1891
        %v2184 = vmul.f32 %v2136, %v1891
        %v2185 = vmul.f32 %v2145, %v1891
        %v2186 = vmul.f32 %v2154, %v1891
        %v2187 = vmul.f32 %v2163, %v1891
        %2189 = vset.pattern.permute.xlu0 0
        %2190 = vperm.xlu0 %2189, %v1900
        %v2191 = vpop.permute.xlu0 %2190
        %v2193 = vlaneseq
        %v2194 = vshrl.u32 %v2193, 7
        %v2195 = vsub.s32 0, %v2194
        %v2196 = vrot.slane %v2191, %v2195
        %2198 = vset.pattern.permute.xlu0 0
        %2199 = vperm.xlu0 %2198, %v1901
        %v2200 = vpop.permute.xlu0 %2199
        %v2202 = vlaneseq
        %v2203 = vshrl.u32 %v2202, 7
        %v2204 = vsub.s32 0, %v2203
        %v2205 = vrot.slane %v2200, %v2204
        %2207 = vset.pattern.permute.xlu0 0
        %2208 = vperm.xlu0 %2207, %v1902
        %v2209 = vpop.permute.xlu0 %2208
        %v2211 = vlaneseq
        %v2212 = vshrl.u32 %v2211, 7
        %v2213 = vsub.s32 0, %v2212
        %v2214 = vrot.slane %v2209, %v2213
        %2216 = vset.pattern.permute.xlu0 0
        %2217 = vperm.xlu0 %2216, %v1903
        %v2218 = vpop.permute.xlu0 %2217
        %v2220 = vlaneseq
        %v2221 = vshrl.u32 %v2220, 7
        %v2222 = vsub.s32 0, %v2221
        %v2223 = vrot.slane %v2218, %v2222
        %2225 = vset.pattern.permute.xlu0 0
        %2226 = vperm.xlu0 %2225, %v1904
        %v2227 = vpop.permute.xlu0 %2226
        %v2229 = vlaneseq
        %v2230 = vshrl.u32 %v2229, 7
        %v2231 = vsub.s32 0, %v2230
        %v2232 = vrot.slane %v2227, %v2231
        %2234 = vset.pattern.permute.xlu0 0
        %2235 = vperm.xlu0 %2234, %v1905
        %v2236 = vpop.permute.xlu0 %2235
        %v2238 = vlaneseq
        %v2239 = vshrl.u32 %v2238, 7
        %v2240 = vsub.s32 0, %v2239
        %v2241 = vrot.slane %v2236, %v2240
        %2243 = vset.pattern.permute.xlu0 0
        %2244 = vperm.xlu0 %2243, %v1906
        %v2245 = vpop.permute.xlu0 %2244
        %v2247 = vlaneseq
        %v2248 = vshrl.u32 %v2247, 7
        %v2249 = vsub.s32 0, %v2248
        %v2250 = vrot.slane %v2245, %v2249
        %2252 = vset.pattern.permute.xlu0 0
        %2253 = vperm.xlu0 %2252, %v1907
        %v2254 = vpop.permute.xlu0 %2253
        %v2256 = vlaneseq
        %v2257 = vshrl.u32 %v2256, 7
        %v2258 = vsub.s32 0, %v2257
        %v2259 = vrot.slane %v2254, %v2258
        %2261 = vset.pattern.permute.xlu0 0
        %2262 = vperm.xlu0 %2261, %v1908
        %v2263 = vpop.permute.xlu0 %2262
        %v2265 = vlaneseq
        %v2266 = vshrl.u32 %v2265, 7
        %v2267 = vsub.s32 0, %v2266
        %v2268 = vrot.slane %v2263, %v2267
        %2270 = vset.pattern.permute.xlu0 0
        %2271 = vperm.xlu0 %2270, %v1909
        %v2272 = vpop.permute.xlu0 %2271
        %v2274 = vlaneseq
        %v2275 = vshrl.u32 %v2274, 7
        %v2276 = vsub.s32 0, %v2275
        %v2277 = vrot.slane %v2272, %v2276
        %2279 = vset.pattern.permute.xlu0 0
        %2280 = vperm.xlu0 %2279, %v1910
        %v2281 = vpop.permute.xlu0 %2280
        %v2283 = vlaneseq
        %v2284 = vshrl.u32 %v2283, 7
        %v2285 = vsub.s32 0, %v2284
        %v2286 = vrot.slane %v2281, %v2285
        %2288 = vset.pattern.permute.xlu0 0
        %2289 = vperm.xlu0 %2288, %v1911
        %v2290 = vpop.permute.xlu0 %2289
        %v2292 = vlaneseq
        %v2293 = vshrl.u32 %v2292, 7
        %v2294 = vsub.s32 0, %v2293
        %v2295 = vrot.slane %v2290, %v2294
        %2297 = vset.pattern.permute.xlu0 0
        %2298 = vperm.xlu0 %2297, %v1912
        %v2299 = vpop.permute.xlu0 %2298
        %v2301 = vlaneseq
        %v2302 = vshrl.u32 %v2301, 7
        %v2303 = vsub.s32 0, %v2302
        %v2304 = vrot.slane %v2299, %v2303
        %2306 = vset.pattern.permute.xlu0 0
        %2307 = vperm.xlu0 %2306, %v1913
        %v2308 = vpop.permute.xlu0 %2307
        %v2310 = vlaneseq
        %v2311 = vshrl.u32 %v2310, 7
        %v2312 = vsub.s32 0, %v2311
        %v2313 = vrot.slane %v2308, %v2312
        %2315 = vset.pattern.permute.xlu0 0
        %2316 = vperm.xlu0 %2315, %v1914
        %v2317 = vpop.permute.xlu0 %2316
        %v2319 = vlaneseq
        %v2320 = vshrl.u32 %v2319, 7
        %v2321 = vsub.s32 0, %v2320
        %v2322 = vrot.slane %v2317, %v2321
        %2324 = vset.pattern.permute.xlu0 0
        %2325 = vperm.xlu0 %2324, %v1915
        %v2326 = vpop.permute.xlu0 %2325
        %v2328 = vlaneseq
        %v2329 = vshrl.u32 %v2328, 7
        %v2330 = vsub.s32 0, %v2329
        %v2331 = vrot.slane %v2326, %v2330
        %2333 = vset.pattern.permute.xlu0 0
        %2334 = vperm.xlu0 %2333, %v1916
        %v2335 = vpop.permute.xlu0 %2334
        %v2337 = vlaneseq
        %v2338 = vshrl.u32 %v2337, 7
        %v2339 = vsub.s32 0, %v2338
        %v2340 = vrot.slane %v2335, %v2339
        %2342 = vset.pattern.permute.xlu0 0
        %2343 = vperm.xlu0 %2342, %v1917
        %v2344 = vpop.permute.xlu0 %2343
        %v2346 = vlaneseq
        %v2347 = vshrl.u32 %v2346, 7
        %v2348 = vsub.s32 0, %v2347
        %v2349 = vrot.slane %v2344, %v2348
        %2351 = vset.pattern.permute.xlu0 0
        %2352 = vperm.xlu0 %2351, %v1918
        %v2353 = vpop.permute.xlu0 %2352
        %v2355 = vlaneseq
        %v2356 = vshrl.u32 %v2355, 7
        %v2357 = vsub.s32 0, %v2356
        %v2358 = vrot.slane %v2353, %v2357
        %2360 = vset.pattern.permute.xlu0 0
        %2361 = vperm.xlu0 %2360, %v1919
        %v2362 = vpop.permute.xlu0 %2361
        %v2364 = vlaneseq
        %v2365 = vshrl.u32 %v2364, 7
        %v2366 = vsub.s32 0, %v2365
        %v2367 = vrot.slane %v2362, %v2366
        %2369 = vset.pattern.permute.xlu0 0
        %2370 = vperm.xlu0 %2369, %v1920
        %v2371 = vpop.permute.xlu0 %2370
        %v2373 = vlaneseq
        %v2374 = vshrl.u32 %v2373, 7
        %v2375 = vsub.s32 0, %v2374
        %v2376 = vrot.slane %v2371, %v2375
        %2378 = vset.pattern.permute.xlu0 0
        %2379 = vperm.xlu0 %2378, %v1921
        %v2380 = vpop.permute.xlu0 %2379
        %v2382 = vlaneseq
        %v2383 = vshrl.u32 %v2382, 7
        %v2384 = vsub.s32 0, %v2383
        %v2385 = vrot.slane %v2380, %v2384
        %2387 = vset.pattern.permute.xlu0 0
        %2388 = vperm.xlu0 %2387, %v1922
        %v2389 = vpop.permute.xlu0 %2388
        %v2391 = vlaneseq
        %v2392 = vshrl.u32 %v2391, 7
        %v2393 = vsub.s32 0, %v2392
        %v2394 = vrot.slane %v2389, %v2393
        %2396 = vset.pattern.permute.xlu0 0
        %2397 = vperm.xlu0 %2396, %v1923
        %v2398 = vpop.permute.xlu0 %2397
        %v2400 = vlaneseq
        %v2401 = vshrl.u32 %v2400, 7
        %v2402 = vsub.s32 0, %v2401
        %v2403 = vrot.slane %v2398, %v2402
        %v2404 = vadd.f32 %v2196, %v2164
        %v2405 = vadd.f32 %v2205, %v2165
        %v2406 = vadd.f32 %v2214, %v2166
        %v2407 = vadd.f32 %v2223, %v2167
        %v2408 = vadd.f32 %v2232, %v2168
        %v2409 = vadd.f32 %v2241, %v2169
        %v2410 = vadd.f32 %v2250, %v2170
        %v2411 = vadd.f32 %v2259, %v2171
        %v2412 = vadd.f32 %v2268, %v2172
        %v2413 = vadd.f32 %v2277, %v2173
        %v2414 = vadd.f32 %v2286, %v2174
        %v2415 = vadd.f32 %v2295, %v2175
        %v2416 = vadd.f32 %v2304, %v2176
        %v2417 = vadd.f32 %v2313, %v2177
        %v2418 = vadd.f32 %v2322, %v2178
        %v2419 = vadd.f32 %v2331, %v2179
        %v2420 = vadd.f32 %v2340, %v2180
        %v2421 = vadd.f32 %v2349, %v2181
        %v2422 = vadd.f32 %v2358, %v2182
        %v2423 = vadd.f32 %v2367, %v2183
        %v2424 = vadd.f32 %v2376, %v2184
        %v2425 = vadd.f32 %v2385, %v2185
        %v2426 = vadd.f32 %v2394, %v2186
        %v2427 = vadd.f32 %v2403, %v2187
        %v2428 = vld [vmem:[%s844] sm:$0x1]
        %v2429 = vld [vmem:[%s844 + $0x1] sm:$0x1]
        %v2430 = vld [vmem:[%s844 + $0x2] sm:$0x1]
        %v2431 = vld [vmem:[%s844 + $0x3] sm:$0x1]
        %v2432 = vld [vmem:[%s844 + $0x4] sm:$0x1]
        %v2433 = vld [vmem:[%s844 + $0x5] sm:$0x1]
        %v2434 = vld [vmem:[%s844 + $0x6] sm:$0x1]
        %v2435 = vld [vmem:[%s844 + $0x7] sm:$0x1]
        %v2436 = vld [vmem:[%s844 + $0x8] sm:$0x1]
        %v2437 = vld [vmem:[%s844 + $0x9] sm:$0x1]
        %v2438 = vld [vmem:[%s844 + $0xa] sm:$0x1]
        %v2439 = vld [vmem:[%s844 + $0xb] sm:$0x1]
        %v2440 = vld [vmem:[%s844 + $0xc] sm:$0x1]
        %v2441 = vld [vmem:[%s844 + $0xd] sm:$0x1]
        %v2442 = vld [vmem:[%s844 + $0xe] sm:$0x1]
        %v2443 = vld [vmem:[%s844 + $0xf] sm:$0x1]
        %v2444 = vld [vmem:[%s844 + $0x10] sm:$0x1]
        %v2445 = vld [vmem:[%s844 + $0x11] sm:$0x1]
        %v2446 = vld [vmem:[%s844 + $0x12] sm:$0x1]
        %v2447 = vld [vmem:[%s844 + $0x13] sm:$0x1]
        %v2448 = vld [vmem:[%s844 + $0x14] sm:$0x1]
        %v2449 = vld [vmem:[%s844 + $0x15] sm:$0x1]
        %v2450 = vld [vmem:[%s844 + $0x16] sm:$0x1]
        %v2451 = vld [vmem:[%s844 + $0x17] sm:$0x1]
        %2453 = vset.pattern.permute.xlu0 0
        %2454 = vperm.xlu0 %2453, %v2428
        %v2455 = vpop.permute.xlu0 %2454
        %v2457 = vlaneseq
        %v2458 = vshrl.u32 %v2457, 7
        %v2459 = vsub.s32 0, %v2458
        %v2460 = vrot.slane %v2455, %v2459
        %2462 = vset.pattern.permute.xlu0 0
        %2463 = vperm.xlu0 %2462, %v2429
        %v2464 = vpop.permute.xlu0 %2463
        %v2466 = vlaneseq
        %v2467 = vshrl.u32 %v2466, 7
        %v2468 = vsub.s32 0, %v2467
        %v2469 = vrot.slane %v2464, %v2468
        %2471 = vset.pattern.permute.xlu0 0
        %2472 = vperm.xlu0 %2471, %v2430
        %v2473 = vpop.permute.xlu0 %2472
        %v2475 = vlaneseq
        %v2476 = vshrl.u32 %v2475, 7
        %v2477 = vsub.s32 0, %v2476
        %v2478 = vrot.slane %v2473, %v2477
        %2480 = vset.pattern.permute.xlu0 0
        %2481 = vperm.xlu0 %2480, %v2431
        %v2482 = vpop.permute.xlu0 %2481
        %v2484 = vlaneseq
        %v2485 = vshrl.u32 %v2484, 7
        %v2486 = vsub.s32 0, %v2485
        %v2487 = vrot.slane %v2482, %v2486
        %2489 = vset.pattern.permute.xlu0 0
        %2490 = vperm.xlu0 %2489, %v2432
        %v2491 = vpop.permute.xlu0 %2490
        %v2493 = vlaneseq
        %v2494 = vshrl.u32 %v2493, 7
        %v2495 = vsub.s32 0, %v2494
        %v2496 = vrot.slane %v2491, %v2495
        %2498 = vset.pattern.permute.xlu0 0
        %2499 = vperm.xlu0 %2498, %v2433
        %v2500 = vpop.permute.xlu0 %2499
        %v2502 = vlaneseq
        %v2503 = vshrl.u32 %v2502, 7
        %v2504 = vsub.s32 0, %v2503
        %v2505 = vrot.slane %v2500, %v2504
        %2507 = vset.pattern.permute.xlu0 0
        %2508 = vperm.xlu0 %2507, %v2434
        %v2509 = vpop.permute.xlu0 %2508
        %v2511 = vlaneseq
        %v2512 = vshrl.u32 %v2511, 7
        %v2513 = vsub.s32 0, %v2512
        %v2514 = vrot.slane %v2509, %v2513
        %2516 = vset.pattern.permute.xlu0 0
        %2517 = vperm.xlu0 %2516, %v2435
        %v2518 = vpop.permute.xlu0 %2517
        %v2520 = vlaneseq
        %v2521 = vshrl.u32 %v2520, 7
        %v2522 = vsub.s32 0, %v2521
        %v2523 = vrot.slane %v2518, %v2522
        %2525 = vset.pattern.permute.xlu0 0
        %2526 = vperm.xlu0 %2525, %v2436
        %v2527 = vpop.permute.xlu0 %2526
        %v2529 = vlaneseq
        %v2530 = vshrl.u32 %v2529, 7
        %v2531 = vsub.s32 0, %v2530
        %v2532 = vrot.slane %v2527, %v2531
        %2534 = vset.pattern.permute.xlu0 0
        %2535 = vperm.xlu0 %2534, %v2437
        %v2536 = vpop.permute.xlu0 %2535
        %v2538 = vlaneseq
        %v2539 = vshrl.u32 %v2538, 7
        %v2540 = vsub.s32 0, %v2539
        %v2541 = vrot.slane %v2536, %v2540
        %2543 = vset.pattern.permute.xlu0 0
        %2544 = vperm.xlu0 %2543, %v2438
        %v2545 = vpop.permute.xlu0 %2544
        %v2547 = vlaneseq
        %v2548 = vshrl.u32 %v2547, 7
        %v2549 = vsub.s32 0, %v2548
        %v2550 = vrot.slane %v2545, %v2549
        %2552 = vset.pattern.permute.xlu0 0
        %2553 = vperm.xlu0 %2552, %v2439
        %v2554 = vpop.permute.xlu0 %2553
        %v2556 = vlaneseq
        %v2557 = vshrl.u32 %v2556, 7
        %v2558 = vsub.s32 0, %v2557
        %v2559 = vrot.slane %v2554, %v2558
        %2561 = vset.pattern.permute.xlu0 0
        %2562 = vperm.xlu0 %2561, %v2440
        %v2563 = vpop.permute.xlu0 %2562
        %v2565 = vlaneseq
        %v2566 = vshrl.u32 %v2565, 7
        %v2567 = vsub.s32 0, %v2566
        %v2568 = vrot.slane %v2563, %v2567
        %2570 = vset.pattern.permute.xlu0 0
        %2571 = vperm.xlu0 %2570, %v2441
        %v2572 = vpop.permute.xlu0 %2571
        %v2574 = vlaneseq
        %v2575 = vshrl.u32 %v2574, 7
        %v2576 = vsub.s32 0, %v2575
        %v2577 = vrot.slane %v2572, %v2576
        %2579 = vset.pattern.permute.xlu0 0
        %2580 = vperm.xlu0 %2579, %v2442
        %v2581 = vpop.permute.xlu0 %2580
        %v2583 = vlaneseq
        %v2584 = vshrl.u32 %v2583, 7
        %v2585 = vsub.s32 0, %v2584
        %v2586 = vrot.slane %v2581, %v2585
        %2588 = vset.pattern.permute.xlu0 0
        %2589 = vperm.xlu0 %2588, %v2443
        %v2590 = vpop.permute.xlu0 %2589
        %v2592 = vlaneseq
        %v2593 = vshrl.u32 %v2592, 7
        %v2594 = vsub.s32 0, %v2593
        %v2595 = vrot.slane %v2590, %v2594
        %2597 = vset.pattern.permute.xlu0 0
        %2598 = vperm.xlu0 %2597, %v2444
        %v2599 = vpop.permute.xlu0 %2598
        %v2601 = vlaneseq
        %v2602 = vshrl.u32 %v2601, 7
        %v2603 = vsub.s32 0, %v2602
        %v2604 = vrot.slane %v2599, %v2603
        %2606 = vset.pattern.permute.xlu0 0
        %2607 = vperm.xlu0 %2606, %v2445
        %v2608 = vpop.permute.xlu0 %2607
        %v2610 = vlaneseq
        %v2611 = vshrl.u32 %v2610, 7
        %v2612 = vsub.s32 0, %v2611
        %v2613 = vrot.slane %v2608, %v2612
        %2615 = vset.pattern.permute.xlu0 0
        %2616 = vperm.xlu0 %2615, %v2446
        %v2617 = vpop.permute.xlu0 %2616
        %v2619 = vlaneseq
        %v2620 = vshrl.u32 %v2619, 7
        %v2621 = vsub.s32 0, %v2620
        %v2622 = vrot.slane %v2617, %v2621
        %2624 = vset.pattern.permute.xlu0 0
        %2625 = vperm.xlu0 %2624, %v2447
        %v2626 = vpop.permute.xlu0 %2625
        %v2628 = vlaneseq
        %v2629 = vshrl.u32 %v2628, 7
        %v2630 = vsub.s32 0, %v2629
        %v2631 = vrot.slane %v2626, %v2630
        %2633 = vset.pattern.permute.xlu0 0
        %2634 = vperm.xlu0 %2633, %v2448
        %v2635 = vpop.permute.xlu0 %2634
        %v2637 = vlaneseq
        %v2638 = vshrl.u32 %v2637, 7
        %v2639 = vsub.s32 0, %v2638
        %v2640 = vrot.slane %v2635, %v2639
        %2642 = vset.pattern.permute.xlu0 0
        %2643 = vperm.xlu0 %2642, %v2449
        %v2644 = vpop.permute.xlu0 %2643
        %v2646 = vlaneseq
        %v2647 = vshrl.u32 %v2646, 7
        %v2648 = vsub.s32 0, %v2647
        %v2649 = vrot.slane %v2644, %v2648
        %2651 = vset.pattern.permute.xlu0 0
        %2652 = vperm.xlu0 %2651, %v2450
        %v2653 = vpop.permute.xlu0 %2652
        %v2655 = vlaneseq
        %v2656 = vshrl.u32 %v2655, 7
        %v2657 = vsub.s32 0, %v2656
        %v2658 = vrot.slane %v2653, %v2657
        %2660 = vset.pattern.permute.xlu0 0
        %2661 = vperm.xlu0 %2660, %v2451
        %v2662 = vpop.permute.xlu0 %2661
        %v2664 = vlaneseq
        %v2665 = vshrl.u32 %v2664, 7
        %v2666 = vsub.s32 0, %v2665
        %v2667 = vrot.slane %v2662, %v2666
        %v2668 = vmul.f32 %v2460, %v1892
        %v2669 = vmul.f32 %v2469, %v1892
        %v2670 = vmul.f32 %v2478, %v1892
        %v2671 = vmul.f32 %v2487, %v1892
        %v2672 = vmul.f32 %v2496, %v1892
        %v2673 = vmul.f32 %v2505, %v1892
        %v2674 = vmul.f32 %v2514, %v1892
        %v2675 = vmul.f32 %v2523, %v1892
        %v2676 = vmul.f32 %v2532, %v1892
        %v2677 = vmul.f32 %v2541, %v1892
        %v2678 = vmul.f32 %v2550, %v1892
        %v2679 = vmul.f32 %v2559, %v1892
        %v2680 = vmul.f32 %v2568, %v1892
        %v2681 = vmul.f32 %v2577, %v1892
        %v2682 = vmul.f32 %v2586, %v1892
        %v2683 = vmul.f32 %v2595, %v1892
        %v2684 = vmul.f32 %v2604, %v1892
        %v2685 = vmul.f32 %v2613, %v1892
        %v2686 = vmul.f32 %v2622, %v1892
        %v2687 = vmul.f32 %v2631, %v1892
        %v2688 = vmul.f32 %v2640, %v1892
        %v2689 = vmul.f32 %v2649, %v1892
        %v2690 = vmul.f32 %v2658, %v1892
        %v2691 = vmul.f32 %v2667, %v1892
        %v2692 = vadd.f32 %v2404, %v2668
        %v2693 = vadd.f32 %v2405, %v2669
        %v2694 = vadd.f32 %v2406, %v2670
        %v2695 = vadd.f32 %v2407, %v2671
        %v2696 = vadd.f32 %v2408, %v2672
        %v2697 = vadd.f32 %v2409, %v2673
        %v2698 = vadd.f32 %v2410, %v2674
        %v2699 = vadd.f32 %v2411, %v2675
        %v2700 = vadd.f32 %v2412, %v2676
        %v2701 = vadd.f32 %v2413, %v2677
        %v2702 = vadd.f32 %v2414, %v2678
        %v2703 = vadd.f32 %v2415, %v2679
        %v2704 = vadd.f32 %v2416, %v2680
        %v2705 = vadd.f32 %v2417, %v2681
        %v2706 = vadd.f32 %v2418, %v2682
        %v2707 = vadd.f32 %v2419, %v2683
        %v2708 = vadd.f32 %v2420, %v2684
        %v2709 = vadd.f32 %v2421, %v2685
        %v2710 = vadd.f32 %v2422, %v2686
        %v2711 = vadd.f32 %v2423, %v2687
        %v2712 = vadd.f32 %v2424, %v2688
        %v2713 = vadd.f32 %v2425, %v2689
        %v2714 = vadd.f32 %v2426, %v2690
        %v2715 = vadd.f32 %v2427, %v2691
        %v2716 = vld [vmem:[%s1133] sm:$0x1]
        %v2717 = vld [vmem:[%s1133 + $0x1] sm:$0x1]
        %v2718 = vld [vmem:[%s1133 + $0x2] sm:$0x1]
        %v2719 = vld [vmem:[%s1133 + $0x3] sm:$0x1]
        %v2720 = vld [vmem:[%s1133 + $0x4] sm:$0x1]
        %v2721 = vld [vmem:[%s1133 + $0x5] sm:$0x1]
        %v2722 = vld [vmem:[%s1133 + $0x6] sm:$0x1]
        %v2723 = vld [vmem:[%s1133 + $0x7] sm:$0x1]
        %v2724 = vld [vmem:[%s1133 + $0x8] sm:$0x1]
        %v2725 = vld [vmem:[%s1133 + $0x9] sm:$0x1]
        %v2726 = vld [vmem:[%s1133 + $0xa] sm:$0x1]
        %v2727 = vld [vmem:[%s1133 + $0xb] sm:$0x1]
        %v2728 = vld [vmem:[%s1133 + $0xc] sm:$0x1]
        %v2729 = vld [vmem:[%s1133 + $0xd] sm:$0x1]
        %v2730 = vld [vmem:[%s1133 + $0xe] sm:$0x1]
        %v2731 = vld [vmem:[%s1133 + $0xf] sm:$0x1]
        %v2732 = vld [vmem:[%s1133 + $0x10] sm:$0x1]
        %v2733 = vld [vmem:[%s1133 + $0x11] sm:$0x1]
        %v2734 = vld [vmem:[%s1133 + $0x12] sm:$0x1]
        %v2735 = vld [vmem:[%s1133 + $0x13] sm:$0x1]
        %v2736 = vld [vmem:[%s1133 + $0x14] sm:$0x1]
        %v2737 = vld [vmem:[%s1133 + $0x15] sm:$0x1]
        %v2738 = vld [vmem:[%s1133 + $0x16] sm:$0x1]
        %v2739 = vld [vmem:[%s1133 + $0x17] sm:$0x1]
        %2741 = vset.pattern.permute.xlu0 0
        %2742 = vperm.xlu0 %2741, %v2716
        %v2743 = vpop.permute.xlu0 %2742
        %v2745 = vlaneseq
        %v2746 = vshrl.u32 %v2745, 7
        %v2747 = vsub.s32 0, %v2746
        %v2748 = vrot.slane %v2743, %v2747
        %2750 = vset.pattern.permute.xlu0 0
        %2751 = vperm.xlu0 %2750, %v2717
        %v2752 = vpop.permute.xlu0 %2751
        %v2754 = vlaneseq
        %v2755 = vshrl.u32 %v2754, 7
        %v2756 = vsub.s32 0, %v2755
        %v2757 = vrot.slane %v2752, %v2756
        %2759 = vset.pattern.permute.xlu0 0
        %2760 = vperm.xlu0 %2759, %v2718
        %v2761 = vpop.permute.xlu0 %2760
        %v2763 = vlaneseq
        %v2764 = vshrl.u32 %v2763, 7
        %v2765 = vsub.s32 0, %v2764
        %v2766 = vrot.slane %v2761, %v2765
        %2768 = vset.pattern.permute.xlu0 0
        %2769 = vperm.xlu0 %2768, %v2719
        %v2770 = vpop.permute.xlu0 %2769
        %v2772 = vlaneseq
        %v2773 = vshrl.u32 %v2772, 7
        %v2774 = vsub.s32 0, %v2773
        %v2775 = vrot.slane %v2770, %v2774
        %2777 = vset.pattern.permute.xlu0 0
        %2778 = vperm.xlu0 %2777, %v2720
        %v2779 = vpop.permute.xlu0 %2778
        %v2781 = vlaneseq
        %v2782 = vshrl.u32 %v2781, 7
        %v2783 = vsub.s32 0, %v2782
        %v2784 = vrot.slane %v2779, %v2783
        %2786 = vset.pattern.permute.xlu0 0
        %2787 = vperm.xlu0 %2786, %v2721
        %v2788 = vpop.permute.xlu0 %2787
        %v2790 = vlaneseq
        %v2791 = vshrl.u32 %v2790, 7
        %v2792 = vsub.s32 0, %v2791
        %v2793 = vrot.slane %v2788, %v2792
        %2795 = vset.pattern.permute.xlu0 0
        %2796 = vperm.xlu0 %2795, %v2722
        %v2797 = vpop.permute.xlu0 %2796
        %v2799 = vlaneseq
        %v2800 = vshrl.u32 %v2799, 7
        %v2801 = vsub.s32 0, %v2800
        %v2802 = vrot.slane %v2797, %v2801
        %2804 = vset.pattern.permute.xlu0 0
        %2805 = vperm.xlu0 %2804, %v2723
        %v2806 = vpop.permute.xlu0 %2805
        %v2808 = vlaneseq
        %v2809 = vshrl.u32 %v2808, 7
        %v2810 = vsub.s32 0, %v2809
        %v2811 = vrot.slane %v2806, %v2810
        %2813 = vset.pattern.permute.xlu0 0
        %2814 = vperm.xlu0 %2813, %v2724
        %v2815 = vpop.permute.xlu0 %2814
        %v2817 = vlaneseq
        %v2818 = vshrl.u32 %v2817, 7
        %v2819 = vsub.s32 0, %v2818
        %v2820 = vrot.slane %v2815, %v2819
        %2822 = vset.pattern.permute.xlu0 0
        %2823 = vperm.xlu0 %2822, %v2725
        %v2824 = vpop.permute.xlu0 %2823
        %v2826 = vlaneseq
        %v2827 = vshrl.u32 %v2826, 7
        %v2828 = vsub.s32 0, %v2827
        %v2829 = vrot.slane %v2824, %v2828
        %2831 = vset.pattern.permute.xlu0 0
        %2832 = vperm.xlu0 %2831, %v2726
        %v2833 = vpop.permute.xlu0 %2832
        %v2835 = vlaneseq
        %v2836 = vshrl.u32 %v2835, 7
        %v2837 = vsub.s32 0, %v2836
        %v2838 = vrot.slane %v2833, %v2837
        %2840 = vset.pattern.permute.xlu0 0
        %2841 = vperm.xlu0 %2840, %v2727
        %v2842 = vpop.permute.xlu0 %2841
        %v2844 = vlaneseq
        %v2845 = vshrl.u32 %v2844, 7
        %v2846 = vsub.s32 0, %v2845
        %v2847 = vrot.slane %v2842, %v2846
        %2849 = vset.pattern.permute.xlu0 0
        %2850 = vperm.xlu0 %2849, %v2728
        %v2851 = vpop.permute.xlu0 %2850
        %v2853 = vlaneseq
        %v2854 = vshrl.u32 %v2853, 7
        %v2855 = vsub.s32 0, %v2854
        %v2856 = vrot.slane %v2851, %v2855
        %2858 = vset.pattern.permute.xlu0 0
        %2859 = vperm.xlu0 %2858, %v2729
        %v2860 = vpop.permute.xlu0 %2859
        %v2862 = vlaneseq
        %v2863 = vshrl.u32 %v2862, 7
        %v2864 = vsub.s32 0, %v2863
        %v2865 = vrot.slane %v2860, %v2864
        %2867 = vset.pattern.permute.xlu0 0
        %2868 = vperm.xlu0 %2867, %v2730
        %v2869 = vpop.permute.xlu0 %2868
        %v2871 = vlaneseq
        %v2872 = vshrl.u32 %v2871, 7
        %v2873 = vsub.s32 0, %v2872
        %v2874 = vrot.slane %v2869, %v2873
        %2876 = vset.pattern.permute.xlu0 0
        %2877 = vperm.xlu0 %2876, %v2731
        %v2878 = vpop.permute.xlu0 %2877
        %v2880 = vlaneseq
        %v2881 = vshrl.u32 %v2880, 7
        %v2882 = vsub.s32 0, %v2881
        %v2883 = vrot.slane %v2878, %v2882
        %2885 = vset.pattern.permute.xlu0 0
        %2886 = vperm.xlu0 %2885, %v2732
        %v2887 = vpop.permute.xlu0 %2886
        %v2889 = vlaneseq
        %v2890 = vshrl.u32 %v2889, 7
        %v2891 = vsub.s32 0, %v2890
        %v2892 = vrot.slane %v2887, %v2891
        %2894 = vset.pattern.permute.xlu0 0
        %2895 = vperm.xlu0 %2894, %v2733
        %v2896 = vpop.permute.xlu0 %2895
        %v2898 = vlaneseq
        %v2899 = vshrl.u32 %v2898, 7
        %v2900 = vsub.s32 0, %v2899
        %v2901 = vrot.slane %v2896, %v2900
        %2903 = vset.pattern.permute.xlu0 0
        %2904 = vperm.xlu0 %2903, %v2734
        %v2905 = vpop.permute.xlu0 %2904
        %v2907 = vlaneseq
        %v2908 = vshrl.u32 %v2907, 7
        %v2909 = vsub.s32 0, %v2908
        %v2910 = vrot.slane %v2905, %v2909
        %2912 = vset.pattern.permute.xlu0 0
        %2913 = vperm.xlu0 %2912, %v2735
        %v2914 = vpop.permute.xlu0 %2913
        %v2916 = vlaneseq
        %v2917 = vshrl.u32 %v2916, 7
        %v2918 = vsub.s32 0, %v2917
        %v2919 = vrot.slane %v2914, %v2918
        %2921 = vset.pattern.permute.xlu0 0
        %2922 = vperm.xlu0 %2921, %v2736
        %v2923 = vpop.permute.xlu0 %2922
        %v2925 = vlaneseq
        %v2926 = vshrl.u32 %v2925, 7
        %v2927 = vsub.s32 0, %v2926
        %v2928 = vrot.slane %v2923, %v2927
        %2930 = vset.pattern.permute.xlu0 0
        %2931 = vperm.xlu0 %2930, %v2737
        %v2932 = vpop.permute.xlu0 %2931
        %v2934 = vlaneseq
        %v2935 = vshrl.u32 %v2934, 7
        %v2936 = vsub.s32 0, %v2935
        %v2937 = vrot.slane %v2932, %v2936
        %2939 = vset.pattern.permute.xlu0 0
        %2940 = vperm.xlu0 %2939, %v2738
        %v2941 = vpop.permute.xlu0 %2940
        %v2943 = vlaneseq
        %v2944 = vshrl.u32 %v2943, 7
        %v2945 = vsub.s32 0, %v2944
        %v2946 = vrot.slane %v2941, %v2945
        %2948 = vset.pattern.permute.xlu0 0
        %2949 = vperm.xlu0 %2948, %v2739
        %v2950 = vpop.permute.xlu0 %2949
        %v2952 = vlaneseq
        %v2953 = vshrl.u32 %v2952, 7
        %v2954 = vsub.s32 0, %v2953
        %v2955 = vrot.slane %v2950, %v2954
        %v2956 = vmul.f32 %v2748, %v1893
        %v2957 = vmul.f32 %v2757, %v1893
        %v2958 = vmul.f32 %v2766, %v1893
        %v2959 = vmul.f32 %v2775, %v1893
        %v2960 = vmul.f32 %v2784, %v1893
        %v2961 = vmul.f32 %v2793, %v1893
        %v2962 = vmul.f32 %v2802, %v1893
        %v2963 = vmul.f32 %v2811, %v1893
        %v2964 = vmul.f32 %v2820, %v1893
        %v2965 = vmul.f32 %v2829, %v1893
        %v2966 = vmul.f32 %v2838, %v1893
        %v2967 = vmul.f32 %v2847, %v1893
        %v2968 = vmul.f32 %v2856, %v1893
        %v2969 = vmul.f32 %v2865, %v1893
        %v2970 = vmul.f32 %v2874, %v1893
        %v2971 = vmul.f32 %v2883, %v1893
        %v2972 = vmul.f32 %v2892, %v1893
        %v2973 = vmul.f32 %v2901, %v1893
        %v2974 = vmul.f32 %v2910, %v1893
        %v2975 = vmul.f32 %v2919, %v1893
        %v2976 = vmul.f32 %v2928, %v1893
        %v2977 = vmul.f32 %v2937, %v1893
        %v2978 = vmul.f32 %v2946, %v1893
        %v2979 = vmul.f32 %v2955, %v1893
        %v2980 = vadd.f32 %v2692, %v2956
        %v2981 = vadd.f32 %v2693, %v2957
        %v2982 = vadd.f32 %v2694, %v2958
        %v2983 = vadd.f32 %v2695, %v2959
        %v2984 = vadd.f32 %v2696, %v2960
        %v2985 = vadd.f32 %v2697, %v2961
        %v2986 = vadd.f32 %v2698, %v2962
        %v2987 = vadd.f32 %v2699, %v2963
        %v2988 = vadd.f32 %v2700, %v2964
        %v2989 = vadd.f32 %v2701, %v2965
        %v2990 = vadd.f32 %v2702, %v2966
        %v2991 = vadd.f32 %v2703, %v2967
        %v2992 = vadd.f32 %v2704, %v2968
        %v2993 = vadd.f32 %v2705, %v2969
        %v2994 = vadd.f32 %v2706, %v2970
        %v2995 = vadd.f32 %v2707, %v2971
        %v2996 = vadd.f32 %v2708, %v2972
        %v2997 = vadd.f32 %v2709, %v2973
        %v2998 = vadd.f32 %v2710, %v2974
        %v2999 = vadd.f32 %v2711, %v2975
        %v3000 = vadd.f32 %v2712, %v2976
        %v3001 = vadd.f32 %v2713, %v2977
        %v3002 = vadd.f32 %v2714, %v2978
        %v3003 = vadd.f32 %v2715, %v2979
        %v3004 = vld [vmem:[%s1422] sm:$0x1]
        %v3005 = vld [vmem:[%s1422 + $0x1] sm:$0x1]
        %v3006 = vld [vmem:[%s1422 + $0x2] sm:$0x1]
        %v3007 = vld [vmem:[%s1422 + $0x3] sm:$0x1]
        %v3008 = vld [vmem:[%s1422 + $0x4] sm:$0x1]
        %v3009 = vld [vmem:[%s1422 + $0x5] sm:$0x1]
        %v3010 = vld [vmem:[%s1422 + $0x6] sm:$0x1]
        %v3011 = vld [vmem:[%s1422 + $0x7] sm:$0x1]
        %v3012 = vld [vmem:[%s1422 + $0x8] sm:$0x1]
        %v3013 = vld [vmem:[%s1422 + $0x9] sm:$0x1]
        %v3014 = vld [vmem:[%s1422 + $0xa] sm:$0x1]
        %v3015 = vld [vmem:[%s1422 + $0xb] sm:$0x1]
        %v3016 = vld [vmem:[%s1422 + $0xc] sm:$0x1]
        %v3017 = vld [vmem:[%s1422 + $0xd] sm:$0x1]
        %v3018 = vld [vmem:[%s1422 + $0xe] sm:$0x1]
        %v3019 = vld [vmem:[%s1422 + $0xf] sm:$0x1]
        %v3020 = vld [vmem:[%s1422 + $0x10] sm:$0x1]
        %v3021 = vld [vmem:[%s1422 + $0x11] sm:$0x1]
        %v3022 = vld [vmem:[%s1422 + $0x12] sm:$0x1]
        %v3023 = vld [vmem:[%s1422 + $0x13] sm:$0x1]
        %v3024 = vld [vmem:[%s1422 + $0x14] sm:$0x1]
        %v3025 = vld [vmem:[%s1422 + $0x15] sm:$0x1]
        %v3026 = vld [vmem:[%s1422 + $0x16] sm:$0x1]
        %v3027 = vld [vmem:[%s1422 + $0x17] sm:$0x1]
        %3029 = vset.pattern.permute.xlu0 0
        %3030 = vperm.xlu0 %3029, %v3004
        %v3031 = vpop.permute.xlu0 %3030
        %v3033 = vlaneseq
        %v3034 = vshrl.u32 %v3033, 7
        %v3035 = vsub.s32 0, %v3034
        %v3036 = vrot.slane %v3031, %v3035
        %3038 = vset.pattern.permute.xlu0 0
        %3039 = vperm.xlu0 %3038, %v3005
        %v3040 = vpop.permute.xlu0 %3039
        %v3042 = vlaneseq
        %v3043 = vshrl.u32 %v3042, 7
        %v3044 = vsub.s32 0, %v3043
        %v3045 = vrot.slane %v3040, %v3044
        %3047 = vset.pattern.permute.xlu0 0
        %3048 = vperm.xlu0 %3047, %v3006
        %v3049 = vpop.permute.xlu0 %3048
        %v3051 = vlaneseq
        %v3052 = vshrl.u32 %v3051, 7
        %v3053 = vsub.s32 0, %v3052
        %v3054 = vrot.slane %v3049, %v3053
        %3056 = vset.pattern.permute.xlu0 0
        %3057 = vperm.xlu0 %3056, %v3007
        %v3058 = vpop.permute.xlu0 %3057
        %v3060 = vlaneseq
        %v3061 = vshrl.u32 %v3060, 7
        %v3062 = vsub.s32 0, %v3061
        %v3063 = vrot.slane %v3058, %v3062
        %3065 = vset.pattern.permute.xlu0 0
        %3066 = vperm.xlu0 %3065, %v3008
        %v3067 = vpop.permute.xlu0 %3066
        %v3069 = vlaneseq
        %v3070 = vshrl.u32 %v3069, 7
        %v3071 = vsub.s32 0, %v3070
        %v3072 = vrot.slane %v3067, %v3071
        %3074 = vset.pattern.permute.xlu0 0
        %3075 = vperm.xlu0 %3074, %v3009
        %v3076 = vpop.permute.xlu0 %3075
        %v3078 = vlaneseq
        %v3079 = vshrl.u32 %v3078, 7
        %v3080 = vsub.s32 0, %v3079
        %v3081 = vrot.slane %v3076, %v3080
        %3083 = vset.pattern.permute.xlu0 0
        %3084 = vperm.xlu0 %3083, %v3010
        %v3085 = vpop.permute.xlu0 %3084
        %v3087 = vlaneseq
        %v3088 = vshrl.u32 %v3087, 7
        %v3089 = vsub.s32 0, %v3088
        %v3090 = vrot.slane %v3085, %v3089
        %3092 = vset.pattern.permute.xlu0 0
        %3093 = vperm.xlu0 %3092, %v3011
        %v3094 = vpop.permute.xlu0 %3093
        %v3096 = vlaneseq
        %v3097 = vshrl.u32 %v3096, 7
        %v3098 = vsub.s32 0, %v3097
        %v3099 = vrot.slane %v3094, %v3098
        %3101 = vset.pattern.permute.xlu0 0
        %3102 = vperm.xlu0 %3101, %v3012
        %v3103 = vpop.permute.xlu0 %3102
        %v3105 = vlaneseq
        %v3106 = vshrl.u32 %v3105, 7
        %v3107 = vsub.s32 0, %v3106
        %v3108 = vrot.slane %v3103, %v3107
        %3110 = vset.pattern.permute.xlu0 0
        %3111 = vperm.xlu0 %3110, %v3013
        %v3112 = vpop.permute.xlu0 %3111
        %v3114 = vlaneseq
        %v3115 = vshrl.u32 %v3114, 7
        %v3116 = vsub.s32 0, %v3115
        %v3117 = vrot.slane %v3112, %v3116
        %3119 = vset.pattern.permute.xlu0 0
        %3120 = vperm.xlu0 %3119, %v3014
        %v3121 = vpop.permute.xlu0 %3120
        %v3123 = vlaneseq
        %v3124 = vshrl.u32 %v3123, 7
        %v3125 = vsub.s32 0, %v3124
        %v3126 = vrot.slane %v3121, %v3125
        %3128 = vset.pattern.permute.xlu0 0
        %3129 = vperm.xlu0 %3128, %v3015
        %v3130 = vpop.permute.xlu0 %3129
        %v3132 = vlaneseq
        %v3133 = vshrl.u32 %v3132, 7
        %v3134 = vsub.s32 0, %v3133
        %v3135 = vrot.slane %v3130, %v3134
        %3137 = vset.pattern.permute.xlu0 0
        %3138 = vperm.xlu0 %3137, %v3016
        %v3139 = vpop.permute.xlu0 %3138
        %v3141 = vlaneseq
        %v3142 = vshrl.u32 %v3141, 7
        %v3143 = vsub.s32 0, %v3142
        %v3144 = vrot.slane %v3139, %v3143
        %3146 = vset.pattern.permute.xlu0 0
        %3147 = vperm.xlu0 %3146, %v3017
        %v3148 = vpop.permute.xlu0 %3147
        %v3150 = vlaneseq
        %v3151 = vshrl.u32 %v3150, 7
        %v3152 = vsub.s32 0, %v3151
        %v3153 = vrot.slane %v3148, %v3152
        %3155 = vset.pattern.permute.xlu0 0
        %3156 = vperm.xlu0 %3155, %v3018
        %v3157 = vpop.permute.xlu0 %3156
        %v3159 = vlaneseq
        %v3160 = vshrl.u32 %v3159, 7
        %v3161 = vsub.s32 0, %v3160
        %v3162 = vrot.slane %v3157, %v3161
        %3164 = vset.pattern.permute.xlu0 0
        %3165 = vperm.xlu0 %3164, %v3019
        %v3166 = vpop.permute.xlu0 %3165
        %v3168 = vlaneseq
        %v3169 = vshrl.u32 %v3168, 7
        %v3170 = vsub.s32 0, %v3169
        %v3171 = vrot.slane %v3166, %v3170
        %3173 = vset.pattern.permute.xlu0 0
        %3174 = vperm.xlu0 %3173, %v3020
        %v3175 = vpop.permute.xlu0 %3174
        %v3177 = vlaneseq
        %v3178 = vshrl.u32 %v3177, 7
        %v3179 = vsub.s32 0, %v3178
        %v3180 = vrot.slane %v3175, %v3179
        %3182 = vset.pattern.permute.xlu0 0
        %3183 = vperm.xlu0 %3182, %v3021
        %v3184 = vpop.permute.xlu0 %3183
        %v3186 = vlaneseq
        %v3187 = vshrl.u32 %v3186, 7
        %v3188 = vsub.s32 0, %v3187
        %v3189 = vrot.slane %v3184, %v3188
        %3191 = vset.pattern.permute.xlu0 0
        %3192 = vperm.xlu0 %3191, %v3022
        %v3193 = vpop.permute.xlu0 %3192
        %v3195 = vlaneseq
        %v3196 = vshrl.u32 %v3195, 7
        %v3197 = vsub.s32 0, %v3196
        %v3198 = vrot.slane %v3193, %v3197
        %3200 = vset.pattern.permute.xlu0 0
        %3201 = vperm.xlu0 %3200, %v3023
        %v3202 = vpop.permute.xlu0 %3201
        %v3204 = vlaneseq
        %v3205 = vshrl.u32 %v3204, 7
        %v3206 = vsub.s32 0, %v3205
        %v3207 = vrot.slane %v3202, %v3206
        %3209 = vset.pattern.permute.xlu0 0
        %3210 = vperm.xlu0 %3209, %v3024
        %v3211 = vpop.permute.xlu0 %3210
        %v3213 = vlaneseq
        %v3214 = vshrl.u32 %v3213, 7
        %v3215 = vsub.s32 0, %v3214
        %v3216 = vrot.slane %v3211, %v3215
        %3218 = vset.pattern.permute.xlu0 0
        %3219 = vperm.xlu0 %3218, %v3025
        %v3220 = vpop.permute.xlu0 %3219
        %v3222 = vlaneseq
        %v3223 = vshrl.u32 %v3222, 7
        %v3224 = vsub.s32 0, %v3223
        %v3225 = vrot.slane %v3220, %v3224
        %3227 = vset.pattern.permute.xlu0 0
        %3228 = vperm.xlu0 %3227, %v3026
        %v3229 = vpop.permute.xlu0 %3228
        %v3231 = vlaneseq
        %v3232 = vshrl.u32 %v3231, 7
        %v3233 = vsub.s32 0, %v3232
        %v3234 = vrot.slane %v3229, %v3233
        %3236 = vset.pattern.permute.xlu0 0
        %3237 = vperm.xlu0 %3236, %v3027
        %v3238 = vpop.permute.xlu0 %3237
        %v3240 = vlaneseq
        %v3241 = vshrl.u32 %v3240, 7
        %v3242 = vsub.s32 0, %v3241
        %v3243 = vrot.slane %v3238, %v3242
        %v3244 = vmul.f32 %v3036, %v1894
        %v3245 = vmul.f32 %v3045, %v1894
        %v3246 = vmul.f32 %v3054, %v1894
        %v3247 = vmul.f32 %v3063, %v1894
        %v3248 = vmul.f32 %v3072, %v1894
        %v3249 = vmul.f32 %v3081, %v1894
        %v3250 = vmul.f32 %v3090, %v1894
        %v3251 = vmul.f32 %v3099, %v1894
        %v3252 = vmul.f32 %v3108, %v1894
        %v3253 = vmul.f32 %v3117, %v1894
        %v3254 = vmul.f32 %v3126, %v1894
        %v3255 = vmul.f32 %v3135, %v1894
        %v3256 = vmul.f32 %v3144, %v1894
        %v3257 = vmul.f32 %v3153, %v1894
        %v3258 = vmul.f32 %v3162, %v1894
        %v3259 = vmul.f32 %v3171, %v1894
        %v3260 = vmul.f32 %v3180, %v1894
        %v3261 = vmul.f32 %v3189, %v1894
        %v3262 = vmul.f32 %v3198, %v1894
        %v3263 = vmul.f32 %v3207, %v1894
        %v3264 = vmul.f32 %v3216, %v1894
        %v3265 = vmul.f32 %v3225, %v1894
        %v3266 = vmul.f32 %v3234, %v1894
        %v3267 = vmul.f32 %v3243, %v1894
        %v3268 = vadd.f32 %v2980, %v3244
        %v3269 = vadd.f32 %v2981, %v3245
        %v3270 = vadd.f32 %v2982, %v3246
        %v3271 = vadd.f32 %v2983, %v3247
        %v3272 = vadd.f32 %v2984, %v3248
        %v3273 = vadd.f32 %v2985, %v3249
        %v3274 = vadd.f32 %v2986, %v3250
        %v3275 = vadd.f32 %v2987, %v3251
        %v3276 = vadd.f32 %v2988, %v3252
        %v3277 = vadd.f32 %v2989, %v3253
        %v3278 = vadd.f32 %v2990, %v3254
        %v3279 = vadd.f32 %v2991, %v3255
        %v3280 = vadd.f32 %v2992, %v3256
        %v3281 = vadd.f32 %v2993, %v3257
        %v3282 = vadd.f32 %v2994, %v3258
        %v3283 = vadd.f32 %v2995, %v3259
        %v3284 = vadd.f32 %v2996, %v3260
        %v3285 = vadd.f32 %v2997, %v3261
        %v3286 = vadd.f32 %v2998, %v3262
        %v3287 = vadd.f32 %v2999, %v3263
        %v3288 = vadd.f32 %v3000, %v3264
        %v3289 = vadd.f32 %v3001, %v3265
        %v3290 = vadd.f32 %v3002, %v3266
        %v3291 = vadd.f32 %v3003, %v3267
        %v3292 = vmax.f32 %v3268, 0.0
        %v3293 = vmax.f32 %v3269, 0.0
        %v3294 = vmax.f32 %v3270, 0.0
        %v3295 = vmax.f32 %v3271, 0.0
        %v3296 = vmax.f32 %v3272, 0.0
        %v3297 = vmax.f32 %v3273, 0.0
        %v3298 = vmax.f32 %v3274, 0.0
        %v3299 = vmax.f32 %v3275, 0.0
        %v3300 = vmax.f32 %v3276, 0.0
        %v3301 = vmax.f32 %v3277, 0.0
        %v3302 = vmax.f32 %v3278, 0.0
        %v3303 = vmax.f32 %v3279, 0.0
        %v3304 = vmax.f32 %v3280, 0.0
        %v3305 = vmax.f32 %v3281, 0.0
        %v3306 = vmax.f32 %v3282, 0.0
        %v3307 = vmax.f32 %v3283, 0.0
        %v3308 = vmax.f32 %v3284, 0.0
        %v3309 = vmax.f32 %v3285, 0.0
        %v3310 = vmax.f32 %v3286, 0.0
        %v3311 = vmax.f32 %v3287, 0.0
        %v3312 = vmax.f32 %v3288, 0.0
        %v3313 = vmax.f32 %v3289, 0.0
        %v3314 = vmax.f32 %v3290, 0.0
        %v3315 = vmax.f32 %v3291, 0.0
        %v3316 = vmin.f32 %v3292, 6.0
        %v3317 = vmin.f32 %v3293, 6.0
        %v3318 = vmin.f32 %v3294, 6.0
        %v3319 = vmin.f32 %v3295, 6.0
        %v3320 = vmin.f32 %v3296, 6.0
        %v3321 = vmin.f32 %v3297, 6.0
        %v3322 = vmin.f32 %v3298, 6.0
        %v3323 = vmin.f32 %v3299, 6.0
        %v3324 = vmin.f32 %v3300, 6.0
        %v3325 = vmin.f32 %v3301, 6.0
        %v3326 = vmin.f32 %v3302, 6.0
        %v3327 = vmin.f32 %v3303, 6.0
        %v3328 = vmin.f32 %v3304, 6.0
        %v3329 = vmin.f32 %v3305, 6.0
        %v3330 = vmin.f32 %v3306, 6.0
        %v3331 = vmin.f32 %v3307, 6.0
        %v3332 = vmin.f32 %v3308, 6.0
        %v3333 = vmin.f32 %v3309, 6.0
        %v3334 = vmin.f32 %v3310, 6.0
        %v3335 = vmin.f32 %v3311, 6.0
        %v3336 = vmin.f32 %v3312, 6.0
        %v3337 = vmin.f32 %v3313, 6.0
        %v3338 = vmin.f32 %v3314, 6.0
        %v3339 = vmin.f32 %v3315, 6.0
        %v3340 = vstv %s1886
        %v3341 = vmul.f32 %v3316, %v3340
        %v3342 = vmul.f32 %v3317, %v3340
        %v3343 = vmul.f32 %v3318, %v3340
        %v3344 = vmul.f32 %v3319, %v3340
        %v3345 = vmul.f32 %v3320, %v3340
        %v3346 = vmul.f32 %v3321, %v3340
        %v3347 = vmul.f32 %v3322, %v3340
        %v3348 = vmul.f32 %v3323, %v3340
        %v3349 = vmul.f32 %v3324, %v3340
        %v3350 = vmul.f32 %v3325, %v3340
        %v3351 = vmul.f32 %v3326, %v3340
        %v3352 = vmul.f32 %v3327, %v3340
        %v3353 = vmul.f32 %v3328, %v3340
        %v3354 = vmul.f32 %v3329, %v3340
        %v3355 = vmul.f32 %v3330, %v3340
        %v3356 = vmul.f32 %v3331, %v3340
        %v3357 = vmul.f32 %v3332, %v3340
        %v3358 = vmul.f32 %v3333, %v3340
        %v3359 = vmul.f32 %v3334, %v3340
        %v3360 = vmul.f32 %v3335, %v3340
        %v3361 = vmul.f32 %v3336, %v3340
        %v3362 = vmul.f32 %v3337, %v3340
        %v3363 = vmul.f32 %v3338, %v3340
        %v3364 = vmul.f32 %v3339, %v3340
        %3389 = vrot.lane.b32.xlu0 %v3341, 1
        %v3390 = vpop.permute.xlu0 %3389
        %3391 = vrot.lane.b32.xlu0 %v3342, 1
        %v3392 = vpop.permute.xlu0 %3391
        %3393 = vrot.lane.b32.xlu0 %v3343, 1
        %v3394 = vpop.permute.xlu0 %3393
        %3395 = vrot.lane.b32.xlu0 %v3344, 1
        %v3396 = vpop.permute.xlu0 %3395
        %3397 = vrot.lane.b32.xlu0 %v3345, 1
        %v3398 = vpop.permute.xlu0 %3397
        %3399 = vrot.lane.b32.xlu0 %v3346, 1
        %v3400 = vpop.permute.xlu0 %3399
        %3401 = vrot.lane.b32.xlu0 %v3347, 1
        %v3402 = vpop.permute.xlu0 %3401
        %3403 = vrot.lane.b32.xlu0 %v3348, 1
        %v3404 = vpop.permute.xlu0 %3403
        %3405 = vrot.lane.b32.xlu0 %v3349, 1
        %v3406 = vpop.permute.xlu0 %3405
        %3407 = vrot.lane.b32.xlu0 %v3350, 1
        %v3408 = vpop.permute.xlu0 %3407
        %3409 = vrot.lane.b32.xlu0 %v3351, 1
        %v3410 = vpop.permute.xlu0 %3409
        %3411 = vrot.lane.b32.xlu0 %v3352, 1
        %v3412 = vpop.permute.xlu0 %3411
        %3413 = vrot.lane.b32.xlu0 %v3353, 1
        %v3414 = vpop.permute.xlu0 %3413
        %3415 = vrot.lane.b32.xlu0 %v3354, 1
        %v3416 = vpop.permute.xlu0 %3415
        %3417 = vrot.lane.b32.xlu0 %v3355, 1
        %v3418 = vpop.permute.xlu0 %3417
        %3419 = vrot.lane.b32.xlu0 %v3356, 1
        %v3420 = vpop.permute.xlu0 %3419
        %3421 = vrot.lane.b32.xlu0 %v3357, 1
        %v3422 = vpop.permute.xlu0 %3421
        %3423 = vrot.lane.b32.xlu0 %v3358, 1
        %v3424 = vpop.permute.xlu0 %3423
        %3425 = vrot.lane.b32.xlu0 %v3359, 1
        %v3426 = vpop.permute.xlu0 %3425
        %3427 = vrot.lane.b32.xlu0 %v3360, 1
        %v3428 = vpop.permute.xlu0 %3427
        %3429 = vrot.lane.b32.xlu0 %v3361, 1
        %v3430 = vpop.permute.xlu0 %3429
        %3431 = vrot.lane.b32.xlu0 %v3362, 1
        %v3432 = vpop.permute.xlu0 %3431
        %3433 = vrot.lane.b32.xlu0 %v3363, 1
        %v3434 = vpop.permute.xlu0 %3433
        %3435 = vrot.lane.b32.xlu0 %v3364, 1
        %v3436 = vpop.permute.xlu0 %3435
        %vm3461 = vcmask 131080
        %3462 = vst.msk [vmem:[#allocation3] sm:$0x1] %vm3461, %v3390
        %3463 = vst.msk [vmem:[#allocation3 + $0x10] sm:$0x1] %vm3461, %v3392
        %3464 = vst.msk [vmem:[#allocation3 + $0x20] sm:$0x1] %vm3461, %v3394
        %3465 = vst.msk [vmem:[#allocation3 + $0x30] sm:$0x1] %vm3461, %v3396
        %3466 = vst.msk [vmem:[#allocation3 + $0x40] sm:$0x1] %vm3461, %v3398
        %3467 = vst.msk [vmem:[#allocation3 + $0x50] sm:$0x1] %vm3461, %v3400
        %3468 = vst.msk [vmem:[#allocation3 + $0x60] sm:$0x1] %vm3461, %v3402
        %3469 = vst.msk [vmem:[#allocation3 + $0x70] sm:$0x1] %vm3461, %v3404
        %3470 = vst.msk [vmem:[#allocation3 + $0x80] sm:$0x1] %vm3461, %v3406
        %3471 = vst.msk [vmem:[#allocation3 + $0x90] sm:$0x1] %vm3461, %v3408
        %3472 = vst.msk [vmem:[#allocation3 + $0xa0] sm:$0x1] %vm3461, %v3410
        %3473 = vst.msk [vmem:[#allocation3 + $0xb0] sm:$0x1] %vm3461, %v3412
        %3474 = vst.msk [vmem:[#allocation3 + $0xc0] sm:$0x1] %vm3461, %v3414
        %3475 = vst.msk [vmem:[#allocation3 + $0xd0] sm:$0x1] %vm3461, %v3416
        %3476 = vst.msk [vmem:[#allocation3 + $0xe0] sm:$0x1] %vm3461, %v3418
        %3477 = vst.msk [vmem:[#allocation3 + $0xf0] sm:$0x1] %vm3461, %v3420
        %3478 = vst.msk [vmem:[#allocation3 + $0x100] sm:$0x1] %vm3461, %v3422
        %3479 = vst.msk [vmem:[#allocation3 + $0x110] sm:$0x1] %vm3461, %v3424
        %3480 = vst.msk [vmem:[#allocation3 + $0x120] sm:$0x1] %vm3461, %v3426
        %3481 = vst.msk [vmem:[#allocation3 + $0x130] sm:$0x1] %vm3461, %v3428
        %3482 = vst.msk [vmem:[#allocation3 + $0x140] sm:$0x1] %vm3461, %v3430
        %3483 = vst.msk [vmem:[#allocation3 + $0x150] sm:$0x1] %vm3461, %v3432
        %3484 = vst.msk [vmem:[#allocation3 + $0x160] sm:$0x1] %vm3461, %v3434
        %3485 = vst.msk [vmem:[#allocation3 + $0x170] sm:$0x1] %vm3461, %v3436
        %v3486 = vld [vmem:[%s2] sm:$0x1]
        %v3487 = vld [vmem:[%s2 + $0x1] sm:$0x1]
        %v3488 = vld [vmem:[%s2 + $0x2] sm:$0x1]
        %v3489 = vld [vmem:[%s2 + $0x3] sm:$0x1]
        %v3490 = vld [vmem:[%s2 + $0x4] sm:$0x1]
        %v3491 = vld [vmem:[%s2 + $0x5] sm:$0x1]
        %v3492 = vld [vmem:[%s2 + $0x6] sm:$0x1]
        %v3493 = vld [vmem:[%s2 + $0x7] sm:$0x1]
        %v3494 = vld [vmem:[%s2 + $0x8] sm:$0x1]
        %v3495 = vld [vmem:[%s2 + $0x9] sm:$0x1]
        %v3496 = vld [vmem:[%s2 + $0xa] sm:$0x1]
        %v3497 = vld [vmem:[%s2 + $0xb] sm:$0x1]
        %v3498 = vld [vmem:[%s2 + $0xc] sm:$0x1]
        %v3499 = vld [vmem:[%s2 + $0xd] sm:$0x1]
        %v3500 = vld [vmem:[%s2 + $0xe] sm:$0x1]
        %v3501 = vld [vmem:[%s2 + $0xf] sm:$0x1]
        %v3502 = vld [vmem:[%s2 + $0x10] sm:$0x1]
        %v3503 = vld [vmem:[%s2 + $0x11] sm:$0x1]
        %v3504 = vld [vmem:[%s2 + $0x12] sm:$0x1]
        %v3505 = vld [vmem:[%s2 + $0x13] sm:$0x1]
        %v3506 = vld [vmem:[%s2 + $0x14] sm:$0x1]
        %v3507 = vld [vmem:[%s2 + $0x15] sm:$0x1]
        %v3508 = vld [vmem:[%s2 + $0x16] sm:$0x1]
        %v3509 = vld [vmem:[%s2 + $0x17] sm:$0x1]
        %v3510 = vld [vmem:[%s1] sm:$0x1]
        %v3511 = vld [vmem:[%s1 + $0x1] sm:$0x1]
        %v3512 = vld [vmem:[%s1 + $0x2] sm:$0x1]
        %v3513 = vld [vmem:[%s1 + $0x3] sm:$0x1]
        %v3514 = vld [vmem:[%s1 + $0x4] sm:$0x1]
        %v3515 = vld [vmem:[%s1 + $0x5] sm:$0x1]
        %v3516 = vld [vmem:[%s1 + $0x6] sm:$0x1]
        %v3517 = vld [vmem:[%s1 + $0x7] sm:$0x1]
        %v3518 = vld [vmem:[%s1 + $0x8] sm:$0x1]
        %v3519 = vld [vmem:[%s1 + $0x9] sm:$0x1]
        %v3520 = vld [vmem:[%s1 + $0xa] sm:$0x1]
        %v3521 = vld [vmem:[%s1 + $0xb] sm:$0x1]
        %v3522 = vld [vmem:[%s1 + $0xc] sm:$0x1]
        %v3523 = vld [vmem:[%s1 + $0xd] sm:$0x1]
        %v3524 = vld [vmem:[%s1 + $0xe] sm:$0x1]
        %v3525 = vld [vmem:[%s1 + $0xf] sm:$0x1]
        %v3526 = vld [vmem:[%s1 + $0x10] sm:$0x1]
        %v3527 = vld [vmem:[%s1 + $0x11] sm:$0x1]
        %v3528 = vld [vmem:[%s1 + $0x12] sm:$0x1]
        %v3529 = vld [vmem:[%s1 + $0x13] sm:$0x1]
        %v3530 = vld [vmem:[%s1 + $0x14] sm:$0x1]
        %v3531 = vld [vmem:[%s1 + $0x15] sm:$0x1]
        %v3532 = vld [vmem:[%s1 + $0x16] sm:$0x1]
        %v3533 = vld [vmem:[%s1 + $0x17] sm:$0x1]
        %3535 = vset.pattern.permute.xlu0 0
        %3536 = vperm.xlu0 %3535, %v3510
        %v3537 = vpop.permute.xlu0 %3536
        %v3539 = vlaneseq
        %v3540 = vshrl.u32 %v3539, 7
        %v3541 = vsub.s32 0, %v3540
        %v3542 = vrot.slane %v3537, %v3541
        %3544 = vset.pattern.permute.xlu0 0
        %3545 = vperm.xlu0 %3544, %v3511
        %v3546 = vpop.permute.xlu0 %3545
        %v3548 = vlaneseq
        %v3549 = vshrl.u32 %v3548, 7
        %v3550 = vsub.s32 0, %v3549
        %v3551 = vrot.slane %v3546, %v3550
        %3553 = vset.pattern.permute.xlu0 0
        %3554 = vperm.xlu0 %3553, %v3512
        %v3555 = vpop.permute.xlu0 %3554
        %v3557 = vlaneseq
        %v3558 = vshrl.u32 %v3557, 7
        %v3559 = vsub.s32 0, %v3558
        %v3560 = vrot.slane %v3555, %v3559
        %3562 = vset.pattern.permute.xlu0 0
        %3563 = vperm.xlu0 %3562, %v3513
        %v3564 = vpop.permute.xlu0 %3563
        %v3566 = vlaneseq
        %v3567 = vshrl.u32 %v3566, 7
        %v3568 = vsub.s32 0, %v3567
        %v3569 = vrot.slane %v3564, %v3568
        %3571 = vset.pattern.permute.xlu0 0
        %3572 = vperm.xlu0 %3571, %v3514
        %v3573 = vpop.permute.xlu0 %3572
        %v3575 = vlaneseq
        %v3576 = vshrl.u32 %v3575, 7
        %v3577 = vsub.s32 0, %v3576
        %v3578 = vrot.slane %v3573, %v3577
        %3580 = vset.pattern.permute.xlu0 0
        %3581 = vperm.xlu0 %3580, %v3515
        %v3582 = vpop.permute.xlu0 %3581
        %v3584 = vlaneseq
        %v3585 = vshrl.u32 %v3584, 7
        %v3586 = vsub.s32 0, %v3585
        %v3587 = vrot.slane %v3582, %v3586
        %3589 = vset.pattern.permute.xlu0 0
        %3590 = vperm.xlu0 %3589, %v3516
        %v3591 = vpop.permute.xlu0 %3590
        %v3593 = vlaneseq
        %v3594 = vshrl.u32 %v3593, 7
        %v3595 = vsub.s32 0, %v3594
        %v3596 = vrot.slane %v3591, %v3595
        %3598 = vset.pattern.permute.xlu0 0
        %3599 = vperm.xlu0 %3598, %v3517
        %v3600 = vpop.permute.xlu0 %3599
        %v3602 = vlaneseq
        %v3603 = vshrl.u32 %v3602, 7
        %v3604 = vsub.s32 0, %v3603
        %v3605 = vrot.slane %v3600, %v3604
        %3607 = vset.pattern.permute.xlu0 0
        %3608 = vperm.xlu0 %3607, %v3518
        %v3609 = vpop.permute.xlu0 %3608
        %v3611 = vlaneseq
        %v3612 = vshrl.u32 %v3611, 7
        %v3613 = vsub.s32 0, %v3612
        %v3614 = vrot.slane %v3609, %v3613
        %3616 = vset.pattern.permute.xlu0 0
        %3617 = vperm.xlu0 %3616, %v3519
        %v3618 = vpop.permute.xlu0 %3617
        %v3620 = vlaneseq
        %v3621 = vshrl.u32 %v3620, 7
        %v3622 = vsub.s32 0, %v3621
        %v3623 = vrot.slane %v3618, %v3622
        %3625 = vset.pattern.permute.xlu0 0
        %3626 = vperm.xlu0 %3625, %v3520
        %v3627 = vpop.permute.xlu0 %3626
        %v3629 = vlaneseq
        %v3630 = vshrl.u32 %v3629, 7
        %v3631 = vsub.s32 0, %v3630
        %v3632 = vrot.slane %v3627, %v3631
        %3634 = vset.pattern.permute.xlu0 0
        %3635 = vperm.xlu0 %3634, %v3521
        %v3636 = vpop.permute.xlu0 %3635
        %v3638 = vlaneseq
        %v3639 = vshrl.u32 %v3638, 7
        %v3640 = vsub.s32 0, %v3639
        %v3641 = vrot.slane %v3636, %v3640
        %3643 = vset.pattern.permute.xlu0 0
        %3644 = vperm.xlu0 %3643, %v3522
        %v3645 = vpop.permute.xlu0 %3644
        %v3647 = vlaneseq
        %v3648 = vshrl.u32 %v3647, 7
        %v3649 = vsub.s32 0, %v3648
        %v3650 = vrot.slane %v3645, %v3649
        %3652 = vset.pattern.permute.xlu0 0
        %3653 = vperm.xlu0 %3652, %v3523
        %v3654 = vpop.permute.xlu0 %3653
        %v3656 = vlaneseq
        %v3657 = vshrl.u32 %v3656, 7
        %v3658 = vsub.s32 0, %v3657
        %v3659 = vrot.slane %v3654, %v3658
        %3661 = vset.pattern.permute.xlu0 0
        %3662 = vperm.xlu0 %3661, %v3524
        %v3663 = vpop.permute.xlu0 %3662
        %v3665 = vlaneseq
        %v3666 = vshrl.u32 %v3665, 7
        %v3667 = vsub.s32 0, %v3666
        %v3668 = vrot.slane %v3663, %v3667
        %3670 = vset.pattern.permute.xlu0 0
        %3671 = vperm.xlu0 %3670, %v3525
        %v3672 = vpop.permute.xlu0 %3671
        %v3674 = vlaneseq
        %v3675 = vshrl.u32 %v3674, 7
        %v3676 = vsub.s32 0, %v3675
        %v3677 = vrot.slane %v3672, %v3676
        %3679 = vset.pattern.permute.xlu0 0
        %3680 = vperm.xlu0 %3679, %v3526
        %v3681 = vpop.permute.xlu0 %3680
        %v3683 = vlaneseq
        %v3684 = vshrl.u32 %v3683, 7
        %v3685 = vsub.s32 0, %v3684
        %v3686 = vrot.slane %v3681, %v3685
        %3688 = vset.pattern.permute.xlu0 0
        %3689 = vperm.xlu0 %3688, %v3527
        %v3690 = vpop.permute.xlu0 %3689
        %v3692 = vlaneseq
        %v3693 = vshrl.u32 %v3692, 7
        %v3694 = vsub.s32 0, %v3693
        %v3695 = vrot.slane %v3690, %v3694
        %3697 = vset.pattern.permute.xlu0 0
        %3698 = vperm.xlu0 %3697, %v3528
        %v3699 = vpop.permute.xlu0 %3698
        %v3701 = vlaneseq
        %v3702 = vshrl.u32 %v3701, 7
        %v3703 = vsub.s32 0, %v3702
        %v3704 = vrot.slane %v3699, %v3703
        %3706 = vset.pattern.permute.xlu0 0
        %3707 = vperm.xlu0 %3706, %v3529
        %v3708 = vpop.permute.xlu0 %3707
        %v3710 = vlaneseq
        %v3711 = vshrl.u32 %v3710, 7
        %v3712 = vsub.s32 0, %v3711
        %v3713 = vrot.slane %v3708, %v3712
        %3715 = vset.pattern.permute.xlu0 0
        %3716 = vperm.xlu0 %3715, %v3530
        %v3717 = vpop.permute.xlu0 %3716
        %v3719 = vlaneseq
        %v3720 = vshrl.u32 %v3719, 7
        %v3721 = vsub.s32 0, %v3720
        %v3722 = vrot.slane %v3717, %v3721
        %3724 = vset.pattern.permute.xlu0 0
        %3725 = vperm.xlu0 %3724, %v3531
        %v3726 = vpop.permute.xlu0 %3725
        %v3728 = vlaneseq
        %v3729 = vshrl.u32 %v3728, 7
        %v3730 = vsub.s32 0, %v3729
        %v3731 = vrot.slane %v3726, %v3730
        %3733 = vset.pattern.permute.xlu0 0
        %3734 = vperm.xlu0 %3733, %v3532
        %v3735 = vpop.permute.xlu0 %3734
        %v3737 = vlaneseq
        %v3738 = vshrl.u32 %v3737, 7
        %v3739 = vsub.s32 0, %v3738
        %v3740 = vrot.slane %v3735, %v3739
        %3742 = vset.pattern.permute.xlu0 0
        %3743 = vperm.xlu0 %3742, %v3533
        %v3744 = vpop.permute.xlu0 %3743
        %v3746 = vlaneseq
        %v3747 = vshrl.u32 %v3746, 7
        %v3748 = vsub.s32 0, %v3747
        %v3749 = vrot.slane %v3744, %v3748
        %v3750 = vmul.f32 %v3542, %v1896
        %v3751 = vmul.f32 %v3551, %v1896
        %v3752 = vmul.f32 %v3560, %v1896
        %v3753 = vmul.f32 %v3569, %v1896
        %v3754 = vmul.f32 %v3578, %v1896
        %v3755 = vmul.f32 %v3587, %v1896
        %v3756 = vmul.f32 %v3596, %v1896
        %v3757 = vmul.f32 %v3605, %v1896
        %v3758 = vmul.f32 %v3614, %v1896
        %v3759 = vmul.f32 %v3623, %v1896
        %v3760 = vmul.f32 %v3632, %v1896
        %v3761 = vmul.f32 %v3641, %v1896
        %v3762 = vmul.f32 %v3650, %v1896
        %v3763 = vmul.f32 %v3659, %v1896
        %v3764 = vmul.f32 %v3668, %v1896
        %v3765 = vmul.f32 %v3677, %v1896
        %v3766 = vmul.f32 %v3686, %v1896
        %v3767 = vmul.f32 %v3695, %v1896
        %v3768 = vmul.f32 %v3704, %v1896
        %v3769 = vmul.f32 %v3713, %v1896
        %v3770 = vmul.f32 %v3722, %v1896
        %v3771 = vmul.f32 %v3731, %v1896
        %v3772 = vmul.f32 %v3740, %v1896
        %v3773 = vmul.f32 %v3749, %v1896
        %3775 = vset.pattern.permute.xlu0 0
        %3776 = vperm.xlu0 %3775, %v3486
        %v3777 = vpop.permute.xlu0 %3776
        %v3779 = vlaneseq
        %v3780 = vshrl.u32 %v3779, 7
        %v3781 = vsub.s32 0, %v3780
        %v3782 = vrot.slane %v3777, %v3781
        %3784 = vset.pattern.permute.xlu0 0
        %3785 = vperm.xlu0 %3784, %v3487
        %v3786 = vpop.permute.xlu0 %3785
        %v3788 = vlaneseq
        %v3789 = vshrl.u32 %v3788, 7
        %v3790 = vsub.s32 0, %v3789
        %v3791 = vrot.slane %v3786, %v3790
        %3793 = vset.pattern.permute.xlu0 0
        %3794 = vperm.xlu0 %3793, %v3488
        %v3795 = vpop.permute.xlu0 %3794
        %v3797 = vlaneseq
        %v3798 = vshrl.u32 %v3797, 7
        %v3799 = vsub.s32 0, %v3798
        %v3800 = vrot.slane %v3795, %v3799
        %3802 = vset.pattern.permute.xlu0 0
        %3803 = vperm.xlu0 %3802, %v3489
        %v3804 = vpop.permute.xlu0 %3803
        %v3806 = vlaneseq
        %v3807 = vshrl.u32 %v3806, 7
        %v3808 = vsub.s32 0, %v3807
        %v3809 = vrot.slane %v3804, %v3808
        %3811 = vset.pattern.permute.xlu0 0
        %3812 = vperm.xlu0 %3811, %v3490
        %v3813 = vpop.permute.xlu0 %3812
        %v3815 = vlaneseq
        %v3816 = vshrl.u32 %v3815, 7
        %v3817 = vsub.s32 0, %v3816
        %v3818 = vrot.slane %v3813, %v3817
        %3820 = vset.pattern.permute.xlu0 0
        %3821 = vperm.xlu0 %3820, %v3491
        %v3822 = vpop.permute.xlu0 %3821
        %v3824 = vlaneseq
        %v3825 = vshrl.u32 %v3824, 7
        %v3826 = vsub.s32 0, %v3825
        %v3827 = vrot.slane %v3822, %v3826
        %3829 = vset.pattern.permute.xlu0 0
        %3830 = vperm.xlu0 %3829, %v3492
        %v3831 = vpop.permute.xlu0 %3830
        %v3833 = vlaneseq
        %v3834 = vshrl.u32 %v3833, 7
        %v3835 = vsub.s32 0, %v3834
        %v3836 = vrot.slane %v3831, %v3835
        %3838 = vset.pattern.permute.xlu0 0
        %3839 = vperm.xlu0 %3838, %v3493
        %v3840 = vpop.permute.xlu0 %3839
        %v3842 = vlaneseq
        %v3843 = vshrl.u32 %v3842, 7
        %v3844 = vsub.s32 0, %v3843
        %v3845 = vrot.slane %v3840, %v3844
        %3847 = vset.pattern.permute.xlu0 0
        %3848 = vperm.xlu0 %3847, %v3494
        %v3849 = vpop.permute.xlu0 %3848
        %v3851 = vlaneseq
        %v3852 = vshrl.u32 %v3851, 7
        %v3853 = vsub.s32 0, %v3852
        %v3854 = vrot.slane %v3849, %v3853
        %3856 = vset.pattern.permute.xlu0 0
        %3857 = vperm.xlu0 %3856, %v3495
        %v3858 = vpop.permute.xlu0 %3857
        %v3860 = vlaneseq
        %v3861 = vshrl.u32 %v3860, 7
        %v3862 = vsub.s32 0, %v3861
        %v3863 = vrot.slane %v3858, %v3862
        %3865 = vset.pattern.permute.xlu0 0
        %3866 = vperm.xlu0 %3865, %v3496
        %v3867 = vpop.permute.xlu0 %3866
        %v3869 = vlaneseq
        %v3870 = vshrl.u32 %v3869, 7
        %v3871 = vsub.s32 0, %v3870
        %v3872 = vrot.slane %v3867, %v3871
        %3874 = vset.pattern.permute.xlu0 0
        %3875 = vperm.xlu0 %3874, %v3497
        %v3876 = vpop.permute.xlu0 %3875
        %v3878 = vlaneseq
        %v3879 = vshrl.u32 %v3878, 7
        %v3880 = vsub.s32 0, %v3879
        %v3881 = vrot.slane %v3876, %v3880
        %3883 = vset.pattern.permute.xlu0 0
        %3884 = vperm.xlu0 %3883, %v3498
        %v3885 = vpop.permute.xlu0 %3884
        %v3887 = vlaneseq
        %v3888 = vshrl.u32 %v3887, 7
        %v3889 = vsub.s32 0, %v3888
        %v3890 = vrot.slane %v3885, %v3889
        %3892 = vset.pattern.permute.xlu0 0
        %3893 = vperm.xlu0 %3892, %v3499
        %v3894 = vpop.permute.xlu0 %3893
        %v3896 = vlaneseq
        %v3897 = vshrl.u32 %v3896, 7
        %v3898 = vsub.s32 0, %v3897
        %v3899 = vrot.slane %v3894, %v3898
        %3901 = vset.pattern.permute.xlu0 0
        %3902 = vperm.xlu0 %3901, %v3500
        %v3903 = vpop.permute.xlu0 %3902
        %v3905 = vlaneseq
        %v3906 = vshrl.u32 %v3905, 7
        %v3907 = vsub.s32 0, %v3906
        %v3908 = vrot.slane %v3903, %v3907
        %3910 = vset.pattern.permute.xlu0 0
        %3911 = vperm.xlu0 %3910, %v3501
        %v3912 = vpop.permute.xlu0 %3911
        %v3914 = vlaneseq
        %v3915 = vshrl.u32 %v3914, 7
        %v3916 = vsub.s32 0, %v3915
        %v3917 = vrot.slane %v3912, %v3916
        %3919 = vset.pattern.permute.xlu0 0
        %3920 = vperm.xlu0 %3919, %v3502
        %v3921 = vpop.permute.xlu0 %3920
        %v3923 = vlaneseq
        %v3924 = vshrl.u32 %v3923, 7
        %v3925 = vsub.s32 0, %v3924
        %v3926 = vrot.slane %v3921, %v3925
        %3928 = vset.pattern.permute.xlu0 0
        %3929 = vperm.xlu0 %3928, %v3503
        %v3930 = vpop.permute.xlu0 %3929
        %v3932 = vlaneseq
        %v3933 = vshrl.u32 %v3932, 7
        %v3934 = vsub.s32 0, %v3933
        %v3935 = vrot.slane %v3930, %v3934
        %3937 = vset.pattern.permute.xlu0 0
        %3938 = vperm.xlu0 %3937, %v3504
        %v3939 = vpop.permute.xlu0 %3938
        %v3941 = vlaneseq
        %v3942 = vshrl.u32 %v3941, 7
        %v3943 = vsub.s32 0, %v3942
        %v3944 = vrot.slane %v3939, %v3943
        %3946 = vset.pattern.permute.xlu0 0
        %3947 = vperm.xlu0 %3946, %v3505
        %v3948 = vpop.permute.xlu0 %3947
        %v3950 = vlaneseq
        %v3951 = vshrl.u32 %v3950, 7
        %v3952 = vsub.s32 0, %v3951
        %v3953 = vrot.slane %v3948, %v3952
        %3955 = vset.pattern.permute.xlu0 0
        %3956 = vperm.xlu0 %3955, %v3506
        %v3957 = vpop.permute.xlu0 %3956
        %v3959 = vlaneseq
        %v3960 = vshrl.u32 %v3959, 7
        %v3961 = vsub.s32 0, %v3960
        %v3962 = vrot.slane %v3957, %v3961
        %3964 = vset.pattern.permute.xlu0 0
        %3965 = vperm.xlu0 %3964, %v3507
        %v3966 = vpop.permute.xlu0 %3965
        %v3968 = vlaneseq
        %v3969 = vshrl.u32 %v3968, 7
        %v3970 = vsub.s32 0, %v3969
        %v3971 = vrot.slane %v3966, %v3970
        %3973 = vset.pattern.permute.xlu0 0
        %3974 = vperm.xlu0 %3973, %v3508
        %v3975 = vpop.permute.xlu0 %3974
        %v3977 = vlaneseq
        %v3978 = vshrl.u32 %v3977, 7
        %v3979 = vsub.s32 0, %v3978
        %v3980 = vrot.slane %v3975, %v3979
        %3982 = vset.pattern.permute.xlu0 0
        %3983 = vperm.xlu0 %3982, %v3509
        %v3984 = vpop.permute.xlu0 %3983
        %v3986 = vlaneseq
        %v3987 = vshrl.u32 %v3986, 7
        %v3988 = vsub.s32 0, %v3987
        %v3989 = vrot.slane %v3984, %v3988
        %v3990 = vadd.f32 %v3782, %v3750
        %v3991 = vadd.f32 %v3791, %v3751
        %v3992 = vadd.f32 %v3800, %v3752
        %v3993 = vadd.f32 %v3809, %v3753
        %v3994 = vadd.f32 %v3818, %v3754
        %v3995 = vadd.f32 %v3827, %v3755
        %v3996 = vadd.f32 %v3836, %v3756
        %v3997 = vadd.f32 %v3845, %v3757
        %v3998 = vadd.f32 %v3854, %v3758
        %v3999 = vadd.f32 %v3863, %v3759
        %v4000 = vadd.f32 %v3872, %v3760
        %v4001 = vadd.f32 %v3881, %v3761
        %v4002 = vadd.f32 %v3890, %v3762
        %v4003 = vadd.f32 %v3899, %v3763
        %v4004 = vadd.f32 %v3908, %v3764
        %v4005 = vadd.f32 %v3917, %v3765
        %v4006 = vadd.f32 %v3926, %v3766
        %v4007 = vadd.f32 %v3935, %v3767
        %v4008 = vadd.f32 %v3944, %v3768
        %v4009 = vadd.f32 %v3953, %v3769
        %v4010 = vadd.f32 %v3962, %v3770
        %v4011 = vadd.f32 %v3971, %v3771
        %v4012 = vadd.f32 %v3980, %v3772
        %v4013 = vadd.f32 %v3989, %v3773
        %v4014 = vld [vmem:[%s844] sm:$0x1]
        %v4015 = vld [vmem:[%s844 + $0x1] sm:$0x1]
        %v4016 = vld [vmem:[%s844 + $0x2] sm:$0x1]
        %v4017 = vld [vmem:[%s844 + $0x3] sm:$0x1]
        %v4018 = vld [vmem:[%s844 + $0x4] sm:$0x1]
        %v4019 = vld [vmem:[%s844 + $0x5] sm:$0x1]
        %v4020 = vld [vmem:[%s844 + $0x6] sm:$0x1]
        %v4021 = vld [vmem:[%s844 + $0x7] sm:$0x1]
        %v4022 = vld [vmem:[%s844 + $0x8] sm:$0x1]
        %v4023 = vld [vmem:[%s844 + $0x9] sm:$0x1]
        %v4024 = vld [vmem:[%s844 + $0xa] sm:$0x1]
        %v4025 = vld [vmem:[%s844 + $0xb] sm:$0x1]
        %v4026 = vld [vmem:[%s844 + $0xc] sm:$0x1]
        %v4027 = vld [vmem:[%s844 + $0xd] sm:$0x1]
        %v4028 = vld [vmem:[%s844 + $0xe] sm:$0x1]
        %v4029 = vld [vmem:[%s844 + $0xf] sm:$0x1]
        %v4030 = vld [vmem:[%s844 + $0x10] sm:$0x1]
        %v4031 = vld [vmem:[%s844 + $0x11] sm:$0x1]
        %v4032 = vld [vmem:[%s844 + $0x12] sm:$0x1]
        %v4033 = vld [vmem:[%s844 + $0x13] sm:$0x1]
        %v4034 = vld [vmem:[%s844 + $0x14] sm:$0x1]
        %v4035 = vld [vmem:[%s844 + $0x15] sm:$0x1]
        %v4036 = vld [vmem:[%s844 + $0x16] sm:$0x1]
        %v4037 = vld [vmem:[%s844 + $0x17] sm:$0x1]
        %4039 = vset.pattern.permute.xlu0 0
        %4040 = vperm.xlu0 %4039, %v4014
        %v4041 = vpop.permute.xlu0 %4040
        %v4043 = vlaneseq
        %v4044 = vshrl.u32 %v4043, 7
        %v4045 = vsub.s32 0, %v4044
        %v4046 = vrot.slane %v4041, %v4045
        %4048 = vset.pattern.permute.xlu0 0
        %4049 = vperm.xlu0 %4048, %v4015
        %v4050 = vpop.permute.xlu0 %4049
        %v4052 = vlaneseq
        %v4053 = vshrl.u32 %v4052, 7
        %v4054 = vsub.s32 0, %v4053
        %v4055 = vrot.slane %v4050, %v4054
        %4057 = vset.pattern.permute.xlu0 0
        %4058 = vperm.xlu0 %4057, %v4016
        %v4059 = vpop.permute.xlu0 %4058
        %v4061 = vlaneseq
        %v4062 = vshrl.u32 %v4061, 7
        %v4063 = vsub.s32 0, %v4062
        %v4064 = vrot.slane %v4059, %v4063
        %4066 = vset.pattern.permute.xlu0 0
        %4067 = vperm.xlu0 %4066, %v4017
        %v4068 = vpop.permute.xlu0 %4067
        %v4070 = vlaneseq
        %v4071 = vshrl.u32 %v4070, 7
        %v4072 = vsub.s32 0, %v4071
        %v4073 = vrot.slane %v4068, %v4072
        %4075 = vset.pattern.permute.xlu0 0
        %4076 = vperm.xlu0 %4075, %v4018
        %v4077 = vpop.permute.xlu0 %4076
        %v4079 = vlaneseq
        %v4080 = vshrl.u32 %v4079, 7
        %v4081 = vsub.s32 0, %v4080
        %v4082 = vrot.slane %v4077, %v4081
        %4084 = vset.pattern.permute.xlu0 0
        %4085 = vperm.xlu0 %4084, %v4019
        %v4086 = vpop.permute.xlu0 %4085
        %v4088 = vlaneseq
        %v4089 = vshrl.u32 %v4088, 7
        %v4090 = vsub.s32 0, %v4089
        %v4091 = vrot.slane %v4086, %v4090
        %4093 = vset.pattern.permute.xlu0 0
        %4094 = vperm.xlu0 %4093, %v4020
        %v4095 = vpop.permute.xlu0 %4094
        %v4097 = vlaneseq
        %v4098 = vshrl.u32 %v4097, 7
        %v4099 = vsub.s32 0, %v4098
        %v4100 = vrot.slane %v4095, %v4099
        %4102 = vset.pattern.permute.xlu0 0
        %4103 = vperm.xlu0 %4102, %v4021
        %v4104 = vpop.permute.xlu0 %4103
        %v4106 = vlaneseq
        %v4107 = vshrl.u32 %v4106, 7
        %v4108 = vsub.s32 0, %v4107
        %v4109 = vrot.slane %v4104, %v4108
        %4111 = vset.pattern.permute.xlu0 0
        %4112 = vperm.xlu0 %4111, %v4022
        %v4113 = vpop.permute.xlu0 %4112
        %v4115 = vlaneseq
        %v4116 = vshrl.u32 %v4115, 7
        %v4117 = vsub.s32 0, %v4116
        %v4118 = vrot.slane %v4113, %v4117
        %4120 = vset.pattern.permute.xlu0 0
        %4121 = vperm.xlu0 %4120, %v4023
        %v4122 = vpop.permute.xlu0 %4121
        %v4124 = vlaneseq
        %v4125 = vshrl.u32 %v4124, 7
        %v4126 = vsub.s32 0, %v4125
        %v4127 = vrot.slane %v4122, %v4126
        %4129 = vset.pattern.permute.xlu0 0
        %4130 = vperm.xlu0 %4129, %v4024
        %v4131 = vpop.permute.xlu0 %4130
        %v4133 = vlaneseq
        %v4134 = vshrl.u32 %v4133, 7
        %v4135 = vsub.s32 0, %v4134
        %v4136 = vrot.slane %v4131, %v4135
        %4138 = vset.pattern.permute.xlu0 0
        %4139 = vperm.xlu0 %4138, %v4025
        %v4140 = vpop.permute.xlu0 %4139
        %v4142 = vlaneseq
        %v4143 = vshrl.u32 %v4142, 7
        %v4144 = vsub.s32 0, %v4143
        %v4145 = vrot.slane %v4140, %v4144
        %4147 = vset.pattern.permute.xlu0 0
        %4148 = vperm.xlu0 %4147, %v4026
        %v4149 = vpop.permute.xlu0 %4148
        %v4151 = vlaneseq
        %v4152 = vshrl.u32 %v4151, 7
        %v4153 = vsub.s32 0, %v4152
        %v4154 = vrot.slane %v4149, %v4153
        %4156 = vset.pattern.permute.xlu0 0
        %4157 = vperm.xlu0 %4156, %v4027
        %v4158 = vpop.permute.xlu0 %4157
        %v4160 = vlaneseq
        %v4161 = vshrl.u32 %v4160, 7
        %v4162 = vsub.s32 0, %v4161
        %v4163 = vrot.slane %v4158, %v4162
        %4165 = vset.pattern.permute.xlu0 0
        %4166 = vperm.xlu0 %4165, %v4028
        %v4167 = vpop.permute.xlu0 %4166
        %v4169 = vlaneseq
        %v4170 = vshrl.u32 %v4169, 7
        %v4171 = vsub.s32 0, %v4170
        %v4172 = vrot.slane %v4167, %v4171
        %4174 = vset.pattern.permute.xlu0 0
        %4175 = vperm.xlu0 %4174, %v4029
        %v4176 = vpop.permute.xlu0 %4175
        %v4178 = vlaneseq
        %v4179 = vshrl.u32 %v4178, 7
        %v4180 = vsub.s32 0, %v4179
        %v4181 = vrot.slane %v4176, %v4180
        %4183 = vset.pattern.permute.xlu0 0
        %4184 = vperm.xlu0 %4183, %v4030
        %v4185 = vpop.permute.xlu0 %4184
        %v4187 = vlaneseq
        %v4188 = vshrl.u32 %v4187, 7
        %v4189 = vsub.s32 0, %v4188
        %v4190 = vrot.slane %v4185, %v4189
        %4192 = vset.pattern.permute.xlu0 0
        %4193 = vperm.xlu0 %4192, %v4031
        %v4194 = vpop.permute.xlu0 %4193
        %v4196 = vlaneseq
        %v4197 = vshrl.u32 %v4196, 7
        %v4198 = vsub.s32 0, %v4197
        %v4199 = vrot.slane %v4194, %v4198
        %4201 = vset.pattern.permute.xlu0 0
        %4202 = vperm.xlu0 %4201, %v4032
        %v4203 = vpop.permute.xlu0 %4202
        %v4205 = vlaneseq
        %v4206 = vshrl.u32 %v4205, 7
        %v4207 = vsub.s32 0, %v4206
        %v4208 = vrot.slane %v4203, %v4207
        %4210 = vset.pattern.permute.xlu0 0
        %4211 = vperm.xlu0 %4210, %v4033
        %v4212 = vpop.permute.xlu0 %4211
        %v4214 = vlaneseq
        %v4215 = vshrl.u32 %v4214, 7
        %v4216 = vsub.s32 0, %v4215
        %v4217 = vrot.slane %v4212, %v4216
        %4219 = vset.pattern.permute.xlu0 0
        %4220 = vperm.xlu0 %4219, %v4034
        %v4221 = vpop.permute.xlu0 %4220
        %v4223 = vlaneseq
        %v4224 = vshrl.u32 %v4223, 7
        %v4225 = vsub.s32 0, %v4224
        %v4226 = vrot.slane %v4221, %v4225
        %4228 = vset.pattern.permute.xlu0 0
        %4229 = vperm.xlu0 %4228, %v4035
        %v4230 = vpop.permute.xlu0 %4229
        %v4232 = vlaneseq
        %v4233 = vshrl.u32 %v4232, 7
        %v4234 = vsub.s32 0, %v4233
        %v4235 = vrot.slane %v4230, %v4234
        %4237 = vset.pattern.permute.xlu0 0
        %4238 = vperm.xlu0 %4237, %v4036
        %v4239 = vpop.permute.xlu0 %4238
        %v4241 = vlaneseq
        %v4242 = vshrl.u32 %v4241, 7
        %v4243 = vsub.s32 0, %v4242
        %v4244 = vrot.slane %v4239, %v4243
        %4246 = vset.pattern.permute.xlu0 0
        %4247 = vperm.xlu0 %4246, %v4037
        %v4248 = vpop.permute.xlu0 %4247
        %v4250 = vlaneseq
        %v4251 = vshrl.u32 %v4250, 7
        %v4252 = vsub.s32 0, %v4251
        %v4253 = vrot.slane %v4248, %v4252
        %v4254 = vmul.f32 %v4046, %v1897
        %v4255 = vmul.f32 %v4055, %v1897
        %v4256 = vmul.f32 %v4064, %v1897
        %v4257 = vmul.f32 %v4073, %v1897
        %v4258 = vmul.f32 %v4082, %v1897
        %v4259 = vmul.f32 %v4091, %v1897
        %v4260 = vmul.f32 %v4100, %v1897
        %v4261 = vmul.f32 %v4109, %v1897
        %v4262 = vmul.f32 %v4118, %v1897
        %v4263 = vmul.f32 %v4127, %v1897
        %v4264 = vmul.f32 %v4136, %v1897
        %v4265 = vmul.f32 %v4145, %v1897
        %v4266 = vmul.f32 %v4154, %v1897
        %v4267 = vmul.f32 %v4163, %v1897
        %v4268 = vmul.f32 %v4172, %v1897
        %v4269 = vmul.f32 %v4181, %v1897
        %v4270 = vmul.f32 %v4190, %v1897
        %v4271 = vmul.f32 %v4199, %v1897
        %v4272 = vmul.f32 %v4208, %v1897
        %v4273 = vmul.f32 %v4217, %v1897
        %v4274 = vmul.f32 %v4226, %v1897
        %v4275 = vmul.f32 %v4235, %v1897
        %v4276 = vmul.f32 %v4244, %v1897
        %v4277 = vmul.f32 %v4253, %v1897
        %v4278 = vadd.f32 %v3990, %v4254
        %v4279 = vadd.f32 %v3991, %v4255
        %v4280 = vadd.f32 %v3992, %v4256
        %v4281 = vadd.f32 %v3993, %v4257
        %v4282 = vadd.f32 %v3994, %v4258
        %v4283 = vadd.f32 %v3995, %v4259
        %v4284 = vadd.f32 %v3996, %v4260
        %v4285 = vadd.f32 %v3997, %v4261
        %v4286 = vadd.f32 %v3998, %v4262
        %v4287 = vadd.f32 %v3999, %v4263
        %v4288 = vadd.f32 %v4000, %v4264
        %v4289 = vadd.f32 %v4001, %v4265
        %v4290 = vadd.f32 %v4002, %v4266
        %v4291 = vadd.f32 %v4003, %v4267
        %v4292 = vadd.f32 %v4004, %v4268
        %v4293 = vadd.f32 %v4005, %v4269
        %v4294 = vadd.f32 %v4006, %v4270
        %v4295 = vadd.f32 %v4007, %v4271
        %v4296 = vadd.f32 %v4008, %v4272
        %v4297 = vadd.f32 %v4009, %v4273
        %v4298 = vadd.f32 %v4010, %v4274
        %v4299 = vadd.f32 %v4011, %v4275
        %v4300 = vadd.f32 %v4012, %v4276
        %v4301 = vadd.f32 %v4013, %v4277
        %v4302 = vld [vmem:[%s1133] sm:$0x1]
        %v4303 = vld [vmem:[%s1133 + $0x1] sm:$0x1]
        %v4304 = vld [vmem:[%s1133 + $0x2] sm:$0x1]
        %v4305 = vld [vmem:[%s1133 + $0x3] sm:$0x1]
        %v4306 = vld [vmem:[%s1133 + $0x4] sm:$0x1]
        %v4307 = vld [vmem:[%s1133 + $0x5] sm:$0x1]
        %v4308 = vld [vmem:[%s1133 + $0x6] sm:$0x1]
        %v4309 = vld [vmem:[%s1133 + $0x7] sm:$0x1]
        %v4310 = vld [vmem:[%s1133 + $0x8] sm:$0x1]
        %v4311 = vld [vmem:[%s1133 + $0x9] sm:$0x1]
        %v4312 = vld [vmem:[%s1133 + $0xa] sm:$0x1]
        %v4313 = vld [vmem:[%s1133 + $0xb] sm:$0x1]
        %v4314 = vld [vmem:[%s1133 + $0xc] sm:$0x1]
        %v4315 = vld [vmem:[%s1133 + $0xd] sm:$0x1]
        %v4316 = vld [vmem:[%s1133 + $0xe] sm:$0x1]
        %v4317 = vld [vmem:[%s1133 + $0xf] sm:$0x1]
        %v4318 = vld [vmem:[%s1133 + $0x10] sm:$0x1]
        %v4319 = vld [vmem:[%s1133 + $0x11] sm:$0x1]
        %v4320 = vld [vmem:[%s1133 + $0x12] sm:$0x1]
        %v4321 = vld [vmem:[%s1133 + $0x13] sm:$0x1]
        %v4322 = vld [vmem:[%s1133 + $0x14] sm:$0x1]
        %v4323 = vld [vmem:[%s1133 + $0x15] sm:$0x1]
        %v4324 = vld [vmem:[%s1133 + $0x16] sm:$0x1]
        %v4325 = vld [vmem:[%s1133 + $0x17] sm:$0x1]
        %4327 = vset.pattern.permute.xlu0 0
        %4328 = vperm.xlu0 %4327, %v4302
        %v4329 = vpop.permute.xlu0 %4328
        %v4331 = vlaneseq
        %v4332 = vshrl.u32 %v4331, 7
        %v4333 = vsub.s32 0, %v4332
        %v4334 = vrot.slane %v4329, %v4333
        %4336 = vset.pattern.permute.xlu0 0
        %4337 = vperm.xlu0 %4336, %v4303
        %v4338 = vpop.permute.xlu0 %4337
        %v4340 = vlaneseq
        %v4341 = vshrl.u32 %v4340, 7
        %v4342 = vsub.s32 0, %v4341
        %v4343 = vrot.slane %v4338, %v4342
        %4345 = vset.pattern.permute.xlu0 0
        %4346 = vperm.xlu0 %4345, %v4304
        %v4347 = vpop.permute.xlu0 %4346
        %v4349 = vlaneseq
        %v4350 = vshrl.u32 %v4349, 7
        %v4351 = vsub.s32 0, %v4350
        %v4352 = vrot.slane %v4347, %v4351
        %4354 = vset.pattern.permute.xlu0 0
        %4355 = vperm.xlu0 %4354, %v4305
        %v4356 = vpop.permute.xlu0 %4355
        %v4358 = vlaneseq
        %v4359 = vshrl.u32 %v4358, 7
        %v4360 = vsub.s32 0, %v4359
        %v4361 = vrot.slane %v4356, %v4360
        %4363 = vset.pattern.permute.xlu0 0
        %4364 = vperm.xlu0 %4363, %v4306
        %v4365 = vpop.permute.xlu0 %4364
        %v4367 = vlaneseq
        %v4368 = vshrl.u32 %v4367, 7
        %v4369 = vsub.s32 0, %v4368
        %v4370 = vrot.slane %v4365, %v4369
        %4372 = vset.pattern.permute.xlu0 0
        %4373 = vperm.xlu0 %4372, %v4307
        %v4374 = vpop.permute.xlu0 %4373
        %v4376 = vlaneseq
        %v4377 = vshrl.u32 %v4376, 7
        %v4378 = vsub.s32 0, %v4377
        %v4379 = vrot.slane %v4374, %v4378
        %4381 = vset.pattern.permute.xlu0 0
        %4382 = vperm.xlu0 %4381, %v4308
        %v4383 = vpop.permute.xlu0 %4382
        %v4385 = vlaneseq
        %v4386 = vshrl.u32 %v4385, 7
        %v4387 = vsub.s32 0, %v4386
        %v4388 = vrot.slane %v4383, %v4387
        %4390 = vset.pattern.permute.xlu0 0
        %4391 = vperm.xlu0 %4390, %v4309
        %v4392 = vpop.permute.xlu0 %4391
        %v4394 = vlaneseq
        %v4395 = vshrl.u32 %v4394, 7
        %v4396 = vsub.s32 0, %v4395
        %v4397 = vrot.slane %v4392, %v4396
        %4399 = vset.pattern.permute.xlu0 0
        %4400 = vperm.xlu0 %4399, %v4310
        %v4401 = vpop.permute.xlu0 %4400
        %v4403 = vlaneseq
        %v4404 = vshrl.u32 %v4403, 7
        %v4405 = vsub.s32 0, %v4404
        %v4406 = vrot.slane %v4401, %v4405
        %4408 = vset.pattern.permute.xlu0 0
        %4409 = vperm.xlu0 %4408, %v4311
        %v4410 = vpop.permute.xlu0 %4409
        %v4412 = vlaneseq
        %v4413 = vshrl.u32 %v4412, 7
        %v4414 = vsub.s32 0, %v4413
        %v4415 = vrot.slane %v4410, %v4414
        %4417 = vset.pattern.permute.xlu0 0
        %4418 = vperm.xlu0 %4417, %v4312
        %v4419 = vpop.permute.xlu0 %4418
        %v4421 = vlaneseq
        %v4422 = vshrl.u32 %v4421, 7
        %v4423 = vsub.s32 0, %v4422
        %v4424 = vrot.slane %v4419, %v4423
        %4426 = vset.pattern.permute.xlu0 0
        %4427 = vperm.xlu0 %4426, %v4313
        %v4428 = vpop.permute.xlu0 %4427
        %v4430 = vlaneseq
        %v4431 = vshrl.u32 %v4430, 7
        %v4432 = vsub.s32 0, %v4431
        %v4433 = vrot.slane %v4428, %v4432
        %4435 = vset.pattern.permute.xlu0 0
        %4436 = vperm.xlu0 %4435, %v4314
        %v4437 = vpop.permute.xlu0 %4436
        %v4439 = vlaneseq
        %v4440 = vshrl.u32 %v4439, 7
        %v4441 = vsub.s32 0, %v4440
        %v4442 = vrot.slane %v4437, %v4441
        %4444 = vset.pattern.permute.xlu0 0
        %4445 = vperm.xlu0 %4444, %v4315
        %v4446 = vpop.permute.xlu0 %4445
        %v4448 = vlaneseq
        %v4449 = vshrl.u32 %v4448, 7
        %v4450 = vsub.s32 0, %v4449
        %v4451 = vrot.slane %v4446, %v4450
        %4453 = vset.pattern.permute.xlu0 0
        %4454 = vperm.xlu0 %4453, %v4316
        %v4455 = vpop.permute.xlu0 %4454
        %v4457 = vlaneseq
        %v4458 = vshrl.u32 %v4457, 7
        %v4459 = vsub.s32 0, %v4458
        %v4460 = vrot.slane %v4455, %v4459
        %4462 = vset.pattern.permute.xlu0 0
        %4463 = vperm.xlu0 %4462, %v4317
        %v4464 = vpop.permute.xlu0 %4463
        %v4466 = vlaneseq
        %v4467 = vshrl.u32 %v4466, 7
        %v4468 = vsub.s32 0, %v4467
        %v4469 = vrot.slane %v4464, %v4468
        %4471 = vset.pattern.permute.xlu0 0
        %4472 = vperm.xlu0 %4471, %v4318
        %v4473 = vpop.permute.xlu0 %4472
        %v4475 = vlaneseq
        %v4476 = vshrl.u32 %v4475, 7
        %v4477 = vsub.s32 0, %v4476
        %v4478 = vrot.slane %v4473, %v4477
        %4480 = vset.pattern.permute.xlu0 0
        %4481 = vperm.xlu0 %4480, %v4319
        %v4482 = vpop.permute.xlu0 %4481
        %v4484 = vlaneseq
        %v4485 = vshrl.u32 %v4484, 7
        %v4486 = vsub.s32 0, %v4485
        %v4487 = vrot.slane %v4482, %v4486
        %4489 = vset.pattern.permute.xlu0 0
        %4490 = vperm.xlu0 %4489, %v4320
        %v4491 = vpop.permute.xlu0 %4490
        %v4493 = vlaneseq
        %v4494 = vshrl.u32 %v4493, 7
        %v4495 = vsub.s32 0, %v4494
        %v4496 = vrot.slane %v4491, %v4495
        %4498 = vset.pattern.permute.xlu0 0
        %4499 = vperm.xlu0 %4498, %v4321
        %v4500 = vpop.permute.xlu0 %4499
        %v4502 = vlaneseq
        %v4503 = vshrl.u32 %v4502, 7
        %v4504 = vsub.s32 0, %v4503
        %v4505 = vrot.slane %v4500, %v4504
        %4507 = vset.pattern.permute.xlu0 0
        %4508 = vperm.xlu0 %4507, %v4322
        %v4509 = vpop.permute.xlu0 %4508
        %v4511 = vlaneseq
        %v4512 = vshrl.u32 %v4511, 7
        %v4513 = vsub.s32 0, %v4512
        %v4514 = vrot.slane %v4509, %v4513
        %4516 = vset.pattern.permute.xlu0 0
        %4517 = vperm.xlu0 %4516, %v4323
        %v4518 = vpop.permute.xlu0 %4517
        %v4520 = vlaneseq
        %v4521 = vshrl.u32 %v4520, 7
        %v4522 = vsub.s32 0, %v4521
        %v4523 = vrot.slane %v4518, %v4522
        %4525 = vset.pattern.permute.xlu0 0
        %4526 = vperm.xlu0 %4525, %v4324
        %v4527 = vpop.permute.xlu0 %4526
        %v4529 = vlaneseq
        %v4530 = vshrl.u32 %v4529, 7
        %v4531 = vsub.s32 0, %v4530
        %v4532 = vrot.slane %v4527, %v4531
        %4534 = vset.pattern.permute.xlu0 0
        %4535 = vperm.xlu0 %4534, %v4325
        %v4536 = vpop.permute.xlu0 %4535
        %v4538 = vlaneseq
        %v4539 = vshrl.u32 %v4538, 7
        %v4540 = vsub.s32 0, %v4539
        %v4541 = vrot.slane %v4536, %v4540
        %v4542 = vmul.f32 %v4334, %v1898
        %v4543 = vmul.f32 %v4343, %v1898
        %v4544 = vmul.f32 %v4352, %v1898
        %v4545 = vmul.f32 %v4361, %v1898
        %v4546 = vmul.f32 %v4370, %v1898
        %v4547 = vmul.f32 %v4379, %v1898
        %v4548 = vmul.f32 %v4388, %v1898
        %v4549 = vmul.f32 %v4397, %v1898
        %v4550 = vmul.f32 %v4406, %v1898
        %v4551 = vmul.f32 %v4415, %v1898
        %v4552 = vmul.f32 %v4424, %v1898
        %v4553 = vmul.f32 %v4433, %v1898
        %v4554 = vmul.f32 %v4442, %v1898
        %v4555 = vmul.f32 %v4451, %v1898
        %v4556 = vmul.f32 %v4460, %v1898
        %v4557 = vmul.f32 %v4469, %v1898
        %v4558 = vmul.f32 %v4478, %v1898
        %v4559 = vmul.f32 %v4487, %v1898
        %v4560 = vmul.f32 %v4496, %v1898
        %v4561 = vmul.f32 %v4505, %v1898
        %v4562 = vmul.f32 %v4514, %v1898
        %v4563 = vmul.f32 %v4523, %v1898
        %v4564 = vmul.f32 %v4532, %v1898
        %v4565 = vmul.f32 %v4541, %v1898
        %v4566 = vadd.f32 %v4278, %v4542
        %v4567 = vadd.f32 %v4279, %v4543
        %v4568 = vadd.f32 %v4280, %v4544
        %v4569 = vadd.f32 %v4281, %v4545
        %v4570 = vadd.f32 %v4282, %v4546
        %v4571 = vadd.f32 %v4283, %v4547
        %v4572 = vadd.f32 %v4284, %v4548
        %v4573 = vadd.f32 %v4285, %v4549
        %v4574 = vadd.f32 %v4286, %v4550
        %v4575 = vadd.f32 %v4287, %v4551
        %v4576 = vadd.f32 %v4288, %v4552
        %v4577 = vadd.f32 %v4289, %v4553
        %v4578 = vadd.f32 %v4290, %v4554
        %v4579 = vadd.f32 %v4291, %v4555
        %v4580 = vadd.f32 %v4292, %v4556
        %v4581 = vadd.f32 %v4293, %v4557
        %v4582 = vadd.f32 %v4294, %v4558
        %v4583 = vadd.f32 %v4295, %v4559
        %v4584 = vadd.f32 %v4296, %v4560
        %v4585 = vadd.f32 %v4297, %v4561
        %v4586 = vadd.f32 %v4298, %v4562
        %v4587 = vadd.f32 %v4299, %v4563
        %v4588 = vadd.f32 %v4300, %v4564
        %v4589 = vadd.f32 %v4301, %v4565
        %v4590 = vld [vmem:[%s1422] sm:$0x1]
        %v4591 = vld [vmem:[%s1422 + $0x1] sm:$0x1]
        %v4592 = vld [vmem:[%s1422 + $0x2] sm:$0x1]
        %v4593 = vld [vmem:[%s1422 + $0x3] sm:$0x1]
        %v4594 = vld [vmem:[%s1422 + $0x4] sm:$0x1]
        %v4595 = vld [vmem:[%s1422 + $0x5] sm:$0x1]
        %v4596 = vld [vmem:[%s1422 + $0x6] sm:$0x1]
        %v4597 = vld [vmem:[%s1422 + $0x7] sm:$0x1]
        %v4598 = vld [vmem:[%s1422 + $0x8] sm:$0x1]
        %v4599 = vld [vmem:[%s1422 + $0x9] sm:$0x1]
        %v4600 = vld [vmem:[%s1422 + $0xa] sm:$0x1]
        %v4601 = vld [vmem:[%s1422 + $0xb] sm:$0x1]
        %v4602 = vld [vmem:[%s1422 + $0xc] sm:$0x1]
        %v4603 = vld [vmem:[%s1422 + $0xd] sm:$0x1]
        %v4604 = vld [vmem:[%s1422 + $0xe] sm:$0x1]
        %v4605 = vld [vmem:[%s1422 + $0xf] sm:$0x1]
        %v4606 = vld [vmem:[%s1422 + $0x10] sm:$0x1]
        %v4607 = vld [vmem:[%s1422 + $0x11] sm:$0x1]
        %v4608 = vld [vmem:[%s1422 + $0x12] sm:$0x1]
        %v4609 = vld [vmem:[%s1422 + $0x13] sm:$0x1]
        %v4610 = vld [vmem:[%s1422 + $0x14] sm:$0x1]
        %v4611 = vld [vmem:[%s1422 + $0x15] sm:$0x1]
        %v4612 = vld [vmem:[%s1422 + $0x16] sm:$0x1]
        %v4613 = vld [vmem:[%s1422 + $0x17] sm:$0x1]
        %4615 = vset.pattern.permute.xlu0 0
        %4616 = vperm.xlu0 %4615, %v4590
        %v4617 = vpop.permute.xlu0 %4616
        %v4619 = vlaneseq
        %v4620 = vshrl.u32 %v4619, 7
        %v4621 = vsub.s32 0, %v4620
        %v4622 = vrot.slane %v4617, %v4621
        %4624 = vset.pattern.permute.xlu0 0
        %4625 = vperm.xlu0 %4624, %v4591
        %v4626 = vpop.permute.xlu0 %4625
        %v4628 = vlaneseq
        %v4629 = vshrl.u32 %v4628, 7
        %v4630 = vsub.s32 0, %v4629
        %v4631 = vrot.slane %v4626, %v4630
        %4633 = vset.pattern.permute.xlu0 0
        %4634 = vperm.xlu0 %4633, %v4592
        %v4635 = vpop.permute.xlu0 %4634
        %v4637 = vlaneseq
        %v4638 = vshrl.u32 %v4637, 7
        %v4639 = vsub.s32 0, %v4638
        %v4640 = vrot.slane %v4635, %v4639
        %4642 = vset.pattern.permute.xlu0 0
        %4643 = vperm.xlu0 %4642, %v4593
        %v4644 = vpop.permute.xlu0 %4643
        %v4646 = vlaneseq
        %v4647 = vshrl.u32 %v4646, 7
        %v4648 = vsub.s32 0, %v4647
        %v4649 = vrot.slane %v4644, %v4648
        %4651 = vset.pattern.permute.xlu0 0
        %4652 = vperm.xlu0 %4651, %v4594
        %v4653 = vpop.permute.xlu0 %4652
        %v4655 = vlaneseq
        %v4656 = vshrl.u32 %v4655, 7
        %v4657 = vsub.s32 0, %v4656
        %v4658 = vrot.slane %v4653, %v4657
        %4660 = vset.pattern.permute.xlu0 0
        %4661 = vperm.xlu0 %4660, %v4595
        %v4662 = vpop.permute.xlu0 %4661
        %v4664 = vlaneseq
        %v4665 = vshrl.u32 %v4664, 7
        %v4666 = vsub.s32 0, %v4665
        %v4667 = vrot.slane %v4662, %v4666
        %4669 = vset.pattern.permute.xlu0 0
        %4670 = vperm.xlu0 %4669, %v4596
        %v4671 = vpop.permute.xlu0 %4670
        %v4673 = vlaneseq
        %v4674 = vshrl.u32 %v4673, 7
        %v4675 = vsub.s32 0, %v4674
        %v4676 = vrot.slane %v4671, %v4675
        %4678 = vset.pattern.permute.xlu0 0
        %4679 = vperm.xlu0 %4678, %v4597
        %v4680 = vpop.permute.xlu0 %4679
        %v4682 = vlaneseq
        %v4683 = vshrl.u32 %v4682, 7
        %v4684 = vsub.s32 0, %v4683
        %v4685 = vrot.slane %v4680, %v4684
        %4687 = vset.pattern.permute.xlu0 0
        %4688 = vperm.xlu0 %4687, %v4598
        %v4689 = vpop.permute.xlu0 %4688
        %v4691 = vlaneseq
        %v4692 = vshrl.u32 %v4691, 7
        %v4693 = vsub.s32 0, %v4692
        %v4694 = vrot.slane %v4689, %v4693
        %4696 = vset.pattern.permute.xlu0 0
        %4697 = vperm.xlu0 %4696, %v4599
        %v4698 = vpop.permute.xlu0 %4697
        %v4700 = vlaneseq
        %v4701 = vshrl.u32 %v4700, 7
        %v4702 = vsub.s32 0, %v4701
        %v4703 = vrot.slane %v4698, %v4702
        %4705 = vset.pattern.permute.xlu0 0
        %4706 = vperm.xlu0 %4705, %v4600
        %v4707 = vpop.permute.xlu0 %4706
        %v4709 = vlaneseq
        %v4710 = vshrl.u32 %v4709, 7
        %v4711 = vsub.s32 0, %v4710
        %v4712 = vrot.slane %v4707, %v4711
        %4714 = vset.pattern.permute.xlu0 0
        %4715 = vperm.xlu0 %4714, %v4601
        %v4716 = vpop.permute.xlu0 %4715
        %v4718 = vlaneseq
        %v4719 = vshrl.u32 %v4718, 7
        %v4720 = vsub.s32 0, %v4719
        %v4721 = vrot.slane %v4716, %v4720
        %4723 = vset.pattern.permute.xlu0 0
        %4724 = vperm.xlu0 %4723, %v4602
        %v4725 = vpop.permute.xlu0 %4724
        %v4727 = vlaneseq
        %v4728 = vshrl.u32 %v4727, 7
        %v4729 = vsub.s32 0, %v4728
        %v4730 = vrot.slane %v4725, %v4729
        %4732 = vset.pattern.permute.xlu0 0
        %4733 = vperm.xlu0 %4732, %v4603
        %v4734 = vpop.permute.xlu0 %4733
        %v4736 = vlaneseq
        %v4737 = vshrl.u32 %v4736, 7
        %v4738 = vsub.s32 0, %v4737
        %v4739 = vrot.slane %v4734, %v4738
        %4741 = vset.pattern.permute.xlu0 0
        %4742 = vperm.xlu0 %4741, %v4604
        %v4743 = vpop.permute.xlu0 %4742
        %v4745 = vlaneseq
        %v4746 = vshrl.u32 %v4745, 7
        %v4747 = vsub.s32 0, %v4746
        %v4748 = vrot.slane %v4743, %v4747
        %4750 = vset.pattern.permute.xlu0 0
        %4751 = vperm.xlu0 %4750, %v4605
        %v4752 = vpop.permute.xlu0 %4751
        %v4754 = vlaneseq
        %v4755 = vshrl.u32 %v4754, 7
        %v4756 = vsub.s32 0, %v4755
        %v4757 = vrot.slane %v4752, %v4756
        %4759 = vset.pattern.permute.xlu0 0
        %4760 = vperm.xlu0 %4759, %v4606
        %v4761 = vpop.permute.xlu0 %4760
        %v4763 = vlaneseq
        %v4764 = vshrl.u32 %v4763, 7
        %v4765 = vsub.s32 0, %v4764
        %v4766 = vrot.slane %v4761, %v4765
        %4768 = vset.pattern.permute.xlu0 0
        %4769 = vperm.xlu0 %4768, %v4607
        %v4770 = vpop.permute.xlu0 %4769
        %v4772 = vlaneseq
        %v4773 = vshrl.u32 %v4772, 7
        %v4774 = vsub.s32 0, %v4773
        %v4775 = vrot.slane %v4770, %v4774
        %4777 = vset.pattern.permute.xlu0 0
        %4778 = vperm.xlu0 %4777, %v4608
        %v4779 = vpop.permute.xlu0 %4778
        %v4781 = vlaneseq
        %v4782 = vshrl.u32 %v4781, 7
        %v4783 = vsub.s32 0, %v4782
        %v4784 = vrot.slane %v4779, %v4783
        %4786 = vset.pattern.permute.xlu0 0
        %4787 = vperm.xlu0 %4786, %v4609
        %v4788 = vpop.permute.xlu0 %4787
        %v4790 = vlaneseq
        %v4791 = vshrl.u32 %v4790, 7
        %v4792 = vsub.s32 0, %v4791
        %v4793 = vrot.slane %v4788, %v4792
        %4795 = vset.pattern.permute.xlu0 0
        %4796 = vperm.xlu0 %4795, %v4610
        %v4797 = vpop.permute.xlu0 %4796
        %v4799 = vlaneseq
        %v4800 = vshrl.u32 %v4799, 7
        %v4801 = vsub.s32 0, %v4800
        %v4802 = vrot.slane %v4797, %v4801
        %4804 = vset.pattern.permute.xlu0 0
        %4805 = vperm.xlu0 %4804, %v4611
        %v4806 = vpop.permute.xlu0 %4805
        %v4808 = vlaneseq
        %v4809 = vshrl.u32 %v4808, 7
        %v4810 = vsub.s32 0, %v4809
        %v4811 = vrot.slane %v4806, %v4810
        %4813 = vset.pattern.permute.xlu0 0
        %4814 = vperm.xlu0 %4813, %v4612
        %v4815 = vpop.permute.xlu0 %4814
        %v4817 = vlaneseq
        %v4818 = vshrl.u32 %v4817, 7
        %v4819 = vsub.s32 0, %v4818
        %v4820 = vrot.slane %v4815, %v4819
        %4822 = vset.pattern.permute.xlu0 0
        %4823 = vperm.xlu0 %4822, %v4613
        %v4824 = vpop.permute.xlu0 %4823
        %v4826 = vlaneseq
        %v4827 = vshrl.u32 %v4826, 7
        %v4828 = vsub.s32 0, %v4827
        %v4829 = vrot.slane %v4824, %v4828
        %v4830 = vmul.f32 %v4622, %v1899
        %v4831 = vmul.f32 %v4631, %v1899
        %v4832 = vmul.f32 %v4640, %v1899
        %v4833 = vmul.f32 %v4649, %v1899
        %v4834 = vmul.f32 %v4658, %v1899
        %v4835 = vmul.f32 %v4667, %v1899
        %v4836 = vmul.f32 %v4676, %v1899
        %v4837 = vmul.f32 %v4685, %v1899
        %v4838 = vmul.f32 %v4694, %v1899
        %v4839 = vmul.f32 %v4703, %v1899
        %v4840 = vmul.f32 %v4712, %v1899
        %v4841 = vmul.f32 %v4721, %v1899
        %v4842 = vmul.f32 %v4730, %v1899
        %v4843 = vmul.f32 %v4739, %v1899
        %v4844 = vmul.f32 %v4748, %v1899
        %v4845 = vmul.f32 %v4757, %v1899
        %v4846 = vmul.f32 %v4766, %v1899
        %v4847 = vmul.f32 %v4775, %v1899
        %v4848 = vmul.f32 %v4784, %v1899
        %v4849 = vmul.f32 %v4793, %v1899
        %v4850 = vmul.f32 %v4802, %v1899
        %v4851 = vmul.f32 %v4811, %v1899
        %v4852 = vmul.f32 %v4820, %v1899
        %v4853 = vmul.f32 %v4829, %v1899
        %v4854 = vadd.f32 %v4566, %v4830
        %v4855 = vadd.f32 %v4567, %v4831
        %v4856 = vadd.f32 %v4568, %v4832
        %v4857 = vadd.f32 %v4569, %v4833
        %v4858 = vadd.f32 %v4570, %v4834
        %v4859 = vadd.f32 %v4571, %v4835
        %v4860 = vadd.f32 %v4572, %v4836
        %v4861 = vadd.f32 %v4573, %v4837
        %v4862 = vadd.f32 %v4574, %v4838
        %v4863 = vadd.f32 %v4575, %v4839
        %v4864 = vadd.f32 %v4576, %v4840
        %v4865 = vadd.f32 %v4577, %v4841
        %v4866 = vadd.f32 %v4578, %v4842
        %v4867 = vadd.f32 %v4579, %v4843
        %v4868 = vadd.f32 %v4580, %v4844
        %v4869 = vadd.f32 %v4581, %v4845
        %v4870 = vadd.f32 %v4582, %v4846
        %v4871 = vadd.f32 %v4583, %v4847
        %v4872 = vadd.f32 %v4584, %v4848
        %v4873 = vadd.f32 %v4585, %v4849
        %v4874 = vadd.f32 %v4586, %v4850
        %v4875 = vadd.f32 %v4587, %v4851
        %v4876 = vadd.f32 %v4588, %v4852
        %v4877 = vadd.f32 %v4589, %v4853
        %v4878 = vmax.f32 %v4854, 0.0
        %v4879 = vmax.f32 %v4855, 0.0
        %v4880 = vmax.f32 %v4856, 0.0
        %v4881 = vmax.f32 %v4857, 0.0
        %v4882 = vmax.f32 %v4858, 0.0
        %v4883 = vmax.f32 %v4859, 0.0
        %v4884 = vmax.f32 %v4860, 0.0
        %v4885 = vmax.f32 %v4861, 0.0
        %v4886 = vmax.f32 %v4862, 0.0
        %v4887 = vmax.f32 %v4863, 0.0
        %v4888 = vmax.f32 %v4864, 0.0
        %v4889 = vmax.f32 %v4865, 0.0
        %v4890 = vmax.f32 %v4866, 0.0
        %v4891 = vmax.f32 %v4867, 0.0
        %v4892 = vmax.f32 %v4868, 0.0
        %v4893 = vmax.f32 %v4869, 0.0
        %v4894 = vmax.f32 %v4870, 0.0
        %v4895 = vmax.f32 %v4871, 0.0
        %v4896 = vmax.f32 %v4872, 0.0
        %v4897 = vmax.f32 %v4873, 0.0
        %v4898 = vmax.f32 %v4874, 0.0
        %v4899 = vmax.f32 %v4875, 0.0
        %v4900 = vmax.f32 %v4876, 0.0
        %v4901 = vmax.f32 %v4877, 0.0
        %v4902 = vmin.f32 %v4878, 6.0
        %v4903 = vmin.f32 %v4879, 6.0
        %v4904 = vmin.f32 %v4880, 6.0
        %v4905 = vmin.f32 %v4881, 6.0
        %v4906 = vmin.f32 %v4882, 6.0
        %v4907 = vmin.f32 %v4883, 6.0
        %v4908 = vmin.f32 %v4884, 6.0
        %v4909 = vmin.f32 %v4885, 6.0
        %v4910 = vmin.f32 %v4886, 6.0
        %v4911 = vmin.f32 %v4887, 6.0
        %v4912 = vmin.f32 %v4888, 6.0
        %v4913 = vmin.f32 %v4889, 6.0
        %v4914 = vmin.f32 %v4890, 6.0
        %v4915 = vmin.f32 %v4891, 6.0
        %v4916 = vmin.f32 %v4892, 6.0
        %v4917 = vmin.f32 %v4893, 6.0
        %v4918 = vmin.f32 %v4894, 6.0
        %v4919 = vmin.f32 %v4895, 6.0
        %v4920 = vmin.f32 %v4896, 6.0
        %v4921 = vmin.f32 %v4897, 6.0
        %v4922 = vmin.f32 %v4898, 6.0
        %v4923 = vmin.f32 %v4899, 6.0
        %v4924 = vmin.f32 %v4900, 6.0
        %v4925 = vmin.f32 %v4901, 6.0
        %v4926 = vstv %s1889
        %v4927 = vmul.f32 %v4902, %v4926
        %v4928 = vmul.f32 %v4903, %v4926
        %v4929 = vmul.f32 %v4904, %v4926
        %v4930 = vmul.f32 %v4905, %v4926
        %v4931 = vmul.f32 %v4906, %v4926
        %v4932 = vmul.f32 %v4907, %v4926
        %v4933 = vmul.f32 %v4908, %v4926
        %v4934 = vmul.f32 %v4909, %v4926
        %v4935 = vmul.f32 %v4910, %v4926
        %v4936 = vmul.f32 %v4911, %v4926
        %v4937 = vmul.f32 %v4912, %v4926
        %v4938 = vmul.f32 %v4913, %v4926
        %v4939 = vmul.f32 %v4914, %v4926
        %v4940 = vmul.f32 %v4915, %v4926
        %v4941 = vmul.f32 %v4916, %v4926
        %v4942 = vmul.f32 %v4917, %v4926
        %v4943 = vmul.f32 %v4918, %v4926
        %v4944 = vmul.f32 %v4919, %v4926
        %v4945 = vmul.f32 %v4920, %v4926
        %v4946 = vmul.f32 %v4921, %v4926
        %v4947 = vmul.f32 %v4922, %v4926
        %v4948 = vmul.f32 %v4923, %v4926
        %v4949 = vmul.f32 %v4924, %v4926
        %v4950 = vmul.f32 %v4925, %v4926
        %4975 = vrot.lane.b32.xlu0 %v4927, 1
        %v4976 = vpop.permute.xlu0 %4975
        %4977 = vrot.lane.b32.xlu0 %v4928, 1
        %v4978 = vpop.permute.xlu0 %4977
        %4979 = vrot.lane.b32.xlu0 %v4929, 1
        %v4980 = vpop.permute.xlu0 %4979
        %4981 = vrot.lane.b32.xlu0 %v4930, 1
        %v4982 = vpop.permute.xlu0 %4981
        %4983 = vrot.lane.b32.xlu0 %v4931, 1
        %v4984 = vpop.permute.xlu0 %4983
        %4985 = vrot.lane.b32.xlu0 %v4932, 1
        %v4986 = vpop.permute.xlu0 %4985
        %4987 = vrot.lane.b32.xlu0 %v4933, 1
        %v4988 = vpop.permute.xlu0 %4987
        %4989 = vrot.lane.b32.xlu0 %v4934, 1
        %v4990 = vpop.permute.xlu0 %4989
        %4991 = vrot.lane.b32.xlu0 %v4935, 1
        %v4992 = vpop.permute.xlu0 %4991
        %4993 = vrot.lane.b32.xlu0 %v4936, 1
        %v4994 = vpop.permute.xlu0 %4993
        %4995 = vrot.lane.b32.xlu0 %v4937, 1
        %v4996 = vpop.permute.xlu0 %4995
        %4997 = vrot.lane.b32.xlu0 %v4938, 1
        %v4998 = vpop.permute.xlu0 %4997
        %4999 = vrot.lane.b32.xlu0 %v4939, 1
        %v5000 = vpop.permute.xlu0 %4999
        %5001 = vrot.lane.b32.xlu0 %v4940, 1
        %v5002 = vpop.permute.xlu0 %5001
        %5003 = vrot.lane.b32.xlu0 %v4941, 1
        %v5004 = vpop.permute.xlu0 %5003
        %5005 = vrot.lane.b32.xlu0 %v4942, 1
        %v5006 = vpop.permute.xlu0 %5005
        %5007 = vrot.lane.b32.xlu0 %v4943, 1
        %v5008 = vpop.permute.xlu0 %5007
        %5009 = vrot.lane.b32.xlu0 %v4944, 1
        %v5010 = vpop.permute.xlu0 %5009
        %5011 = vrot.lane.b32.xlu0 %v4945, 1
        %v5012 = vpop.permute.xlu0 %5011
        %5013 = vrot.lane.b32.xlu0 %v4946, 1
        %v5014 = vpop.permute.xlu0 %5013
        %5015 = vrot.lane.b32.xlu0 %v4947, 1
        %v5016 = vpop.permute.xlu0 %5015
        %5017 = vrot.lane.b32.xlu0 %v4948, 1
        %v5018 = vpop.permute.xlu0 %5017
        %5019 = vrot.lane.b32.xlu0 %v4949, 1
        %v5020 = vpop.permute.xlu0 %5019
        %5021 = vrot.lane.b32.xlu0 %v4950, 1
        %v5022 = vpop.permute.xlu0 %5021
        %5047 = vst.msk [vmem:[#allocation3 + $0x9] sm:$0x1] %vm3461, %v4976
        %5048 = vst.msk [vmem:[#allocation3 + $0x19] sm:$0x1] %vm3461, %v4978
        %5049 = vst.msk [vmem:[#allocation3 + $0x29] sm:$0x1] %vm3461, %v4980
        %5050 = vst.msk [vmem:[#allocation3 + $0x39] sm:$0x1] %vm3461, %v4982
        %5051 = vst.msk [vmem:[#allocation3 + $0x49] sm:$0x1] %vm3461, %v4984
        %5052 = vst.msk [vmem:[#allocation3 + $0x59] sm:$0x1] %vm3461, %v4986
        %5053 = vst.msk [vmem:[#allocation3 + $0x69] sm:$0x1] %vm3461, %v4988
        %5054 = vst.msk [vmem:[#allocation3 + $0x79] sm:$0x1] %vm3461, %v4990
        %5055 = vst.msk [vmem:[#allocation3 + $0x89] sm:$0x1] %vm3461, %v4992
        %5056 = vst.msk [vmem:[#allocation3 + $0x99] sm:$0x1] %vm3461, %v4994
        %5057 = vst.msk [vmem:[#allocation3 + $0xa9] sm:$0x1] %vm3461, %v4996
        %5058 = vst.msk [vmem:[#allocation3 + $0xb9] sm:$0x1] %vm3461, %v4998
        %5059 = vst.msk [vmem:[#allocation3 + $0xc9] sm:$0x1] %vm3461, %v5000
        %5060 = vst.msk [vmem:[#allocation3 + $0xd9] sm:$0x1] %vm3461, %v5002
        %5061 = vst.msk [vmem:[#allocation3 + $0xe9] sm:$0x1] %vm3461, %v5004
        %5062 = vst.msk [vmem:[#allocation3 + $0xf9] sm:$0x1] %vm3461, %v5006
        %5063 = vst.msk [vmem:[#allocation3 + $0x109] sm:$0x1] %vm3461, %v5008
        %5064 = vst.msk [vmem:[#allocation3 + $0x119] sm:$0x1] %vm3461, %v5010
        %5065 = vst.msk [vmem:[#allocation3 + $0x129] sm:$0x1] %vm3461, %v5012
        %5066 = vst.msk [vmem:[#allocation3 + $0x139] sm:$0x1] %vm3461, %v5014
        %5067 = vst.msk [vmem:[#allocation3 + $0x149] sm:$0x1] %vm3461, %v5016
        %5068 = vst.msk [vmem:[#allocation3 + $0x159] sm:$0x1] %vm3461, %v5018
        %5069 = vst.msk [vmem:[#allocation3 + $0x169] sm:$0x1] %vm3461, %v5020
        %5070 = vst.msk [vmem:[#allocation3 + $0x179] sm:$0x1] %vm3461, %v5022
        %vm5071 = vcmask 7168
        %5072 = vst.msk [vmem:[#allocation3] sm:$0xff] %vm5071, 0.0
        %vm5073 = vcmask 1024
        %5074 = vst.msk [vmem:[#allocation3 + $0x8] sm:$0x3] %vm5073, 0.0
        %5075 = vst.msk [vmem:[#allocation3 + $0x10] sm:$0xff] %vm5071, 0.0
        %5076 = vst.msk [vmem:[#allocation3 + $0x18] sm:$0x3] %vm5073, 0.0
        %5077 = vst.msk [vmem:[#allocation3 + $0x20] sm:$0xff] %vm5071, 0.0
        %5078 = vst.msk [vmem:[#allocation3 + $0x28] sm:$0x3] %vm5073, 0.0
        %5079 = vst.msk [vmem:[#allocation3 + $0x30] sm:$0xff] %vm5071, 0.0
        %5080 = vst.msk [vmem:[#allocation3 + $0x38] sm:$0x3] %vm5073, 0.0
        %5081 = vst.msk [vmem:[#allocation3 + $0x40] sm:$0xff] %vm5071, 0.0
        %5082 = vst.msk [vmem:[#allocation3 + $0x48] sm:$0x3] %vm5073, 0.0
        %5083 = vst.msk [vmem:[#allocation3 + $0x50] sm:$0xff] %vm5071, 0.0
        %5084 = vst.msk [vmem:[#allocation3 + $0x58] sm:$0x3] %vm5073, 0.0
        %5085 = vst.msk [vmem:[#allocation3 + $0x60] sm:$0xff] %vm5071, 0.0
        %5086 = vst.msk [vmem:[#allocation3 + $0x68] sm:$0x3] %vm5073, 0.0
        %5087 = vst.msk [vmem:[#allocation3 + $0x70] sm:$0xff] %vm5071, 0.0
        %5088 = vst.msk [vmem:[#allocation3 + $0x78] sm:$0x3] %vm5073, 0.0
        %5089 = vst.msk [vmem:[#allocation3 + $0x80] sm:$0xff] %vm5071, 0.0
        %5090 = vst.msk [vmem:[#allocation3 + $0x88] sm:$0x3] %vm5073, 0.0
        %5091 = vst.msk [vmem:[#allocation3 + $0x90] sm:$0xff] %vm5071, 0.0
        %5092 = vst.msk [vmem:[#allocation3 + $0x98] sm:$0x3] %vm5073, 0.0
        %5093 = vst.msk [vmem:[#allocation3 + $0xa0] sm:$0xff] %vm5071, 0.0
        %5094 = vst.msk [vmem:[#allocation3 + $0xa8] sm:$0x3] %vm5073, 0.0
        %5095 = vst.msk [vmem:[#allocation3 + $0xb0] sm:$0xff] %vm5071, 0.0
        %5096 = vst.msk [vmem:[#allocation3 + $0xb8] sm:$0x3] %vm5073, 0.0
        %5097 = vst.msk [vmem:[#allocation3 + $0xc0] sm:$0xff] %vm5071, 0.0
        %5098 = vst.msk [vmem:[#allocation3 + $0xc8] sm:$0x3] %vm5073, 0.0
        %5099 = vst.msk [vmem:[#allocation3 + $0xd0] sm:$0xff] %vm5071, 0.0
        %5100 = vst.msk [vmem:[#allocation3 + $0xd8] sm:$0x3] %vm5073, 0.0
        %5101 = vst.msk [vmem:[#allocation3 + $0xe0] sm:$0xff] %vm5071, 0.0
        %5102 = vst.msk [vmem:[#allocation3 + $0xe8] sm:$0x3] %vm5073, 0.0
        %5103 = vst.msk [vmem:[#allocation3 + $0xf0] sm:$0xff] %vm5071, 0.0
        %5104 = vst.msk [vmem:[#allocation3 + $0xf8] sm:$0x3] %vm5073, 0.0
        %5105 = vst.msk [vmem:[#allocation3 + $0x100] sm:$0xff] %vm5071, 0.0
        %5106 = vst.msk [vmem:[#allocation3 + $0x108] sm:$0x3] %vm5073, 0.0
        %5107 = vst.msk [vmem:[#allocation3 + $0x110] sm:$0xff] %vm5071, 0.0
        %5108 = vst.msk [vmem:[#allocation3 + $0x118] sm:$0x3] %vm5073, 0.0
        %5109 = vst.msk [vmem:[#allocation3 + $0x120] sm:$0xff] %vm5071, 0.0
        %5110 = vst.msk [vmem:[#allocation3 + $0x128] sm:$0x3] %vm5073, 0.0
        %5111 = vst.msk [vmem:[#allocation3 + $0x130] sm:$0xff] %vm5071, 0.0
        %5112 = vst.msk [vmem:[#allocation3 + $0x138] sm:$0x3] %vm5073, 0.0
        %5113 = vst.msk [vmem:[#allocation3 + $0x140] sm:$0xff] %vm5071, 0.0
        %5114 = vst.msk [vmem:[#allocation3 + $0x148] sm:$0x3] %vm5073, 0.0
        %5115 = vst.msk [vmem:[#allocation3 + $0x150] sm:$0xff] %vm5071, 0.0
        %5116 = vst.msk [vmem:[#allocation3 + $0x158] sm:$0x3] %vm5073, 0.0
        %5117 = vst.msk [vmem:[#allocation3 + $0x160] sm:$0xff] %vm5071, 0.0
        %5118 = vst.msk [vmem:[#allocation3 + $0x168] sm:$0x3] %vm5073, 0.0
        %5119 = vst.msk [vmem:[#allocation3 + $0x170] sm:$0xff] %vm5071, 0.0
        %5120 = vst.msk [vmem:[#allocation3 + $0x178] sm:$0x3] %vm5073, 0.0
        %vm5121 = vcmask 146568
        %5122 = vst.msk [vmem:[#allocation3] sm:$0xff] %vm5121, 0.0
        %vm5123 = vcmask 140424
        %5124 = vst.msk [vmem:[#allocation3 + $0x8] sm:$0x3] %vm5123, 0.0
        %5125 = vst.msk [vmem:[#allocation3 + $0x10] sm:$0xff] %vm5121, 0.0
        %5126 = vst.msk [vmem:[#allocation3 + $0x18] sm:$0x3] %vm5123, 0.0
        %5127 = vst.msk [vmem:[#allocation3 + $0x20] sm:$0xff] %vm5121, 0.0
        %5128 = vst.msk [vmem:[#allocation3 + $0x28] sm:$0x3] %vm5123, 0.0
        %5129 = vst.msk [vmem:[#allocation3 + $0x30] sm:$0xff] %vm5121, 0.0
        %5130 = vst.msk [vmem:[#allocation3 + $0x38] sm:$0x3] %vm5123, 0.0
        %5131 = vst.msk [vmem:[#allocation3 + $0x40] sm:$0xff] %vm5121, 0.0
        %5132 = vst.msk [vmem:[#allocation3 + $0x48] sm:$0x3] %vm5123, 0.0
        %5133 = vst.msk [vmem:[#allocation3 + $0x50] sm:$0xff] %vm5121, 0.0
        %5134 = vst.msk [vmem:[#allocation3 + $0x58] sm:$0x3] %vm5123, 0.0
        %5135 = vst.msk [vmem:[#allocation3 + $0x60] sm:$0xff] %vm5121, 0.0
        %5136 = vst.msk [vmem:[#allocation3 + $0x68] sm:$0x3] %vm5123, 0.0
        %5137 = vst.msk [vmem:[#allocation3 + $0x70] sm:$0xff] %vm5121, 0.0
        %5138 = vst.msk [vmem:[#allocation3 + $0x78] sm:$0x3] %vm5123, 0.0
        %5139 = vst.msk [vmem:[#allocation3 + $0x80] sm:$0xff] %vm5121, 0.0
        %5140 = vst.msk [vmem:[#allocation3 + $0x88] sm:$0x3] %vm5123, 0.0
        %5141 = vst.msk [vmem:[#allocation3 + $0x90] sm:$0xff] %vm5121, 0.0
        %5142 = vst.msk [vmem:[#allocation3 + $0x98] sm:$0x3] %vm5123, 0.0
        %5143 = vst.msk [vmem:[#allocation3 + $0xa0] sm:$0xff] %vm5121, 0.0
        %5144 = vst.msk [vmem:[#allocation3 + $0xa8] sm:$0x3] %vm5123, 0.0
        %5145 = vst.msk [vmem:[#allocation3 + $0xb0] sm:$0xff] %vm5121, 0.0
        %5146 = vst.msk [vmem:[#allocation3 + $0xb8] sm:$0x3] %vm5123, 0.0
        %5147 = vst.msk [vmem:[#allocation3 + $0xc0] sm:$0xff] %vm5121, 0.0
        %5148 = vst.msk [vmem:[#allocation3 + $0xc8] sm:$0x3] %vm5123, 0.0
        %5149 = vst.msk [vmem:[#allocation3 + $0xd0] sm:$0xff] %vm5121, 0.0
        %5150 = vst.msk [vmem:[#allocation3 + $0xd8] sm:$0x3] %vm5123, 0.0
        %5151 = vst.msk [vmem:[#allocation3 + $0xe0] sm:$0xff] %vm5121, 0.0
        %5152 = vst.msk [vmem:[#allocation3 + $0xe8] sm:$0x3] %vm5123, 0.0
        %5153 = vst.msk [vmem:[#allocation3 + $0xf0] sm:$0xff] %vm5121, 0.0
        %5154 = vst.msk [vmem:[#allocation3 + $0xf8] sm:$0x3] %vm5123, 0.0
        %5155 = vst.msk [vmem:[#allocation3 + $0x100] sm:$0xff] %vm5121, 0.0
        %5156 = vst.msk [vmem:[#allocation3 + $0x108] sm:$0x3] %vm5123, 0.0
        %5157 = vst.msk [vmem:[#allocation3 + $0x110] sm:$0xff] %vm5121, 0.0
        %5158 = vst.msk [vmem:[#allocation3 + $0x118] sm:$0x3] %vm5123, 0.0
        %5159 = vst.msk [vmem:[#allocation3 + $0x120] sm:$0xff] %vm5121, 0.0
        %5160 = vst.msk [vmem:[#allocation3 + $0x128] sm:$0x3] %vm5123, 0.0
        %5161 = vst.msk [vmem:[#allocation3 + $0x130] sm:$0xff] %vm5121, 0.0
        %5162 = vst.msk [vmem:[#allocation3 + $0x138] sm:$0x3] %vm5123, 0.0
        %5163 = vst.msk [vmem:[#allocation3 + $0x140] sm:$0xff] %vm5121, 0.0
        %5164 = vst.msk [vmem:[#allocation3 + $0x148] sm:$0x3] %vm5123, 0.0
        %5165 = vst.msk [vmem:[#allocation3 + $0x150] sm:$0xff] %vm5121, 0.0
        %5166 = vst.msk [vmem:[#allocation3 + $0x158] sm:$0x3] %vm5123, 0.0
        %5167 = vst.msk [vmem:[#allocation3 + $0x160] sm:$0xff] %vm5121, 0.0
        %5168 = vst.msk [vmem:[#allocation3 + $0x168] sm:$0x3] %vm5123, 0.0
        %5169 = vst.msk [vmem:[#allocation3 + $0x170] sm:$0xff] %vm5121, 0.0
        %5170 = vst.msk [vmem:[#allocation3 + $0x178] sm:$0x3] %vm5123, 0.0
        %v5171 = vld [vmem:[#allocation3] sm:$0xff]
        %v5172 = vld [vmem:[#allocation3 + $0x8] sm:$0x3]
        %v5173 = vld [vmem:[#allocation3 + $0x10] sm:$0xff]
        %v5174 = vld [vmem:[#allocation3 + $0x18] sm:$0x3]
        %v5175 = vld [vmem:[#allocation3 + $0x20] sm:$0xff]
        %v5176 = vld [vmem:[#allocation3 + $0x28] sm:$0x3]
        %v5177 = vld [vmem:[#allocation3 + $0x30] sm:$0xff]
        %v5178 = vld [vmem:[#allocation3 + $0x38] sm:$0x3]
        %v5179 = vld [vmem:[#allocation3 + $0x40] sm:$0xff]
        %v5180 = vld [vmem:[#allocation3 + $0x48] sm:$0x3]
        %v5181 = vld [vmem:[#allocation3 + $0x50] sm:$0xff]
        %v5182 = vld [vmem:[#allocation3 + $0x58] sm:$0x3]
        %v5183 = vld [vmem:[#allocation3 + $0x60] sm:$0xff]
        %v5184 = vld [vmem:[#allocation3 + $0x68] sm:$0x3]
        %v5185 = vld [vmem:[#allocation3 + $0x70] sm:$0xff]
        %v5186 = vld [vmem:[#allocation3 + $0x78] sm:$0x3]
        %v5187 = vld [vmem:[#allocation3 + $0x80] sm:$0xff]
        %v5188 = vld [vmem:[#allocation3 + $0x88] sm:$0x3]
        %v5189 = vld [vmem:[#allocation3 + $0x90] sm:$0xff]
        %v5190 = vld [vmem:[#allocation3 + $0x98] sm:$0x3]
        %v5191 = vld [vmem:[#allocation3 + $0xa0] sm:$0xff]
        %v5192 = vld [vmem:[#allocation3 + $0xa8] sm:$0x3]
        %v5193 = vld [vmem:[#allocation3 + $0xb0] sm:$0xff]
        %v5194 = vld [vmem:[#allocation3 + $0xb8] sm:$0x3]
        %v5195 = vld [vmem:[#allocation3 + $0xc0] sm:$0xff]
        %v5196 = vld [vmem:[#allocation3 + $0xc8] sm:$0x3]
        %v5197 = vld [vmem:[#allocation3 + $0xd0] sm:$0xff]
        %v5198 = vld [vmem:[#allocation3 + $0xd8] sm:$0x3]
        %v5199 = vld [vmem:[#allocation3 + $0xe0] sm:$0xff]
        %v5200 = vld [vmem:[#allocation3 + $0xe8] sm:$0x3]
        %v5201 = vld [vmem:[#allocation3 + $0xf0] sm:$0xff]
        %v5202 = vld [vmem:[#allocation3 + $0xf8] sm:$0x3]
        %v5203 = vld [vmem:[#allocation3 + $0x100] sm:$0xff]
        %v5204 = vld [vmem:[#allocation3 + $0x108] sm:$0x3]
        %v5205 = vld [vmem:[#allocation3 + $0x110] sm:$0xff]
        %v5206 = vld [vmem:[#allocation3 + $0x118] sm:$0x3]
        %v5207 = vld [vmem:[#allocation3 + $0x120] sm:$0xff]
        %v5208 = vld [vmem:[#allocation3 + $0x128] sm:$0x3]
        %v5209 = vld [vmem:[#allocation3 + $0x130] sm:$0xff]
        %v5210 = vld [vmem:[#allocation3 + $0x138] sm:$0x3]
        %v5211 = vld [vmem:[#allocation3 + $0x140] sm:$0xff]
        %v5212 = vld [vmem:[#allocation3 + $0x148] sm:$0x3]
        %v5213 = vld [vmem:[#allocation3 + $0x150] sm:$0xff]
        %v5214 = vld [vmem:[#allocation3 + $0x158] sm:$0x3]
        %v5215 = vld [vmem:[#allocation3 + $0x160] sm:$0xff]
        %v5216 = vld [vmem:[#allocation3 + $0x168] sm:$0x3]
        %v5217 = vld [vmem:[#allocation3 + $0x170] sm:$0xff]
        %v5218 = vld [vmem:[#allocation3 + $0x178] sm:$0x3]
        %v5219 = vld [vmem:[%s3] sm:$0x1]
        %v5220 = vld [vmem:[%s3 + $0x1] sm:$0x1]
        %v5221 = vld [vmem:[%s3 + $0x2] sm:$0x1]
        %v5222 = vld [vmem:[%s3 + $0x3] sm:$0x1]
        %v5223 = vld [vmem:[%s3 + $0x4] sm:$0x1]
        %v5224 = vld [vmem:[%s3 + $0x5] sm:$0x1]
        %v5225 = vld [vmem:[%s3 + $0x6] sm:$0x1]
        %v5226 = vld [vmem:[%s3 + $0x7] sm:$0x1]
        %v5227 = vld [vmem:[%s3 + $0x8] sm:$0x1]
        %v5228 = vld [vmem:[%s3 + $0x9] sm:$0x1]
        %v5229 = vld [vmem:[%s3 + $0xa] sm:$0x1]
        %v5230 = vld [vmem:[%s3 + $0xb] sm:$0x1]
        %v5231 = vld [vmem:[%s3 + $0xc] sm:$0x1]
        %v5232 = vld [vmem:[%s3 + $0xd] sm:$0x1]
        %v5233 = vld [vmem:[%s3 + $0xe] sm:$0x1]
        %v5234 = vld [vmem:[%s3 + $0xf] sm:$0x1]
        %v5235 = vld [vmem:[%s3 + $0x10] sm:$0x1]
        %v5236 = vld [vmem:[%s3 + $0x11] sm:$0x1]
        %v5237 = vld [vmem:[%s3 + $0x12] sm:$0x1]
        %v5238 = vld [vmem:[%s3 + $0x13] sm:$0x1]
        %v5239 = vld [vmem:[%s3 + $0x14] sm:$0x1]
        %v5240 = vld [vmem:[%s3 + $0x15] sm:$0x1]
        %v5241 = vld [vmem:[%s3 + $0x16] sm:$0x1]
        %v5242 = vld [vmem:[%s3 + $0x17] sm:$0x1]
        %v5267 = vlaneseq
        %v5268 = vshrl.u32 %v5267, 7
        %v5269 = vsub.s32 0, %v5268
        %v5270 = vrot.slane %v5219, %v5269
        %v5271 = vlaneseq
        %v5272 = vshrl.u32 %v5271, 7
        %v5273 = vsub.s32 0, %v5272
        %v5274 = vrot.slane %v5220, %v5273
        %v5275 = vlaneseq
        %v5276 = vshrl.u32 %v5275, 7
        %v5277 = vsub.s32 0, %v5276
        %v5278 = vrot.slane %v5221, %v5277
        %v5279 = vlaneseq
        %v5280 = vshrl.u32 %v5279, 7
        %v5281 = vsub.s32 0, %v5280
        %v5282 = vrot.slane %v5222, %v5281
        %v5283 = vlaneseq
        %v5284 = vshrl.u32 %v5283, 7
        %v5285 = vsub.s32 0, %v5284
        %v5286 = vrot.slane %v5223, %v5285
        %v5287 = vlaneseq
        %v5288 = vshrl.u32 %v5287, 7
        %v5289 = vsub.s32 0, %v5288
        %v5290 = vrot.slane %v5224, %v5289
        %v5291 = vlaneseq
        %v5292 = vshrl.u32 %v5291, 7
        %v5293 = vsub.s32 0, %v5292
        %v5294 = vrot.slane %v5225, %v5293
        %v5295 = vlaneseq
        %v5296 = vshrl.u32 %v5295, 7
        %v5297 = vsub.s32 0, %v5296
        %v5298 = vrot.slane %v5226, %v5297
        %v5299 = vlaneseq
        %v5300 = vshrl.u32 %v5299, 7
        %v5301 = vsub.s32 0, %v5300
        %v5302 = vrot.slane %v5227, %v5301
        %v5303 = vlaneseq
        %v5304 = vshrl.u32 %v5303, 7
        %v5305 = vsub.s32 0, %v5304
        %v5306 = vrot.slane %v5228, %v5305
        %v5307 = vlaneseq
        %v5308 = vshrl.u32 %v5307, 7
        %v5309 = vsub.s32 0, %v5308
        %v5310 = vrot.slane %v5229, %v5309
        %v5311 = vlaneseq
        %v5312 = vshrl.u32 %v5311, 7
        %v5313 = vsub.s32 0, %v5312
        %v5314 = vrot.slane %v5230, %v5313
        %v5315 = vlaneseq
        %v5316 = vshrl.u32 %v5315, 7
        %v5317 = vsub.s32 0, %v5316
        %v5318 = vrot.slane %v5231, %v5317
        %v5319 = vlaneseq
        %v5320 = vshrl.u32 %v5319, 7
        %v5321 = vsub.s32 0, %v5320
        %v5322 = vrot.slane %v5232, %v5321
        %v5323 = vlaneseq
        %v5324 = vshrl.u32 %v5323, 7
        %v5325 = vsub.s32 0, %v5324
        %v5326 = vrot.slane %v5233, %v5325
        %v5327 = vlaneseq
        %v5328 = vshrl.u32 %v5327, 7
        %v5329 = vsub.s32 0, %v5328
        %v5330 = vrot.slane %v5234, %v5329
        %v5331 = vlaneseq
        %v5332 = vshrl.u32 %v5331, 7
        %v5333 = vsub.s32 0, %v5332
        %v5334 = vrot.slane %v5235, %v5333
        %v5335 = vlaneseq
        %v5336 = vshrl.u32 %v5335, 7
        %v5337 = vsub.s32 0, %v5336
        %v5338 = vrot.slane %v5236, %v5337
        %v5339 = vlaneseq
        %v5340 = vshrl.u32 %v5339, 7
        %v5341 = vsub.s32 0, %v5340
        %v5342 = vrot.slane %v5237, %v5341
        %v5343 = vlaneseq
        %v5344 = vshrl.u32 %v5343, 7
        %v5345 = vsub.s32 0, %v5344
        %v5346 = vrot.slane %v5238, %v5345
        %v5347 = vlaneseq
        %v5348 = vshrl.u32 %v5347, 7
        %v5349 = vsub.s32 0, %v5348
        %v5350 = vrot.slane %v5239, %v5349
        %v5351 = vlaneseq
        %v5352 = vshrl.u32 %v5351, 7
        %v5353 = vsub.s32 0, %v5352
        %v5354 = vrot.slane %v5240, %v5353
        %v5355 = vlaneseq
        %v5356 = vshrl.u32 %v5355, 7
        %v5357 = vsub.s32 0, %v5356
        %v5358 = vrot.slane %v5241, %v5357
        %v5359 = vlaneseq
        %v5360 = vshrl.u32 %v5359, 7
        %v5361 = vsub.s32 0, %v5360
        %v5362 = vrot.slane %v5242, %v5361
        %5363 = vset.pattern.permute.xlu0 0
        %5364 = vperm.xlu0 %5363, %v5270
        %v5365 = vpop.permute.xlu0 %5364
        %5367 = vset.pattern.permute.xlu0 0
        %5368 = vperm.xlu0 %5367, %v5274
        %v5369 = vpop.permute.xlu0 %5368
        %5371 = vset.pattern.permute.xlu0 0
        %5372 = vperm.xlu0 %5371, %v5278
        %v5373 = vpop.permute.xlu0 %5372
        %5375 = vset.pattern.permute.xlu0 0
        %5376 = vperm.xlu0 %5375, %v5282
        %v5377 = vpop.permute.xlu0 %5376
        %5379 = vset.pattern.permute.xlu0 0
        %5380 = vperm.xlu0 %5379, %v5286
        %v5381 = vpop.permute.xlu0 %5380
        %5383 = vset.pattern.permute.xlu0 0
        %5384 = vperm.xlu0 %5383, %v5290
        %v5385 = vpop.permute.xlu0 %5384
        %5387 = vset.pattern.permute.xlu0 0
        %5388 = vperm.xlu0 %5387, %v5294
        %v5389 = vpop.permute.xlu0 %5388
        %5391 = vset.pattern.permute.xlu0 0
        %5392 = vperm.xlu0 %5391, %v5298
        %v5393 = vpop.permute.xlu0 %5392
        %5395 = vset.pattern.permute.xlu0 0
        %5396 = vperm.xlu0 %5395, %v5302
        %v5397 = vpop.permute.xlu0 %5396
        %5399 = vset.pattern.permute.xlu0 0
        %5400 = vperm.xlu0 %5399, %v5306
        %v5401 = vpop.permute.xlu0 %5400
        %5403 = vset.pattern.permute.xlu0 0
        %5404 = vperm.xlu0 %5403, %v5310
        %v5405 = vpop.permute.xlu0 %5404
        %5407 = vset.pattern.permute.xlu0 0
        %5408 = vperm.xlu0 %5407, %v5314
        %v5409 = vpop.permute.xlu0 %5408
        %5411 = vset.pattern.permute.xlu0 0
        %5412 = vperm.xlu0 %5411, %v5318
        %v5413 = vpop.permute.xlu0 %5412
        %5415 = vset.pattern.permute.xlu0 0
        %5416 = vperm.xlu0 %5415, %v5322
        %v5417 = vpop.permute.xlu0 %5416
        %5419 = vset.pattern.permute.xlu0 0
        %5420 = vperm.xlu0 %5419, %v5326
        %v5421 = vpop.permute.xlu0 %5420
        %5423 = vset.pattern.permute.xlu0 0
        %5424 = vperm.xlu0 %5423, %v5330
        %v5425 = vpop.permute.xlu0 %5424
        %5427 = vset.pattern.permute.xlu0 0
        %5428 = vperm.xlu0 %5427, %v5334
        %v5429 = vpop.permute.xlu0 %5428
        %5431 = vset.pattern.permute.xlu0 0
        %5432 = vperm.xlu0 %5431, %v5338
        %v5433 = vpop.permute.xlu0 %5432
        %5435 = vset.pattern.permute.xlu0 0
        %5436 = vperm.xlu0 %5435, %v5342
        %v5437 = vpop.permute.xlu0 %5436
        %5439 = vset.pattern.permute.xlu0 0
        %5440 = vperm.xlu0 %5439, %v5346
        %v5441 = vpop.permute.xlu0 %5440
        %5443 = vset.pattern.permute.xlu0 0
        %5444 = vperm.xlu0 %5443, %v5350
        %v5445 = vpop.permute.xlu0 %5444
        %5447 = vset.pattern.permute.xlu0 0
        %5448 = vperm.xlu0 %5447, %v5354
        %v5449 = vpop.permute.xlu0 %5448
        %5451 = vset.pattern.permute.xlu0 0
        %5452 = vperm.xlu0 %5451, %v5358
        %v5453 = vpop.permute.xlu0 %5452
        %5455 = vset.pattern.permute.xlu0 0
        %5456 = vperm.xlu0 %5455, %v5362
        %v5457 = vpop.permute.xlu0 %5456
        %v5459 = vmul.f32 %v5365, %v5171
        %v5460 = vmul.f32 %v5369, %v5173
        %v5461 = vmul.f32 %v5373, %v5175
        %v5462 = vmul.f32 %v5377, %v5177
        %v5463 = vmul.f32 %v5381, %v5179
        %v5464 = vmul.f32 %v5385, %v5181
        %v5465 = vmul.f32 %v5389, %v5183
        %v5466 = vmul.f32 %v5393, %v5185
        %v5467 = vmul.f32 %v5397, %v5187
        %v5468 = vmul.f32 %v5401, %v5189
        %v5469 = vmul.f32 %v5405, %v5191
        %v5470 = vmul.f32 %v5409, %v5193
        %v5471 = vmul.f32 %v5413, %v5195
        %v5472 = vmul.f32 %v5417, %v5197
        %v5473 = vmul.f32 %v5421, %v5199
        %v5474 = vmul.f32 %v5425, %v5201
        %v5475 = vmul.f32 %v5429, %v5203
        %v5476 = vmul.f32 %v5433, %v5205
        %v5477 = vmul.f32 %v5437, %v5207
        %v5478 = vmul.f32 %v5441, %v5209
        %v5479 = vmul.f32 %v5445, %v5211
        %v5480 = vmul.f32 %v5449, %v5213
        %v5481 = vmul.f32 %v5453, %v5215
        %v5482 = vmul.f32 %v5457, %v5217
        %v5483 = vadd.f32 %v5459, 0.0
        %v5484 = vadd.f32 %v5460, 0.0
        %v5485 = vadd.f32 %v5461, 0.0
        %v5486 = vadd.f32 %v5462, 0.0
        %v5487 = vadd.f32 %v5463, 0.0
        %v5488 = vadd.f32 %v5464, 0.0
        %v5489 = vadd.f32 %v5465, 0.0
        %v5490 = vadd.f32 %v5466, 0.0
        %v5491 = vadd.f32 %v5467, 0.0
        %v5492 = vadd.f32 %v5468, 0.0
        %v5493 = vadd.f32 %v5469, 0.0
        %v5494 = vadd.f32 %v5470, 0.0
        %v5495 = vadd.f32 %v5471, 0.0
        %v5496 = vadd.f32 %v5472, 0.0
        %v5497 = vadd.f32 %v5473, 0.0
        %v5498 = vadd.f32 %v5474, 0.0
        %v5499 = vadd.f32 %v5475, 0.0
        %v5500 = vadd.f32 %v5476, 0.0
        %v5501 = vadd.f32 %v5477, 0.0
        %v5502 = vadd.f32 %v5478, 0.0
        %v5503 = vadd.f32 %v5479, 0.0
        %v5504 = vadd.f32 %v5480, 0.0
        %v5505 = vadd.f32 %v5481, 0.0
        %v5506 = vadd.f32 %v5482, 0.0
        %s5507 = scalar_lea.vmem %s3, 24
        %v5508 = vld [vmem:[%s5507] sm:$0x1]
        %v5509 = vld [vmem:[%s5507 + $0x1] sm:$0x1]
        %v5510 = vld [vmem:[%s5507 + $0x2] sm:$0x1]
        %v5511 = vld [vmem:[%s5507 + $0x3] sm:$0x1]
        %v5512 = vld [vmem:[%s5507 + $0x4] sm:$0x1]
        %v5513 = vld [vmem:[%s5507 + $0x5] sm:$0x1]
        %v5514 = vld [vmem:[%s5507 + $0x6] sm:$0x1]
        %v5515 = vld [vmem:[%s5507 + $0x7] sm:$0x1]
        %v5516 = vld [vmem:[%s5507 + $0x8] sm:$0x1]
        %v5517 = vld [vmem:[%s5507 + $0x9] sm:$0x1]
        %v5518 = vld [vmem:[%s5507 + $0xa] sm:$0x1]
        %v5519 = vld [vmem:[%s5507 + $0xb] sm:$0x1]
        %v5520 = vld [vmem:[%s5507 + $0xc] sm:$0x1]
        %v5521 = vld [vmem:[%s5507 + $0xd] sm:$0x1]
        %v5522 = vld [vmem:[%s5507 + $0xe] sm:$0x1]
        %v5523 = vld [vmem:[%s5507 + $0xf] sm:$0x1]
        %v5524 = vld [vmem:[%s5507 + $0x10] sm:$0x1]
        %v5525 = vld [vmem:[%s5507 + $0x11] sm:$0x1]
        %v5526 = vld [vmem:[%s5507 + $0x12] sm:$0x1]
        %v5527 = vld [vmem:[%s5507 + $0x13] sm:$0x1]
        %v5528 = vld [vmem:[%s5507 + $0x14] sm:$0x1]
        %v5529 = vld [vmem:[%s5507 + $0x15] sm:$0x1]
        %v5530 = vld [vmem:[%s5507 + $0x16] sm:$0x1]
        %v5531 = vld [vmem:[%s5507 + $0x17] sm:$0x1]
        %v5556 = vlaneseq
        %v5557 = vshrl.u32 %v5556, 7
        %v5558 = vsub.s32 0, %v5557
        %v5559 = vrot.slane %v5508, %v5558
        %v5560 = vlaneseq
        %v5561 = vshrl.u32 %v5560, 7
        %v5562 = vsub.s32 0, %v5561
        %v5563 = vrot.slane %v5509, %v5562
        %v5564 = vlaneseq
        %v5565 = vshrl.u32 %v5564, 7
        %v5566 = vsub.s32 0, %v5565
        %v5567 = vrot.slane %v5510, %v5566
        %v5568 = vlaneseq
        %v5569 = vshrl.u32 %v5568, 7
        %v5570 = vsub.s32 0, %v5569
        %v5571 = vrot.slane %v5511, %v5570
        %v5572 = vlaneseq
        %v5573 = vshrl.u32 %v5572, 7
        %v5574 = vsub.s32 0, %v5573
        %v5575 = vrot.slane %v5512, %v5574
        %v5576 = vlaneseq
        %v5577 = vshrl.u32 %v5576, 7
        %v5578 = vsub.s32 0, %v5577
        %v5579 = vrot.slane %v5513, %v5578
        %v5580 = vlaneseq
        %v5581 = vshrl.u32 %v5580, 7
        %v5582 = vsub.s32 0, %v5581
        %v5583 = vrot.slane %v5514, %v5582
        %v5584 = vlaneseq
        %v5585 = vshrl.u32 %v5584, 7
        %v5586 = vsub.s32 0, %v5585
        %v5587 = vrot.slane %v5515, %v5586
        %v5588 = vlaneseq
        %v5589 = vshrl.u32 %v5588, 7
        %v5590 = vsub.s32 0, %v5589
        %v5591 = vrot.slane %v5516, %v5590
        %v5592 = vlaneseq
        %v5593 = vshrl.u32 %v5592, 7
        %v5594 = vsub.s32 0, %v5593
        %v5595 = vrot.slane %v5517, %v5594
        %v5596 = vlaneseq
        %v5597 = vshrl.u32 %v5596, 7
        %v5598 = vsub.s32 0, %v5597
        %v5599 = vrot.slane %v5518, %v5598
        %v5600 = vlaneseq
        %v5601 = vshrl.u32 %v5600, 7
        %v5602 = vsub.s32 0, %v5601
        %v5603 = vrot.slane %v5519, %v5602
        %v5604 = vlaneseq
        %v5605 = vshrl.u32 %v5604, 7
        %v5606 = vsub.s32 0, %v5605
        %v5607 = vrot.slane %v5520, %v5606
        %v5608 = vlaneseq
        %v5609 = vshrl.u32 %v5608, 7
        %v5610 = vsub.s32 0, %v5609
        %v5611 = vrot.slane %v5521, %v5610
        %v5612 = vlaneseq
        %v5613 = vshrl.u32 %v5612, 7
        %v5614 = vsub.s32 0, %v5613
        %v5615 = vrot.slane %v5522, %v5614
        %v5616 = vlaneseq
        %v5617 = vshrl.u32 %v5616, 7
        %v5618 = vsub.s32 0, %v5617
        %v5619 = vrot.slane %v5523, %v5618
        %v5620 = vlaneseq
        %v5621 = vshrl.u32 %v5620, 7
        %v5622 = vsub.s32 0, %v5621
        %v5623 = vrot.slane %v5524, %v5622
        %v5624 = vlaneseq
        %v5625 = vshrl.u32 %v5624, 7
        %v5626 = vsub.s32 0, %v5625
        %v5627 = vrot.slane %v5525, %v5626
        %v5628 = vlaneseq
        %v5629 = vshrl.u32 %v5628, 7
        %v5630 = vsub.s32 0, %v5629
        %v5631 = vrot.slane %v5526, %v5630
        %v5632 = vlaneseq
        %v5633 = vshrl.u32 %v5632, 7
        %v5634 = vsub.s32 0, %v5633
        %v5635 = vrot.slane %v5527, %v5634
        %v5636 = vlaneseq
        %v5637 = vshrl.u32 %v5636, 7
        %v5638 = vsub.s32 0, %v5637
        %v5639 = vrot.slane %v5528, %v5638
        %v5640 = vlaneseq
        %v5641 = vshrl.u32 %v5640, 7
        %v5642 = vsub.s32 0, %v5641
        %v5643 = vrot.slane %v5529, %v5642
        %v5644 = vlaneseq
        %v5645 = vshrl.u32 %v5644, 7
        %v5646 = vsub.s32 0, %v5645
        %v5647 = vrot.slane %v5530, %v5646
        %v5648 = vlaneseq
        %v5649 = vshrl.u32 %v5648, 7
        %v5650 = vsub.s32 0, %v5649
        %v5651 = vrot.slane %v5531, %v5650
        %5652 = vset.pattern.permute.xlu0 0
        %5653 = vperm.xlu0 %5652, %v5559
        %v5654 = vpop.permute.xlu0 %5653
        %5656 = vset.pattern.permute.xlu0 0
        %5657 = vperm.xlu0 %5656, %v5563
        %v5658 = vpop.permute.xlu0 %5657
        %5660 = vset.pattern.permute.xlu0 0
        %5661 = vperm.xlu0 %5660, %v5567
        %v5662 = vpop.permute.xlu0 %5661
        %5664 = vset.pattern.permute.xlu0 0
        %5665 = vperm.xlu0 %5664, %v5571
        %v5666 = vpop.permute.xlu0 %5665
        %5668 = vset.pattern.permute.xlu0 0
        %5669 = vperm.xlu0 %5668, %v5575
        %v5670 = vpop.permute.xlu0 %5669
        %5672 = vset.pattern.permute.xlu0 0
        %5673 = vperm.xlu0 %5672, %v5579
        %v5674 = vpop.permute.xlu0 %5673
        %5676 = vset.pattern.permute.xlu0 0
        %5677 = vperm.xlu0 %5676, %v5583
        %v5678 = vpop.permute.xlu0 %5677
        %5680 = vset.pattern.permute.xlu0 0
        %5681 = vperm.xlu0 %5680, %v5587
        %v5682 = vpop.permute.xlu0 %5681
        %5684 = vset.pattern.permute.xlu0 0
        %5685 = vperm.xlu0 %5684, %v5591
        %v5686 = vpop.permute.xlu0 %5685
        %5688 = vset.pattern.permute.xlu0 0
        %5689 = vperm.xlu0 %5688, %v5595
        %v5690 = vpop.permute.xlu0 %5689
        %5692 = vset.pattern.permute.xlu0 0
        %5693 = vperm.xlu0 %5692, %v5599
        %v5694 = vpop.permute.xlu0 %5693
        %5696 = vset.pattern.permute.xlu0 0
        %5697 = vperm.xlu0 %5696, %v5603
        %v5698 = vpop.permute.xlu0 %5697
        %5700 = vset.pattern.permute.xlu0 0
        %5701 = vperm.xlu0 %5700, %v5607
        %v5702 = vpop.permute.xlu0 %5701
        %5704 = vset.pattern.permute.xlu0 0
        %5705 = vperm.xlu0 %5704, %v5611
        %v5706 = vpop.permute.xlu0 %5705
        %5708 = vset.pattern.permute.xlu0 0
        %5709 = vperm.xlu0 %5708, %v5615
        %v5710 = vpop.permute.xlu0 %5709
        %5712 = vset.pattern.permute.xlu0 0
        %5713 = vperm.xlu0 %5712, %v5619
        %v5714 = vpop.permute.xlu0 %5713
        %5716 = vset.pattern.permute.xlu0 0
        %5717 = vperm.xlu0 %5716, %v5623
        %v5718 = vpop.permute.xlu0 %5717
        %5720 = vset.pattern.permute.xlu0 0
        %5721 = vperm.xlu0 %5720, %v5627
        %v5722 = vpop.permute.xlu0 %5721
        %5724 = vset.pattern.permute.xlu0 0
        %5725 = vperm.xlu0 %5724, %v5631
        %v5726 = vpop.permute.xlu0 %5725
        %5728 = vset.pattern.permute.xlu0 0
        %5729 = vperm.xlu0 %5728, %v5635
        %v5730 = vpop.permute.xlu0 %5729
        %5732 = vset.pattern.permute.xlu0 0
        %5733 = vperm.xlu0 %5732, %v5639
        %v5734 = vpop.permute.xlu0 %5733
        %5736 = vset.pattern.permute.xlu0 0
        %5737 = vperm.xlu0 %5736, %v5643
        %v5738 = vpop.permute.xlu0 %5737
        %5740 = vset.pattern.permute.xlu0 0
        %5741 = vperm.xlu0 %5740, %v5647
        %v5742 = vpop.permute.xlu0 %5741
        %5744 = vset.pattern.permute.xlu0 0
        %5745 = vperm.xlu0 %5744, %v5651
        %v5746 = vpop.permute.xlu0 %5745
        %v5748 = vmul.f32 %v5654, %v5171
        %v5749 = vmul.f32 %v5658, %v5173
        %v5750 = vmul.f32 %v5662, %v5175
        %v5751 = vmul.f32 %v5666, %v5177
        %v5752 = vmul.f32 %v5670, %v5179
        %v5753 = vmul.f32 %v5674, %v5181
        %v5754 = vmul.f32 %v5678, %v5183
        %v5755 = vmul.f32 %v5682, %v5185
        %v5756 = vmul.f32 %v5686, %v5187
        %v5757 = vmul.f32 %v5690, %v5189
        %v5758 = vmul.f32 %v5694, %v5191
        %v5759 = vmul.f32 %v5698, %v5193
        %v5760 = vmul.f32 %v5702, %v5195
        %v5761 = vmul.f32 %v5706, %v5197
        %v5762 = vmul.f32 %v5710, %v5199
        %v5763 = vmul.f32 %v5714, %v5201
        %v5764 = vmul.f32 %v5718, %v5203
        %v5765 = vmul.f32 %v5722, %v5205
        %v5766 = vmul.f32 %v5726, %v5207
        %v5767 = vmul.f32 %v5730, %v5209
        %v5768 = vmul.f32 %v5734, %v5211
        %v5769 = vmul.f32 %v5738, %v5213
        %v5770 = vmul.f32 %v5742, %v5215
        %v5771 = vmul.f32 %v5746, %v5217
        %5796 = vrot.lane.b32.xlu0 %v5748, 127
        %v5797 = vpop.permute.xlu0 %5796
        %5798 = vrot.lane.b32.xlu0 %v5749, 127
        %v5799 = vpop.permute.xlu0 %5798
        %5800 = vrot.lane.b32.xlu0 %v5750, 127
        %v5801 = vpop.permute.xlu0 %5800
        %5802 = vrot.lane.b32.xlu0 %v5751, 127
        %v5803 = vpop.permute.xlu0 %5802
        %5804 = vrot.lane.b32.xlu0 %v5752, 127
        %v5805 = vpop.permute.xlu0 %5804
        %5806 = vrot.lane.b32.xlu0 %v5753, 127
        %v5807 = vpop.permute.xlu0 %5806
        %5808 = vrot.lane.b32.xlu0 %v5754, 127
        %v5809 = vpop.permute.xlu0 %5808
        %5810 = vrot.lane.b32.xlu0 %v5755, 127
        %v5811 = vpop.permute.xlu0 %5810
        %5812 = vrot.lane.b32.xlu0 %v5756, 127
        %v5813 = vpop.permute.xlu0 %5812
        %5814 = vrot.lane.b32.xlu0 %v5757, 127
        %v5815 = vpop.permute.xlu0 %5814
        %5816 = vrot.lane.b32.xlu0 %v5758, 127
        %v5817 = vpop.permute.xlu0 %5816
        %5818 = vrot.lane.b32.xlu0 %v5759, 127
        %v5819 = vpop.permute.xlu0 %5818
        %5820 = vrot.lane.b32.xlu0 %v5760, 127
        %v5821 = vpop.permute.xlu0 %5820
        %5822 = vrot.lane.b32.xlu0 %v5761, 127
        %v5823 = vpop.permute.xlu0 %5822
        %5824 = vrot.lane.b32.xlu0 %v5762, 127
        %v5825 = vpop.permute.xlu0 %5824
        %5826 = vrot.lane.b32.xlu0 %v5763, 127
        %v5827 = vpop.permute.xlu0 %5826
        %5828 = vrot.lane.b32.xlu0 %v5764, 127
        %v5829 = vpop.permute.xlu0 %5828
        %5830 = vrot.lane.b32.xlu0 %v5765, 127
        %v5831 = vpop.permute.xlu0 %5830
        %5832 = vrot.lane.b32.xlu0 %v5766, 127
        %v5833 = vpop.permute.xlu0 %5832
        %5834 = vrot.lane.b32.xlu0 %v5767, 127
        %v5835 = vpop.permute.xlu0 %5834
        %5836 = vrot.lane.b32.xlu0 %v5768, 127
        %v5837 = vpop.permute.xlu0 %5836
        %5838 = vrot.lane.b32.xlu0 %v5769, 127
        %v5839 = vpop.permute.xlu0 %5838
        %5840 = vrot.lane.b32.xlu0 %v5770, 127
        %v5841 = vpop.permute.xlu0 %5840
        %5842 = vrot.lane.b32.xlu0 %v5771, 127
        %v5843 = vpop.permute.xlu0 %5842
        %v5868 = vadd.f32 %v5483, %v5797
        %v5869 = vadd.f32 %v5484, %v5799
        %v5870 = vadd.f32 %v5485, %v5801
        %v5871 = vadd.f32 %v5486, %v5803
        %v5872 = vadd.f32 %v5487, %v5805
        %v5873 = vadd.f32 %v5488, %v5807
        %v5874 = vadd.f32 %v5489, %v5809
        %v5875 = vadd.f32 %v5490, %v5811
        %v5876 = vadd.f32 %v5491, %v5813
        %v5877 = vadd.f32 %v5492, %v5815
        %v5878 = vadd.f32 %v5493, %v5817
        %v5879 = vadd.f32 %v5494, %v5819
        %v5880 = vadd.f32 %v5495, %v5821
        %v5881 = vadd.f32 %v5496, %v5823
        %v5882 = vadd.f32 %v5497, %v5825
        %v5883 = vadd.f32 %v5498, %v5827
        %v5884 = vadd.f32 %v5499, %v5829
        %v5885 = vadd.f32 %v5500, %v5831
        %v5886 = vadd.f32 %v5501, %v5833
        %v5887 = vadd.f32 %v5502, %v5835
        %v5888 = vadd.f32 %v5503, %v5837
        %v5889 = vadd.f32 %v5504, %v5839
        %v5890 = vadd.f32 %v5505, %v5841
        %v5891 = vadd.f32 %v5506, %v5843
        %s5892 = scalar_lea.vmem %s3, 48
        %v5893 = vld [vmem:[%s5892] sm:$0x1]
        %v5894 = vld [vmem:[%s5892 + $0x1] sm:$0x1]
        %v5895 = vld [vmem:[%s5892 + $0x2] sm:$0x1]
        %v5896 = vld [vmem:[%s5892 + $0x3] sm:$0x1]
        %v5897 = vld [vmem:[%s5892 + $0x4] sm:$0x1]
        %v5898 = vld [vmem:[%s5892 + $0x5] sm:$0x1]
        %v5899 = vld [vmem:[%s5892 + $0x6] sm:$0x1]
        %v5900 = vld [vmem:[%s5892 + $0x7] sm:$0x1]
        %v5901 = vld [vmem:[%s5892 + $0x8] sm:$0x1]
        %v5902 = vld [vmem:[%s5892 + $0x9] sm:$0x1]
        %v5903 = vld [vmem:[%s5892 + $0xa] sm:$0x1]
        %v5904 = vld [vmem:[%s5892 + $0xb] sm:$0x1]
        %v5905 = vld [vmem:[%s5892 + $0xc] sm:$0x1]
        %v5906 = vld [vmem:[%s5892 + $0xd] sm:$0x1]
        %v5907 = vld [vmem:[%s5892 + $0xe] sm:$0x1]
        %v5908 = vld [vmem:[%s5892 + $0xf] sm:$0x1]
        %v5909 = vld [vmem:[%s5892 + $0x10] sm:$0x1]
        %v5910 = vld [vmem:[%s5892 + $0x11] sm:$0x1]
        %v5911 = vld [vmem:[%s5892 + $0x12] sm:$0x1]
        %v5912 = vld [vmem:[%s5892 + $0x13] sm:$0x1]
        %v5913 = vld [vmem:[%s5892 + $0x14] sm:$0x1]
        %v5914 = vld [vmem:[%s5892 + $0x15] sm:$0x1]
        %v5915 = vld [vmem:[%s5892 + $0x16] sm:$0x1]
        %v5916 = vld [vmem:[%s5892 + $0x17] sm:$0x1]
        %v5941 = vlaneseq
        %v5942 = vshrl.u32 %v5941, 7
        %v5943 = vsub.s32 0, %v5942
        %v5944 = vrot.slane %v5893, %v5943
        %v5945 = vlaneseq
        %v5946 = vshrl.u32 %v5945, 7
        %v5947 = vsub.s32 0, %v5946
        %v5948 = vrot.slane %v5894, %v5947
        %v5949 = vlaneseq
        %v5950 = vshrl.u32 %v5949, 7
        %v5951 = vsub.s32 0, %v5950
        %v5952 = vrot.slane %v5895, %v5951
        %v5953 = vlaneseq
        %v5954 = vshrl.u32 %v5953, 7
        %v5955 = vsub.s32 0, %v5954
        %v5956 = vrot.slane %v5896, %v5955
        %v5957 = vlaneseq
        %v5958 = vshrl.u32 %v5957, 7
        %v5959 = vsub.s32 0, %v5958
        %v5960 = vrot.slane %v5897, %v5959
        %v5961 = vlaneseq
        %v5962 = vshrl.u32 %v5961, 7
        %v5963 = vsub.s32 0, %v5962
        %v5964 = vrot.slane %v5898, %v5963
        %v5965 = vlaneseq
        %v5966 = vshrl.u32 %v5965, 7
        %v5967 = vsub.s32 0, %v5966
        %v5968 = vrot.slane %v5899, %v5967
        %v5969 = vlaneseq
        %v5970 = vshrl.u32 %v5969, 7
        %v5971 = vsub.s32 0, %v5970
        %v5972 = vrot.slane %v5900, %v5971
        %v5973 = vlaneseq
        %v5974 = vshrl.u32 %v5973, 7
        %v5975 = vsub.s32 0, %v5974
        %v5976 = vrot.slane %v5901, %v5975
        %v5977 = vlaneseq
        %v5978 = vshrl.u32 %v5977, 7
        %v5979 = vsub.s32 0, %v5978
        %v5980 = vrot.slane %v5902, %v5979
        %v5981 = vlaneseq
        %v5982 = vshrl.u32 %v5981, 7
        %v5983 = vsub.s32 0, %v5982
        %v5984 = vrot.slane %v5903, %v5983
        %v5985 = vlaneseq
        %v5986 = vshrl.u32 %v5985, 7
        %v5987 = vsub.s32 0, %v5986
        %v5988 = vrot.slane %v5904, %v5987
        %v5989 = vlaneseq
        %v5990 = vshrl.u32 %v5989, 7
        %v5991 = vsub.s32 0, %v5990
        %v5992 = vrot.slane %v5905, %v5991
        %v5993 = vlaneseq
        %v5994 = vshrl.u32 %v5993, 7
        %v5995 = vsub.s32 0, %v5994
        %v5996 = vrot.slane %v5906, %v5995
        %v5997 = vlaneseq
        %v5998 = vshrl.u32 %v5997, 7
        %v5999 = vsub.s32 0, %v5998
        %v6000 = vrot.slane %v5907, %v5999
        %v6001 = vlaneseq
        %v6002 = vshrl.u32 %v6001, 7
        %v6003 = vsub.s32 0, %v6002
        %v6004 = vrot.slane %v5908, %v6003
        %v6005 = vlaneseq
        %v6006 = vshrl.u32 %v6005, 7
        %v6007 = vsub.s32 0, %v6006
        %v6008 = vrot.slane %v5909, %v6007
        %v6009 = vlaneseq
        %v6010 = vshrl.u32 %v6009, 7
        %v6011 = vsub.s32 0, %v6010
        %v6012 = vrot.slane %v5910, %v6011
        %v6013 = vlaneseq
        %v6014 = vshrl.u32 %v6013, 7
        %v6015 = vsub.s32 0, %v6014
        %v6016 = vrot.slane %v5911, %v6015
        %v6017 = vlaneseq
        %v6018 = vshrl.u32 %v6017, 7
        %v6019 = vsub.s32 0, %v6018
        %v6020 = vrot.slane %v5912, %v6019
        %v6021 = vlaneseq
        %v6022 = vshrl.u32 %v6021, 7
        %v6023 = vsub.s32 0, %v6022
        %v6024 = vrot.slane %v5913, %v6023
        %v6025 = vlaneseq
        %v6026 = vshrl.u32 %v6025, 7
        %v6027 = vsub.s32 0, %v6026
        %v6028 = vrot.slane %v5914, %v6027
        %v6029 = vlaneseq
        %v6030 = vshrl.u32 %v6029, 7
        %v6031 = vsub.s32 0, %v6030
        %v6032 = vrot.slane %v5915, %v6031
        %v6033 = vlaneseq
        %v6034 = vshrl.u32 %v6033, 7
        %v6035 = vsub.s32 0, %v6034
        %v6036 = vrot.slane %v5916, %v6035
        %6037 = vset.pattern.permute.xlu0 0
        %6038 = vperm.xlu0 %6037, %v5944
        %v6039 = vpop.permute.xlu0 %6038
        %6041 = vset.pattern.permute.xlu0 0
        %6042 = vperm.xlu0 %6041, %v5948
        %v6043 = vpop.permute.xlu0 %6042
        %6045 = vset.pattern.permute.xlu0 0
        %6046 = vperm.xlu0 %6045, %v5952
        %v6047 = vpop.permute.xlu0 %6046
        %6049 = vset.pattern.permute.xlu0 0
        %6050 = vperm.xlu0 %6049, %v5956
        %v6051 = vpop.permute.xlu0 %6050
        %6053 = vset.pattern.permute.xlu0 0
        %6054 = vperm.xlu0 %6053, %v5960
        %v6055 = vpop.permute.xlu0 %6054
        %6057 = vset.pattern.permute.xlu0 0
        %6058 = vperm.xlu0 %6057, %v5964
        %v6059 = vpop.permute.xlu0 %6058
        %6061 = vset.pattern.permute.xlu0 0
        %6062 = vperm.xlu0 %6061, %v5968
        %v6063 = vpop.permute.xlu0 %6062
        %6065 = vset.pattern.permute.xlu0 0
        %6066 = vperm.xlu0 %6065, %v5972
        %v6067 = vpop.permute.xlu0 %6066
        %6069 = vset.pattern.permute.xlu0 0
        %6070 = vperm.xlu0 %6069, %v5976
        %v6071 = vpop.permute.xlu0 %6070
        %6073 = vset.pattern.permute.xlu0 0
        %6074 = vperm.xlu0 %6073, %v5980
        %v6075 = vpop.permute.xlu0 %6074
        %6077 = vset.pattern.permute.xlu0 0
        %6078 = vperm.xlu0 %6077, %v5984
        %v6079 = vpop.permute.xlu0 %6078
        %6081 = vset.pattern.permute.xlu0 0
        %6082 = vperm.xlu0 %6081, %v5988
        %v6083 = vpop.permute.xlu0 %6082
        %6085 = vset.pattern.permute.xlu0 0
        %6086 = vperm.xlu0 %6085, %v5992
        %v6087 = vpop.permute.xlu0 %6086
        %6089 = vset.pattern.permute.xlu0 0
        %6090 = vperm.xlu0 %6089, %v5996
        %v6091 = vpop.permute.xlu0 %6090
        %6093 = vset.pattern.permute.xlu0 0
        %6094 = vperm.xlu0 %6093, %v6000
        %v6095 = vpop.permute.xlu0 %6094
        %6097 = vset.pattern.permute.xlu0 0
        %6098 = vperm.xlu0 %6097, %v6004
        %v6099 = vpop.permute.xlu0 %6098
        %6101 = vset.pattern.permute.xlu0 0
        %6102 = vperm.xlu0 %6101, %v6008
        %v6103 = vpop.permute.xlu0 %6102
        %6105 = vset.pattern.permute.xlu0 0
        %6106 = vperm.xlu0 %6105, %v6012
        %v6107 = vpop.permute.xlu0 %6106
        %6109 = vset.pattern.permute.xlu0 0
        %6110 = vperm.xlu0 %6109, %v6016
        %v6111 = vpop.permute.xlu0 %6110
        %6113 = vset.pattern.permute.xlu0 0
        %6114 = vperm.xlu0 %6113, %v6020
        %v6115 = vpop.permute.xlu0 %6114
        %6117 = vset.pattern.permute.xlu0 0
        %6118 = vperm.xlu0 %6117, %v6024
        %v6119 = vpop.permute.xlu0 %6118
        %6121 = vset.pattern.permute.xlu0 0
        %6122 = vperm.xlu0 %6121, %v6028
        %v6123 = vpop.permute.xlu0 %6122
        %6125 = vset.pattern.permute.xlu0 0
        %6126 = vperm.xlu0 %6125, %v6032
        %v6127 = vpop.permute.xlu0 %6126
        %6129 = vset.pattern.permute.xlu0 0
        %6130 = vperm.xlu0 %6129, %v6036
        %v6131 = vpop.permute.xlu0 %6130
        %v6133 = vmul.f32 %v6039, %v5171
        %v6134 = vmul.f32 %v6043, %v5173
        %v6135 = vmul.f32 %v6047, %v5175
        %v6136 = vmul.f32 %v6051, %v5177
        %v6137 = vmul.f32 %v6055, %v5179
        %v6138 = vmul.f32 %v6059, %v5181
        %v6139 = vmul.f32 %v6063, %v5183
        %v6140 = vmul.f32 %v6067, %v5185
        %v6141 = vmul.f32 %v6071, %v5187
        %v6142 = vmul.f32 %v6075, %v5189
        %v6143 = vmul.f32 %v6079, %v5191
        %v6144 = vmul.f32 %v6083, %v5193
        %v6145 = vmul.f32 %v6087, %v5195
        %v6146 = vmul.f32 %v6091, %v5197
        %v6147 = vmul.f32 %v6095, %v5199
        %v6148 = vmul.f32 %v6099, %v5201
        %v6149 = vmul.f32 %v6103, %v5203
        %v6150 = vmul.f32 %v6107, %v5205
        %v6151 = vmul.f32 %v6111, %v5207
        %v6152 = vmul.f32 %v6115, %v5209
        %v6153 = vmul.f32 %v6119, %v5211
        %v6154 = vmul.f32 %v6123, %v5213
        %v6155 = vmul.f32 %v6127, %v5215
        %v6156 = vmul.f32 %v6131, %v5217
        %6181 = vrot.lane.b32.xlu0 %v6133, 126
        %v6182 = vpop.permute.xlu0 %6181
        %6183 = vrot.lane.b32.xlu0 %v6134, 126
        %v6184 = vpop.permute.xlu0 %6183
        %6185 = vrot.lane.b32.xlu0 %v6135, 126
        %v6186 = vpop.permute.xlu0 %6185
        %6187 = vrot.lane.b32.xlu0 %v6136, 126
        %v6188 = vpop.permute.xlu0 %6187
        %6189 = vrot.lane.b32.xlu0 %v6137, 126
        %v6190 = vpop.permute.xlu0 %6189
        %6191 = vrot.lane.b32.xlu0 %v6138, 126
        %v6192 = vpop.permute.xlu0 %6191
        %6193 = vrot.lane.b32.xlu0 %v6139, 126
        %v6194 = vpop.permute.xlu0 %6193
        %6195 = vrot.lane.b32.xlu0 %v6140, 126
        %v6196 = vpop.permute.xlu0 %6195
        %6197 = vrot.lane.b32.xlu0 %v6141, 126
        %v6198 = vpop.permute.xlu0 %6197
        %6199 = vrot.lane.b32.xlu0 %v6142, 126
        %v6200 = vpop.permute.xlu0 %6199
        %6201 = vrot.lane.b32.xlu0 %v6143, 126
        %v6202 = vpop.permute.xlu0 %6201
        %6203 = vrot.lane.b32.xlu0 %v6144, 126
        %v6204 = vpop.permute.xlu0 %6203
        %6205 = vrot.lane.b32.xlu0 %v6145, 126
        %v6206 = vpop.permute.xlu0 %6205
        %6207 = vrot.lane.b32.xlu0 %v6146, 126
        %v6208 = vpop.permute.xlu0 %6207
        %6209 = vrot.lane.b32.xlu0 %v6147, 126
        %v6210 = vpop.permute.xlu0 %6209
        %6211 = vrot.lane.b32.xlu0 %v6148, 126
        %v6212 = vpop.permute.xlu0 %6211
        %6213 = vrot.lane.b32.xlu0 %v6149, 126
        %v6214 = vpop.permute.xlu0 %6213
        %6215 = vrot.lane.b32.xlu0 %v6150, 126
        %v6216 = vpop.permute.xlu0 %6215
        %6217 = vrot.lane.b32.xlu0 %v6151, 126
        %v6218 = vpop.permute.xlu0 %6217
        %6219 = vrot.lane.b32.xlu0 %v6152, 126
        %v6220 = vpop.permute.xlu0 %6219
        %6221 = vrot.lane.b32.xlu0 %v6153, 126
        %v6222 = vpop.permute.xlu0 %6221
        %6223 = vrot.lane.b32.xlu0 %v6154, 126
        %v6224 = vpop.permute.xlu0 %6223
        %6225 = vrot.lane.b32.xlu0 %v6155, 126
        %v6226 = vpop.permute.xlu0 %6225
        %6227 = vrot.lane.b32.xlu0 %v6156, 126
        %v6228 = vpop.permute.xlu0 %6227
        %v6253 = vadd.f32 %v5868, %v6182
        %v6254 = vadd.f32 %v5869, %v6184
        %v6255 = vadd.f32 %v5870, %v6186
        %v6256 = vadd.f32 %v5871, %v6188
        %v6257 = vadd.f32 %v5872, %v6190
        %v6258 = vadd.f32 %v5873, %v6192
        %v6259 = vadd.f32 %v5874, %v6194
        %v6260 = vadd.f32 %v5875, %v6196
        %v6261 = vadd.f32 %v5876, %v6198
        %v6262 = vadd.f32 %v5877, %v6200
        %v6263 = vadd.f32 %v5878, %v6202
        %v6264 = vadd.f32 %v5879, %v6204
        %v6265 = vadd.f32 %v5880, %v6206
        %v6266 = vadd.f32 %v5881, %v6208
        %v6267 = vadd.f32 %v5882, %v6210
        %v6268 = vadd.f32 %v5883, %v6212
        %v6269 = vadd.f32 %v5884, %v6214
        %v6270 = vadd.f32 %v5885, %v6216
        %v6271 = vadd.f32 %v5886, %v6218
        %v6272 = vadd.f32 %v5887, %v6220
        %v6273 = vadd.f32 %v5888, %v6222
        %v6274 = vadd.f32 %v5889, %v6224
        %v6275 = vadd.f32 %v5890, %v6226
        %v6276 = vadd.f32 %v5891, %v6228
        %s6277 = scalar_lea.vmem %s3, 72
        %v6278 = vld [vmem:[%s6277] sm:$0x1]
        %v6279 = vld [vmem:[%s6277 + $0x1] sm:$0x1]
        %v6280 = vld [vmem:[%s6277 + $0x2] sm:$0x1]
        %v6281 = vld [vmem:[%s6277 + $0x3] sm:$0x1]
        %v6282 = vld [vmem:[%s6277 + $0x4] sm:$0x1]
        %v6283 = vld [vmem:[%s6277 + $0x5] sm:$0x1]
        %v6284 = vld [vmem:[%s6277 + $0x6] sm:$0x1]
        %v6285 = vld [vmem:[%s6277 + $0x7] sm:$0x1]
        %v6286 = vld [vmem:[%s6277 + $0x8] sm:$0x1]
        %v6287 = vld [vmem:[%s6277 + $0x9] sm:$0x1]
        %v6288 = vld [vmem:[%s6277 + $0xa] sm:$0x1]
        %v6289 = vld [vmem:[%s6277 + $0xb] sm:$0x1]
        %v6290 = vld [vmem:[%s6277 + $0xc] sm:$0x1]
        %v6291 = vld [vmem:[%s6277 + $0xd] sm:$0x1]
        %v6292 = vld [vmem:[%s6277 + $0xe] sm:$0x1]
        %v6293 = vld [vmem:[%s6277 + $0xf] sm:$0x1]
        %v6294 = vld [vmem:[%s6277 + $0x10] sm:$0x1]
        %v6295 = vld [vmem:[%s6277 + $0x11] sm:$0x1]
        %v6296 = vld [vmem:[%s6277 + $0x12] sm:$0x1]
        %v6297 = vld [vmem:[%s6277 + $0x13] sm:$0x1]
        %v6298 = vld [vmem:[%s6277 + $0x14] sm:$0x1]
        %v6299 = vld [vmem:[%s6277 + $0x15] sm:$0x1]
        %v6300 = vld [vmem:[%s6277 + $0x16] sm:$0x1]
        %v6301 = vld [vmem:[%s6277 + $0x17] sm:$0x1]
        %v6326 = vlaneseq
        %v6327 = vshrl.u32 %v6326, 7
        %v6328 = vsub.s32 0, %v6327
        %v6329 = vrot.slane %v6278, %v6328
        %v6330 = vlaneseq
        %v6331 = vshrl.u32 %v6330, 7
        %v6332 = vsub.s32 0, %v6331
        %v6333 = vrot.slane %v6279, %v6332
        %v6334 = vlaneseq
        %v6335 = vshrl.u32 %v6334, 7
        %v6336 = vsub.s32 0, %v6335
        %v6337 = vrot.slane %v6280, %v6336
        %v6338 = vlaneseq
        %v6339 = vshrl.u32 %v6338, 7
        %v6340 = vsub.s32 0, %v6339
        %v6341 = vrot.slane %v6281, %v6340
        %v6342 = vlaneseq
        %v6343 = vshrl.u32 %v6342, 7
        %v6344 = vsub.s32 0, %v6343
        %v6345 = vrot.slane %v6282, %v6344
        %v6346 = vlaneseq
        %v6347 = vshrl.u32 %v6346, 7
        %v6348 = vsub.s32 0, %v6347
        %v6349 = vrot.slane %v6283, %v6348
        %v6350 = vlaneseq
        %v6351 = vshrl.u32 %v6350, 7
        %v6352 = vsub.s32 0, %v6351
        %v6353 = vrot.slane %v6284, %v6352
        %v6354 = vlaneseq
        %v6355 = vshrl.u32 %v6354, 7
        %v6356 = vsub.s32 0, %v6355
        %v6357 = vrot.slane %v6285, %v6356
        %v6358 = vlaneseq
        %v6359 = vshrl.u32 %v6358, 7
        %v6360 = vsub.s32 0, %v6359
        %v6361 = vrot.slane %v6286, %v6360
        %v6362 = vlaneseq
        %v6363 = vshrl.u32 %v6362, 7
        %v6364 = vsub.s32 0, %v6363
        %v6365 = vrot.slane %v6287, %v6364
        %v6366 = vlaneseq
        %v6367 = vshrl.u32 %v6366, 7
        %v6368 = vsub.s32 0, %v6367
        %v6369 = vrot.slane %v6288, %v6368
        %v6370 = vlaneseq
        %v6371 = vshrl.u32 %v6370, 7
        %v6372 = vsub.s32 0, %v6371
        %v6373 = vrot.slane %v6289, %v6372
        %v6374 = vlaneseq
        %v6375 = vshrl.u32 %v6374, 7
        %v6376 = vsub.s32 0, %v6375
        %v6377 = vrot.slane %v6290, %v6376
        %v6378 = vlaneseq
        %v6379 = vshrl.u32 %v6378, 7
        %v6380 = vsub.s32 0, %v6379
        %v6381 = vrot.slane %v6291, %v6380
        %v6382 = vlaneseq
        %v6383 = vshrl.u32 %v6382, 7
        %v6384 = vsub.s32 0, %v6383
        %v6385 = vrot.slane %v6292, %v6384
        %v6386 = vlaneseq
        %v6387 = vshrl.u32 %v6386, 7
        %v6388 = vsub.s32 0, %v6387
        %v6389 = vrot.slane %v6293, %v6388
        %v6390 = vlaneseq
        %v6391 = vshrl.u32 %v6390, 7
        %v6392 = vsub.s32 0, %v6391
        %v6393 = vrot.slane %v6294, %v6392
        %v6394 = vlaneseq
        %v6395 = vshrl.u32 %v6394, 7
        %v6396 = vsub.s32 0, %v6395
        %v6397 = vrot.slane %v6295, %v6396
        %v6398 = vlaneseq
        %v6399 = vshrl.u32 %v6398, 7
        %v6400 = vsub.s32 0, %v6399
        %v6401 = vrot.slane %v6296, %v6400
        %v6402 = vlaneseq
        %v6403 = vshrl.u32 %v6402, 7
        %v6404 = vsub.s32 0, %v6403
        %v6405 = vrot.slane %v6297, %v6404
        %v6406 = vlaneseq
        %v6407 = vshrl.u32 %v6406, 7
        %v6408 = vsub.s32 0, %v6407
        %v6409 = vrot.slane %v6298, %v6408
        %v6410 = vlaneseq
        %v6411 = vshrl.u32 %v6410, 7
        %v6412 = vsub.s32 0, %v6411
        %v6413 = vrot.slane %v6299, %v6412
        %v6414 = vlaneseq
        %v6415 = vshrl.u32 %v6414, 7
        %v6416 = vsub.s32 0, %v6415
        %v6417 = vrot.slane %v6300, %v6416
        %v6418 = vlaneseq
        %v6419 = vshrl.u32 %v6418, 7
        %v6420 = vsub.s32 0, %v6419
        %v6421 = vrot.slane %v6301, %v6420
        %6422 = vset.pattern.permute.xlu0 0
        %6423 = vperm.xlu0 %6422, %v6329
        %v6424 = vpop.permute.xlu0 %6423
        %6426 = vset.pattern.permute.xlu0 0
        %6427 = vperm.xlu0 %6426, %v6333
        %v6428 = vpop.permute.xlu0 %6427
        %6430 = vset.pattern.permute.xlu0 0
        %6431 = vperm.xlu0 %6430, %v6337
        %v6432 = vpop.permute.xlu0 %6431
        %6434 = vset.pattern.permute.xlu0 0
        %6435 = vperm.xlu0 %6434, %v6341
        %v6436 = vpop.permute.xlu0 %6435
        %6438 = vset.pattern.permute.xlu0 0
        %6439 = vperm.xlu0 %6438, %v6345
        %v6440 = vpop.permute.xlu0 %6439
        %6442 = vset.pattern.permute.xlu0 0
        %6443 = vperm.xlu0 %6442, %v6349
        %v6444 = vpop.permute.xlu0 %6443
        %6446 = vset.pattern.permute.xlu0 0
        %6447 = vperm.xlu0 %6446, %v6353
        %v6448 = vpop.permute.xlu0 %6447
        %6450 = vset.pattern.permute.xlu0 0
        %6451 = vperm.xlu0 %6450, %v6357
        %v6452 = vpop.permute.xlu0 %6451
        %6454 = vset.pattern.permute.xlu0 0
        %6455 = vperm.xlu0 %6454, %v6361
        %v6456 = vpop.permute.xlu0 %6455
        %6458 = vset.pattern.permute.xlu0 0
        %6459 = vperm.xlu0 %6458, %v6365
        %v6460 = vpop.permute.xlu0 %6459
        %6462 = vset.pattern.permute.xlu0 0
        %6463 = vperm.xlu0 %6462, %v6369
        %v6464 = vpop.permute.xlu0 %6463
        %6466 = vset.pattern.permute.xlu0 0
        %6467 = vperm.xlu0 %6466, %v6373
        %v6468 = vpop.permute.xlu0 %6467
        %6470 = vset.pattern.permute.xlu0 0
        %6471 = vperm.xlu0 %6470, %v6377
        %v6472 = vpop.permute.xlu0 %6471
        %6474 = vset.pattern.permute.xlu0 0
        %6475 = vperm.xlu0 %6474, %v6381
        %v6476 = vpop.permute.xlu0 %6475
        %6478 = vset.pattern.permute.xlu0 0
        %6479 = vperm.xlu0 %6478, %v6385
        %v6480 = vpop.permute.xlu0 %6479
        %6482 = vset.pattern.permute.xlu0 0
        %6483 = vperm.xlu0 %6482, %v6389
        %v6484 = vpop.permute.xlu0 %6483
        %6486 = vset.pattern.permute.xlu0 0
        %6487 = vperm.xlu0 %6486, %v6393
        %v6488 = vpop.permute.xlu0 %6487
        %6490 = vset.pattern.permute.xlu0 0
        %6491 = vperm.xlu0 %6490, %v6397
        %v6492 = vpop.permute.xlu0 %6491
        %6494 = vset.pattern.permute.xlu0 0
        %6495 = vperm.xlu0 %6494, %v6401
        %v6496 = vpop.permute.xlu0 %6495
        %6498 = vset.pattern.permute.xlu0 0
        %6499 = vperm.xlu0 %6498, %v6405
        %v6500 = vpop.permute.xlu0 %6499
        %6502 = vset.pattern.permute.xlu0 0
        %6503 = vperm.xlu0 %6502, %v6409
        %v6504 = vpop.permute.xlu0 %6503
        %6506 = vset.pattern.permute.xlu0 0
        %6507 = vperm.xlu0 %6506, %v6413
        %v6508 = vpop.permute.xlu0 %6507
        %6510 = vset.pattern.permute.xlu0 0
        %6511 = vperm.xlu0 %6510, %v6417
        %v6512 = vpop.permute.xlu0 %6511
        %6514 = vset.pattern.permute.xlu0 0
        %6515 = vperm.xlu0 %6514, %v6421
        %v6516 = vpop.permute.xlu0 %6515
        %v6518 = vmul.f32 %v6424, %v5171
        %v6519 = vmul.f32 %v6424, %v5172
        %v6520 = vmul.f32 %v6428, %v5173
        %v6521 = vmul.f32 %v6428, %v5174
        %v6522 = vmul.f32 %v6432, %v5175
        %v6523 = vmul.f32 %v6432, %v5176
        %v6524 = vmul.f32 %v6436, %v5177
        %v6525 = vmul.f32 %v6436, %v5178
        %v6526 = vmul.f32 %v6440, %v5179
        %v6527 = vmul.f32 %v6440, %v5180
        %v6528 = vmul.f32 %v6444, %v5181
        %v6529 = vmul.f32 %v6444, %v5182
        %v6530 = vmul.f32 %v6448, %v5183
        %v6531 = vmul.f32 %v6448, %v5184
        %v6532 = vmul.f32 %v6452, %v5185
        %v6533 = vmul.f32 %v6452, %v5186
        %v6534 = vmul.f32 %v6456, %v5187
        %v6535 = vmul.f32 %v6456, %v5188
        %v6536 = vmul.f32 %v6460, %v5189
        %v6537 = vmul.f32 %v6460, %v5190
        %v6538 = vmul.f32 %v6464, %v5191
        %v6539 = vmul.f32 %v6464, %v5192
        %v6540 = vmul.f32 %v6468, %v5193
        %v6541 = vmul.f32 %v6468, %v5194
        %v6542 = vmul.f32 %v6472, %v5195
        %v6543 = vmul.f32 %v6472, %v5196
        %v6544 = vmul.f32 %v6476, %v5197
        %v6545 = vmul.f32 %v6476, %v5198
        %v6546 = vmul.f32 %v6480, %v5199
        %v6547 = vmul.f32 %v6480, %v5200
        %v6548 = vmul.f32 %v6484, %v5201
        %v6549 = vmul.f32 %v6484, %v5202
        %v6550 = vmul.f32 %v6488, %v5203
        %v6551 = vmul.f32 %v6488, %v5204
        %v6552 = vmul.f32 %v6492, %v5205
        %v6553 = vmul.f32 %v6492, %v5206
        %v6554 = vmul.f32 %v6496, %v5207
        %v6555 = vmul.f32 %v6496, %v5208
        %v6556 = vmul.f32 %v6500, %v5209
        %v6557 = vmul.f32 %v6500, %v5210
        %v6558 = vmul.f32 %v6504, %v5211
        %v6559 = vmul.f32 %v6504, %v5212
        %v6560 = vmul.f32 %v6508, %v5213
        %v6561 = vmul.f32 %v6508, %v5214
        %v6562 = vmul.f32 %v6512, %v5215
        %v6563 = vmul.f32 %v6512, %v5216
        %v6564 = vmul.f32 %v6516, %v5217
        %v6565 = vmul.f32 %v6516, %v5218
        %vm6614 = vcmask 1046528
        %v6615 = vrot.slane %v6518, 1
        %v6616 = vrot.slane %v6519, 1
        %v6617 = vsel %vm6614, %v6615, %v6616
        %v6618 = vrot.slane %v6520, 1
        %v6619 = vrot.slane %v6521, 1
        %v6620 = vsel %vm6614, %v6618, %v6619
        %v6621 = vrot.slane %v6522, 1
        %v6622 = vrot.slane %v6523, 1
        %v6623 = vsel %vm6614, %v6621, %v6622
        %v6624 = vrot.slane %v6524, 1
        %v6625 = vrot.slane %v6525, 1
        %v6626 = vsel %vm6614, %v6624, %v6625
        %v6627 = vrot.slane %v6526, 1
        %v6628 = vrot.slane %v6527, 1
        %v6629 = vsel %vm6614, %v6627, %v6628
        %v6630 = vrot.slane %v6528, 1
        %v6631 = vrot.slane %v6529, 1
        %v6632 = vsel %vm6614, %v6630, %v6631
        %v6633 = vrot.slane %v6530, 1
        %v6634 = vrot.slane %v6531, 1
        %v6635 = vsel %vm6614, %v6633, %v6634
        %v6636 = vrot.slane %v6532, 1
        %v6637 = vrot.slane %v6533, 1
        %v6638 = vsel %vm6614, %v6636, %v6637
        %v6639 = vrot.slane %v6534, 1
        %v6640 = vrot.slane %v6535, 1
        %v6641 = vsel %vm6614, %v6639, %v6640
        %v6642 = vrot.slane %v6536, 1
        %v6643 = vrot.slane %v6537, 1
        %v6644 = vsel %vm6614, %v6642, %v6643
        %v6645 = vrot.slane %v6538, 1
        %v6646 = vrot.slane %v6539, 1
        %v6647 = vsel %vm6614, %v6645, %v6646
        %v6648 = vrot.slane %v6540, 1
        %v6649 = vrot.slane %v6541, 1
        %v6650 = vsel %vm6614, %v6648, %v6649
        %v6651 = vrot.slane %v6542, 1
        %v6652 = vrot.slane %v6543, 1
        %v6653 = vsel %vm6614, %v6651, %v6652
        %v6654 = vrot.slane %v6544, 1
        %v6655 = vrot.slane %v6545, 1
        %v6656 = vsel %vm6614, %v6654, %v6655
        %v6657 = vrot.slane %v6546, 1
        %v6658 = vrot.slane %v6547, 1
        %v6659 = vsel %vm6614, %v6657, %v6658
        %v6660 = vrot.slane %v6548, 1
        %v6661 = vrot.slane %v6549, 1
        %v6662 = vsel %vm6614, %v6660, %v6661
        %v6663 = vrot.slane %v6550, 1
        %v6664 = vrot.slane %v6551, 1
        %v6665 = vsel %vm6614, %v6663, %v6664
        %v6666 = vrot.slane %v6552, 1
        %v6667 = vrot.slane %v6553, 1
        %v6668 = vsel %vm6614, %v6666, %v6667
        %v6669 = vrot.slane %v6554, 1
        %v6670 = vrot.slane %v6555, 1
        %v6671 = vsel %vm6614, %v6669, %v6670
        %v6672 = vrot.slane %v6556, 1
        %v6673 = vrot.slane %v6557, 1
        %v6674 = vsel %vm6614, %v6672, %v6673
        %v6675 = vrot.slane %v6558, 1
        %v6676 = vrot.slane %v6559, 1
        %v6677 = vsel %vm6614, %v6675, %v6676
        %v6678 = vrot.slane %v6560, 1
        %v6679 = vrot.slane %v6561, 1
        %v6680 = vsel %vm6614, %v6678, %v6679
        %v6681 = vrot.slane %v6562, 1
        %v6682 = vrot.slane %v6563, 1
        %v6683 = vsel %vm6614, %v6681, %v6682
        %v6684 = vrot.slane %v6564, 1
        %v6685 = vrot.slane %v6565, 1
        %v6686 = vsel %vm6614, %v6684, %v6685
        %v6711 = vadd.f32 %v6253, %v6617
        %v6712 = vadd.f32 %v6254, %v6620
        %v6713 = vadd.f32 %v6255, %v6623
        %v6714 = vadd.f32 %v6256, %v6626
        %v6715 = vadd.f32 %v6257, %v6629
        %v6716 = vadd.f32 %v6258, %v6632
        %v6717 = vadd.f32 %v6259, %v6635
        %v6718 = vadd.f32 %v6260, %v6638
        %v6719 = vadd.f32 %v6261, %v6641
        %v6720 = vadd.f32 %v6262, %v6644
        %v6721 = vadd.f32 %v6263, %v6647
        %v6722 = vadd.f32 %v6264, %v6650
        %v6723 = vadd.f32 %v6265, %v6653
        %v6724 = vadd.f32 %v6266, %v6656
        %v6725 = vadd.f32 %v6267, %v6659
        %v6726 = vadd.f32 %v6268, %v6662
        %v6727 = vadd.f32 %v6269, %v6665
        %v6728 = vadd.f32 %v6270, %v6668
        %v6729 = vadd.f32 %v6271, %v6671
        %v6730 = vadd.f32 %v6272, %v6674
        %v6731 = vadd.f32 %v6273, %v6677
        %v6732 = vadd.f32 %v6274, %v6680
        %v6733 = vadd.f32 %v6275, %v6683
        %v6734 = vadd.f32 %v6276, %v6686
        %s6735 = scalar_lea.vmem %s3, 96
        %v6736 = vld [vmem:[%s6735] sm:$0x1]
        %v6737 = vld [vmem:[%s6735 + $0x1] sm:$0x1]
        %v6738 = vld [vmem:[%s6735 + $0x2] sm:$0x1]
        %v6739 = vld [vmem:[%s6735 + $0x3] sm:$0x1]
        %v6740 = vld [vmem:[%s6735 + $0x4] sm:$0x1]
        %v6741 = vld [vmem:[%s6735 + $0x5] sm:$0x1]
        %v6742 = vld [vmem:[%s6735 + $0x6] sm:$0x1]
        %v6743 = vld [vmem:[%s6735 + $0x7] sm:$0x1]
        %v6744 = vld [vmem:[%s6735 + $0x8] sm:$0x1]
        %v6745 = vld [vmem:[%s6735 + $0x9] sm:$0x1]
        %v6746 = vld [vmem:[%s6735 + $0xa] sm:$0x1]
        %v6747 = vld [vmem:[%s6735 + $0xb] sm:$0x1]
        %v6748 = vld [vmem:[%s6735 + $0xc] sm:$0x1]
        %v6749 = vld [vmem:[%s6735 + $0xd] sm:$0x1]
        %v6750 = vld [vmem:[%s6735 + $0xe] sm:$0x1]
        %v6751 = vld [vmem:[%s6735 + $0xf] sm:$0x1]
        %v6752 = vld [vmem:[%s6735 + $0x10] sm:$0x1]
        %v6753 = vld [vmem:[%s6735 + $0x11] sm:$0x1]
        %v6754 = vld [vmem:[%s6735 + $0x12] sm:$0x1]
        %v6755 = vld [vmem:[%s6735 + $0x13] sm:$0x1]
        %v6756 = vld [vmem:[%s6735 + $0x14] sm:$0x1]
        %v6757 = vld [vmem:[%s6735 + $0x15] sm:$0x1]
        %v6758 = vld [vmem:[%s6735 + $0x16] sm:$0x1]
        %v6759 = vld [vmem:[%s6735 + $0x17] sm:$0x1]
        %v6784 = vlaneseq
        %v6785 = vshrl.u32 %v6784, 7
        %v6786 = vsub.s32 0, %v6785
        %v6787 = vrot.slane %v6736, %v6786
        %v6788 = vlaneseq
        %v6789 = vshrl.u32 %v6788, 7
        %v6790 = vsub.s32 0, %v6789
        %v6791 = vrot.slane %v6737, %v6790
        %v6792 = vlaneseq
        %v6793 = vshrl.u32 %v6792, 7
        %v6794 = vsub.s32 0, %v6793
        %v6795 = vrot.slane %v6738, %v6794
        %v6796 = vlaneseq
        %v6797 = vshrl.u32 %v6796, 7
        %v6798 = vsub.s32 0, %v6797
        %v6799 = vrot.slane %v6739, %v6798
        %v6800 = vlaneseq
        %v6801 = vshrl.u32 %v6800, 7
        %v6802 = vsub.s32 0, %v6801
        %v6803 = vrot.slane %v6740, %v6802
        %v6804 = vlaneseq
        %v6805 = vshrl.u32 %v6804, 7
        %v6806 = vsub.s32 0, %v6805
        %v6807 = vrot.slane %v6741, %v6806
        %v6808 = vlaneseq
        %v6809 = vshrl.u32 %v6808, 7
        %v6810 = vsub.s32 0, %v6809
        %v6811 = vrot.slane %v6742, %v6810
        %v6812 = vlaneseq
        %v6813 = vshrl.u32 %v6812, 7
        %v6814 = vsub.s32 0, %v6813
        %v6815 = vrot.slane %v6743, %v6814
        %v6816 = vlaneseq
        %v6817 = vshrl.u32 %v6816, 7
        %v6818 = vsub.s32 0, %v6817
        %v6819 = vrot.slane %v6744, %v6818
        %v6820 = vlaneseq
        %v6821 = vshrl.u32 %v6820, 7
        %v6822 = vsub.s32 0, %v6821
        %v6823 = vrot.slane %v6745, %v6822
        %v6824 = vlaneseq
        %v6825 = vshrl.u32 %v6824, 7
        %v6826 = vsub.s32 0, %v6825
        %v6827 = vrot.slane %v6746, %v6826
        %v6828 = vlaneseq
        %v6829 = vshrl.u32 %v6828, 7
        %v6830 = vsub.s32 0, %v6829
        %v6831 = vrot.slane %v6747, %v6830
        %v6832 = vlaneseq
        %v6833 = vshrl.u32 %v6832, 7
        %v6834 = vsub.s32 0, %v6833
        %v6835 = vrot.slane %v6748, %v6834
        %v6836 = vlaneseq
        %v6837 = vshrl.u32 %v6836, 7
        %v6838 = vsub.s32 0, %v6837
        %v6839 = vrot.slane %v6749, %v6838
        %v6840 = vlaneseq
        %v6841 = vshrl.u32 %v6840, 7
        %v6842 = vsub.s32 0, %v6841
        %v6843 = vrot.slane %v6750, %v6842
        %v6844 = vlaneseq
        %v6845 = vshrl.u32 %v6844, 7
        %v6846 = vsub.s32 0, %v6845
        %v6847 = vrot.slane %v6751, %v6846
        %v6848 = vlaneseq
        %v6849 = vshrl.u32 %v6848, 7
        %v6850 = vsub.s32 0, %v6849
        %v6851 = vrot.slane %v6752, %v6850
        %v6852 = vlaneseq
        %v6853 = vshrl.u32 %v6852, 7
        %v6854 = vsub.s32 0, %v6853
        %v6855 = vrot.slane %v6753, %v6854
        %v6856 = vlaneseq
        %v6857 = vshrl.u32 %v6856, 7
        %v6858 = vsub.s32 0, %v6857
        %v6859 = vrot.slane %v6754, %v6858
        %v6860 = vlaneseq
        %v6861 = vshrl.u32 %v6860, 7
        %v6862 = vsub.s32 0, %v6861
        %v6863 = vrot.slane %v6755, %v6862
        %v6864 = vlaneseq
        %v6865 = vshrl.u32 %v6864, 7
        %v6866 = vsub.s32 0, %v6865
        %v6867 = vrot.slane %v6756, %v6866
        %v6868 = vlaneseq
        %v6869 = vshrl.u32 %v6868, 7
        %v6870 = vsub.s32 0, %v6869
        %v6871 = vrot.slane %v6757, %v6870
        %v6872 = vlaneseq
        %v6873 = vshrl.u32 %v6872, 7
        %v6874 = vsub.s32 0, %v6873
        %v6875 = vrot.slane %v6758, %v6874
        %v6876 = vlaneseq
        %v6877 = vshrl.u32 %v6876, 7
        %v6878 = vsub.s32 0, %v6877
        %v6879 = vrot.slane %v6759, %v6878
        %6880 = vset.pattern.permute.xlu0 0
        %6881 = vperm.xlu0 %6880, %v6787
        %v6882 = vpop.permute.xlu0 %6881
        %6884 = vset.pattern.permute.xlu0 0
        %6885 = vperm.xlu0 %6884, %v6791
        %v6886 = vpop.permute.xlu0 %6885
        %6888 = vset.pattern.permute.xlu0 0
        %6889 = vperm.xlu0 %6888, %v6795
        %v6890 = vpop.permute.xlu0 %6889
        %6892 = vset.pattern.permute.xlu0 0
        %6893 = vperm.xlu0 %6892, %v6799
        %v6894 = vpop.permute.xlu0 %6893
        %6896 = vset.pattern.permute.xlu0 0
        %6897 = vperm.xlu0 %6896, %v6803
        %v6898 = vpop.permute.xlu0 %6897
        %6900 = vset.pattern.permute.xlu0 0
        %6901 = vperm.xlu0 %6900, %v6807
        %v6902 = vpop.permute.xlu0 %6901
        %6904 = vset.pattern.permute.xlu0 0
        %6905 = vperm.xlu0 %6904, %v6811
        %v6906 = vpop.permute.xlu0 %6905
        %6908 = vset.pattern.permute.xlu0 0
        %6909 = vperm.xlu0 %6908, %v6815
        %v6910 = vpop.permute.xlu0 %6909
        %6912 = vset.pattern.permute.xlu0 0
        %6913 = vperm.xlu0 %6912, %v6819
        %v6914 = vpop.permute.xlu0 %6913
        %6916 = vset.pattern.permute.xlu0 0
        %6917 = vperm.xlu0 %6916, %v6823
        %v6918 = vpop.permute.xlu0 %6917
        %6920 = vset.pattern.permute.xlu0 0
        %6921 = vperm.xlu0 %6920, %v6827
        %v6922 = vpop.permute.xlu0 %6921
        %6924 = vset.pattern.permute.xlu0 0
        %6925 = vperm.xlu0 %6924, %v6831
        %v6926 = vpop.permute.xlu0 %6925
        %6928 = vset.pattern.permute.xlu0 0
        %6929 = vperm.xlu0 %6928, %v6835
        %v6930 = vpop.permute.xlu0 %6929
        %6932 = vset.pattern.permute.xlu0 0
        %6933 = vperm.xlu0 %6932, %v6839
        %v6934 = vpop.permute.xlu0 %6933
        %6936 = vset.pattern.permute.xlu0 0
        %6937 = vperm.xlu0 %6936, %v6843
        %v6938 = vpop.permute.xlu0 %6937
        %6940 = vset.pattern.permute.xlu0 0
        %6941 = vperm.xlu0 %6940, %v6847
        %v6942 = vpop.permute.xlu0 %6941
        %6944 = vset.pattern.permute.xlu0 0
        %6945 = vperm.xlu0 %6944, %v6851
        %v6946 = vpop.permute.xlu0 %6945
        %6948 = vset.pattern.permute.xlu0 0
        %6949 = vperm.xlu0 %6948, %v6855
        %v6950 = vpop.permute.xlu0 %6949
        %6952 = vset.pattern.permute.xlu0 0
        %6953 = vperm.xlu0 %6952, %v6859
        %v6954 = vpop.permute.xlu0 %6953
        %6956 = vset.pattern.permute.xlu0 0
        %6957 = vperm.xlu0 %6956, %v6863
        %v6958 = vpop.permute.xlu0 %6957
        %6960 = vset.pattern.permute.xlu0 0
        %6961 = vperm.xlu0 %6960, %v6867
        %v6962 = vpop.permute.xlu0 %6961
        %6964 = vset.pattern.permute.xlu0 0
        %6965 = vperm.xlu0 %6964, %v6871
        %v6966 = vpop.permute.xlu0 %6965
        %6968 = vset.pattern.permute.xlu0 0
        %6969 = vperm.xlu0 %6968, %v6875
        %v6970 = vpop.permute.xlu0 %6969
        %6972 = vset.pattern.permute.xlu0 0
        %6973 = vperm.xlu0 %6972, %v6879
        %v6974 = vpop.permute.xlu0 %6973
        %v6976 = vmul.f32 %v6882, %v5171
        %v6977 = vmul.f32 %v6882, %v5172
        %v6978 = vmul.f32 %v6886, %v5173
        %v6979 = vmul.f32 %v6886, %v5174
        %v6980 = vmul.f32 %v6890, %v5175
        %v6981 = vmul.f32 %v6890, %v5176
        %v6982 = vmul.f32 %v6894, %v5177
        %v6983 = vmul.f32 %v6894, %v5178
        %v6984 = vmul.f32 %v6898, %v5179
        %v6985 = vmul.f32 %v6898, %v5180
        %v6986 = vmul.f32 %v6902, %v5181
        %v6987 = vmul.f32 %v6902, %v5182
        %v6988 = vmul.f32 %v6906, %v5183
        %v6989 = vmul.f32 %v6906, %v5184
        %v6990 = vmul.f32 %v6910, %v5185
        %v6991 = vmul.f32 %v6910, %v5186
        %v6992 = vmul.f32 %v6914, %v5187
        %v6993 = vmul.f32 %v6914, %v5188
        %v6994 = vmul.f32 %v6918, %v5189
        %v6995 = vmul.f32 %v6918, %v5190
        %v6996 = vmul.f32 %v6922, %v5191
        %v6997 = vmul.f32 %v6922, %v5192
        %v6998 = vmul.f32 %v6926, %v5193
        %v6999 = vmul.f32 %v6926, %v5194
        %v7000 = vmul.f32 %v6930, %v5195
        %v7001 = vmul.f32 %v6930, %v5196
        %v7002 = vmul.f32 %v6934, %v5197
        %v7003 = vmul.f32 %v6934, %v5198
        %v7004 = vmul.f32 %v6938, %v5199
        %v7005 = vmul.f32 %v6938, %v5200
        %v7006 = vmul.f32 %v6942, %v5201
        %v7007 = vmul.f32 %v6942, %v5202
        %v7008 = vmul.f32 %v6946, %v5203
        %v7009 = vmul.f32 %v6946, %v5204
        %v7010 = vmul.f32 %v6950, %v5205
        %v7011 = vmul.f32 %v6950, %v5206
        %v7012 = vmul.f32 %v6954, %v5207
        %v7013 = vmul.f32 %v6954, %v5208
        %v7014 = vmul.f32 %v6958, %v5209
        %v7015 = vmul.f32 %v6958, %v5210
        %v7016 = vmul.f32 %v6962, %v5211
        %v7017 = vmul.f32 %v6962, %v5212
        %v7018 = vmul.f32 %v6966, %v5213
        %v7019 = vmul.f32 %v6966, %v5214
        %v7020 = vmul.f32 %v6970, %v5215
        %v7021 = vmul.f32 %v6970, %v5216
        %v7022 = vmul.f32 %v6974, %v5217
        %v7023 = vmul.f32 %v6974, %v5218
        %v7072 = vrot.slane %v6976, 1
        %v7073 = vrot.slane %v6977, 1
        %v7074 = vsel %vm6614, %v7072, %v7073
        %v7075 = vrot.slane %v6978, 1
        %v7076 = vrot.slane %v6979, 1
        %v7077 = vsel %vm6614, %v7075, %v7076
        %v7078 = vrot.slane %v6980, 1
        %v7079 = vrot.slane %v6981, 1
        %v7080 = vsel %vm6614, %v7078, %v7079
        %v7081 = vrot.slane %v6982, 1
        %v7082 = vrot.slane %v6983, 1
        %v7083 = vsel %vm6614, %v7081, %v7082
        %v7084 = vrot.slane %v6984, 1
        %v7085 = vrot.slane %v6985, 1
        %v7086 = vsel %vm6614, %v7084, %v7085
        %v7087 = vrot.slane %v6986, 1
        %v7088 = vrot.slane %v6987, 1
        %v7089 = vsel %vm6614, %v7087, %v7088
        %v7090 = vrot.slane %v6988, 1
        %v7091 = vrot.slane %v6989, 1
        %v7092 = vsel %vm6614, %v7090, %v7091
        %v7093 = vrot.slane %v6990, 1
        %v7094 = vrot.slane %v6991, 1
        %v7095 = vsel %vm6614, %v7093, %v7094
        %v7096 = vrot.slane %v6992, 1
        %v7097 = vrot.slane %v6993, 1
        %v7098 = vsel %vm6614, %v7096, %v7097
        %v7099 = vrot.slane %v6994, 1
        %v7100 = vrot.slane %v6995, 1
        %v7101 = vsel %vm6614, %v7099, %v7100
        %v7102 = vrot.slane %v6996, 1
        %v7103 = vrot.slane %v6997, 1
        %v7104 = vsel %vm6614, %v7102, %v7103
        %v7105 = vrot.slane %v6998, 1
        %v7106 = vrot.slane %v6999, 1
        %v7107 = vsel %vm6614, %v7105, %v7106
        %v7108 = vrot.slane %v7000, 1
        %v7109 = vrot.slane %v7001, 1
        %v7110 = vsel %vm6614, %v7108, %v7109
        %v7111 = vrot.slane %v7002, 1
        %v7112 = vrot.slane %v7003, 1
        %v7113 = vsel %vm6614, %v7111, %v7112
        %v7114 = vrot.slane %v7004, 1
        %v7115 = vrot.slane %v7005, 1
        %v7116 = vsel %vm6614, %v7114, %v7115
        %v7117 = vrot.slane %v7006, 1
        %v7118 = vrot.slane %v7007, 1
        %v7119 = vsel %vm6614, %v7117, %v7118
        %v7120 = vrot.slane %v7008, 1
        %v7121 = vrot.slane %v7009, 1
        %v7122 = vsel %vm6614, %v7120, %v7121
        %v7123 = vrot.slane %v7010, 1
        %v7124 = vrot.slane %v7011, 1
        %v7125 = vsel %vm6614, %v7123, %v7124
        %v7126 = vrot.slane %v7012, 1
        %v7127 = vrot.slane %v7013, 1
        %v7128 = vsel %vm6614, %v7126, %v7127
        %v7129 = vrot.slane %v7014, 1
        %v7130 = vrot.slane %v7015, 1
        %v7131 = vsel %vm6614, %v7129, %v7130
        %v7132 = vrot.slane %v7016, 1
        %v7133 = vrot.slane %v7017, 1
        %v7134 = vsel %vm6614, %v7132, %v7133
        %v7135 = vrot.slane %v7018, 1
        %v7136 = vrot.slane %v7019, 1
        %v7137 = vsel %vm6614, %v7135, %v7136
        %v7138 = vrot.slane %v7020, 1
        %v7139 = vrot.slane %v7021, 1
        %v7140 = vsel %vm6614, %v7138, %v7139
        %v7141 = vrot.slane %v7022, 1
        %v7142 = vrot.slane %v7023, 1
        %v7143 = vsel %vm6614, %v7141, %v7142
        %7144 = vrot.lane.b32.xlu0 %v7074, 127
        %v7145 = vpop.permute.xlu0 %7144
        %7146 = vrot.lane.b32.xlu0 %v7077, 127
        %v7147 = vpop.permute.xlu0 %7146
        %7148 = vrot.lane.b32.xlu0 %v7080, 127
        %v7149 = vpop.permute.xlu0 %7148
        %7150 = vrot.lane.b32.xlu0 %v7083, 127
        %v7151 = vpop.permute.xlu0 %7150
        %7152 = vrot.lane.b32.xlu0 %v7086, 127
        %v7153 = vpop.permute.xlu0 %7152
        %7154 = vrot.lane.b32.xlu0 %v7089, 127
        %v7155 = vpop.permute.xlu0 %7154
        %7156 = vrot.lane.b32.xlu0 %v7092, 127
        %v7157 = vpop.permute.xlu0 %7156
        %7158 = vrot.lane.b32.xlu0 %v7095, 127
        %v7159 = vpop.permute.xlu0 %7158
        %7160 = vrot.lane.b32.xlu0 %v7098, 127
        %v7161 = vpop.permute.xlu0 %7160
        %7162 = vrot.lane.b32.xlu0 %v7101, 127
        %v7163 = vpop.permute.xlu0 %7162
        %7164 = vrot.lane.b32.xlu0 %v7104, 127
        %v7165 = vpop.permute.xlu0 %7164
        %7166 = vrot.lane.b32.xlu0 %v7107, 127
        %v7167 = vpop.permute.xlu0 %7166
        %7168 = vrot.lane.b32.xlu0 %v7110, 127
        %v7169 = vpop.permute.xlu0 %7168
        %7170 = vrot.lane.b32.xlu0 %v7113, 127
        %v7171 = vpop.permute.xlu0 %7170
        %7172 = vrot.lane.b32.xlu0 %v7116, 127
        %v7173 = vpop.permute.xlu0 %7172
        %7174 = vrot.lane.b32.xlu0 %v7119, 127
        %v7175 = vpop.permute.xlu0 %7174
        %7176 = vrot.lane.b32.xlu0 %v7122, 127
        %v7177 = vpop.permute.xlu0 %7176
        %7178 = vrot.lane.b32.xlu0 %v7125, 127
        %v7179 = vpop.permute.xlu0 %7178
        %7180 = vrot.lane.b32.xlu0 %v7128, 127
        %v7181 = vpop.permute.xlu0 %7180
        %7182 = vrot.lane.b32.xlu0 %v7131, 127
        %v7183 = vpop.permute.xlu0 %7182
        %7184 = vrot.lane.b32.xlu0 %v7134, 127
        %v7185 = vpop.permute.xlu0 %7184
        %7186 = vrot.lane.b32.xlu0 %v7137, 127
        %v7187 = vpop.permute.xlu0 %7186
        %7188 = vrot.lane.b32.xlu0 %v7140, 127
        %v7189 = vpop.permute.xlu0 %7188
        %7190 = vrot.lane.b32.xlu0 %v7143, 127
        %v7191 = vpop.permute.xlu0 %7190
        %v7216 = vadd.f32 %v6711, %v7145
        %v7217 = vadd.f32 %v6712, %v7147
        %v7218 = vadd.f32 %v6713, %v7149
        %v7219 = vadd.f32 %v6714, %v7151
        %v7220 = vadd.f32 %v6715, %v7153
        %v7221 = vadd.f32 %v6716, %v7155
        %v7222 = vadd.f32 %v6717, %v7157
        %v7223 = vadd.f32 %v6718, %v7159
        %v7224 = vadd.f32 %v6719, %v7161
        %v7225 = vadd.f32 %v6720, %v7163
        %v7226 = vadd.f32 %v6721, %v7165
        %v7227 = vadd.f32 %v6722, %v7167
        %v7228 = vadd.f32 %v6723, %v7169
        %v7229 = vadd.f32 %v6724, %v7171
        %v7230 = vadd.f32 %v6725, %v7173
        %v7231 = vadd.f32 %v6726, %v7175
        %v7232 = vadd.f32 %v6727, %v7177
        %v7233 = vadd.f32 %v6728, %v7179
        %v7234 = vadd.f32 %v6729, %v7181
        %v7235 = vadd.f32 %v6730, %v7183
        %v7236 = vadd.f32 %v6731, %v7185
        %v7237 = vadd.f32 %v6732, %v7187
        %v7238 = vadd.f32 %v6733, %v7189
        %v7239 = vadd.f32 %v6734, %v7191
        %s7240 = scalar_lea.vmem %s3, 120
        %v7241 = vld [vmem:[%s7240] sm:$0x1]
        %v7242 = vld [vmem:[%s7240 + $0x1] sm:$0x1]
        %v7243 = vld [vmem:[%s7240 + $0x2] sm:$0x1]
        %v7244 = vld [vmem:[%s7240 + $0x3] sm:$0x1]
        %v7245 = vld [vmem:[%s7240 + $0x4] sm:$0x1]
        %v7246 = vld [vmem:[%s7240 + $0x5] sm:$0x1]
        %v7247 = vld [vmem:[%s7240 + $0x6] sm:$0x1]
        %v7248 = vld [vmem:[%s7240 + $0x7] sm:$0x1]
        %v7249 = vld [vmem:[%s7240 + $0x8] sm:$0x1]
        %v7250 = vld [vmem:[%s7240 + $0x9] sm:$0x1]
        %v7251 = vld [vmem:[%s7240 + $0xa] sm:$0x1]
        %v7252 = vld [vmem:[%s7240 + $0xb] sm:$0x1]
        %v7253 = vld [vmem:[%s7240 + $0xc] sm:$0x1]
        %v7254 = vld [vmem:[%s7240 + $0xd] sm:$0x1]
        %v7255 = vld [vmem:[%s7240 + $0xe] sm:$0x1]
        %v7256 = vld [vmem:[%s7240 + $0xf] sm:$0x1]
        %v7257 = vld [vmem:[%s7240 + $0x10] sm:$0x1]
        %v7258 = vld [vmem:[%s7240 + $0x11] sm:$0x1]
        %v7259 = vld [vmem:[%s7240 + $0x12] sm:$0x1]
        %v7260 = vld [vmem:[%s7240 + $0x13] sm:$0x1]
        %v7261 = vld [vmem:[%s7240 + $0x14] sm:$0x1]
        %v7262 = vld [vmem:[%s7240 + $0x15] sm:$0x1]
        %v7263 = vld [vmem:[%s7240 + $0x16] sm:$0x1]
        %v7264 = vld [vmem:[%s7240 + $0x17] sm:$0x1]
        %v7289 = vlaneseq
        %v7290 = vshrl.u32 %v7289, 7
        %v7291 = vsub.s32 0, %v7290
        %v7292 = vrot.slane %v7241, %v7291
        %v7293 = vlaneseq
        %v7294 = vshrl.u32 %v7293, 7
        %v7295 = vsub.s32 0, %v7294
        %v7296 = vrot.slane %v7242, %v7295
        %v7297 = vlaneseq
        %v7298 = vshrl.u32 %v7297, 7
        %v7299 = vsub.s32 0, %v7298
        %v7300 = vrot.slane %v7243, %v7299
        %v7301 = vlaneseq
        %v7302 = vshrl.u32 %v7301, 7
        %v7303 = vsub.s32 0, %v7302
        %v7304 = vrot.slane %v7244, %v7303
        %v7305 = vlaneseq
        %v7306 = vshrl.u32 %v7305, 7
        %v7307 = vsub.s32 0, %v7306
        %v7308 = vrot.slane %v7245, %v7307
        %v7309 = vlaneseq
        %v7310 = vshrl.u32 %v7309, 7
        %v7311 = vsub.s32 0, %v7310
        %v7312 = vrot.slane %v7246, %v7311
        %v7313 = vlaneseq
        %v7314 = vshrl.u32 %v7313, 7
        %v7315 = vsub.s32 0, %v7314
        %v7316 = vrot.slane %v7247, %v7315
        %v7317 = vlaneseq
        %v7318 = vshrl.u32 %v7317, 7
        %v7319 = vsub.s32 0, %v7318
        %v7320 = vrot.slane %v7248, %v7319
        %v7321 = vlaneseq
        %v7322 = vshrl.u32 %v7321, 7
        %v7323 = vsub.s32 0, %v7322
        %v7324 = vrot.slane %v7249, %v7323
        %v7325 = vlaneseq
        %v7326 = vshrl.u32 %v7325, 7
        %v7327 = vsub.s32 0, %v7326
        %v7328 = vrot.slane %v7250, %v7327
        %v7329 = vlaneseq
        %v7330 = vshrl.u32 %v7329, 7
        %v7331 = vsub.s32 0, %v7330
        %v7332 = vrot.slane %v7251, %v7331
        %v7333 = vlaneseq
        %v7334 = vshrl.u32 %v7333, 7
        %v7335 = vsub.s32 0, %v7334
        %v7336 = vrot.slane %v7252, %v7335
        %v7337 = vlaneseq
        %v7338 = vshrl.u32 %v7337, 7
        %v7339 = vsub.s32 0, %v7338
        %v7340 = vrot.slane %v7253, %v7339
        %v7341 = vlaneseq
        %v7342 = vshrl.u32 %v7341, 7
        %v7343 = vsub.s32 0, %v7342
        %v7344 = vrot.slane %v7254, %v7343
        %v7345 = vlaneseq
        %v7346 = vshrl.u32 %v7345, 7
        %v7347 = vsub.s32 0, %v7346
        %v7348 = vrot.slane %v7255, %v7347
        %v7349 = vlaneseq
        %v7350 = vshrl.u32 %v7349, 7
        %v7351 = vsub.s32 0, %v7350
        %v7352 = vrot.slane %v7256, %v7351
        %v7353 = vlaneseq
        %v7354 = vshrl.u32 %v7353, 7
        %v7355 = vsub.s32 0, %v7354
        %v7356 = vrot.slane %v7257, %v7355
        %v7357 = vlaneseq
        %v7358 = vshrl.u32 %v7357, 7
        %v7359 = vsub.s32 0, %v7358
        %v7360 = vrot.slane %v7258, %v7359
        %v7361 = vlaneseq
        %v7362 = vshrl.u32 %v7361, 7
        %v7363 = vsub.s32 0, %v7362
        %v7364 = vrot.slane %v7259, %v7363
        %v7365 = vlaneseq
        %v7366 = vshrl.u32 %v7365, 7
        %v7367 = vsub.s32 0, %v7366
        %v7368 = vrot.slane %v7260, %v7367
        %v7369 = vlaneseq
        %v7370 = vshrl.u32 %v7369, 7
        %v7371 = vsub.s32 0, %v7370
        %v7372 = vrot.slane %v7261, %v7371
        %v7373 = vlaneseq
        %v7374 = vshrl.u32 %v7373, 7
        %v7375 = vsub.s32 0, %v7374
        %v7376 = vrot.slane %v7262, %v7375
        %v7377 = vlaneseq
        %v7378 = vshrl.u32 %v7377, 7
        %v7379 = vsub.s32 0, %v7378
        %v7380 = vrot.slane %v7263, %v7379
        %v7381 = vlaneseq
        %v7382 = vshrl.u32 %v7381, 7
        %v7383 = vsub.s32 0, %v7382
        %v7384 = vrot.slane %v7264, %v7383
        %7385 = vset.pattern.permute.xlu0 0
        %7386 = vperm.xlu0 %7385, %v7292
        %v7387 = vpop.permute.xlu0 %7386
        %7389 = vset.pattern.permute.xlu0 0
        %7390 = vperm.xlu0 %7389, %v7296
        %v7391 = vpop.permute.xlu0 %7390
        %7393 = vset.pattern.permute.xlu0 0
        %7394 = vperm.xlu0 %7393, %v7300
        %v7395 = vpop.permute.xlu0 %7394
        %7397 = vset.pattern.permute.xlu0 0
        %7398 = vperm.xlu0 %7397, %v7304
        %v7399 = vpop.permute.xlu0 %7398
        %7401 = vset.pattern.permute.xlu0 0
        %7402 = vperm.xlu0 %7401, %v7308
        %v7403 = vpop.permute.xlu0 %7402
        %7405 = vset.pattern.permute.xlu0 0
        %7406 = vperm.xlu0 %7405, %v7312
        %v7407 = vpop.permute.xlu0 %7406
        %7409 = vset.pattern.permute.xlu0 0
        %7410 = vperm.xlu0 %7409, %v7316
        %v7411 = vpop.permute.xlu0 %7410
        %7413 = vset.pattern.permute.xlu0 0
        %7414 = vperm.xlu0 %7413, %v7320
        %v7415 = vpop.permute.xlu0 %7414
        %7417 = vset.pattern.permute.xlu0 0
        %7418 = vperm.xlu0 %7417, %v7324
        %v7419 = vpop.permute.xlu0 %7418
        %7421 = vset.pattern.permute.xlu0 0
        %7422 = vperm.xlu0 %7421, %v7328
        %v7423 = vpop.permute.xlu0 %7422
        %7425 = vset.pattern.permute.xlu0 0
        %7426 = vperm.xlu0 %7425, %v7332
        %v7427 = vpop.permute.xlu0 %7426
        %7429 = vset.pattern.permute.xlu0 0
        %7430 = vperm.xlu0 %7429, %v7336
        %v7431 = vpop.permute.xlu0 %7430
        %7433 = vset.pattern.permute.xlu0 0
        %7434 = vperm.xlu0 %7433, %v7340
        %v7435 = vpop.permute.xlu0 %7434
        %7437 = vset.pattern.permute.xlu0 0
        %7438 = vperm.xlu0 %7437, %v7344
        %v7439 = vpop.permute.xlu0 %7438
        %7441 = vset.pattern.permute.xlu0 0
        %7442 = vperm.xlu0 %7441, %v7348
        %v7443 = vpop.permute.xlu0 %7442
        %7445 = vset.pattern.permute.xlu0 0
        %7446 = vperm.xlu0 %7445, %v7352
        %v7447 = vpop.permute.xlu0 %7446
        %7449 = vset.pattern.permute.xlu0 0
        %7450 = vperm.xlu0 %7449, %v7356
        %v7451 = vpop.permute.xlu0 %7450
        %7453 = vset.pattern.permute.xlu0 0
        %7454 = vperm.xlu0 %7453, %v7360
        %v7455 = vpop.permute.xlu0 %7454
        %7457 = vset.pattern.permute.xlu0 0
        %7458 = vperm.xlu0 %7457, %v7364
        %v7459 = vpop.permute.xlu0 %7458
        %7461 = vset.pattern.permute.xlu0 0
        %7462 = vperm.xlu0 %7461, %v7368
        %v7463 = vpop.permute.xlu0 %7462
        %7465 = vset.pattern.permute.xlu0 0
        %7466 = vperm.xlu0 %7465, %v7372
        %v7467 = vpop.permute.xlu0 %7466
        %7469 = vset.pattern.permute.xlu0 0
        %7470 = vperm.xlu0 %7469, %v7376
        %v7471 = vpop.permute.xlu0 %7470
        %7473 = vset.pattern.permute.xlu0 0
        %7474 = vperm.xlu0 %7473, %v7380
        %v7475 = vpop.permute.xlu0 %7474
        %7477 = vset.pattern.permute.xlu0 0
        %7478 = vperm.xlu0 %7477, %v7384
        %v7479 = vpop.permute.xlu0 %7478
        %v7481 = vmul.f32 %v7387, %v5171
        %v7482 = vmul.f32 %v7387, %v5172
        %v7483 = vmul.f32 %v7391, %v5173
        %v7484 = vmul.f32 %v7391, %v5174
        %v7485 = vmul.f32 %v7395, %v5175
        %v7486 = vmul.f32 %v7395, %v5176
        %v7487 = vmul.f32 %v7399, %v5177
        %v7488 = vmul.f32 %v7399, %v5178
        %v7489 = vmul.f32 %v7403, %v5179
        %v7490 = vmul.f32 %v7403, %v5180
        %v7491 = vmul.f32 %v7407, %v5181
        %v7492 = vmul.f32 %v7407, %v5182
        %v7493 = vmul.f32 %v7411, %v5183
        %v7494 = vmul.f32 %v7411, %v5184
        %v7495 = vmul.f32 %v7415, %v5185
        %v7496 = vmul.f32 %v7415, %v5186
        %v7497 = vmul.f32 %v7419, %v5187
        %v7498 = vmul.f32 %v7419, %v5188
        %v7499 = vmul.f32 %v7423, %v5189
        %v7500 = vmul.f32 %v7423, %v5190
        %v7501 = vmul.f32 %v7427, %v5191
        %v7502 = vmul.f32 %v7427, %v5192
        %v7503 = vmul.f32 %v7431, %v5193
        %v7504 = vmul.f32 %v7431, %v5194
        %v7505 = vmul.f32 %v7435, %v5195
        %v7506 = vmul.f32 %v7435, %v5196
        %v7507 = vmul.f32 %v7439, %v5197
        %v7508 = vmul.f32 %v7439, %v5198
        %v7509 = vmul.f32 %v7443, %v5199
        %v7510 = vmul.f32 %v7443, %v5200
        %v7511 = vmul.f32 %v7447, %v5201
        %v7512 = vmul.f32 %v7447, %v5202
        %v7513 = vmul.f32 %v7451, %v5203
        %v7514 = vmul.f32 %v7451, %v5204
        %v7515 = vmul.f32 %v7455, %v5205
        %v7516 = vmul.f32 %v7455, %v5206
        %v7517 = vmul.f32 %v7459, %v5207
        %v7518 = vmul.f32 %v7459, %v5208
        %v7519 = vmul.f32 %v7463, %v5209
        %v7520 = vmul.f32 %v7463, %v5210
        %v7521 = vmul.f32 %v7467, %v5211
        %v7522 = vmul.f32 %v7467, %v5212
        %v7523 = vmul.f32 %v7471, %v5213
        %v7524 = vmul.f32 %v7471, %v5214
        %v7525 = vmul.f32 %v7475, %v5215
        %v7526 = vmul.f32 %v7475, %v5216
        %v7527 = vmul.f32 %v7479, %v5217
        %v7528 = vmul.f32 %v7479, %v5218
        %v7577 = vrot.slane %v7481, 1
        %v7578 = vrot.slane %v7482, 1
        %v7579 = vsel %vm6614, %v7577, %v7578
        %v7580 = vrot.slane %v7483, 1
        %v7581 = vrot.slane %v7484, 1
        %v7582 = vsel %vm6614, %v7580, %v7581
        %v7583 = vrot.slane %v7485, 1
        %v7584 = vrot.slane %v7486, 1
        %v7585 = vsel %vm6614, %v7583, %v7584
        %v7586 = vrot.slane %v7487, 1
        %v7587 = vrot.slane %v7488, 1
        %v7588 = vsel %vm6614, %v7586, %v7587
        %v7589 = vrot.slane %v7489, 1
        %v7590 = vrot.slane %v7490, 1
        %v7591 = vsel %vm6614, %v7589, %v7590
        %v7592 = vrot.slane %v7491, 1
        %v7593 = vrot.slane %v7492, 1
        %v7594 = vsel %vm6614, %v7592, %v7593
        %v7595 = vrot.slane %v7493, 1
        %v7596 = vrot.slane %v7494, 1
        %v7597 = vsel %vm6614, %v7595, %v7596
        %v7598 = vrot.slane %v7495, 1
        %v7599 = vrot.slane %v7496, 1
        %v7600 = vsel %vm6614, %v7598, %v7599
        %v7601 = vrot.slane %v7497, 1
        %v7602 = vrot.slane %v7498, 1
        %v7603 = vsel %vm6614, %v7601, %v7602
        %v7604 = vrot.slane %v7499, 1
        %v7605 = vrot.slane %v7500, 1
        %v7606 = vsel %vm6614, %v7604, %v7605
        %v7607 = vrot.slane %v7501, 1
        %v7608 = vrot.slane %v7502, 1
        %v7609 = vsel %vm6614, %v7607, %v7608
        %v7610 = vrot.slane %v7503, 1
        %v7611 = vrot.slane %v7504, 1
        %v7612 = vsel %vm6614, %v7610, %v7611
        %v7613 = vrot.slane %v7505, 1
        %v7614 = vrot.slane %v7506, 1
        %v7615 = vsel %vm6614, %v7613, %v7614
        %v7616 = vrot.slane %v7507, 1
        %v7617 = vrot.slane %v7508, 1
        %v7618 = vsel %vm6614, %v7616, %v7617
        %v7619 = vrot.slane %v7509, 1
        %v7620 = vrot.slane %v7510, 1
        %v7621 = vsel %vm6614, %v7619, %v7620
        %v7622 = vrot.slane %v7511, 1
        %v7623 = vrot.slane %v7512, 1
        %v7624 = vsel %vm6614, %v7622, %v7623
        %v7625 = vrot.slane %v7513, 1
        %v7626 = vrot.slane %v7514, 1
        %v7627 = vsel %vm6614, %v7625, %v7626
        %v7628 = vrot.slane %v7515, 1
        %v7629 = vrot.slane %v7516, 1
        %v7630 = vsel %vm6614, %v7628, %v7629
        %v7631 = vrot.slane %v7517, 1
        %v7632 = vrot.slane %v7518, 1
        %v7633 = vsel %vm6614, %v7631, %v7632
        %v7634 = vrot.slane %v7519, 1
        %v7635 = vrot.slane %v7520, 1
        %v7636 = vsel %vm6614, %v7634, %v7635
        %v7637 = vrot.slane %v7521, 1
        %v7638 = vrot.slane %v7522, 1
        %v7639 = vsel %vm6614, %v7637, %v7638
        %v7640 = vrot.slane %v7523, 1
        %v7641 = vrot.slane %v7524, 1
        %v7642 = vsel %vm6614, %v7640, %v7641
        %v7643 = vrot.slane %v7525, 1
        %v7644 = vrot.slane %v7526, 1
        %v7645 = vsel %vm6614, %v7643, %v7644
        %v7646 = vrot.slane %v7527, 1
        %v7647 = vrot.slane %v7528, 1
        %v7648 = vsel %vm6614, %v7646, %v7647
        %7649 = vrot.lane.b32.xlu0 %v7579, 126
        %v7650 = vpop.permute.xlu0 %7649
        %7651 = vrot.lane.b32.xlu0 %v7582, 126
        %v7652 = vpop.permute.xlu0 %7651
        %7653 = vrot.lane.b32.xlu0 %v7585, 126
        %v7654 = vpop.permute.xlu0 %7653
        %7655 = vrot.lane.b32.xlu0 %v7588, 126
        %v7656 = vpop.permute.xlu0 %7655
        %7657 = vrot.lane.b32.xlu0 %v7591, 126
        %v7658 = vpop.permute.xlu0 %7657
        %7659 = vrot.lane.b32.xlu0 %v7594, 126
        %v7660 = vpop.permute.xlu0 %7659
        %7661 = vrot.lane.b32.xlu0 %v7597, 126
        %v7662 = vpop.permute.xlu0 %7661
        %7663 = vrot.lane.b32.xlu0 %v7600, 126
        %v7664 = vpop.permute.xlu0 %7663
        %7665 = vrot.lane.b32.xlu0 %v7603, 126
        %v7666 = vpop.permute.xlu0 %7665
        %7667 = vrot.lane.b32.xlu0 %v7606, 126
        %v7668 = vpop.permute.xlu0 %7667
        %7669 = vrot.lane.b32.xlu0 %v7609, 126
        %v7670 = vpop.permute.xlu0 %7669
        %7671 = vrot.lane.b32.xlu0 %v7612, 126
        %v7672 = vpop.permute.xlu0 %7671
        %7673 = vrot.lane.b32.xlu0 %v7615, 126
        %v7674 = vpop.permute.xlu0 %7673
        %7675 = vrot.lane.b32.xlu0 %v7618, 126
        %v7676 = vpop.permute.xlu0 %7675
        %7677 = vrot.lane.b32.xlu0 %v7621, 126
        %v7678 = vpop.permute.xlu0 %7677
        %7679 = vrot.lane.b32.xlu0 %v7624, 126
        %v7680 = vpop.permute.xlu0 %7679
        %7681 = vrot.lane.b32.xlu0 %v7627, 126
        %v7682 = vpop.permute.xlu0 %7681
        %7683 = vrot.lane.b32.xlu0 %v7630, 126
        %v7684 = vpop.permute.xlu0 %7683
        %7685 = vrot.lane.b32.xlu0 %v7633, 126
        %v7686 = vpop.permute.xlu0 %7685
        %7687 = vrot.lane.b32.xlu0 %v7636, 126
        %v7688 = vpop.permute.xlu0 %7687
        %7689 = vrot.lane.b32.xlu0 %v7639, 126
        %v7690 = vpop.permute.xlu0 %7689
        %7691 = vrot.lane.b32.xlu0 %v7642, 126
        %v7692 = vpop.permute.xlu0 %7691
        %7693 = vrot.lane.b32.xlu0 %v7645, 126
        %v7694 = vpop.permute.xlu0 %7693
        %7695 = vrot.lane.b32.xlu0 %v7648, 126
        %v7696 = vpop.permute.xlu0 %7695
        %v7721 = vadd.f32 %v7216, %v7650
        %v7722 = vadd.f32 %v7217, %v7652
        %v7723 = vadd.f32 %v7218, %v7654
        %v7724 = vadd.f32 %v7219, %v7656
        %v7725 = vadd.f32 %v7220, %v7658
        %v7726 = vadd.f32 %v7221, %v7660
        %v7727 = vadd.f32 %v7222, %v7662
        %v7728 = vadd.f32 %v7223, %v7664
        %v7729 = vadd.f32 %v7224, %v7666
        %v7730 = vadd.f32 %v7225, %v7668
        %v7731 = vadd.f32 %v7226, %v7670
        %v7732 = vadd.f32 %v7227, %v7672
        %v7733 = vadd.f32 %v7228, %v7674
        %v7734 = vadd.f32 %v7229, %v7676
        %v7735 = vadd.f32 %v7230, %v7678
        %v7736 = vadd.f32 %v7231, %v7680
        %v7737 = vadd.f32 %v7232, %v7682
        %v7738 = vadd.f32 %v7233, %v7684
        %v7739 = vadd.f32 %v7234, %v7686
        %v7740 = vadd.f32 %v7235, %v7688
        %v7741 = vadd.f32 %v7236, %v7690
        %v7742 = vadd.f32 %v7237, %v7692
        %v7743 = vadd.f32 %v7238, %v7694
        %v7744 = vadd.f32 %v7239, %v7696
        %s7745 = scalar_lea.vmem %s3, 144
        %v7746 = vld [vmem:[%s7745] sm:$0x1]
        %v7747 = vld [vmem:[%s7745 + $0x1] sm:$0x1]
        %v7748 = vld [vmem:[%s7745 + $0x2] sm:$0x1]
        %v7749 = vld [vmem:[%s7745 + $0x3] sm:$0x1]
        %v7750 = vld [vmem:[%s7745 + $0x4] sm:$0x1]
        %v7751 = vld [vmem:[%s7745 + $0x5] sm:$0x1]
        %v7752 = vld [vmem:[%s7745 + $0x6] sm:$0x1]
        %v7753 = vld [vmem:[%s7745 + $0x7] sm:$0x1]
        %v7754 = vld [vmem:[%s7745 + $0x8] sm:$0x1]
        %v7755 = vld [vmem:[%s7745 + $0x9] sm:$0x1]
        %v7756 = vld [vmem:[%s7745 + $0xa] sm:$0x1]
        %v7757 = vld [vmem:[%s7745 + $0xb] sm:$0x1]
        %v7758 = vld [vmem:[%s7745 + $0xc] sm:$0x1]
        %v7759 = vld [vmem:[%s7745 + $0xd] sm:$0x1]
        %v7760 = vld [vmem:[%s7745 + $0xe] sm:$0x1]
        %v7761 = vld [vmem:[%s7745 + $0xf] sm:$0x1]
        %v7762 = vld [vmem:[%s7745 + $0x10] sm:$0x1]
        %v7763 = vld [vmem:[%s7745 + $0x11] sm:$0x1]
        %v7764 = vld [vmem:[%s7745 + $0x12] sm:$0x1]
        %v7765 = vld [vmem:[%s7745 + $0x13] sm:$0x1]
        %v7766 = vld [vmem:[%s7745 + $0x14] sm:$0x1]
        %v7767 = vld [vmem:[%s7745 + $0x15] sm:$0x1]
        %v7768 = vld [vmem:[%s7745 + $0x16] sm:$0x1]
        %v7769 = vld [vmem:[%s7745 + $0x17] sm:$0x1]
        %v7794 = vlaneseq
        %v7795 = vshrl.u32 %v7794, 7
        %v7796 = vsub.s32 0, %v7795
        %v7797 = vrot.slane %v7746, %v7796
        %v7798 = vlaneseq
        %v7799 = vshrl.u32 %v7798, 7
        %v7800 = vsub.s32 0, %v7799
        %v7801 = vrot.slane %v7747, %v7800
        %v7802 = vlaneseq
        %v7803 = vshrl.u32 %v7802, 7
        %v7804 = vsub.s32 0, %v7803
        %v7805 = vrot.slane %v7748, %v7804
        %v7806 = vlaneseq
        %v7807 = vshrl.u32 %v7806, 7
        %v7808 = vsub.s32 0, %v7807
        %v7809 = vrot.slane %v7749, %v7808
        %v7810 = vlaneseq
        %v7811 = vshrl.u32 %v7810, 7
        %v7812 = vsub.s32 0, %v7811
        %v7813 = vrot.slane %v7750, %v7812
        %v7814 = vlaneseq
        %v7815 = vshrl.u32 %v7814, 7
        %v7816 = vsub.s32 0, %v7815
        %v7817 = vrot.slane %v7751, %v7816
        %v7818 = vlaneseq
        %v7819 = vshrl.u32 %v7818, 7
        %v7820 = vsub.s32 0, %v7819
        %v7821 = vrot.slane %v7752, %v7820
        %v7822 = vlaneseq
        %v7823 = vshrl.u32 %v7822, 7
        %v7824 = vsub.s32 0, %v7823
        %v7825 = vrot.slane %v7753, %v7824
        %v7826 = vlaneseq
        %v7827 = vshrl.u32 %v7826, 7
        %v7828 = vsub.s32 0, %v7827
        %v7829 = vrot.slane %v7754, %v7828
        %v7830 = vlaneseq
        %v7831 = vshrl.u32 %v7830, 7
        %v7832 = vsub.s32 0, %v7831
        %v7833 = vrot.slane %v7755, %v7832
        %v7834 = vlaneseq
        %v7835 = vshrl.u32 %v7834, 7
        %v7836 = vsub.s32 0, %v7835
        %v7837 = vrot.slane %v7756, %v7836
        %v7838 = vlaneseq
        %v7839 = vshrl.u32 %v7838, 7
        %v7840 = vsub.s32 0, %v7839
        %v7841 = vrot.slane %v7757, %v7840
        %v7842 = vlaneseq
        %v7843 = vshrl.u32 %v7842, 7
        %v7844 = vsub.s32 0, %v7843
        %v7845 = vrot.slane %v7758, %v7844
        %v7846 = vlaneseq
        %v7847 = vshrl.u32 %v7846, 7
        %v7848 = vsub.s32 0, %v7847
        %v7849 = vrot.slane %v7759, %v7848
        %v7850 = vlaneseq
        %v7851 = vshrl.u32 %v7850, 7
        %v7852 = vsub.s32 0, %v7851
        %v7853 = vrot.slane %v7760, %v7852
        %v7854 = vlaneseq
        %v7855 = vshrl.u32 %v7854, 7
        %v7856 = vsub.s32 0, %v7855
        %v7857 = vrot.slane %v7761, %v7856
        %v7858 = vlaneseq
        %v7859 = vshrl.u32 %v7858, 7
        %v7860 = vsub.s32 0, %v7859
        %v7861 = vrot.slane %v7762, %v7860
        %v7862 = vlaneseq
        %v7863 = vshrl.u32 %v7862, 7
        %v7864 = vsub.s32 0, %v7863
        %v7865 = vrot.slane %v7763, %v7864
        %v7866 = vlaneseq
        %v7867 = vshrl.u32 %v7866, 7
        %v7868 = vsub.s32 0, %v7867
        %v7869 = vrot.slane %v7764, %v7868
        %v7870 = vlaneseq
        %v7871 = vshrl.u32 %v7870, 7
        %v7872 = vsub.s32 0, %v7871
        %v7873 = vrot.slane %v7765, %v7872
        %v7874 = vlaneseq
        %v7875 = vshrl.u32 %v7874, 7
        %v7876 = vsub.s32 0, %v7875
        %v7877 = vrot.slane %v7766, %v7876
        %v7878 = vlaneseq
        %v7879 = vshrl.u32 %v7878, 7
        %v7880 = vsub.s32 0, %v7879
        %v7881 = vrot.slane %v7767, %v7880
        %v7882 = vlaneseq
        %v7883 = vshrl.u32 %v7882, 7
        %v7884 = vsub.s32 0, %v7883
        %v7885 = vrot.slane %v7768, %v7884
        %v7886 = vlaneseq
        %v7887 = vshrl.u32 %v7886, 7
        %v7888 = vsub.s32 0, %v7887
        %v7889 = vrot.slane %v7769, %v7888
        %7890 = vset.pattern.permute.xlu0 0
        %7891 = vperm.xlu0 %7890, %v7797
        %v7892 = vpop.permute.xlu0 %7891
        %7894 = vset.pattern.permute.xlu0 0
        %7895 = vperm.xlu0 %7894, %v7801
        %v7896 = vpop.permute.xlu0 %7895
        %7898 = vset.pattern.permute.xlu0 0
        %7899 = vperm.xlu0 %7898, %v7805
        %v7900 = vpop.permute.xlu0 %7899
        %7902 = vset.pattern.permute.xlu0 0
        %7903 = vperm.xlu0 %7902, %v7809
        %v7904 = vpop.permute.xlu0 %7903
        %7906 = vset.pattern.permute.xlu0 0
        %7907 = vperm.xlu0 %7906, %v7813
        %v7908 = vpop.permute.xlu0 %7907
        %7910 = vset.pattern.permute.xlu0 0
        %7911 = vperm.xlu0 %7910, %v7817
        %v7912 = vpop.permute.xlu0 %7911
        %7914 = vset.pattern.permute.xlu0 0
        %7915 = vperm.xlu0 %7914, %v7821
        %v7916 = vpop.permute.xlu0 %7915
        %7918 = vset.pattern.permute.xlu0 0
        %7919 = vperm.xlu0 %7918, %v7825
        %v7920 = vpop.permute.xlu0 %7919
        %7922 = vset.pattern.permute.xlu0 0
        %7923 = vperm.xlu0 %7922, %v7829
        %v7924 = vpop.permute.xlu0 %7923
        %7926 = vset.pattern.permute.xlu0 0
        %7927 = vperm.xlu0 %7926, %v7833
        %v7928 = vpop.permute.xlu0 %7927
        %7930 = vset.pattern.permute.xlu0 0
        %7931 = vperm.xlu0 %7930, %v7837
        %v7932 = vpop.permute.xlu0 %7931
        %7934 = vset.pattern.permute.xlu0 0
        %7935 = vperm.xlu0 %7934, %v7841
        %v7936 = vpop.permute.xlu0 %7935
        %7938 = vset.pattern.permute.xlu0 0
        %7939 = vperm.xlu0 %7938, %v7845
        %v7940 = vpop.permute.xlu0 %7939
        %7942 = vset.pattern.permute.xlu0 0
        %7943 = vperm.xlu0 %7942, %v7849
        %v7944 = vpop.permute.xlu0 %7943
        %7946 = vset.pattern.permute.xlu0 0
        %7947 = vperm.xlu0 %7946, %v7853
        %v7948 = vpop.permute.xlu0 %7947
        %7950 = vset.pattern.permute.xlu0 0
        %7951 = vperm.xlu0 %7950, %v7857
        %v7952 = vpop.permute.xlu0 %7951
        %7954 = vset.pattern.permute.xlu0 0
        %7955 = vperm.xlu0 %7954, %v7861
        %v7956 = vpop.permute.xlu0 %7955
        %7958 = vset.pattern.permute.xlu0 0
        %7959 = vperm.xlu0 %7958, %v7865
        %v7960 = vpop.permute.xlu0 %7959
        %7962 = vset.pattern.permute.xlu0 0
        %7963 = vperm.xlu0 %7962, %v7869
        %v7964 = vpop.permute.xlu0 %7963
        %7966 = vset.pattern.permute.xlu0 0
        %7967 = vperm.xlu0 %7966, %v7873
        %v7968 = vpop.permute.xlu0 %7967
        %7970 = vset.pattern.permute.xlu0 0
        %7971 = vperm.xlu0 %7970, %v7877
        %v7972 = vpop.permute.xlu0 %7971
        %7974 = vset.pattern.permute.xlu0 0
        %7975 = vperm.xlu0 %7974, %v7881
        %v7976 = vpop.permute.xlu0 %7975
        %7978 = vset.pattern.permute.xlu0 0
        %7979 = vperm.xlu0 %7978, %v7885
        %v7980 = vpop.permute.xlu0 %7979
        %7982 = vset.pattern.permute.xlu0 0
        %7983 = vperm.xlu0 %7982, %v7889
        %v7984 = vpop.permute.xlu0 %7983
        %v7986 = vmul.f32 %v7892, %v5171
        %v7987 = vmul.f32 %v7892, %v5172
        %v7988 = vmul.f32 %v7896, %v5173
        %v7989 = vmul.f32 %v7896, %v5174
        %v7990 = vmul.f32 %v7900, %v5175
        %v7991 = vmul.f32 %v7900, %v5176
        %v7992 = vmul.f32 %v7904, %v5177
        %v7993 = vmul.f32 %v7904, %v5178
        %v7994 = vmul.f32 %v7908, %v5179
        %v7995 = vmul.f32 %v7908, %v5180
        %v7996 = vmul.f32 %v7912, %v5181
        %v7997 = vmul.f32 %v7912, %v5182
        %v7998 = vmul.f32 %v7916, %v5183
        %v7999 = vmul.f32 %v7916, %v5184
        %v8000 = vmul.f32 %v7920, %v5185
        %v8001 = vmul.f32 %v7920, %v5186
        %v8002 = vmul.f32 %v7924, %v5187
        %v8003 = vmul.f32 %v7924, %v5188
        %v8004 = vmul.f32 %v7928, %v5189
        %v8005 = vmul.f32 %v7928, %v5190
        %v8006 = vmul.f32 %v7932, %v5191
        %v8007 = vmul.f32 %v7932, %v5192
        %v8008 = vmul.f32 %v7936, %v5193
        %v8009 = vmul.f32 %v7936, %v5194
        %v8010 = vmul.f32 %v7940, %v5195
        %v8011 = vmul.f32 %v7940, %v5196
        %v8012 = vmul.f32 %v7944, %v5197
        %v8013 = vmul.f32 %v7944, %v5198
        %v8014 = vmul.f32 %v7948, %v5199
        %v8015 = vmul.f32 %v7948, %v5200
        %v8016 = vmul.f32 %v7952, %v5201
        %v8017 = vmul.f32 %v7952, %v5202
        %v8018 = vmul.f32 %v7956, %v5203
        %v8019 = vmul.f32 %v7956, %v5204
        %v8020 = vmul.f32 %v7960, %v5205
        %v8021 = vmul.f32 %v7960, %v5206
        %v8022 = vmul.f32 %v7964, %v5207
        %v8023 = vmul.f32 %v7964, %v5208
        %v8024 = vmul.f32 %v7968, %v5209
        %v8025 = vmul.f32 %v7968, %v5210
        %v8026 = vmul.f32 %v7972, %v5211
        %v8027 = vmul.f32 %v7972, %v5212
        %v8028 = vmul.f32 %v7976, %v5213
        %v8029 = vmul.f32 %v7976, %v5214
        %v8030 = vmul.f32 %v7980, %v5215
        %v8031 = vmul.f32 %v7980, %v5216
        %v8032 = vmul.f32 %v7984, %v5217
        %v8033 = vmul.f32 %v7984, %v5218
        %vm8082 = vcmask 1045504
        %v8083 = vrot.slane %v7986, 2
        %v8084 = vrot.slane %v7987, 2
        %v8085 = vsel %vm8082, %v8083, %v8084
        %v8086 = vrot.slane %v7988, 2
        %v8087 = vrot.slane %v7989, 2
        %v8088 = vsel %vm8082, %v8086, %v8087
        %v8089 = vrot.slane %v7990, 2
        %v8090 = vrot.slane %v7991, 2
        %v8091 = vsel %vm8082, %v8089, %v8090
        %v8092 = vrot.slane %v7992, 2
        %v8093 = vrot.slane %v7993, 2
        %v8094 = vsel %vm8082, %v8092, %v8093
        %v8095 = vrot.slane %v7994, 2
        %v8096 = vrot.slane %v7995, 2
        %v8097 = vsel %vm8082, %v8095, %v8096
        %v8098 = vrot.slane %v7996, 2
        %v8099 = vrot.slane %v7997, 2
        %v8100 = vsel %vm8082, %v8098, %v8099
        %v8101 = vrot.slane %v7998, 2
        %v8102 = vrot.slane %v7999, 2
        %v8103 = vsel %vm8082, %v8101, %v8102
        %v8104 = vrot.slane %v8000, 2
        %v8105 = vrot.slane %v8001, 2
        %v8106 = vsel %vm8082, %v8104, %v8105
        %v8107 = vrot.slane %v8002, 2
        %v8108 = vrot.slane %v8003, 2
        %v8109 = vsel %vm8082, %v8107, %v8108
        %v8110 = vrot.slane %v8004, 2
        %v8111 = vrot.slane %v8005, 2
        %v8112 = vsel %vm8082, %v8110, %v8111
        %v8113 = vrot.slane %v8006, 2
        %v8114 = vrot.slane %v8007, 2
        %v8115 = vsel %vm8082, %v8113, %v8114
        %v8116 = vrot.slane %v8008, 2
        %v8117 = vrot.slane %v8009, 2
        %v8118 = vsel %vm8082, %v8116, %v8117
        %v8119 = vrot.slane %v8010, 2
        %v8120 = vrot.slane %v8011, 2
        %v8121 = vsel %vm8082, %v8119, %v8120
        %v8122 = vrot.slane %v8012, 2
        %v8123 = vrot.slane %v8013, 2
        %v8124 = vsel %vm8082, %v8122, %v8123
        %v8125 = vrot.slane %v8014, 2
        %v8126 = vrot.slane %v8015, 2
        %v8127 = vsel %vm8082, %v8125, %v8126
        %v8128 = vrot.slane %v8016, 2
        %v8129 = vrot.slane %v8017, 2
        %v8130 = vsel %vm8082, %v8128, %v8129
        %v8131 = vrot.slane %v8018, 2
        %v8132 = vrot.slane %v8019, 2
        %v8133 = vsel %vm8082, %v8131, %v8132
        %v8134 = vrot.slane %v8020, 2
        %v8135 = vrot.slane %v8021, 2
        %v8136 = vsel %vm8082, %v8134, %v8135
        %v8137 = vrot.slane %v8022, 2
        %v8138 = vrot.slane %v8023, 2
        %v8139 = vsel %vm8082, %v8137, %v8138
        %v8140 = vrot.slane %v8024, 2
        %v8141 = vrot.slane %v8025, 2
        %v8142 = vsel %vm8082, %v8140, %v8141
        %v8143 = vrot.slane %v8026, 2
        %v8144 = vrot.slane %v8027, 2
        %v8145 = vsel %vm8082, %v8143, %v8144
        %v8146 = vrot.slane %v8028, 2
        %v8147 = vrot.slane %v8029, 2
        %v8148 = vsel %vm8082, %v8146, %v8147
        %v8149 = vrot.slane %v8030, 2
        %v8150 = vrot.slane %v8031, 2
        %v8151 = vsel %vm8082, %v8149, %v8150
        %v8152 = vrot.slane %v8032, 2
        %v8153 = vrot.slane %v8033, 2
        %v8154 = vsel %vm8082, %v8152, %v8153
        %v8179 = vadd.f32 %v7721, %v8085
        %v8180 = vadd.f32 %v7722, %v8088
        %v8181 = vadd.f32 %v7723, %v8091
        %v8182 = vadd.f32 %v7724, %v8094
        %v8183 = vadd.f32 %v7725, %v8097
        %v8184 = vadd.f32 %v7726, %v8100
        %v8185 = vadd.f32 %v7727, %v8103
        %v8186 = vadd.f32 %v7728, %v8106
        %v8187 = vadd.f32 %v7729, %v8109
        %v8188 = vadd.f32 %v7730, %v8112
        %v8189 = vadd.f32 %v7731, %v8115
        %v8190 = vadd.f32 %v7732, %v8118
        %v8191 = vadd.f32 %v7733, %v8121
        %v8192 = vadd.f32 %v7734, %v8124
        %v8193 = vadd.f32 %v7735, %v8127
        %v8194 = vadd.f32 %v7736, %v8130
        %v8195 = vadd.f32 %v7737, %v8133
        %v8196 = vadd.f32 %v7738, %v8136
        %v8197 = vadd.f32 %v7739, %v8139
        %v8198 = vadd.f32 %v7740, %v8142
        %v8199 = vadd.f32 %v7741, %v8145
        %v8200 = vadd.f32 %v7742, %v8148
        %v8201 = vadd.f32 %v7743, %v8151
        %v8202 = vadd.f32 %v7744, %v8154
        %s8203 = scalar_lea.vmem %s3, 168
        %v8204 = vld [vmem:[%s8203] sm:$0x1]
        %v8205 = vld [vmem:[%s8203 + $0x1] sm:$0x1]
        %v8206 = vld [vmem:[%s8203 + $0x2] sm:$0x1]
        %v8207 = vld [vmem:[%s8203 + $0x3] sm:$0x1]
        %v8208 = vld [vmem:[%s8203 + $0x4] sm:$0x1]
        %v8209 = vld [vmem:[%s8203 + $0x5] sm:$0x1]
        %v8210 = vld [vmem:[%s8203 + $0x6] sm:$0x1]
        %v8211 = vld [vmem:[%s8203 + $0x7] sm:$0x1]
        %v8212 = vld [vmem:[%s8203 + $0x8] sm:$0x1]
        %v8213 = vld [vmem:[%s8203 + $0x9] sm:$0x1]
        %v8214 = vld [vmem:[%s8203 + $0xa] sm:$0x1]
        %v8215 = vld [vmem:[%s8203 + $0xb] sm:$0x1]
        %v8216 = vld [vmem:[%s8203 + $0xc] sm:$0x1]
        %v8217 = vld [vmem:[%s8203 + $0xd] sm:$0x1]
        %v8218 = vld [vmem:[%s8203 + $0xe] sm:$0x1]
        %v8219 = vld [vmem:[%s8203 + $0xf] sm:$0x1]
        %v8220 = vld [vmem:[%s8203 + $0x10] sm:$0x1]
        %v8221 = vld [vmem:[%s8203 + $0x11] sm:$0x1]
        %v8222 = vld [vmem:[%s8203 + $0x12] sm:$0x1]
        %v8223 = vld [vmem:[%s8203 + $0x13] sm:$0x1]
        %v8224 = vld [vmem:[%s8203 + $0x14] sm:$0x1]
        %v8225 = vld [vmem:[%s8203 + $0x15] sm:$0x1]
        %v8226 = vld [vmem:[%s8203 + $0x16] sm:$0x1]
        %v8227 = vld [vmem:[%s8203 + $0x17] sm:$0x1]
        %v8252 = vlaneseq
        %v8253 = vshrl.u32 %v8252, 7
        %v8254 = vsub.s32 0, %v8253
        %v8255 = vrot.slane %v8204, %v8254
        %v8256 = vlaneseq
        %v8257 = vshrl.u32 %v8256, 7
        %v8258 = vsub.s32 0, %v8257
        %v8259 = vrot.slane %v8205, %v8258
        %v8260 = vlaneseq
        %v8261 = vshrl.u32 %v8260, 7
        %v8262 = vsub.s32 0, %v8261
        %v8263 = vrot.slane %v8206, %v8262
        %v8264 = vlaneseq
        %v8265 = vshrl.u32 %v8264, 7
        %v8266 = vsub.s32 0, %v8265
        %v8267 = vrot.slane %v8207, %v8266
        %v8268 = vlaneseq
        %v8269 = vshrl.u32 %v8268, 7
        %v8270 = vsub.s32 0, %v8269
        %v8271 = vrot.slane %v8208, %v8270
        %v8272 = vlaneseq
        %v8273 = vshrl.u32 %v8272, 7
        %v8274 = vsub.s32 0, %v8273
        %v8275 = vrot.slane %v8209, %v8274
        %v8276 = vlaneseq
        %v8277 = vshrl.u32 %v8276, 7
        %v8278 = vsub.s32 0, %v8277
        %v8279 = vrot.slane %v8210, %v8278
        %v8280 = vlaneseq
        %v8281 = vshrl.u32 %v8280, 7
        %v8282 = vsub.s32 0, %v8281
        %v8283 = vrot.slane %v8211, %v8282
        %v8284 = vlaneseq
        %v8285 = vshrl.u32 %v8284, 7
        %v8286 = vsub.s32 0, %v8285
        %v8287 = vrot.slane %v8212, %v8286
        %v8288 = vlaneseq
        %v8289 = vshrl.u32 %v8288, 7
        %v8290 = vsub.s32 0, %v8289
        %v8291 = vrot.slane %v8213, %v8290
        %v8292 = vlaneseq
        %v8293 = vshrl.u32 %v8292, 7
        %v8294 = vsub.s32 0, %v8293
        %v8295 = vrot.slane %v8214, %v8294
        %v8296 = vlaneseq
        %v8297 = vshrl.u32 %v8296, 7
        %v8298 = vsub.s32 0, %v8297
        %v8299 = vrot.slane %v8215, %v8298
        %v8300 = vlaneseq
        %v8301 = vshrl.u32 %v8300, 7
        %v8302 = vsub.s32 0, %v8301
        %v8303 = vrot.slane %v8216, %v8302
        %v8304 = vlaneseq
        %v8305 = vshrl.u32 %v8304, 7
        %v8306 = vsub.s32 0, %v8305
        %v8307 = vrot.slane %v8217, %v8306
        %v8308 = vlaneseq
        %v8309 = vshrl.u32 %v8308, 7
        %v8310 = vsub.s32 0, %v8309
        %v8311 = vrot.slane %v8218, %v8310
        %v8312 = vlaneseq
        %v8313 = vshrl.u32 %v8312, 7
        %v8314 = vsub.s32 0, %v8313
        %v8315 = vrot.slane %v8219, %v8314
        %v8316 = vlaneseq
        %v8317 = vshrl.u32 %v8316, 7
        %v8318 = vsub.s32 0, %v8317
        %v8319 = vrot.slane %v8220, %v8318
        %v8320 = vlaneseq
        %v8321 = vshrl.u32 %v8320, 7
        %v8322 = vsub.s32 0, %v8321
        %v8323 = vrot.slane %v8221, %v8322
        %v8324 = vlaneseq
        %v8325 = vshrl.u32 %v8324, 7
        %v8326 = vsub.s32 0, %v8325
        %v8327 = vrot.slane %v8222, %v8326
        %v8328 = vlaneseq
        %v8329 = vshrl.u32 %v8328, 7
        %v8330 = vsub.s32 0, %v8329
        %v8331 = vrot.slane %v8223, %v8330
        %v8332 = vlaneseq
        %v8333 = vshrl.u32 %v8332, 7
        %v8334 = vsub.s32 0, %v8333
        %v8335 = vrot.slane %v8224, %v8334
        %v8336 = vlaneseq
        %v8337 = vshrl.u32 %v8336, 7
        %v8338 = vsub.s32 0, %v8337
        %v8339 = vrot.slane %v8225, %v8338
        %v8340 = vlaneseq
        %v8341 = vshrl.u32 %v8340, 7
        %v8342 = vsub.s32 0, %v8341
        %v8343 = vrot.slane %v8226, %v8342
        %v8344 = vlaneseq
        %v8345 = vshrl.u32 %v8344, 7
        %v8346 = vsub.s32 0, %v8345
        %v8347 = vrot.slane %v8227, %v8346
        %8348 = vset.pattern.permute.xlu0 0
        %8349 = vperm.xlu0 %8348, %v8255
        %v8350 = vpop.permute.xlu0 %8349
        %8352 = vset.pattern.permute.xlu0 0
        %8353 = vperm.xlu0 %8352, %v8259
        %v8354 = vpop.permute.xlu0 %8353
        %8356 = vset.pattern.permute.xlu0 0
        %8357 = vperm.xlu0 %8356, %v8263
        %v8358 = vpop.permute.xlu0 %8357
        %8360 = vset.pattern.permute.xlu0 0
        %8361 = vperm.xlu0 %8360, %v8267
        %v8362 = vpop.permute.xlu0 %8361
        %8364 = vset.pattern.permute.xlu0 0
        %8365 = vperm.xlu0 %8364, %v8271
        %v8366 = vpop.permute.xlu0 %8365
        %8368 = vset.pattern.permute.xlu0 0
        %8369 = vperm.xlu0 %8368, %v8275
        %v8370 = vpop.permute.xlu0 %8369
        %8372 = vset.pattern.permute.xlu0 0
        %8373 = vperm.xlu0 %8372, %v8279
        %v8374 = vpop.permute.xlu0 %8373
        %8376 = vset.pattern.permute.xlu0 0
        %8377 = vperm.xlu0 %8376, %v8283
        %v8378 = vpop.permute.xlu0 %8377
        %8380 = vset.pattern.permute.xlu0 0
        %8381 = vperm.xlu0 %8380, %v8287
        %v8382 = vpop.permute.xlu0 %8381
        %8384 = vset.pattern.permute.xlu0 0
        %8385 = vperm.xlu0 %8384, %v8291
        %v8386 = vpop.permute.xlu0 %8385
        %8388 = vset.pattern.permute.xlu0 0
        %8389 = vperm.xlu0 %8388, %v8295
        %v8390 = vpop.permute.xlu0 %8389
        %8392 = vset.pattern.permute.xlu0 0
        %8393 = vperm.xlu0 %8392, %v8299
        %v8394 = vpop.permute.xlu0 %8393
        %8396 = vset.pattern.permute.xlu0 0
        %8397 = vperm.xlu0 %8396, %v8303
        %v8398 = vpop.permute.xlu0 %8397
        %8400 = vset.pattern.permute.xlu0 0
        %8401 = vperm.xlu0 %8400, %v8307
        %v8402 = vpop.permute.xlu0 %8401
        %8404 = vset.pattern.permute.xlu0 0
        %8405 = vperm.xlu0 %8404, %v8311
        %v8406 = vpop.permute.xlu0 %8405
        %8408 = vset.pattern.permute.xlu0 0
        %8409 = vperm.xlu0 %8408, %v8315
        %v8410 = vpop.permute.xlu0 %8409
        %8412 = vset.pattern.permute.xlu0 0
        %8413 = vperm.xlu0 %8412, %v8319
        %v8414 = vpop.permute.xlu0 %8413
        %8416 = vset.pattern.permute.xlu0 0
        %8417 = vperm.xlu0 %8416, %v8323
        %v8418 = vpop.permute.xlu0 %8417
        %8420 = vset.pattern.permute.xlu0 0
        %8421 = vperm.xlu0 %8420, %v8327
        %v8422 = vpop.permute.xlu0 %8421
        %8424 = vset.pattern.permute.xlu0 0
        %8425 = vperm.xlu0 %8424, %v8331
        %v8426 = vpop.permute.xlu0 %8425
        %8428 = vset.pattern.permute.xlu0 0
        %8429 = vperm.xlu0 %8428, %v8335
        %v8430 = vpop.permute.xlu0 %8429
        %8432 = vset.pattern.permute.xlu0 0
        %8433 = vperm.xlu0 %8432, %v8339
        %v8434 = vpop.permute.xlu0 %8433
        %8436 = vset.pattern.permute.xlu0 0
        %8437 = vperm.xlu0 %8436, %v8343
        %v8438 = vpop.permute.xlu0 %8437
        %8440 = vset.pattern.permute.xlu0 0
        %8441 = vperm.xlu0 %8440, %v8347
        %v8442 = vpop.permute.xlu0 %8441
        %v8444 = vmul.f32 %v8350, %v5171
        %v8445 = vmul.f32 %v8350, %v5172
        %v8446 = vmul.f32 %v8354, %v5173
        %v8447 = vmul.f32 %v8354, %v5174
        %v8448 = vmul.f32 %v8358, %v5175
        %v8449 = vmul.f32 %v8358, %v5176
        %v8450 = vmul.f32 %v8362, %v5177
        %v8451 = vmul.f32 %v8362, %v5178
        %v8452 = vmul.f32 %v8366, %v5179
        %v8453 = vmul.f32 %v8366, %v5180
        %v8454 = vmul.f32 %v8370, %v5181
        %v8455 = vmul.f32 %v8370, %v5182
        %v8456 = vmul.f32 %v8374, %v5183
        %v8457 = vmul.f32 %v8374, %v5184
        %v8458 = vmul.f32 %v8378, %v5185
        %v8459 = vmul.f32 %v8378, %v5186
        %v8460 = vmul.f32 %v8382, %v5187
        %v8461 = vmul.f32 %v8382, %v5188
        %v8462 = vmul.f32 %v8386, %v5189
        %v8463 = vmul.f32 %v8386, %v5190
        %v8464 = vmul.f32 %v8390, %v5191
        %v8465 = vmul.f32 %v8390, %v5192
        %v8466 = vmul.f32 %v8394, %v5193
        %v8467 = vmul.f32 %v8394, %v5194
        %v8468 = vmul.f32 %v8398, %v5195
        %v8469 = vmul.f32 %v8398, %v5196
        %v8470 = vmul.f32 %v8402, %v5197
        %v8471 = vmul.f32 %v8402, %v5198
        %v8472 = vmul.f32 %v8406, %v5199
        %v8473 = vmul.f32 %v8406, %v5200
        %v8474 = vmul.f32 %v8410, %v5201
        %v8475 = vmul.f32 %v8410, %v5202
        %v8476 = vmul.f32 %v8414, %v5203
        %v8477 = vmul.f32 %v8414, %v5204
        %v8478 = vmul.f32 %v8418, %v5205
        %v8479 = vmul.f32 %v8418, %v5206
        %v8480 = vmul.f32 %v8422, %v5207
        %v8481 = vmul.f32 %v8422, %v5208
        %v8482 = vmul.f32 %v8426, %v5209
        %v8483 = vmul.f32 %v8426, %v5210
        %v8484 = vmul.f32 %v8430, %v5211
        %v8485 = vmul.f32 %v8430, %v5212
        %v8486 = vmul.f32 %v8434, %v5213
        %v8487 = vmul.f32 %v8434, %v5214
        %v8488 = vmul.f32 %v8438, %v5215
        %v8489 = vmul.f32 %v8438, %v5216
        %v8490 = vmul.f32 %v8442, %v5217
        %v8491 = vmul.f32 %v8442, %v5218
        %v8540 = vrot.slane %v8444, 2
        %v8541 = vrot.slane %v8445, 2
        %v8542 = vsel %vm8082, %v8540, %v8541
        %v8543 = vrot.slane %v8446, 2
        %v8544 = vrot.slane %v8447, 2
        %v8545 = vsel %vm8082, %v8543, %v8544
        %v8546 = vrot.slane %v8448, 2
        %v8547 = vrot.slane %v8449, 2
        %v8548 = vsel %vm8082, %v8546, %v8547
        %v8549 = vrot.slane %v8450, 2
        %v8550 = vrot.slane %v8451, 2
        %v8551 = vsel %vm8082, %v8549, %v8550
        %v8552 = vrot.slane %v8452, 2
        %v8553 = vrot.slane %v8453, 2
        %v8554 = vsel %vm8082, %v8552, %v8553
        %v8555 = vrot.slane %v8454, 2
        %v8556 = vrot.slane %v8455, 2
        %v8557 = vsel %vm8082, %v8555, %v8556
        %v8558 = vrot.slane %v8456, 2
        %v8559 = vrot.slane %v8457, 2
        %v8560 = vsel %vm8082, %v8558, %v8559
        %v8561 = vrot.slane %v8458, 2
        %v8562 = vrot.slane %v8459, 2
        %v8563 = vsel %vm8082, %v8561, %v8562
        %v8564 = vrot.slane %v8460, 2
        %v8565 = vrot.slane %v8461, 2
        %v8566 = vsel %vm8082, %v8564, %v8565
        %v8567 = vrot.slane %v8462, 2
        %v8568 = vrot.slane %v8463, 2
        %v8569 = vsel %vm8082, %v8567, %v8568
        %v8570 = vrot.slane %v8464, 2
        %v8571 = vrot.slane %v8465, 2
        %v8572 = vsel %vm8082, %v8570, %v8571
        %v8573 = vrot.slane %v8466, 2
        %v8574 = vrot.slane %v8467, 2
        %v8575 = vsel %vm8082, %v8573, %v8574
        %v8576 = vrot.slane %v8468, 2
        %v8577 = vrot.slane %v8469, 2
        %v8578 = vsel %vm8082, %v8576, %v8577
        %v8579 = vrot.slane %v8470, 2
        %v8580 = vrot.slane %v8471, 2
        %v8581 = vsel %vm8082, %v8579, %v8580
        %v8582 = vrot.slane %v8472, 2
        %v8583 = vrot.slane %v8473, 2
        %v8584 = vsel %vm8082, %v8582, %v8583
        %v8585 = vrot.slane %v8474, 2
        %v8586 = vrot.slane %v8475, 2
        %v8587 = vsel %vm8082, %v8585, %v8586
        %v8588 = vrot.slane %v8476, 2
        %v8589 = vrot.slane %v8477, 2
        %v8590 = vsel %vm8082, %v8588, %v8589
        %v8591 = vrot.slane %v8478, 2
        %v8592 = vrot.slane %v8479, 2
        %v8593 = vsel %vm8082, %v8591, %v8592
        %v8594 = vrot.slane %v8480, 2
        %v8595 = vrot.slane %v8481, 2
        %v8596 = vsel %vm8082, %v8594, %v8595
        %v8597 = vrot.slane %v8482, 2
        %v8598 = vrot.slane %v8483, 2
        %v8599 = vsel %vm8082, %v8597, %v8598
        %v8600 = vrot.slane %v8484, 2
        %v8601 = vrot.slane %v8485, 2
        %v8602 = vsel %vm8082, %v8600, %v8601
        %v8603 = vrot.slane %v8486, 2
        %v8604 = vrot.slane %v8487, 2
        %v8605 = vsel %vm8082, %v8603, %v8604
        %v8606 = vrot.slane %v8488, 2
        %v8607 = vrot.slane %v8489, 2
        %v8608 = vsel %vm8082, %v8606, %v8607
        %v8609 = vrot.slane %v8490, 2
        %v8610 = vrot.slane %v8491, 2
        %v8611 = vsel %vm8082, %v8609, %v8610
        %8612 = vrot.lane.b32.xlu0 %v8542, 127
        %v8613 = vpop.permute.xlu0 %8612
        %8614 = vrot.lane.b32.xlu0 %v8545, 127
        %v8615 = vpop.permute.xlu0 %8614
        %8616 = vrot.lane.b32.xlu0 %v8548, 127
        %v8617 = vpop.permute.xlu0 %8616
        %8618 = vrot.lane.b32.xlu0 %v8551, 127
        %v8619 = vpop.permute.xlu0 %8618
        %8620 = vrot.lane.b32.xlu0 %v8554, 127
        %v8621 = vpop.permute.xlu0 %8620
        %8622 = vrot.lane.b32.xlu0 %v8557, 127
        %v8623 = vpop.permute.xlu0 %8622
        %8624 = vrot.lane.b32.xlu0 %v8560, 127
        %v8625 = vpop.permute.xlu0 %8624
        %8626 = vrot.lane.b32.xlu0 %v8563, 127
        %v8627 = vpop.permute.xlu0 %8626
        %8628 = vrot.lane.b32.xlu0 %v8566, 127
        %v8629 = vpop.permute.xlu0 %8628
        %8630 = vrot.lane.b32.xlu0 %v8569, 127
        %v8631 = vpop.permute.xlu0 %8630
        %8632 = vrot.lane.b32.xlu0 %v8572, 127
        %v8633 = vpop.permute.xlu0 %8632
        %8634 = vrot.lane.b32.xlu0 %v8575, 127
        %v8635 = vpop.permute.xlu0 %8634
        %8636 = vrot.lane.b32.xlu0 %v8578, 127
        %v8637 = vpop.permute.xlu0 %8636
        %8638 = vrot.lane.b32.xlu0 %v8581, 127
        %v8639 = vpop.permute.xlu0 %8638
        %8640 = vrot.lane.b32.xlu0 %v8584, 127
        %v8641 = vpop.permute.xlu0 %8640
        %8642 = vrot.lane.b32.xlu0 %v8587, 127
        %v8643 = vpop.permute.xlu0 %8642
        %8644 = vrot.lane.b32.xlu0 %v8590, 127
        %v8645 = vpop.permute.xlu0 %8644
        %8646 = vrot.lane.b32.xlu0 %v8593, 127
        %v8647 = vpop.permute.xlu0 %8646
        %8648 = vrot.lane.b32.xlu0 %v8596, 127
        %v8649 = vpop.permute.xlu0 %8648
        %8650 = vrot.lane.b32.xlu0 %v8599, 127
        %v8651 = vpop.permute.xlu0 %8650
        %8652 = vrot.lane.b32.xlu0 %v8602, 127
        %v8653 = vpop.permute.xlu0 %8652
        %8654 = vrot.lane.b32.xlu0 %v8605, 127
        %v8655 = vpop.permute.xlu0 %8654
        %8656 = vrot.lane.b32.xlu0 %v8608, 127
        %v8657 = vpop.permute.xlu0 %8656
        %8658 = vrot.lane.b32.xlu0 %v8611, 127
        %v8659 = vpop.permute.xlu0 %8658
        %v8684 = vadd.f32 %v8179, %v8613
        %v8685 = vadd.f32 %v8180, %v8615
        %v8686 = vadd.f32 %v8181, %v8617
        %v8687 = vadd.f32 %v8182, %v8619
        %v8688 = vadd.f32 %v8183, %v8621
        %v8689 = vadd.f32 %v8184, %v8623
        %v8690 = vadd.f32 %v8185, %v8625
        %v8691 = vadd.f32 %v8186, %v8627
        %v8692 = vadd.f32 %v8187, %v8629
        %v8693 = vadd.f32 %v8188, %v8631
        %v8694 = vadd.f32 %v8189, %v8633
        %v8695 = vadd.f32 %v8190, %v8635
        %v8696 = vadd.f32 %v8191, %v8637
        %v8697 = vadd.f32 %v8192, %v8639
        %v8698 = vadd.f32 %v8193, %v8641
        %v8699 = vadd.f32 %v8194, %v8643
        %v8700 = vadd.f32 %v8195, %v8645
        %v8701 = vadd.f32 %v8196, %v8647
        %v8702 = vadd.f32 %v8197, %v8649
        %v8703 = vadd.f32 %v8198, %v8651
        %v8704 = vadd.f32 %v8199, %v8653
        %v8705 = vadd.f32 %v8200, %v8655
        %v8706 = vadd.f32 %v8201, %v8657
        %v8707 = vadd.f32 %v8202, %v8659
        %s8708 = scalar_lea.vmem %s3, 192
        %v8709 = vld [vmem:[%s8708] sm:$0x1]
        %v8710 = vld [vmem:[%s8708 + $0x1] sm:$0x1]
        %v8711 = vld [vmem:[%s8708 + $0x2] sm:$0x1]
        %v8712 = vld [vmem:[%s8708 + $0x3] sm:$0x1]
        %v8713 = vld [vmem:[%s8708 + $0x4] sm:$0x1]
        %v8714 = vld [vmem:[%s8708 + $0x5] sm:$0x1]
        %v8715 = vld [vmem:[%s8708 + $0x6] sm:$0x1]
        %v8716 = vld [vmem:[%s8708 + $0x7] sm:$0x1]
        %v8717 = vld [vmem:[%s8708 + $0x8] sm:$0x1]
        %v8718 = vld [vmem:[%s8708 + $0x9] sm:$0x1]
        %v8719 = vld [vmem:[%s8708 + $0xa] sm:$0x1]
        %v8720 = vld [vmem:[%s8708 + $0xb] sm:$0x1]
        %v8721 = vld [vmem:[%s8708 + $0xc] sm:$0x1]
        %v8722 = vld [vmem:[%s8708 + $0xd] sm:$0x1]
        %v8723 = vld [vmem:[%s8708 + $0xe] sm:$0x1]
        %v8724 = vld [vmem:[%s8708 + $0xf] sm:$0x1]
        %v8725 = vld [vmem:[%s8708 + $0x10] sm:$0x1]
        %v8726 = vld [vmem:[%s8708 + $0x11] sm:$0x1]
        %v8727 = vld [vmem:[%s8708 + $0x12] sm:$0x1]
        %v8728 = vld [vmem:[%s8708 + $0x13] sm:$0x1]
        %v8729 = vld [vmem:[%s8708 + $0x14] sm:$0x1]
        %v8730 = vld [vmem:[%s8708 + $0x15] sm:$0x1]
        %v8731 = vld [vmem:[%s8708 + $0x16] sm:$0x1]
        %v8732 = vld [vmem:[%s8708 + $0x17] sm:$0x1]
        %v8757 = vlaneseq
        %v8758 = vshrl.u32 %v8757, 7
        %v8759 = vsub.s32 0, %v8758
        %v8760 = vrot.slane %v8709, %v8759
        %v8761 = vlaneseq
        %v8762 = vshrl.u32 %v8761, 7
        %v8763 = vsub.s32 0, %v8762
        %v8764 = vrot.slane %v8710, %v8763
        %v8765 = vlaneseq
        %v8766 = vshrl.u32 %v8765, 7
        %v8767 = vsub.s32 0, %v8766
        %v8768 = vrot.slane %v8711, %v8767
        %v8769 = vlaneseq
        %v8770 = vshrl.u32 %v8769, 7
        %v8771 = vsub.s32 0, %v8770
        %v8772 = vrot.slane %v8712, %v8771
        %v8773 = vlaneseq
        %v8774 = vshrl.u32 %v8773, 7
        %v8775 = vsub.s32 0, %v8774
        %v8776 = vrot.slane %v8713, %v8775
        %v8777 = vlaneseq
        %v8778 = vshrl.u32 %v8777, 7
        %v8779 = vsub.s32 0, %v8778
        %v8780 = vrot.slane %v8714, %v8779
        %v8781 = vlaneseq
        %v8782 = vshrl.u32 %v8781, 7
        %v8783 = vsub.s32 0, %v8782
        %v8784 = vrot.slane %v8715, %v8783
        %v8785 = vlaneseq
        %v8786 = vshrl.u32 %v8785, 7
        %v8787 = vsub.s32 0, %v8786
        %v8788 = vrot.slane %v8716, %v8787
        %v8789 = vlaneseq
        %v8790 = vshrl.u32 %v8789, 7
        %v8791 = vsub.s32 0, %v8790
        %v8792 = vrot.slane %v8717, %v8791
        %v8793 = vlaneseq
        %v8794 = vshrl.u32 %v8793, 7
        %v8795 = vsub.s32 0, %v8794
        %v8796 = vrot.slane %v8718, %v8795
        %v8797 = vlaneseq
        %v8798 = vshrl.u32 %v8797, 7
        %v8799 = vsub.s32 0, %v8798
        %v8800 = vrot.slane %v8719, %v8799
        %v8801 = vlaneseq
        %v8802 = vshrl.u32 %v8801, 7
        %v8803 = vsub.s32 0, %v8802
        %v8804 = vrot.slane %v8720, %v8803
        %v8805 = vlaneseq
        %v8806 = vshrl.u32 %v8805, 7
        %v8807 = vsub.s32 0, %v8806
        %v8808 = vrot.slane %v8721, %v8807
        %v8809 = vlaneseq
        %v8810 = vshrl.u32 %v8809, 7
        %v8811 = vsub.s32 0, %v8810
        %v8812 = vrot.slane %v8722, %v8811
        %v8813 = vlaneseq
        %v8814 = vshrl.u32 %v8813, 7
        %v8815 = vsub.s32 0, %v8814
        %v8816 = vrot.slane %v8723, %v8815
        %v8817 = vlaneseq
        %v8818 = vshrl.u32 %v8817, 7
        %v8819 = vsub.s32 0, %v8818
        %v8820 = vrot.slane %v8724, %v8819
        %v8821 = vlaneseq
        %v8822 = vshrl.u32 %v8821, 7
        %v8823 = vsub.s32 0, %v8822
        %v8824 = vrot.slane %v8725, %v8823
        %v8825 = vlaneseq
        %v8826 = vshrl.u32 %v8825, 7
        %v8827 = vsub.s32 0, %v8826
        %v8828 = vrot.slane %v8726, %v8827
        %v8829 = vlaneseq
        %v8830 = vshrl.u32 %v8829, 7
        %v8831 = vsub.s32 0, %v8830
        %v8832 = vrot.slane %v8727, %v8831
        %v8833 = vlaneseq
        %v8834 = vshrl.u32 %v8833, 7
        %v8835 = vsub.s32 0, %v8834
        %v8836 = vrot.slane %v8728, %v8835
        %v8837 = vlaneseq
        %v8838 = vshrl.u32 %v8837, 7
        %v8839 = vsub.s32 0, %v8838
        %v8840 = vrot.slane %v8729, %v8839
        %v8841 = vlaneseq
        %v8842 = vshrl.u32 %v8841, 7
        %v8843 = vsub.s32 0, %v8842
        %v8844 = vrot.slane %v8730, %v8843
        %v8845 = vlaneseq
        %v8846 = vshrl.u32 %v8845, 7
        %v8847 = vsub.s32 0, %v8846
        %v8848 = vrot.slane %v8731, %v8847
        %v8849 = vlaneseq
        %v8850 = vshrl.u32 %v8849, 7
        %v8851 = vsub.s32 0, %v8850
        %v8852 = vrot.slane %v8732, %v8851
        %8853 = vset.pattern.permute.xlu0 0
        %8854 = vperm.xlu0 %8853, %v8760
        %v8855 = vpop.permute.xlu0 %8854
        %8857 = vset.pattern.permute.xlu0 0
        %8858 = vperm.xlu0 %8857, %v8764
        %v8859 = vpop.permute.xlu0 %8858
        %8861 = vset.pattern.permute.xlu0 0
        %8862 = vperm.xlu0 %8861, %v8768
        %v8863 = vpop.permute.xlu0 %8862
        %8865 = vset.pattern.permute.xlu0 0
        %8866 = vperm.xlu0 %8865, %v8772
        %v8867 = vpop.permute.xlu0 %8866
        %8869 = vset.pattern.permute.xlu0 0
        %8870 = vperm.xlu0 %8869, %v8776
        %v8871 = vpop.permute.xlu0 %8870
        %8873 = vset.pattern.permute.xlu0 0
        %8874 = vperm.xlu0 %8873, %v8780
        %v8875 = vpop.permute.xlu0 %8874
        %8877 = vset.pattern.permute.xlu0 0
        %8878 = vperm.xlu0 %8877, %v8784
        %v8879 = vpop.permute.xlu0 %8878
        %8881 = vset.pattern.permute.xlu0 0
        %8882 = vperm.xlu0 %8881, %v8788
        %v8883 = vpop.permute.xlu0 %8882
        %8885 = vset.pattern.permute.xlu0 0
        %8886 = vperm.xlu0 %8885, %v8792
        %v8887 = vpop.permute.xlu0 %8886
        %8889 = vset.pattern.permute.xlu0 0
        %8890 = vperm.xlu0 %8889, %v8796
        %v8891 = vpop.permute.xlu0 %8890
        %8893 = vset.pattern.permute.xlu0 0
        %8894 = vperm.xlu0 %8893, %v8800
        %v8895 = vpop.permute.xlu0 %8894
        %8897 = vset.pattern.permute.xlu0 0
        %8898 = vperm.xlu0 %8897, %v8804
        %v8899 = vpop.permute.xlu0 %8898
        %8901 = vset.pattern.permute.xlu0 0
        %8902 = vperm.xlu0 %8901, %v8808
        %v8903 = vpop.permute.xlu0 %8902
        %8905 = vset.pattern.permute.xlu0 0
        %8906 = vperm.xlu0 %8905, %v8812
        %v8907 = vpop.permute.xlu0 %8906
        %8909 = vset.pattern.permute.xlu0 0
        %8910 = vperm.xlu0 %8909, %v8816
        %v8911 = vpop.permute.xlu0 %8910
        %8913 = vset.pattern.permute.xlu0 0
        %8914 = vperm.xlu0 %8913, %v8820
        %v8915 = vpop.permute.xlu0 %8914
        %8917 = vset.pattern.permute.xlu0 0
        %8918 = vperm.xlu0 %8917, %v8824
        %v8919 = vpop.permute.xlu0 %8918
        %8921 = vset.pattern.permute.xlu0 0
        %8922 = vperm.xlu0 %8921, %v8828
        %v8923 = vpop.permute.xlu0 %8922
        %8925 = vset.pattern.permute.xlu0 0
        %8926 = vperm.xlu0 %8925, %v8832
        %v8927 = vpop.permute.xlu0 %8926
        %8929 = vset.pattern.permute.xlu0 0
        %8930 = vperm.xlu0 %8929, %v8836
        %v8931 = vpop.permute.xlu0 %8930
        %8933 = vset.pattern.permute.xlu0 0
        %8934 = vperm.xlu0 %8933, %v8840
        %v8935 = vpop.permute.xlu0 %8934
        %8937 = vset.pattern.permute.xlu0 0
        %8938 = vperm.xlu0 %8937, %v8844
        %v8939 = vpop.permute.xlu0 %8938
        %8941 = vset.pattern.permute.xlu0 0
        %8942 = vperm.xlu0 %8941, %v8848
        %v8943 = vpop.permute.xlu0 %8942
        %8945 = vset.pattern.permute.xlu0 0
        %8946 = vperm.xlu0 %8945, %v8852
        %v8947 = vpop.permute.xlu0 %8946
        %v8949 = vmul.f32 %v8855, %v5171
        %v8950 = vmul.f32 %v8855, %v5172
        %v8951 = vmul.f32 %v8859, %v5173
        %v8952 = vmul.f32 %v8859, %v5174
        %v8953 = vmul.f32 %v8863, %v5175
        %v8954 = vmul.f32 %v8863, %v5176
        %v8955 = vmul.f32 %v8867, %v5177
        %v8956 = vmul.f32 %v8867, %v5178
        %v8957 = vmul.f32 %v8871, %v5179
        %v8958 = vmul.f32 %v8871, %v5180
        %v8959 = vmul.f32 %v8875, %v5181
        %v8960 = vmul.f32 %v8875, %v5182
        %v8961 = vmul.f32 %v8879, %v5183
        %v8962 = vmul.f32 %v8879, %v5184
        %v8963 = vmul.f32 %v8883, %v5185
        %v8964 = vmul.f32 %v8883, %v5186
        %v8965 = vmul.f32 %v8887, %v5187
        %v8966 = vmul.f32 %v8887, %v5188
        %v8967 = vmul.f32 %v8891, %v5189
        %v8968 = vmul.f32 %v8891, %v5190
        %v8969 = vmul.f32 %v8895, %v5191
        %v8970 = vmul.f32 %v8895, %v5192
        %v8971 = vmul.f32 %v8899, %v5193
        %v8972 = vmul.f32 %v8899, %v5194
        %v8973 = vmul.f32 %v8903, %v5195
        %v8974 = vmul.f32 %v8903, %v5196
        %v8975 = vmul.f32 %v8907, %v5197
        %v8976 = vmul.f32 %v8907, %v5198
        %v8977 = vmul.f32 %v8911, %v5199
        %v8978 = vmul.f32 %v8911, %v5200
        %v8979 = vmul.f32 %v8915, %v5201
        %v8980 = vmul.f32 %v8915, %v5202
        %v8981 = vmul.f32 %v8919, %v5203
        %v8982 = vmul.f32 %v8919, %v5204
        %v8983 = vmul.f32 %v8923, %v5205
        %v8984 = vmul.f32 %v8923, %v5206
        %v8985 = vmul.f32 %v8927, %v5207
        %v8986 = vmul.f32 %v8927, %v5208
        %v8987 = vmul.f32 %v8931, %v5209
        %v8988 = vmul.f32 %v8931, %v5210
        %v8989 = vmul.f32 %v8935, %v5211
        %v8990 = vmul.f32 %v8935, %v5212
        %v8991 = vmul.f32 %v8939, %v5213
        %v8992 = vmul.f32 %v8939, %v5214
        %v8993 = vmul.f32 %v8943, %v5215
        %v8994 = vmul.f32 %v8943, %v5216
        %v8995 = vmul.f32 %v8947, %v5217
        %v8996 = vmul.f32 %v8947, %v5218
        %v9045 = vrot.slane %v8949, 2
        %v9046 = vrot.slane %v8950, 2
        %v9047 = vsel %vm8082, %v9045, %v9046
        %v9048 = vrot.slane %v8951, 2
        %v9049 = vrot.slane %v8952, 2
        %v9050 = vsel %vm8082, %v9048, %v9049
        %v9051 = vrot.slane %v8953, 2
        %v9052 = vrot.slane %v8954, 2
        %v9053 = vsel %vm8082, %v9051, %v9052
        %v9054 = vrot.slane %v8955, 2
        %v9055 = vrot.slane %v8956, 2
        %v9056 = vsel %vm8082, %v9054, %v9055
        %v9057 = vrot.slane %v8957, 2
        %v9058 = vrot.slane %v8958, 2
        %v9059 = vsel %vm8082, %v9057, %v9058
        %v9060 = vrot.slane %v8959, 2
        %v9061 = vrot.slane %v8960, 2
        %v9062 = vsel %vm8082, %v9060, %v9061
        %v9063 = vrot.slane %v8961, 2
        %v9064 = vrot.slane %v8962, 2
        %v9065 = vsel %vm8082, %v9063, %v9064
        %v9066 = vrot.slane %v8963, 2
        %v9067 = vrot.slane %v8964, 2
        %v9068 = vsel %vm8082, %v9066, %v9067
        %v9069 = vrot.slane %v8965, 2
        %v9070 = vrot.slane %v8966, 2
        %v9071 = vsel %vm8082, %v9069, %v9070
        %v9072 = vrot.slane %v8967, 2
        %v9073 = vrot.slane %v8968, 2
        %v9074 = vsel %vm8082, %v9072, %v9073
        %v9075 = vrot.slane %v8969, 2
        %v9076 = vrot.slane %v8970, 2
        %v9077 = vsel %vm8082, %v9075, %v9076
        %v9078 = vrot.slane %v8971, 2
        %v9079 = vrot.slane %v8972, 2
        %v9080 = vsel %vm8082, %v9078, %v9079
        %v9081 = vrot.slane %v8973, 2
        %v9082 = vrot.slane %v8974, 2
        %v9083 = vsel %vm8082, %v9081, %v9082
        %v9084 = vrot.slane %v8975, 2
        %v9085 = vrot.slane %v8976, 2
        %v9086 = vsel %vm8082, %v9084, %v9085
        %v9087 = vrot.slane %v8977, 2
        %v9088 = vrot.slane %v8978, 2
        %v9089 = vsel %vm8082, %v9087, %v9088
        %v9090 = vrot.slane %v8979, 2
        %v9091 = vrot.slane %v8980, 2
        %v9092 = vsel %vm8082, %v9090, %v9091
        %v9093 = vrot.slane %v8981, 2
        %v9094 = vrot.slane %v8982, 2
        %v9095 = vsel %vm8082, %v9093, %v9094
        %v9096 = vrot.slane %v8983, 2
        %v9097 = vrot.slane %v8984, 2
        %v9098 = vsel %vm8082, %v9096, %v9097
        %v9099 = vrot.slane %v8985, 2
        %v9100 = vrot.slane %v8986, 2
        %v9101 = vsel %vm8082, %v9099, %v9100
        %v9102 = vrot.slane %v8987, 2
        %v9103 = vrot.slane %v8988, 2
        %v9104 = vsel %vm8082, %v9102, %v9103
        %v9105 = vrot.slane %v8989, 2
        %v9106 = vrot.slane %v8990, 2
        %v9107 = vsel %vm8082, %v9105, %v9106
        %v9108 = vrot.slane %v8991, 2
        %v9109 = vrot.slane %v8992, 2
        %v9110 = vsel %vm8082, %v9108, %v9109
        %v9111 = vrot.slane %v8993, 2
        %v9112 = vrot.slane %v8994, 2
        %v9113 = vsel %vm8082, %v9111, %v9112
        %v9114 = vrot.slane %v8995, 2
        %v9115 = vrot.slane %v8996, 2
        %v9116 = vsel %vm8082, %v9114, %v9115
        %9117 = vrot.lane.b32.xlu0 %v9047, 126
        %v9118 = vpop.permute.xlu0 %9117
        %9119 = vrot.lane.b32.xlu0 %v9050, 126
        %v9120 = vpop.permute.xlu0 %9119
        %9121 = vrot.lane.b32.xlu0 %v9053, 126
        %v9122 = vpop.permute.xlu0 %9121
        %9123 = vrot.lane.b32.xlu0 %v9056, 126
        %v9124 = vpop.permute.xlu0 %9123
        %9125 = vrot.lane.b32.xlu0 %v9059, 126
        %v9126 = vpop.permute.xlu0 %9125
        %9127 = vrot.lane.b32.xlu0 %v9062, 126
        %v9128 = vpop.permute.xlu0 %9127
        %9129 = vrot.lane.b32.xlu0 %v9065, 126
        %v9130 = vpop.permute.xlu0 %9129
        %9131 = vrot.lane.b32.xlu0 %v9068, 126
        %v9132 = vpop.permute.xlu0 %9131
        %9133 = vrot.lane.b32.xlu0 %v9071, 126
        %v9134 = vpop.permute.xlu0 %9133
        %9135 = vrot.lane.b32.xlu0 %v9074, 126
        %v9136 = vpop.permute.xlu0 %9135
        %9137 = vrot.lane.b32.xlu0 %v9077, 126
        %v9138 = vpop.permute.xlu0 %9137
        %9139 = vrot.lane.b32.xlu0 %v9080, 126
        %v9140 = vpop.permute.xlu0 %9139
        %9141 = vrot.lane.b32.xlu0 %v9083, 126
        %v9142 = vpop.permute.xlu0 %9141
        %9143 = vrot.lane.b32.xlu0 %v9086, 126
        %v9144 = vpop.permute.xlu0 %9143
        %9145 = vrot.lane.b32.xlu0 %v9089, 126
        %v9146 = vpop.permute.xlu0 %9145
        %9147 = vrot.lane.b32.xlu0 %v9092, 126
        %v9148 = vpop.permute.xlu0 %9147
        %9149 = vrot.lane.b32.xlu0 %v9095, 126
        %v9150 = vpop.permute.xlu0 %9149
        %9151 = vrot.lane.b32.xlu0 %v9098, 126
        %v9152 = vpop.permute.xlu0 %9151
        %9153 = vrot.lane.b32.xlu0 %v9101, 126
        %v9154 = vpop.permute.xlu0 %9153
        %9155 = vrot.lane.b32.xlu0 %v9104, 126
        %v9156 = vpop.permute.xlu0 %9155
        %9157 = vrot.lane.b32.xlu0 %v9107, 126
        %v9158 = vpop.permute.xlu0 %9157
        %9159 = vrot.lane.b32.xlu0 %v9110, 126
        %v9160 = vpop.permute.xlu0 %9159
        %9161 = vrot.lane.b32.xlu0 %v9113, 126
        %v9162 = vpop.permute.xlu0 %9161
        %9163 = vrot.lane.b32.xlu0 %v9116, 126
        %v9164 = vpop.permute.xlu0 %9163
        %v9189 = vadd.f32 %v8684, %v9118
        %v9190 = vadd.f32 %v8685, %v9120
        %v9191 = vadd.f32 %v8686, %v9122
        %v9192 = vadd.f32 %v8687, %v9124
        %v9193 = vadd.f32 %v8688, %v9126
        %v9194 = vadd.f32 %v8689, %v9128
        %v9195 = vadd.f32 %v8690, %v9130
        %v9196 = vadd.f32 %v8691, %v9132
        %v9197 = vadd.f32 %v8692, %v9134
        %v9198 = vadd.f32 %v8693, %v9136
        %v9199 = vadd.f32 %v8694, %v9138
        %v9200 = vadd.f32 %v8695, %v9140
        %v9201 = vadd.f32 %v8696, %v9142
        %v9202 = vadd.f32 %v8697, %v9144
        %v9203 = vadd.f32 %v8698, %v9146
        %v9204 = vadd.f32 %v8699, %v9148
        %v9205 = vadd.f32 %v8700, %v9150
        %v9206 = vadd.f32 %v8701, %v9152
        %v9207 = vadd.f32 %v8702, %v9154
        %v9208 = vadd.f32 %v8703, %v9156
        %v9209 = vadd.f32 %v8704, %v9158
        %v9210 = vadd.f32 %v8705, %v9160
        %v9211 = vadd.f32 %v8706, %v9162
        %v9212 = vadd.f32 %v8707, %v9164
        %v9213 = vld [vmem:[%s4] sm:$0x1]
        %v9214 = vld [vmem:[%s4 + $0x1] sm:$0x1]
        %v9215 = vld [vmem:[%s4 + $0x2] sm:$0x1]
        %v9216 = vld [vmem:[%s4 + $0x3] sm:$0x1]
        %v9217 = vld [vmem:[%s4 + $0x4] sm:$0x1]
        %v9218 = vld [vmem:[%s4 + $0x5] sm:$0x1]
        %v9219 = vld [vmem:[%s4 + $0x6] sm:$0x1]
        %v9220 = vld [vmem:[%s4 + $0x7] sm:$0x1]
        %v9221 = vld [vmem:[%s4 + $0x8] sm:$0x1]
        %v9222 = vld [vmem:[%s4 + $0x9] sm:$0x1]
        %v9223 = vld [vmem:[%s4 + $0xa] sm:$0x1]
        %v9224 = vld [vmem:[%s4 + $0xb] sm:$0x1]
        %v9225 = vld [vmem:[%s4 + $0xc] sm:$0x1]
        %v9226 = vld [vmem:[%s4 + $0xd] sm:$0x1]
        %v9227 = vld [vmem:[%s4 + $0xe] sm:$0x1]
        %v9228 = vld [vmem:[%s4 + $0xf] sm:$0x1]
        %v9229 = vld [vmem:[%s4 + $0x10] sm:$0x1]
        %v9230 = vld [vmem:[%s4 + $0x11] sm:$0x1]
        %v9231 = vld [vmem:[%s4 + $0x12] sm:$0x1]
        %v9232 = vld [vmem:[%s4 + $0x13] sm:$0x1]
        %v9233 = vld [vmem:[%s4 + $0x14] sm:$0x1]
        %v9234 = vld [vmem:[%s4 + $0x15] sm:$0x1]
        %v9235 = vld [vmem:[%s4 + $0x16] sm:$0x1]
        %v9236 = vld [vmem:[%s4 + $0x17] sm:$0x1]
        %v9261 = vlaneseq
        %v9262 = vshrl.u32 %v9261, 7
        %v9263 = vsub.s32 0, %v9262
        %v9264 = vrot.slane %v9213, %v9263
        %v9265 = vlaneseq
        %v9266 = vshrl.u32 %v9265, 7
        %v9267 = vsub.s32 0, %v9266
        %v9268 = vrot.slane %v9214, %v9267
        %v9269 = vlaneseq
        %v9270 = vshrl.u32 %v9269, 7
        %v9271 = vsub.s32 0, %v9270
        %v9272 = vrot.slane %v9215, %v9271
        %v9273 = vlaneseq
        %v9274 = vshrl.u32 %v9273, 7
        %v9275 = vsub.s32 0, %v9274
        %v9276 = vrot.slane %v9216, %v9275
        %v9277 = vlaneseq
        %v9278 = vshrl.u32 %v9277, 7
        %v9279 = vsub.s32 0, %v9278
        %v9280 = vrot.slane %v9217, %v9279
        %v9281 = vlaneseq
        %v9282 = vshrl.u32 %v9281, 7
        %v9283 = vsub.s32 0, %v9282
        %v9284 = vrot.slane %v9218, %v9283
        %v9285 = vlaneseq
        %v9286 = vshrl.u32 %v9285, 7
        %v9287 = vsub.s32 0, %v9286
        %v9288 = vrot.slane %v9219, %v9287
        %v9289 = vlaneseq
        %v9290 = vshrl.u32 %v9289, 7
        %v9291 = vsub.s32 0, %v9290
        %v9292 = vrot.slane %v9220, %v9291
        %v9293 = vlaneseq
        %v9294 = vshrl.u32 %v9293, 7
        %v9295 = vsub.s32 0, %v9294
        %v9296 = vrot.slane %v9221, %v9295
        %v9297 = vlaneseq
        %v9298 = vshrl.u32 %v9297, 7
        %v9299 = vsub.s32 0, %v9298
        %v9300 = vrot.slane %v9222, %v9299
        %v9301 = vlaneseq
        %v9302 = vshrl.u32 %v9301, 7
        %v9303 = vsub.s32 0, %v9302
        %v9304 = vrot.slane %v9223, %v9303
        %v9305 = vlaneseq
        %v9306 = vshrl.u32 %v9305, 7
        %v9307 = vsub.s32 0, %v9306
        %v9308 = vrot.slane %v9224, %v9307
        %v9309 = vlaneseq
        %v9310 = vshrl.u32 %v9309, 7
        %v9311 = vsub.s32 0, %v9310
        %v9312 = vrot.slane %v9225, %v9311
        %v9313 = vlaneseq
        %v9314 = vshrl.u32 %v9313, 7
        %v9315 = vsub.s32 0, %v9314
        %v9316 = vrot.slane %v9226, %v9315
        %v9317 = vlaneseq
        %v9318 = vshrl.u32 %v9317, 7
        %v9319 = vsub.s32 0, %v9318
        %v9320 = vrot.slane %v9227, %v9319
        %v9321 = vlaneseq
        %v9322 = vshrl.u32 %v9321, 7
        %v9323 = vsub.s32 0, %v9322
        %v9324 = vrot.slane %v9228, %v9323
        %v9325 = vlaneseq
        %v9326 = vshrl.u32 %v9325, 7
        %v9327 = vsub.s32 0, %v9326
        %v9328 = vrot.slane %v9229, %v9327
        %v9329 = vlaneseq
        %v9330 = vshrl.u32 %v9329, 7
        %v9331 = vsub.s32 0, %v9330
        %v9332 = vrot.slane %v9230, %v9331
        %v9333 = vlaneseq
        %v9334 = vshrl.u32 %v9333, 7
        %v9335 = vsub.s32 0, %v9334
        %v9336 = vrot.slane %v9231, %v9335
        %v9337 = vlaneseq
        %v9338 = vshrl.u32 %v9337, 7
        %v9339 = vsub.s32 0, %v9338
        %v9340 = vrot.slane %v9232, %v9339
        %v9341 = vlaneseq
        %v9342 = vshrl.u32 %v9341, 7
        %v9343 = vsub.s32 0, %v9342
        %v9344 = vrot.slane %v9233, %v9343
        %v9345 = vlaneseq
        %v9346 = vshrl.u32 %v9345, 7
        %v9347 = vsub.s32 0, %v9346
        %v9348 = vrot.slane %v9234, %v9347
        %v9349 = vlaneseq
        %v9350 = vshrl.u32 %v9349, 7
        %v9351 = vsub.s32 0, %v9350
        %v9352 = vrot.slane %v9235, %v9351
        %v9353 = vlaneseq
        %v9354 = vshrl.u32 %v9353, 7
        %v9355 = vsub.s32 0, %v9354
        %v9356 = vrot.slane %v9236, %v9355
        %9357 = vset.pattern.permute.xlu0 0
        %9358 = vperm.xlu0 %9357, %v9264
        %v9359 = vpop.permute.xlu0 %9358
        %9361 = vset.pattern.permute.xlu0 0
        %9362 = vperm.xlu0 %9361, %v9268
        %v9363 = vpop.permute.xlu0 %9362
        %9365 = vset.pattern.permute.xlu0 0
        %9366 = vperm.xlu0 %9365, %v9272
        %v9367 = vpop.permute.xlu0 %9366
        %9369 = vset.pattern.permute.xlu0 0
        %9370 = vperm.xlu0 %9369, %v9276
        %v9371 = vpop.permute.xlu0 %9370
        %9373 = vset.pattern.permute.xlu0 0
        %9374 = vperm.xlu0 %9373, %v9280
        %v9375 = vpop.permute.xlu0 %9374
        %9377 = vset.pattern.permute.xlu0 0
        %9378 = vperm.xlu0 %9377, %v9284
        %v9379 = vpop.permute.xlu0 %9378
        %9381 = vset.pattern.permute.xlu0 0
        %9382 = vperm.xlu0 %9381, %v9288
        %v9383 = vpop.permute.xlu0 %9382
        %9385 = vset.pattern.permute.xlu0 0
        %9386 = vperm.xlu0 %9385, %v9292
        %v9387 = vpop.permute.xlu0 %9386
        %9389 = vset.pattern.permute.xlu0 0
        %9390 = vperm.xlu0 %9389, %v9296
        %v9391 = vpop.permute.xlu0 %9390
        %9393 = vset.pattern.permute.xlu0 0
        %9394 = vperm.xlu0 %9393, %v9300
        %v9395 = vpop.permute.xlu0 %9394
        %9397 = vset.pattern.permute.xlu0 0
        %9398 = vperm.xlu0 %9397, %v9304
        %v9399 = vpop.permute.xlu0 %9398
        %9401 = vset.pattern.permute.xlu0 0
        %9402 = vperm.xlu0 %9401, %v9308
        %v9403 = vpop.permute.xlu0 %9402
        %9405 = vset.pattern.permute.xlu0 0
        %9406 = vperm.xlu0 %9405, %v9312
        %v9407 = vpop.permute.xlu0 %9406
        %9409 = vset.pattern.permute.xlu0 0
        %9410 = vperm.xlu0 %9409, %v9316
        %v9411 = vpop.permute.xlu0 %9410
        %9413 = vset.pattern.permute.xlu0 0
        %9414 = vperm.xlu0 %9413, %v9320
        %v9415 = vpop.permute.xlu0 %9414
        %9417 = vset.pattern.permute.xlu0 0
        %9418 = vperm.xlu0 %9417, %v9324
        %v9419 = vpop.permute.xlu0 %9418
        %9421 = vset.pattern.permute.xlu0 0
        %9422 = vperm.xlu0 %9421, %v9328
        %v9423 = vpop.permute.xlu0 %9422
        %9425 = vset.pattern.permute.xlu0 0
        %9426 = vperm.xlu0 %9425, %v9332
        %v9427 = vpop.permute.xlu0 %9426
        %9429 = vset.pattern.permute.xlu0 0
        %9430 = vperm.xlu0 %9429, %v9336
        %v9431 = vpop.permute.xlu0 %9430
        %9433 = vset.pattern.permute.xlu0 0
        %9434 = vperm.xlu0 %9433, %v9340
        %v9435 = vpop.permute.xlu0 %9434
        %9437 = vset.pattern.permute.xlu0 0
        %9438 = vperm.xlu0 %9437, %v9344
        %v9439 = vpop.permute.xlu0 %9438
        %9441 = vset.pattern.permute.xlu0 0
        %9442 = vperm.xlu0 %9441, %v9348
        %v9443 = vpop.permute.xlu0 %9442
        %9445 = vset.pattern.permute.xlu0 0
        %9446 = vperm.xlu0 %9445, %v9352
        %v9447 = vpop.permute.xlu0 %9446
        %9449 = vset.pattern.permute.xlu0 0
        %9450 = vperm.xlu0 %9449, %v9356
        %v9451 = vpop.permute.xlu0 %9450
        %v9453 = vadd.f32 %v9189, %v9359
        %v9454 = vadd.f32 %v9190, %v9363
        %v9455 = vadd.f32 %v9191, %v9367
        %v9456 = vadd.f32 %v9192, %v9371
        %v9457 = vadd.f32 %v9193, %v9375
        %v9458 = vadd.f32 %v9194, %v9379
        %v9459 = vadd.f32 %v9195, %v9383
        %v9460 = vadd.f32 %v9196, %v9387
        %v9461 = vadd.f32 %v9197, %v9391
        %v9462 = vadd.f32 %v9198, %v9395
        %v9463 = vadd.f32 %v9199, %v9399
        %v9464 = vadd.f32 %v9200, %v9403
        %v9465 = vadd.f32 %v9201, %v9407
        %v9466 = vadd.f32 %v9202, %v9411
        %v9467 = vadd.f32 %v9203, %v9415
        %v9468 = vadd.f32 %v9204, %v9419
        %v9469 = vadd.f32 %v9205, %v9423
        %v9470 = vadd.f32 %v9206, %v9427
        %v9471 = vadd.f32 %v9207, %v9431
        %v9472 = vadd.f32 %v9208, %v9435
        %v9473 = vadd.f32 %v9209, %v9439
        %v9474 = vadd.f32 %v9210, %v9443
        %v9475 = vadd.f32 %v9211, %v9447
        %v9476 = vadd.f32 %v9212, %v9451
        %v9477 = vmax.f32 %v9453, 0.0
        %v9478 = vmax.f32 %v9454, 0.0
        %v9479 = vmax.f32 %v9455, 0.0
        %v9480 = vmax.f32 %v9456, 0.0
        %v9481 = vmax.f32 %v9457, 0.0
        %v9482 = vmax.f32 %v9458, 0.0
        %v9483 = vmax.f32 %v9459, 0.0
        %v9484 = vmax.f32 %v9460, 0.0
        %v9485 = vmax.f32 %v9461, 0.0
        %v9486 = vmax.f32 %v9462, 0.0
        %v9487 = vmax.f32 %v9463, 0.0
        %v9488 = vmax.f32 %v9464, 0.0
        %v9489 = vmax.f32 %v9465, 0.0
        %v9490 = vmax.f32 %v9466, 0.0
        %v9491 = vmax.f32 %v9467, 0.0
        %v9492 = vmax.f32 %v9468, 0.0
        %v9493 = vmax.f32 %v9469, 0.0
        %v9494 = vmax.f32 %v9470, 0.0
        %v9495 = vmax.f32 %v9471, 0.0
        %v9496 = vmax.f32 %v9472, 0.0
        %v9497 = vmax.f32 %v9473, 0.0
        %v9498 = vmax.f32 %v9474, 0.0
        %v9499 = vmax.f32 %v9475, 0.0
        %v9500 = vmax.f32 %v9476, 0.0
        %v9501 = vmin.f32 %v9477, 6.0
        %v9502 = vmin.f32 %v9478, 6.0
        %v9503 = vmin.f32 %v9479, 6.0
        %v9504 = vmin.f32 %v9480, 6.0
        %v9505 = vmin.f32 %v9481, 6.0
        %v9506 = vmin.f32 %v9482, 6.0
        %v9507 = vmin.f32 %v9483, 6.0
        %v9508 = vmin.f32 %v9484, 6.0
        %v9509 = vmin.f32 %v9485, 6.0
        %v9510 = vmin.f32 %v9486, 6.0
        %v9511 = vmin.f32 %v9487, 6.0
        %v9512 = vmin.f32 %v9488, 6.0
        %v9513 = vmin.f32 %v9489, 6.0
        %v9514 = vmin.f32 %v9490, 6.0
        %v9515 = vmin.f32 %v9491, 6.0
        %v9516 = vmin.f32 %v9492, 6.0
        %v9517 = vmin.f32 %v9493, 6.0
        %v9518 = vmin.f32 %v9494, 6.0
        %v9519 = vmin.f32 %v9495, 6.0
        %v9520 = vmin.f32 %v9496, 6.0
        %v9521 = vmin.f32 %v9497, 6.0
        %v9522 = vmin.f32 %v9498, 6.0
        %v9523 = vmin.f32 %v9499, 6.0
        %v9524 = vmin.f32 %v9500, 6.0
        %v9525 = vld [vmem:[%s6] sm:$0x1]
        %v9526 = vld [vmem:[%s6 + $0x1] sm:$0x1]
        %v9527 = vld [vmem:[%s6 + $0x2] sm:$0x1]
        %v9528 = vld [vmem:[%s6 + $0x3] sm:$0x1]
        %v9529 = vld [vmem:[%s5] sm:$0x1]
        %v9530 = vld [vmem:[%s5 + $0x1] sm:$0x1]
        %v9531 = vld [vmem:[%s5 + $0x2] sm:$0x1]
        %v9532 = vld [vmem:[%s5 + $0x3] sm:$0x1]
        %v9537 = vlaneseq
        %v9538 = vshrl.u32 %v9537, 7
        %v9539 = vsub.s32 0, %v9538
        %v9540 = vrot.slane %v9529, %v9539
        %v9541 = vlaneseq
        %v9542 = vshrl.u32 %v9541, 7
        %v9543 = vsub.s32 0, %v9542
        %v9544 = vrot.slane %v9530, %v9543
        %v9545 = vlaneseq
        %v9546 = vshrl.u32 %v9545, 7
        %v9547 = vsub.s32 0, %v9546
        %v9548 = vrot.slane %v9531, %v9547
        %v9549 = vlaneseq
        %v9550 = vshrl.u32 %v9549, 7
        %v9551 = vsub.s32 0, %v9550
        %v9552 = vrot.slane %v9532, %v9551
        %9553 = vset.pattern.permute.xlu0 0
        %9554 = vperm.xlu0 %9553, %v9540
        %v9555 = vpop.permute.xlu0 %9554
        %9557 = vset.pattern.permute.xlu0 0
        %9558 = vperm.xlu0 %9557, %v9544
        %v9559 = vpop.permute.xlu0 %9558
        %9561 = vset.pattern.permute.xlu0 0
        %9562 = vperm.xlu0 %9561, %v9548
        %v9563 = vpop.permute.xlu0 %9562
        %9565 = vset.pattern.permute.xlu0 0
        %9566 = vperm.xlu0 %9565, %v9552
        %v9567 = vpop.permute.xlu0 %9566
        %v9569 = vmul.f32 %v9555, %v9501
        %v9570 = vmul.f32 %v9559, %v9501
        %v9571 = vmul.f32 %v9563, %v9501
        %v9572 = vmul.f32 %v9567, %v9501
        %v9577 = vlaneseq
        %v9578 = vshrl.u32 %v9577, 7
        %v9579 = vsub.s32 0, %v9578
        %v9580 = vrot.slane %v9525, %v9579
        %v9581 = vlaneseq
        %v9582 = vshrl.u32 %v9581, 7
        %v9583 = vsub.s32 0, %v9582
        %v9584 = vrot.slane %v9526, %v9583
        %v9585 = vlaneseq
        %v9586 = vshrl.u32 %v9585, 7
        %v9587 = vsub.s32 0, %v9586
        %v9588 = vrot.slane %v9527, %v9587
        %v9589 = vlaneseq
        %v9590 = vshrl.u32 %v9589, 7
        %v9591 = vsub.s32 0, %v9590
        %v9592 = vrot.slane %v9528, %v9591
        %9593 = vset.pattern.permute.xlu0 0
        %9594 = vperm.xlu0 %9593, %v9580
        %v9595 = vpop.permute.xlu0 %9594
        %9597 = vset.pattern.permute.xlu0 0
        %9598 = vperm.xlu0 %9597, %v9584
        %v9599 = vpop.permute.xlu0 %9598
        %9601 = vset.pattern.permute.xlu0 0
        %9602 = vperm.xlu0 %9601, %v9588
        %v9603 = vpop.permute.xlu0 %9602
        %9605 = vset.pattern.permute.xlu0 0
        %9606 = vperm.xlu0 %9605, %v9592
        %v9607 = vpop.permute.xlu0 %9606
        %v9609 = vadd.f32 %v9595, %v9569
        %v9610 = vadd.f32 %v9599, %v9570
        %v9611 = vadd.f32 %v9603, %v9571
        %v9612 = vadd.f32 %v9607, %v9572
        %s9613 = scalar_lea.vmem %s5, 4
        %v9614 = vld [vmem:[%s9613] sm:$0x1]
        %v9615 = vld [vmem:[%s9613 + $0x1] sm:$0x1]
        %v9616 = vld [vmem:[%s9613 + $0x2] sm:$0x1]
        %v9617 = vld [vmem:[%s9613 + $0x3] sm:$0x1]
        %v9622 = vlaneseq
        %v9623 = vshrl.u32 %v9622, 7
        %v9624 = vsub.s32 0, %v9623
        %v9625 = vrot.slane %v9614, %v9624
        %v9626 = vlaneseq
        %v9627 = vshrl.u32 %v9626, 7
        %v9628 = vsub.s32 0, %v9627
        %v9629 = vrot.slane %v9615, %v9628
        %v9630 = vlaneseq
        %v9631 = vshrl.u32 %v9630, 7
        %v9632 = vsub.s32 0, %v9631
        %v9633 = vrot.slane %v9616, %v9632
        %v9634 = vlaneseq
        %v9635 = vshrl.u32 %v9634, 7
        %v9636 = vsub.s32 0, %v9635
        %v9637 = vrot.slane %v9617, %v9636
        %9638 = vset.pattern.permute.xlu0 0
        %9639 = vperm.xlu0 %9638, %v9625
        %v9640 = vpop.permute.xlu0 %9639
        %9642 = vset.pattern.permute.xlu0 0
        %9643 = vperm.xlu0 %9642, %v9629
        %v9644 = vpop.permute.xlu0 %9643
        %9646 = vset.pattern.permute.xlu0 0
        %9647 = vperm.xlu0 %9646, %v9633
        %v9648 = vpop.permute.xlu0 %9647
        %9650 = vset.pattern.permute.xlu0 0
        %9651 = vperm.xlu0 %9650, %v9637
        %v9652 = vpop.permute.xlu0 %9651
        %v9654 = vmul.f32 %v9640, %v9502
        %v9655 = vmul.f32 %v9644, %v9502
        %v9656 = vmul.f32 %v9648, %v9502
        %v9657 = vmul.f32 %v9652, %v9502
        %v9658 = vadd.f32 %v9609, %v9654
        %v9659 = vadd.f32 %v9610, %v9655
        %v9660 = vadd.f32 %v9611, %v9656
        %v9661 = vadd.f32 %v9612, %v9657
        %s9662 = scalar_lea.vmem %s5, 8
        %v9663 = vld [vmem:[%s9662] sm:$0x1]
        %v9664 = vld [vmem:[%s9662 + $0x1] sm:$0x1]
        %v9665 = vld [vmem:[%s9662 + $0x2] sm:$0x1]
        %v9666 = vld [vmem:[%s9662 + $0x3] sm:$0x1]
        %v9671 = vlaneseq
        %v9672 = vshrl.u32 %v9671, 7
        %v9673 = vsub.s32 0, %v9672
        %v9674 = vrot.slane %v9663, %v9673
        %v9675 = vlaneseq
        %v9676 = vshrl.u32 %v9675, 7
        %v9677 = vsub.s32 0, %v9676
        %v9678 = vrot.slane %v9664, %v9677
        %v9679 = vlaneseq
        %v9680 = vshrl.u32 %v9679, 7
        %v9681 = vsub.s32 0, %v9680
        %v9682 = vrot.slane %v9665, %v9681
        %v9683 = vlaneseq
        %v9684 = vshrl.u32 %v9683, 7
        %v9685 = vsub.s32 0, %v9684
        %v9686 = vrot.slane %v9666, %v9685
        %9687 = vset.pattern.permute.xlu0 0
        %9688 = vperm.xlu0 %9687, %v9674
        %v9689 = vpop.permute.xlu0 %9688
        %9691 = vset.pattern.permute.xlu0 0
        %9692 = vperm.xlu0 %9691, %v9678
        %v9693 = vpop.permute.xlu0 %9692
        %9695 = vset.pattern.permute.xlu0 0
        %9696 = vperm.xlu0 %9695, %v9682
        %v9697 = vpop.permute.xlu0 %9696
        %9699 = vset.pattern.permute.xlu0 0
        %9700 = vperm.xlu0 %9699, %v9686
        %v9701 = vpop.permute.xlu0 %9700
        %v9703 = vmul.f32 %v9689, %v9503
        %v9704 = vmul.f32 %v9693, %v9503
        %v9705 = vmul.f32 %v9697, %v9503
        %v9706 = vmul.f32 %v9701, %v9503
        %v9707 = vadd.f32 %v9658, %v9703
        %v9708 = vadd.f32 %v9659, %v9704
        %v9709 = vadd.f32 %v9660, %v9705
        %v9710 = vadd.f32 %v9661, %v9706
        %s9711 = scalar_lea.vmem %s5, 12
        %v9712 = vld [vmem:[%s9711] sm:$0x1]
        %v9713 = vld [vmem:[%s9711 + $0x1] sm:$0x1]
        %v9714 = vld [vmem:[%s9711 + $0x2] sm:$0x1]
        %v9715 = vld [vmem:[%s9711 + $0x3] sm:$0x1]
        %v9720 = vlaneseq
        %v9721 = vshrl.u32 %v9720, 7
        %v9722 = vsub.s32 0, %v9721
        %v9723 = vrot.slane %v9712, %v9722
        %v9724 = vlaneseq
        %v9725 = vshrl.u32 %v9724, 7
        %v9726 = vsub.s32 0, %v9725
        %v9727 = vrot.slane %v9713, %v9726
        %v9728 = vlaneseq
        %v9729 = vshrl.u32 %v9728, 7
        %v9730 = vsub.s32 0, %v9729
        %v9731 = vrot.slane %v9714, %v9730
        %v9732 = vlaneseq
        %v9733 = vshrl.u32 %v9732, 7
        %v9734 = vsub.s32 0, %v9733
        %v9735 = vrot.slane %v9715, %v9734
        %9736 = vset.pattern.permute.xlu0 0
        %9737 = vperm.xlu0 %9736, %v9723
        %v9738 = vpop.permute.xlu0 %9737
        %9740 = vset.pattern.permute.xlu0 0
        %9741 = vperm.xlu0 %9740, %v9727
        %v9742 = vpop.permute.xlu0 %9741
        %9744 = vset.pattern.permute.xlu0 0
        %9745 = vperm.xlu0 %9744, %v9731
        %v9746 = vpop.permute.xlu0 %9745
        %9748 = vset.pattern.permute.xlu0 0
        %9749 = vperm.xlu0 %9748, %v9735
        %v9750 = vpop.permute.xlu0 %9749
        %v9752 = vmul.f32 %v9738, %v9504
        %v9753 = vmul.f32 %v9742, %v9504
        %v9754 = vmul.f32 %v9746, %v9504
        %v9755 = vmul.f32 %v9750, %v9504
        %v9756 = vadd.f32 %v9707, %v9752
        %v9757 = vadd.f32 %v9708, %v9753
        %v9758 = vadd.f32 %v9709, %v9754
        %v9759 = vadd.f32 %v9710, %v9755
        %s9760 = scalar_lea.vmem %s5, 16
        %v9761 = vld [vmem:[%s9760] sm:$0x1]
        %v9762 = vld [vmem:[%s9760 + $0x1] sm:$0x1]
        %v9763 = vld [vmem:[%s9760 + $0x2] sm:$0x1]
        %v9764 = vld [vmem:[%s9760 + $0x3] sm:$0x1]
        %v9769 = vlaneseq
        %v9770 = vshrl.u32 %v9769, 7
        %v9771 = vsub.s32 0, %v9770
        %v9772 = vrot.slane %v9761, %v9771
        %v9773 = vlaneseq
        %v9774 = vshrl.u32 %v9773, 7
        %v9775 = vsub.s32 0, %v9774
        %v9776 = vrot.slane %v9762, %v9775
        %v9777 = vlaneseq
        %v9778 = vshrl.u32 %v9777, 7
        %v9779 = vsub.s32 0, %v9778
        %v9780 = vrot.slane %v9763, %v9779
        %v9781 = vlaneseq
        %v9782 = vshrl.u32 %v9781, 7
        %v9783 = vsub.s32 0, %v9782
        %v9784 = vrot.slane %v9764, %v9783
        %9785 = vset.pattern.permute.xlu0 0
        %9786 = vperm.xlu0 %9785, %v9772
        %v9787 = vpop.permute.xlu0 %9786
        %9789 = vset.pattern.permute.xlu0 0
        %9790 = vperm.xlu0 %9789, %v9776
        %v9791 = vpop.permute.xlu0 %9790
        %9793 = vset.pattern.permute.xlu0 0
        %9794 = vperm.xlu0 %9793, %v9780
        %v9795 = vpop.permute.xlu0 %9794
        %9797 = vset.pattern.permute.xlu0 0
        %9798 = vperm.xlu0 %9797, %v9784
        %v9799 = vpop.permute.xlu0 %9798
        %v9801 = vmul.f32 %v9787, %v9505
        %v9802 = vmul.f32 %v9791, %v9505
        %v9803 = vmul.f32 %v9795, %v9505
        %v9804 = vmul.f32 %v9799, %v9505
        %v9805 = vadd.f32 %v9756, %v9801
        %v9806 = vadd.f32 %v9757, %v9802
        %v9807 = vadd.f32 %v9758, %v9803
        %v9808 = vadd.f32 %v9759, %v9804
        %s9809 = scalar_lea.vmem %s5, 20
        %v9810 = vld [vmem:[%s9809] sm:$0x1]
        %v9811 = vld [vmem:[%s9809 + $0x1] sm:$0x1]
        %v9812 = vld [vmem:[%s9809 + $0x2] sm:$0x1]
        %v9813 = vld [vmem:[%s9809 + $0x3] sm:$0x1]
        %v9818 = vlaneseq
        %v9819 = vshrl.u32 %v9818, 7
        %v9820 = vsub.s32 0, %v9819
        %v9821 = vrot.slane %v9810, %v9820
        %v9822 = vlaneseq
        %v9823 = vshrl.u32 %v9822, 7
        %v9824 = vsub.s32 0, %v9823
        %v9825 = vrot.slane %v9811, %v9824
        %v9826 = vlaneseq
        %v9827 = vshrl.u32 %v9826, 7
        %v9828 = vsub.s32 0, %v9827
        %v9829 = vrot.slane %v9812, %v9828
        %v9830 = vlaneseq
        %v9831 = vshrl.u32 %v9830, 7
        %v9832 = vsub.s32 0, %v9831
        %v9833 = vrot.slane %v9813, %v9832
        %9834 = vset.pattern.permute.xlu0 0
        %9835 = vperm.xlu0 %9834, %v9821
        %v9836 = vpop.permute.xlu0 %9835
        %9838 = vset.pattern.permute.xlu0 0
        %9839 = vperm.xlu0 %9838, %v9825
        %v9840 = vpop.permute.xlu0 %9839
        %9842 = vset.pattern.permute.xlu0 0
        %9843 = vperm.xlu0 %9842, %v9829
        %v9844 = vpop.permute.xlu0 %9843
        %9846 = vset.pattern.permute.xlu0 0
        %9847 = vperm.xlu0 %9846, %v9833
        %v9848 = vpop.permute.xlu0 %9847
        %v9850 = vmul.f32 %v9836, %v9506
        %v9851 = vmul.f32 %v9840, %v9506
        %v9852 = vmul.f32 %v9844, %v9506
        %v9853 = vmul.f32 %v9848, %v9506
        %v9854 = vadd.f32 %v9805, %v9850
        %v9855 = vadd.f32 %v9806, %v9851
        %v9856 = vadd.f32 %v9807, %v9852
        %v9857 = vadd.f32 %v9808, %v9853
        %s9858 = scalar_lea.vmem %s5, 24
        %v9859 = vld [vmem:[%s9858] sm:$0x1]
        %v9860 = vld [vmem:[%s9858 + $0x1] sm:$0x1]
        %v9861 = vld [vmem:[%s9858 + $0x2] sm:$0x1]
        %v9862 = vld [vmem:[%s9858 + $0x3] sm:$0x1]
        %v9867 = vlaneseq
        %v9868 = vshrl.u32 %v9867, 7
        %v9869 = vsub.s32 0, %v9868
        %v9870 = vrot.slane %v9859, %v9869
        %v9871 = vlaneseq
        %v9872 = vshrl.u32 %v9871, 7
        %v9873 = vsub.s32 0, %v9872
        %v9874 = vrot.slane %v9860, %v9873
        %v9875 = vlaneseq
        %v9876 = vshrl.u32 %v9875, 7
        %v9877 = vsub.s32 0, %v9876
        %v9878 = vrot.slane %v9861, %v9877
        %v9879 = vlaneseq
        %v9880 = vshrl.u32 %v9879, 7
        %v9881 = vsub.s32 0, %v9880
        %v9882 = vrot.slane %v9862, %v9881
        %9883 = vset.pattern.permute.xlu0 0
        %9884 = vperm.xlu0 %9883, %v9870
        %v9885 = vpop.permute.xlu0 %9884
        %9887 = vset.pattern.permute.xlu0 0
        %9888 = vperm.xlu0 %9887, %v9874
        %v9889 = vpop.permute.xlu0 %9888
        %9891 = vset.pattern.permute.xlu0 0
        %9892 = vperm.xlu0 %9891, %v9878
        %v9893 = vpop.permute.xlu0 %9892
        %9895 = vset.pattern.permute.xlu0 0
        %9896 = vperm.xlu0 %9895, %v9882
        %v9897 = vpop.permute.xlu0 %9896
        %v9899 = vmul.f32 %v9885, %v9507
        %v9900 = vmul.f32 %v9889, %v9507
        %v9901 = vmul.f32 %v9893, %v9507
        %v9902 = vmul.f32 %v9897, %v9507
        %v9903 = vadd.f32 %v9854, %v9899
        %v9904 = vadd.f32 %v9855, %v9900
        %v9905 = vadd.f32 %v9856, %v9901
        %v9906 = vadd.f32 %v9857, %v9902
        %s9907 = scalar_lea.vmem %s5, 28
        %v9908 = vld [vmem:[%s9907] sm:$0x1]
        %v9909 = vld [vmem:[%s9907 + $0x1] sm:$0x1]
        %v9910 = vld [vmem:[%s9907 + $0x2] sm:$0x1]
        %v9911 = vld [vmem:[%s9907 + $0x3] sm:$0x1]
        %v9916 = vlaneseq
        %v9917 = vshrl.u32 %v9916, 7
        %v9918 = vsub.s32 0, %v9917
        %v9919 = vrot.slane %v9908, %v9918
        %v9920 = vlaneseq
        %v9921 = vshrl.u32 %v9920, 7
        %v9922 = vsub.s32 0, %v9921
        %v9923 = vrot.slane %v9909, %v9922
        %v9924 = vlaneseq
        %v9925 = vshrl.u32 %v9924, 7
        %v9926 = vsub.s32 0, %v9925
        %v9927 = vrot.slane %v9910, %v9926
        %v9928 = vlaneseq
        %v9929 = vshrl.u32 %v9928, 7
        %v9930 = vsub.s32 0, %v9929
        %v9931 = vrot.slane %v9911, %v9930
        %9932 = vset.pattern.permute.xlu0 0
        %9933 = vperm.xlu0 %9932, %v9919
        %v9934 = vpop.permute.xlu0 %9933
        %9936 = vset.pattern.permute.xlu0 0
        %9937 = vperm.xlu0 %9936, %v9923
        %v9938 = vpop.permute.xlu0 %9937
        %9940 = vset.pattern.permute.xlu0 0
        %9941 = vperm.xlu0 %9940, %v9927
        %v9942 = vpop.permute.xlu0 %9941
        %9944 = vset.pattern.permute.xlu0 0
        %9945 = vperm.xlu0 %9944, %v9931
        %v9946 = vpop.permute.xlu0 %9945
        %v9948 = vmul.f32 %v9934, %v9508
        %v9949 = vmul.f32 %v9938, %v9508
        %v9950 = vmul.f32 %v9942, %v9508
        %v9951 = vmul.f32 %v9946, %v9508
        %v9952 = vadd.f32 %v9903, %v9948
        %v9953 = vadd.f32 %v9904, %v9949
        %v9954 = vadd.f32 %v9905, %v9950
        %v9955 = vadd.f32 %v9906, %v9951
        %s9956 = scalar_lea.vmem %s5, 32
        %v9957 = vld [vmem:[%s9956] sm:$0x1]
        %v9958 = vld [vmem:[%s9956 + $0x1] sm:$0x1]
        %v9959 = vld [vmem:[%s9956 + $0x2] sm:$0x1]
        %v9960 = vld [vmem:[%s9956 + $0x3] sm:$0x1]
        %v9965 = vlaneseq
        %v9966 = vshrl.u32 %v9965, 7
        %v9967 = vsub.s32 0, %v9966
        %v9968 = vrot.slane %v9957, %v9967
        %v9969 = vlaneseq
        %v9970 = vshrl.u32 %v9969, 7
        %v9971 = vsub.s32 0, %v9970
        %v9972 = vrot.slane %v9958, %v9971
        %v9973 = vlaneseq
        %v9974 = vshrl.u32 %v9973, 7
        %v9975 = vsub.s32 0, %v9974
        %v9976 = vrot.slane %v9959, %v9975
        %v9977 = vlaneseq
        %v9978 = vshrl.u32 %v9977, 7
        %v9979 = vsub.s32 0, %v9978
        %v9980 = vrot.slane %v9960, %v9979
        %9981 = vset.pattern.permute.xlu0 0
        %9982 = vperm.xlu0 %9981, %v9968
        %v9983 = vpop.permute.xlu0 %9982
        %9985 = vset.pattern.permute.xlu0 0
        %9986 = vperm.xlu0 %9985, %v9972
        %v9987 = vpop.permute.xlu0 %9986
        %9989 = vset.pattern.permute.xlu0 0
        %9990 = vperm.xlu0 %9989, %v9976
        %v9991 = vpop.permute.xlu0 %9990
        %9993 = vset.pattern.permute.xlu0 0
        %9994 = vperm.xlu0 %9993, %v9980
        %v9995 = vpop.permute.xlu0 %9994
        %v9997 = vmul.f32 %v9983, %v9509
        %v9998 = vmul.f32 %v9987, %v9509
        %v9999 = vmul.f32 %v9991, %v9509
        %v10000 = vmul.f32 %v9995, %v9509
        %v10001 = vadd.f32 %v9952, %v9997
        %v10002 = vadd.f32 %v9953, %v9998
        %v10003 = vadd.f32 %v9954, %v9999
        %v10004 = vadd.f32 %v9955, %v10000
        %s10005 = scalar_lea.vmem %s5, 36
        %v10006 = vld [vmem:[%s10005] sm:$0x1]
        %v10007 = vld [vmem:[%s10005 + $0x1] sm:$0x1]
        %v10008 = vld [vmem:[%s10005 + $0x2] sm:$0x1]
        %v10009 = vld [vmem:[%s10005 + $0x3] sm:$0x1]
        %v10014 = vlaneseq
        %v10015 = vshrl.u32 %v10014, 7
        %v10016 = vsub.s32 0, %v10015
        %v10017 = vrot.slane %v10006, %v10016
        %v10018 = vlaneseq
        %v10019 = vshrl.u32 %v10018, 7
        %v10020 = vsub.s32 0, %v10019
        %v10021 = vrot.slane %v10007, %v10020
        %v10022 = vlaneseq
        %v10023 = vshrl.u32 %v10022, 7
        %v10024 = vsub.s32 0, %v10023
        %v10025 = vrot.slane %v10008, %v10024
        %v10026 = vlaneseq
        %v10027 = vshrl.u32 %v10026, 7
        %v10028 = vsub.s32 0, %v10027
        %v10029 = vrot.slane %v10009, %v10028
        %10030 = vset.pattern.permute.xlu0 0
        %10031 = vperm.xlu0 %10030, %v10017
        %v10032 = vpop.permute.xlu0 %10031
        %10034 = vset.pattern.permute.xlu0 0
        %10035 = vperm.xlu0 %10034, %v10021
        %v10036 = vpop.permute.xlu0 %10035
        %10038 = vset.pattern.permute.xlu0 0
        %10039 = vperm.xlu0 %10038, %v10025
        %v10040 = vpop.permute.xlu0 %10039
        %10042 = vset.pattern.permute.xlu0 0
        %10043 = vperm.xlu0 %10042, %v10029
        %v10044 = vpop.permute.xlu0 %10043
        %v10046 = vmul.f32 %v10032, %v9510
        %v10047 = vmul.f32 %v10036, %v9510
        %v10048 = vmul.f32 %v10040, %v9510
        %v10049 = vmul.f32 %v10044, %v9510
        %v10050 = vadd.f32 %v10001, %v10046
        %v10051 = vadd.f32 %v10002, %v10047
        %v10052 = vadd.f32 %v10003, %v10048
        %v10053 = vadd.f32 %v10004, %v10049
        %s10054 = scalar_lea.vmem %s5, 40
        %v10055 = vld [vmem:[%s10054] sm:$0x1]
        %v10056 = vld [vmem:[%s10054 + $0x1] sm:$0x1]
        %v10057 = vld [vmem:[%s10054 + $0x2] sm:$0x1]
        %v10058 = vld [vmem:[%s10054 + $0x3] sm:$0x1]
        %v10063 = vlaneseq
        %v10064 = vshrl.u32 %v10063, 7
        %v10065 = vsub.s32 0, %v10064
        %v10066 = vrot.slane %v10055, %v10065
        %v10067 = vlaneseq
        %v10068 = vshrl.u32 %v10067, 7
        %v10069 = vsub.s32 0, %v10068
        %v10070 = vrot.slane %v10056, %v10069
        %v10071 = vlaneseq
        %v10072 = vshrl.u32 %v10071, 7
        %v10073 = vsub.s32 0, %v10072
        %v10074 = vrot.slane %v10057, %v10073
        %v10075 = vlaneseq
        %v10076 = vshrl.u32 %v10075, 7
        %v10077 = vsub.s32 0, %v10076
        %v10078 = vrot.slane %v10058, %v10077
        %10079 = vset.pattern.permute.xlu0 0
        %10080 = vperm.xlu0 %10079, %v10066
        %v10081 = vpop.permute.xlu0 %10080
        %10083 = vset.pattern.permute.xlu0 0
        %10084 = vperm.xlu0 %10083, %v10070
        %v10085 = vpop.permute.xlu0 %10084
        %10087 = vset.pattern.permute.xlu0 0
        %10088 = vperm.xlu0 %10087, %v10074
        %v10089 = vpop.permute.xlu0 %10088
        %10091 = vset.pattern.permute.xlu0 0
        %10092 = vperm.xlu0 %10091, %v10078
        %v10093 = vpop.permute.xlu0 %10092
        %v10095 = vmul.f32 %v10081, %v9511
        %v10096 = vmul.f32 %v10085, %v9511
        %v10097 = vmul.f32 %v10089, %v9511
        %v10098 = vmul.f32 %v10093, %v9511
        %v10099 = vadd.f32 %v10050, %v10095
        %v10100 = vadd.f32 %v10051, %v10096
        %v10101 = vadd.f32 %v10052, %v10097
        %v10102 = vadd.f32 %v10053, %v10098
        %s10103 = scalar_lea.vmem %s5, 44
        %v10104 = vld [vmem:[%s10103] sm:$0x1]
        %v10105 = vld [vmem:[%s10103 + $0x1] sm:$0x1]
        %v10106 = vld [vmem:[%s10103 + $0x2] sm:$0x1]
        %v10107 = vld [vmem:[%s10103 + $0x3] sm:$0x1]
        %v10112 = vlaneseq
        %v10113 = vshrl.u32 %v10112, 7
        %v10114 = vsub.s32 0, %v10113
        %v10115 = vrot.slane %v10104, %v10114
        %v10116 = vlaneseq
        %v10117 = vshrl.u32 %v10116, 7
        %v10118 = vsub.s32 0, %v10117
        %v10119 = vrot.slane %v10105, %v10118
        %v10120 = vlaneseq
        %v10121 = vshrl.u32 %v10120, 7
        %v10122 = vsub.s32 0, %v10121
        %v10123 = vrot.slane %v10106, %v10122
        %v10124 = vlaneseq
        %v10125 = vshrl.u32 %v10124, 7
        %v10126 = vsub.s32 0, %v10125
        %v10127 = vrot.slane %v10107, %v10126
        %10128 = vset.pattern.permute.xlu0 0
        %10129 = vperm.xlu0 %10128, %v10115
        %v10130 = vpop.permute.xlu0 %10129
        %10132 = vset.pattern.permute.xlu0 0
        %10133 = vperm.xlu0 %10132, %v10119
        %v10134 = vpop.permute.xlu0 %10133
        %10136 = vset.pattern.permute.xlu0 0
        %10137 = vperm.xlu0 %10136, %v10123
        %v10138 = vpop.permute.xlu0 %10137
        %10140 = vset.pattern.permute.xlu0 0
        %10141 = vperm.xlu0 %10140, %v10127
        %v10142 = vpop.permute.xlu0 %10141
        %v10144 = vmul.f32 %v10130, %v9512
        %v10145 = vmul.f32 %v10134, %v9512
        %v10146 = vmul.f32 %v10138, %v9512
        %v10147 = vmul.f32 %v10142, %v9512
        %v10148 = vadd.f32 %v10099, %v10144
        %v10149 = vadd.f32 %v10100, %v10145
        %v10150 = vadd.f32 %v10101, %v10146
        %v10151 = vadd.f32 %v10102, %v10147
        %s10152 = scalar_lea.vmem %s5, 48
        %v10153 = vld [vmem:[%s10152] sm:$0x1]
        %v10154 = vld [vmem:[%s10152 + $0x1] sm:$0x1]
        %v10155 = vld [vmem:[%s10152 + $0x2] sm:$0x1]
        %v10156 = vld [vmem:[%s10152 + $0x3] sm:$0x1]
        %v10161 = vlaneseq
        %v10162 = vshrl.u32 %v10161, 7
        %v10163 = vsub.s32 0, %v10162
        %v10164 = vrot.slane %v10153, %v10163
        %v10165 = vlaneseq
        %v10166 = vshrl.u32 %v10165, 7
        %v10167 = vsub.s32 0, %v10166
        %v10168 = vrot.slane %v10154, %v10167
        %v10169 = vlaneseq
        %v10170 = vshrl.u32 %v10169, 7
        %v10171 = vsub.s32 0, %v10170
        %v10172 = vrot.slane %v10155, %v10171
        %v10173 = vlaneseq
        %v10174 = vshrl.u32 %v10173, 7
        %v10175 = vsub.s32 0, %v10174
        %v10176 = vrot.slane %v10156, %v10175
        %10177 = vset.pattern.permute.xlu0 0
        %10178 = vperm.xlu0 %10177, %v10164
        %v10179 = vpop.permute.xlu0 %10178
        %10181 = vset.pattern.permute.xlu0 0
        %10182 = vperm.xlu0 %10181, %v10168
        %v10183 = vpop.permute.xlu0 %10182
        %10185 = vset.pattern.permute.xlu0 0
        %10186 = vperm.xlu0 %10185, %v10172
        %v10187 = vpop.permute.xlu0 %10186
        %10189 = vset.pattern.permute.xlu0 0
        %10190 = vperm.xlu0 %10189, %v10176
        %v10191 = vpop.permute.xlu0 %10190
        %v10193 = vmul.f32 %v10179, %v9513
        %v10194 = vmul.f32 %v10183, %v9513
        %v10195 = vmul.f32 %v10187, %v9513
        %v10196 = vmul.f32 %v10191, %v9513
        %v10197 = vadd.f32 %v10148, %v10193
        %v10198 = vadd.f32 %v10149, %v10194
        %v10199 = vadd.f32 %v10150, %v10195
        %v10200 = vadd.f32 %v10151, %v10196
        %s10201 = scalar_lea.vmem %s5, 52
        %v10202 = vld [vmem:[%s10201] sm:$0x1]
        %v10203 = vld [vmem:[%s10201 + $0x1] sm:$0x1]
        %v10204 = vld [vmem:[%s10201 + $0x2] sm:$0x1]
        %v10205 = vld [vmem:[%s10201 + $0x3] sm:$0x1]
        %v10210 = vlaneseq
        %v10211 = vshrl.u32 %v10210, 7
        %v10212 = vsub.s32 0, %v10211
        %v10213 = vrot.slane %v10202, %v10212
        %v10214 = vlaneseq
        %v10215 = vshrl.u32 %v10214, 7
        %v10216 = vsub.s32 0, %v10215
        %v10217 = vrot.slane %v10203, %v10216
        %v10218 = vlaneseq
        %v10219 = vshrl.u32 %v10218, 7
        %v10220 = vsub.s32 0, %v10219
        %v10221 = vrot.slane %v10204, %v10220
        %v10222 = vlaneseq
        %v10223 = vshrl.u32 %v10222, 7
        %v10224 = vsub.s32 0, %v10223
        %v10225 = vrot.slane %v10205, %v10224
        %10226 = vset.pattern.permute.xlu0 0
        %10227 = vperm.xlu0 %10226, %v10213
        %v10228 = vpop.permute.xlu0 %10227
        %10230 = vset.pattern.permute.xlu0 0
        %10231 = vperm.xlu0 %10230, %v10217
        %v10232 = vpop.permute.xlu0 %10231
        %10234 = vset.pattern.permute.xlu0 0
        %10235 = vperm.xlu0 %10234, %v10221
        %v10236 = vpop.permute.xlu0 %10235
        %10238 = vset.pattern.permute.xlu0 0
        %10239 = vperm.xlu0 %10238, %v10225
        %v10240 = vpop.permute.xlu0 %10239
        %v10242 = vmul.f32 %v10228, %v9514
        %v10243 = vmul.f32 %v10232, %v9514
        %v10244 = vmul.f32 %v10236, %v9514
        %v10245 = vmul.f32 %v10240, %v9514
        %v10246 = vadd.f32 %v10197, %v10242
        %v10247 = vadd.f32 %v10198, %v10243
        %v10248 = vadd.f32 %v10199, %v10244
        %v10249 = vadd.f32 %v10200, %v10245
        %s10250 = scalar_lea.vmem %s5, 56
        %v10251 = vld [vmem:[%s10250] sm:$0x1]
        %v10252 = vld [vmem:[%s10250 + $0x1] sm:$0x1]
        %v10253 = vld [vmem:[%s10250 + $0x2] sm:$0x1]
        %v10254 = vld [vmem:[%s10250 + $0x3] sm:$0x1]
        %v10259 = vlaneseq
        %v10260 = vshrl.u32 %v10259, 7
        %v10261 = vsub.s32 0, %v10260
        %v10262 = vrot.slane %v10251, %v10261
        %v10263 = vlaneseq
        %v10264 = vshrl.u32 %v10263, 7
        %v10265 = vsub.s32 0, %v10264
        %v10266 = vrot.slane %v10252, %v10265
        %v10267 = vlaneseq
        %v10268 = vshrl.u32 %v10267, 7
        %v10269 = vsub.s32 0, %v10268
        %v10270 = vrot.slane %v10253, %v10269
        %v10271 = vlaneseq
        %v10272 = vshrl.u32 %v10271, 7
        %v10273 = vsub.s32 0, %v10272
        %v10274 = vrot.slane %v10254, %v10273
        %10275 = vset.pattern.permute.xlu0 0
        %10276 = vperm.xlu0 %10275, %v10262
        %v10277 = vpop.permute.xlu0 %10276
        %10279 = vset.pattern.permute.xlu0 0
        %10280 = vperm.xlu0 %10279, %v10266
        %v10281 = vpop.permute.xlu0 %10280
        %10283 = vset.pattern.permute.xlu0 0
        %10284 = vperm.xlu0 %10283, %v10270
        %v10285 = vpop.permute.xlu0 %10284
        %10287 = vset.pattern.permute.xlu0 0
        %10288 = vperm.xlu0 %10287, %v10274
        %v10289 = vpop.permute.xlu0 %10288
        %v10291 = vmul.f32 %v10277, %v9515
        %v10292 = vmul.f32 %v10281, %v9515
        %v10293 = vmul.f32 %v10285, %v9515
        %v10294 = vmul.f32 %v10289, %v9515
        %v10295 = vadd.f32 %v10246, %v10291
        %v10296 = vadd.f32 %v10247, %v10292
        %v10297 = vadd.f32 %v10248, %v10293
        %v10298 = vadd.f32 %v10249, %v10294
        %s10299 = scalar_lea.vmem %s5, 60
        %v10300 = vld [vmem:[%s10299] sm:$0x1]
        %v10301 = vld [vmem:[%s10299 + $0x1] sm:$0x1]
        %v10302 = vld [vmem:[%s10299 + $0x2] sm:$0x1]
        %v10303 = vld [vmem:[%s10299 + $0x3] sm:$0x1]
        %v10308 = vlaneseq
        %v10309 = vshrl.u32 %v10308, 7
        %v10310 = vsub.s32 0, %v10309
        %v10311 = vrot.slane %v10300, %v10310
        %v10312 = vlaneseq
        %v10313 = vshrl.u32 %v10312, 7
        %v10314 = vsub.s32 0, %v10313
        %v10315 = vrot.slane %v10301, %v10314
        %v10316 = vlaneseq
        %v10317 = vshrl.u32 %v10316, 7
        %v10318 = vsub.s32 0, %v10317
        %v10319 = vrot.slane %v10302, %v10318
        %v10320 = vlaneseq
        %v10321 = vshrl.u32 %v10320, 7
        %v10322 = vsub.s32 0, %v10321
        %v10323 = vrot.slane %v10303, %v10322
        %10324 = vset.pattern.permute.xlu0 0
        %10325 = vperm.xlu0 %10324, %v10311
        %v10326 = vpop.permute.xlu0 %10325
        %10328 = vset.pattern.permute.xlu0 0
        %10329 = vperm.xlu0 %10328, %v10315
        %v10330 = vpop.permute.xlu0 %10329
        %10332 = vset.pattern.permute.xlu0 0
        %10333 = vperm.xlu0 %10332, %v10319
        %v10334 = vpop.permute.xlu0 %10333
        %10336 = vset.pattern.permute.xlu0 0
        %10337 = vperm.xlu0 %10336, %v10323
        %v10338 = vpop.permute.xlu0 %10337
        %v10340 = vmul.f32 %v10326, %v9516
        %v10341 = vmul.f32 %v10330, %v9516
        %v10342 = vmul.f32 %v10334, %v9516
        %v10343 = vmul.f32 %v10338, %v9516
        %v10344 = vadd.f32 %v10295, %v10340
        %v10345 = vadd.f32 %v10296, %v10341
        %v10346 = vadd.f32 %v10297, %v10342
        %v10347 = vadd.f32 %v10298, %v10343
        %s10348 = scalar_lea.vmem %s5, 64
        %v10349 = vld [vmem:[%s10348] sm:$0x1]
        %v10350 = vld [vmem:[%s10348 + $0x1] sm:$0x1]
        %v10351 = vld [vmem:[%s10348 + $0x2] sm:$0x1]
        %v10352 = vld [vmem:[%s10348 + $0x3] sm:$0x1]
        %v10357 = vlaneseq
        %v10358 = vshrl.u32 %v10357, 7
        %v10359 = vsub.s32 0, %v10358
        %v10360 = vrot.slane %v10349, %v10359
        %v10361 = vlaneseq
        %v10362 = vshrl.u32 %v10361, 7
        %v10363 = vsub.s32 0, %v10362
        %v10364 = vrot.slane %v10350, %v10363
        %v10365 = vlaneseq
        %v10366 = vshrl.u32 %v10365, 7
        %v10367 = vsub.s32 0, %v10366
        %v10368 = vrot.slane %v10351, %v10367
        %v10369 = vlaneseq
        %v10370 = vshrl.u32 %v10369, 7
        %v10371 = vsub.s32 0, %v10370
        %v10372 = vrot.slane %v10352, %v10371
        %10373 = vset.pattern.permute.xlu0 0
        %10374 = vperm.xlu0 %10373, %v10360
        %v10375 = vpop.permute.xlu0 %10374
        %10377 = vset.pattern.permute.xlu0 0
        %10378 = vperm.xlu0 %10377, %v10364
        %v10379 = vpop.permute.xlu0 %10378
        %10381 = vset.pattern.permute.xlu0 0
        %10382 = vperm.xlu0 %10381, %v10368
        %v10383 = vpop.permute.xlu0 %10382
        %10385 = vset.pattern.permute.xlu0 0
        %10386 = vperm.xlu0 %10385, %v10372
        %v10387 = vpop.permute.xlu0 %10386
        %v10389 = vmul.f32 %v10375, %v9517
        %v10390 = vmul.f32 %v10379, %v9517
        %v10391 = vmul.f32 %v10383, %v9517
        %v10392 = vmul.f32 %v10387, %v9517
        %v10393 = vadd.f32 %v10344, %v10389
        %v10394 = vadd.f32 %v10345, %v10390
        %v10395 = vadd.f32 %v10346, %v10391
        %v10396 = vadd.f32 %v10347, %v10392
        %s10397 = scalar_lea.vmem %s5, 68
        %v10398 = vld [vmem:[%s10397] sm:$0x1]
        %v10399 = vld [vmem:[%s10397 + $0x1] sm:$0x1]
        %v10400 = vld [vmem:[%s10397 + $0x2] sm:$0x1]
        %v10401 = vld [vmem:[%s10397 + $0x3] sm:$0x1]
        %v10406 = vlaneseq
        %v10407 = vshrl.u32 %v10406, 7
        %v10408 = vsub.s32 0, %v10407
        %v10409 = vrot.slane %v10398, %v10408
        %v10410 = vlaneseq
        %v10411 = vshrl.u32 %v10410, 7
        %v10412 = vsub.s32 0, %v10411
        %v10413 = vrot.slane %v10399, %v10412
        %v10414 = vlaneseq
        %v10415 = vshrl.u32 %v10414, 7
        %v10416 = vsub.s32 0, %v10415
        %v10417 = vrot.slane %v10400, %v10416
        %v10418 = vlaneseq
        %v10419 = vshrl.u32 %v10418, 7
        %v10420 = vsub.s32 0, %v10419
        %v10421 = vrot.slane %v10401, %v10420
        %10422 = vset.pattern.permute.xlu0 0
        %10423 = vperm.xlu0 %10422, %v10409
        %v10424 = vpop.permute.xlu0 %10423
        %10426 = vset.pattern.permute.xlu0 0
        %10427 = vperm.xlu0 %10426, %v10413
        %v10428 = vpop.permute.xlu0 %10427
        %10430 = vset.pattern.permute.xlu0 0
        %10431 = vperm.xlu0 %10430, %v10417
        %v10432 = vpop.permute.xlu0 %10431
        %10434 = vset.pattern.permute.xlu0 0
        %10435 = vperm.xlu0 %10434, %v10421
        %v10436 = vpop.permute.xlu0 %10435
        %v10438 = vmul.f32 %v10424, %v9518
        %v10439 = vmul.f32 %v10428, %v9518
        %v10440 = vmul.f32 %v10432, %v9518
        %v10441 = vmul.f32 %v10436, %v9518
        %v10442 = vadd.f32 %v10393, %v10438
        %v10443 = vadd.f32 %v10394, %v10439
        %v10444 = vadd.f32 %v10395, %v10440
        %v10445 = vadd.f32 %v10396, %v10441
        %s10446 = scalar_lea.vmem %s5, 72
        %v10447 = vld [vmem:[%s10446] sm:$0x1]
        %v10448 = vld [vmem:[%s10446 + $0x1] sm:$0x1]
        %v10449 = vld [vmem:[%s10446 + $0x2] sm:$0x1]
        %v10450 = vld [vmem:[%s10446 + $0x3] sm:$0x1]
        %v10455 = vlaneseq
        %v10456 = vshrl.u32 %v10455, 7
        %v10457 = vsub.s32 0, %v10456
        %v10458 = vrot.slane %v10447, %v10457
        %v10459 = vlaneseq
        %v10460 = vshrl.u32 %v10459, 7
        %v10461 = vsub.s32 0, %v10460
        %v10462 = vrot.slane %v10448, %v10461
        %v10463 = vlaneseq
        %v10464 = vshrl.u32 %v10463, 7
        %v10465 = vsub.s32 0, %v10464
        %v10466 = vrot.slane %v10449, %v10465
        %v10467 = vlaneseq
        %v10468 = vshrl.u32 %v10467, 7
        %v10469 = vsub.s32 0, %v10468
        %v10470 = vrot.slane %v10450, %v10469
        %10471 = vset.pattern.permute.xlu0 0
        %10472 = vperm.xlu0 %10471, %v10458
        %v10473 = vpop.permute.xlu0 %10472
        %10475 = vset.pattern.permute.xlu0 0
        %10476 = vperm.xlu0 %10475, %v10462
        %v10477 = vpop.permute.xlu0 %10476
        %10479 = vset.pattern.permute.xlu0 0
        %10480 = vperm.xlu0 %10479, %v10466
        %v10481 = vpop.permute.xlu0 %10480
        %10483 = vset.pattern.permute.xlu0 0
        %10484 = vperm.xlu0 %10483, %v10470
        %v10485 = vpop.permute.xlu0 %10484
        %v10487 = vmul.f32 %v10473, %v9519
        %v10488 = vmul.f32 %v10477, %v9519
        %v10489 = vmul.f32 %v10481, %v9519
        %v10490 = vmul.f32 %v10485, %v9519
        %v10491 = vadd.f32 %v10442, %v10487
        %v10492 = vadd.f32 %v10443, %v10488
        %v10493 = vadd.f32 %v10444, %v10489
        %v10494 = vadd.f32 %v10445, %v10490
        %s10495 = scalar_lea.vmem %s5, 76
        %v10496 = vld [vmem:[%s10495] sm:$0x1]
        %v10497 = vld [vmem:[%s10495 + $0x1] sm:$0x1]
        %v10498 = vld [vmem:[%s10495 + $0x2] sm:$0x1]
        %v10499 = vld [vmem:[%s10495 + $0x3] sm:$0x1]
        %v10504 = vlaneseq
        %v10505 = vshrl.u32 %v10504, 7
        %v10506 = vsub.s32 0, %v10505
        %v10507 = vrot.slane %v10496, %v10506
        %v10508 = vlaneseq
        %v10509 = vshrl.u32 %v10508, 7
        %v10510 = vsub.s32 0, %v10509
        %v10511 = vrot.slane %v10497, %v10510
        %v10512 = vlaneseq
        %v10513 = vshrl.u32 %v10512, 7
        %v10514 = vsub.s32 0, %v10513
        %v10515 = vrot.slane %v10498, %v10514
        %v10516 = vlaneseq
        %v10517 = vshrl.u32 %v10516, 7
        %v10518 = vsub.s32 0, %v10517
        %v10519 = vrot.slane %v10499, %v10518
        %10520 = vset.pattern.permute.xlu0 0
        %10521 = vperm.xlu0 %10520, %v10507
        %v10522 = vpop.permute.xlu0 %10521
        %10524 = vset.pattern.permute.xlu0 0
        %10525 = vperm.xlu0 %10524, %v10511
        %v10526 = vpop.permute.xlu0 %10525
        %10528 = vset.pattern.permute.xlu0 0
        %10529 = vperm.xlu0 %10528, %v10515
        %v10530 = vpop.permute.xlu0 %10529
        %10532 = vset.pattern.permute.xlu0 0
        %10533 = vperm.xlu0 %10532, %v10519
        %v10534 = vpop.permute.xlu0 %10533
        %v10536 = vmul.f32 %v10522, %v9520
        %v10537 = vmul.f32 %v10526, %v9520
        %v10538 = vmul.f32 %v10530, %v9520
        %v10539 = vmul.f32 %v10534, %v9520
        %v10540 = vadd.f32 %v10491, %v10536
        %v10541 = vadd.f32 %v10492, %v10537
        %v10542 = vadd.f32 %v10493, %v10538
        %v10543 = vadd.f32 %v10494, %v10539
        %s10544 = scalar_lea.vmem %s5, 80
        %v10545 = vld [vmem:[%s10544] sm:$0x1]
        %v10546 = vld [vmem:[%s10544 + $0x1] sm:$0x1]
        %v10547 = vld [vmem:[%s10544 + $0x2] sm:$0x1]
        %v10548 = vld [vmem:[%s10544 + $0x3] sm:$0x1]
        %v10553 = vlaneseq
        %v10554 = vshrl.u32 %v10553, 7
        %v10555 = vsub.s32 0, %v10554
        %v10556 = vrot.slane %v10545, %v10555
        %v10557 = vlaneseq
        %v10558 = vshrl.u32 %v10557, 7
        %v10559 = vsub.s32 0, %v10558
        %v10560 = vrot.slane %v10546, %v10559
        %v10561 = vlaneseq
        %v10562 = vshrl.u32 %v10561, 7
        %v10563 = vsub.s32 0, %v10562
        %v10564 = vrot.slane %v10547, %v10563
        %v10565 = vlaneseq
        %v10566 = vshrl.u32 %v10565, 7
        %v10567 = vsub.s32 0, %v10566
        %v10568 = vrot.slane %v10548, %v10567
        %10569 = vset.pattern.permute.xlu0 0
        %10570 = vperm.xlu0 %10569, %v10556
        %v10571 = vpop.permute.xlu0 %10570
        %10573 = vset.pattern.permute.xlu0 0
        %10574 = vperm.xlu0 %10573, %v10560
        %v10575 = vpop.permute.xlu0 %10574
        %10577 = vset.pattern.permute.xlu0 0
        %10578 = vperm.xlu0 %10577, %v10564
        %v10579 = vpop.permute.xlu0 %10578
        %10581 = vset.pattern.permute.xlu0 0
        %10582 = vperm.xlu0 %10581, %v10568
        %v10583 = vpop.permute.xlu0 %10582
        %v10585 = vmul.f32 %v10571, %v9521
        %v10586 = vmul.f32 %v10575, %v9521
        %v10587 = vmul.f32 %v10579, %v9521
        %v10588 = vmul.f32 %v10583, %v9521
        %v10589 = vadd.f32 %v10540, %v10585
        %v10590 = vadd.f32 %v10541, %v10586
        %v10591 = vadd.f32 %v10542, %v10587
        %v10592 = vadd.f32 %v10543, %v10588
        %s10593 = scalar_lea.vmem %s5, 84
        %v10594 = vld [vmem:[%s10593] sm:$0x1]
        %v10595 = vld [vmem:[%s10593 + $0x1] sm:$0x1]
        %v10596 = vld [vmem:[%s10593 + $0x2] sm:$0x1]
        %v10597 = vld [vmem:[%s10593 + $0x3] sm:$0x1]
        %v10602 = vlaneseq
        %v10603 = vshrl.u32 %v10602, 7
        %v10604 = vsub.s32 0, %v10603
        %v10605 = vrot.slane %v10594, %v10604
        %v10606 = vlaneseq
        %v10607 = vshrl.u32 %v10606, 7
        %v10608 = vsub.s32 0, %v10607
        %v10609 = vrot.slane %v10595, %v10608
        %v10610 = vlaneseq
        %v10611 = vshrl.u32 %v10610, 7
        %v10612 = vsub.s32 0, %v10611
        %v10613 = vrot.slane %v10596, %v10612
        %v10614 = vlaneseq
        %v10615 = vshrl.u32 %v10614, 7
        %v10616 = vsub.s32 0, %v10615
        %v10617 = vrot.slane %v10597, %v10616
        %10618 = vset.pattern.permute.xlu0 0
        %10619 = vperm.xlu0 %10618, %v10605
        %v10620 = vpop.permute.xlu0 %10619
        %10622 = vset.pattern.permute.xlu0 0
        %10623 = vperm.xlu0 %10622, %v10609
        %v10624 = vpop.permute.xlu0 %10623
        %10626 = vset.pattern.permute.xlu0 0
        %10627 = vperm.xlu0 %10626, %v10613
        %v10628 = vpop.permute.xlu0 %10627
        %10630 = vset.pattern.permute.xlu0 0
        %10631 = vperm.xlu0 %10630, %v10617
        %v10632 = vpop.permute.xlu0 %10631
        %v10634 = vmul.f32 %v10620, %v9522
        %v10635 = vmul.f32 %v10624, %v9522
        %v10636 = vmul.f32 %v10628, %v9522
        %v10637 = vmul.f32 %v10632, %v9522
        %v10638 = vadd.f32 %v10589, %v10634
        %v10639 = vadd.f32 %v10590, %v10635
        %v10640 = vadd.f32 %v10591, %v10636
        %v10641 = vadd.f32 %v10592, %v10637
        %s10642 = scalar_lea.vmem %s5, 88
        %v10643 = vld [vmem:[%s10642] sm:$0x1]
        %v10644 = vld [vmem:[%s10642 + $0x1] sm:$0x1]
        %v10645 = vld [vmem:[%s10642 + $0x2] sm:$0x1]
        %v10646 = vld [vmem:[%s10642 + $0x3] sm:$0x1]
        %v10651 = vlaneseq
        %v10652 = vshrl.u32 %v10651, 7
        %v10653 = vsub.s32 0, %v10652
        %v10654 = vrot.slane %v10643, %v10653
        %v10655 = vlaneseq
        %v10656 = vshrl.u32 %v10655, 7
        %v10657 = vsub.s32 0, %v10656
        %v10658 = vrot.slane %v10644, %v10657
        %v10659 = vlaneseq
        %v10660 = vshrl.u32 %v10659, 7
        %v10661 = vsub.s32 0, %v10660
        %v10662 = vrot.slane %v10645, %v10661
        %v10663 = vlaneseq
        %v10664 = vshrl.u32 %v10663, 7
        %v10665 = vsub.s32 0, %v10664
        %v10666 = vrot.slane %v10646, %v10665
        %10667 = vset.pattern.permute.xlu0 0
        %10668 = vperm.xlu0 %10667, %v10654
        %v10669 = vpop.permute.xlu0 %10668
        %10671 = vset.pattern.permute.xlu0 0
        %10672 = vperm.xlu0 %10671, %v10658
        %v10673 = vpop.permute.xlu0 %10672
        %10675 = vset.pattern.permute.xlu0 0
        %10676 = vperm.xlu0 %10675, %v10662
        %v10677 = vpop.permute.xlu0 %10676
        %10679 = vset.pattern.permute.xlu0 0
        %10680 = vperm.xlu0 %10679, %v10666
        %v10681 = vpop.permute.xlu0 %10680
        %v10683 = vmul.f32 %v10669, %v9523
        %v10684 = vmul.f32 %v10673, %v9523
        %v10685 = vmul.f32 %v10677, %v9523
        %v10686 = vmul.f32 %v10681, %v9523
        %v10687 = vadd.f32 %v10638, %v10683
        %v10688 = vadd.f32 %v10639, %v10684
        %v10689 = vadd.f32 %v10640, %v10685
        %v10690 = vadd.f32 %v10641, %v10686
        %s10691 = scalar_lea.vmem %s5, 92
        %v10692 = vld [vmem:[%s10691] sm:$0x1]
        %v10693 = vld [vmem:[%s10691 + $0x1] sm:$0x1]
        %v10694 = vld [vmem:[%s10691 + $0x2] sm:$0x1]
        %v10695 = vld [vmem:[%s10691 + $0x3] sm:$0x1]
        %v10700 = vlaneseq
        %v10701 = vshrl.u32 %v10700, 7
        %v10702 = vsub.s32 0, %v10701
        %v10703 = vrot.slane %v10692, %v10702
        %v10704 = vlaneseq
        %v10705 = vshrl.u32 %v10704, 7
        %v10706 = vsub.s32 0, %v10705
        %v10707 = vrot.slane %v10693, %v10706
        %v10708 = vlaneseq
        %v10709 = vshrl.u32 %v10708, 7
        %v10710 = vsub.s32 0, %v10709
        %v10711 = vrot.slane %v10694, %v10710
        %v10712 = vlaneseq
        %v10713 = vshrl.u32 %v10712, 7
        %v10714 = vsub.s32 0, %v10713
        %v10715 = vrot.slane %v10695, %v10714
        %10716 = vset.pattern.permute.xlu0 0
        %10717 = vperm.xlu0 %10716, %v10703
        %v10718 = vpop.permute.xlu0 %10717
        %10720 = vset.pattern.permute.xlu0 0
        %10721 = vperm.xlu0 %10720, %v10707
        %v10722 = vpop.permute.xlu0 %10721
        %10724 = vset.pattern.permute.xlu0 0
        %10725 = vperm.xlu0 %10724, %v10711
        %v10726 = vpop.permute.xlu0 %10725
        %10728 = vset.pattern.permute.xlu0 0
        %10729 = vperm.xlu0 %10728, %v10715
        %v10730 = vpop.permute.xlu0 %10729
        %v10732 = vmul.f32 %v10718, %v9524
        %v10733 = vmul.f32 %v10722, %v9524
        %v10734 = vmul.f32 %v10726, %v9524
        %v10735 = vmul.f32 %v10730, %v9524
        %v10736 = vadd.f32 %v10687, %v10732
        %v10737 = vadd.f32 %v10688, %v10733
        %v10738 = vadd.f32 %v10689, %v10734
        %v10739 = vadd.f32 %v10690, %v10735
        %v10740 = vadd.f32 %v10736, %v312
        %v10741 = vadd.f32 %v10737, %v313
        %v10742 = vadd.f32 %v10738, %v314
        %v10743 = vadd.f32 %v10739, %v315
        %10744 = vst.msk [vmem:[%s285] sm:$0xff] %vm302, %v10740
        %10745 = vst.msk [vmem:[%s285 + $0x8] sm:$0xff] %vm302, %v10741
        %10746 = vst.msk [vmem:[%s285 + $0x10] sm:$0xff] %vm302, %v10742
        %10747 = vst.msk [vmem:[%s285 + $0x18] sm:$0xff] %vm302, %v10743
        %s10748 = sand.u32 %s195, 1
        %s10749 = scalar_lea.sflag [#allocation5], %s10748
        %s10750 = sand.u32 %s195, 1
        %s10751 = smul.addr %s10750, 32
        %s10752 = scalar_lea.vmem [#allocation4], %s10751
        // Predicated region
        $region49: #{tpu_custom_call.1} parent=47 // pred_check
          %p10753 = pneg %p205
        $region50: #{tpu_custom_call.1} parent=47 // pred_check_branch
          %10755 = sbr.rel (%p10753) target = $region52
        $region51: #{tpu_custom_call.1} parent=47 // pred_region
          %s10757 = ssub.s32 512, 512
          %10758 = vsyncadd %s10749, %s10757
          %s10759 = smul.addr %s25, 8
          %s10760 = sadd.s32 %s26, %s10759
          %s10761 = smul.addr %s10760, 128
          %s10762 = scalar_lea.hbm %s7, %s10761
          %s10763 = sshll.u32 %s10752, 4
          %s10764 = int_to_ptr.vmem [resolvable:$true] %s10763
          %10769 = dma.vmem_to_hbm [thread:$0]  %s10764, 512, %s10762, %s10749, 128, 256, 8
        $region52: #{tpu_custom_call.1} parent=47 // pred_fallthru
          _
      $region48: #{tpu_custom_call.1} parent=5 // pred_fallthru
        _
      %p10770 = scmp.le.s32.totalorder 2, %s16
      // Predicated region
      $region53: #{tpu_custom_call.1} parent=5 // pred_check
        %p10771 = pneg %p10770
      $region54: #{tpu_custom_call.1} parent=5 // pred_check_branch
        %10773 = sbr.rel (%p10771) target = $region56
      $region55: #{tpu_custom_call.1} parent=5 // pred_region
        %s10774 = ssub.s32 %s16, 2
        // Predicated region
        $region57: #{tpu_custom_call.1} parent=55 // pred_check
          %p10775 = pneg %p211
        $region58: #{tpu_custom_call.1} parent=55 // pred_check_branch
          %10777 = sbr.rel (%p10775) target = $region60
        $region59: #{tpu_custom_call.1} parent=55 // pred_region
          %s10778 = sand.u32 %s196, 1
          %s10779 = scalar_lea.sflag [#allocation5], %s10778
          %s10780 = sand.u32 %s196, 1
          %s10781 = smul.addr %s10780, 32
          %s10782 = scalar_lea.vmem [#allocation4], %s10781
          %10783 = dma.done %s10779, 512
        $region60: #{tpu_custom_call.1} parent=55 // pred_fallthru
          _
      $region56: #{tpu_custom_call.1} parent=5 // pred_fallthru
        _
    $region6: #{tpu_custom_call.1} parent=1 // loop_footer
      %s20 = sadd.s32 1, %s16
    $region7: #{tpu_custom_call.1} parent=1 // loop_footer_branch
      %15 = sbr.rel target = $region3
    $region8: #{tpu_custom_call.1} parent=1 // loop_exit
      _
    %10784 = vsyncpa [#allocation5], 1
    %s10785 = scalar_lea.sflag [#allocation5], 1
    %10786 = vsyncpa %s10785, 1

</llo_original>
